<compile_context>
chip_gen: v5e
topology: v5e:2x2
jax: 0.10.0
libtpu: 0.0.40
codegen_flags: <defaults>
</compile_context>

<pallas_src>
import functools

import numpy as np
import jax
import jax.numpy as jnp
from jax.experimental import pallas as pl
from jax.experimental.pallas import tpu as pltpu


# --------------------------------------------------------------------- static spatial operators
def _shift_basis(h, w, k, pad):
    """S[t, p_in, p_out] = 1 iff input pixel p_in feeds tap t of output pixel p_out
    for a kxk, stride-1, zero-padded conv (PyTorch cross-correlation convention)."""
    s = np.zeros((k * k, h * w, h * w), np.float32)
    ii, jj = np.meshgrid(np.arange(h), np.arange(w), indexing="ij")
    out_idx = (ii * w + jj).ravel()
    for di in range(k):
        for dj in range(k):
            r = ii + di - pad
            c = jj + dj - pad
            valid = ((r >= 0) & (r < h) & (c >= 0) & (c < w)).ravel()
            in_idx = (np.clip(r, 0, h - 1) * w + np.clip(c, 0, w - 1)).ravel()
            s[di * k + dj, in_idx[valid], out_idx[valid]] = 1.0
    return s


def _bilinear_1d(n_in, n_out):
    """1-D bilinear resize matrix, align_corners=True (matches F.interpolate)."""
    L = np.zeros((n_out, n_in), np.float32)
    if n_out == 1:
        L[0, 0] = 1.0
        return L
    scale = (n_in - 1) / (n_out - 1)
    for i in range(n_out):
        src = i * scale
        i0 = int(np.floor(src))
        i1 = min(i0 + 1, n_in - 1)
        f = src - i0
        L[i, i0] += 1.0 - f
        L[i, i1] += f
    return L


def _nearest_up_1d(n_in, factor):
    n_out = n_in * factor
    U = np.zeros((n_out, n_in), np.float32)
    U[np.arange(n_out), np.arange(n_out) // factor] = 1.0
    return U


# --------------------------------------------------------------------- helpers
def _pixel_shuffle(x, r):
    b, c, h, w = x.shape
    co = c // (r * r)
    x = x.reshape(b, co, r, r, h, w)
    x = x.transpose(0, 1, 4, 2, 5, 3)
    return x.reshape(b, co, h * r, w * r)


def _fold_bn(w, bn, eps=1e-5):
    gamma, beta, mean, var = bn
    scale = gamma / jnp.sqrt(var + eps)
    return w * scale[:, None, None, None], beta - scale * mean


def _pack_rows(blocks):
    """Pack (name, 2-D array [cols <= 128]) pairs into one (R,128) f32 slab.
    Each block starts on an 8-row boundary so in-kernel slices stay sublane-aligned."""
    offs, r = {}, 0
    for name, a in blocks:
        offs[name] = (r, tuple(a.shape))
        r += ((a.shape[0] + 7) // 8) * 8
    slab = jnp.zeros((max(r, 8), 128), jnp.float32)
    for name, a in blocks:
        r0, shp = offs[name]
        slab = slab.at[r0:r0 + shp[0], :shp[1]].set(a.astype(jnp.float32))
    return slab, offs


# --------------------------------------------------------------------- forward
@functools.partial(jax.jit, static_argnames=("size1", "size2"))
def node_forward(r1, r2, d1, d2, params, *, size1, size2):
    B, C1, _, _ = r1.shape          # in_channel1
    C2 = r2.shape[1]                # in_channel2
    Cd2 = d2.shape[1]
    d_ls = size1 // size2
    Cx = C1 + C2 // (d_ls * d_ls)   # channels of cat(r1, pixel_shuffle(r2))
    HW1, HW2 = size1 * size1, size2 * size2
    TEMP = 34.0                     # attention2d temperature (see TODO above)

    # ---------------- wrapper glue: pure data movement feeding the kernel
    x12 = jnp.concatenate([r1, _pixel_shuffle(r2, d_ls)], axis=1).astype(jnp.float32)
    x12_flat = x12.reshape(B, Cx, HW1)
    d1_flat = d1.reshape(B, C1, HW1).astype(jnp.float32)
    d2_flat = d2.reshape(B, Cd2, HW2).astype(jnp.float32)

    # ---------------- fixed spatial operators (numpy constants)
    S16 = _shift_basis(size1, size1, 3, 1).reshape(9 * HW1, HW1)
    S8 = _shift_basis(size2, size2, 3, 1).reshape(9 * HW2, HW2)
    S7 = _shift_basis(size2, size2, 7, 3)
    Lb = _bilinear_1d(size1, size2)
    M_down = np.kron(Lb, Lb).T.astype(np.float32)        # (HW1, HW2) bilinear down
    Un = _nearest_up_1d(size2, d_ls)
    M_up = np.kron(Un, Un).T.astype(np.float32)          # (HW2, HW1) nearest up x2

    # ---------------- fold BatchNorm, reorganise weights (tap-major stacks)
    w1f, b1 = _fold_bn(*params["conv1"])   # (C1, Cx, 3, 3)
    wlf, bl = _fold_bn(*params["y1l"])     # (C2, C1, 3, 3)
    wuf, bu = _fold_bn(*params["yuc"])     # (C1, C2, 3, 3)
    wcf, bc = _fold_bn(*params["y1c"])     # (1,  C1, 3, 3)

    w1_taps = jnp.transpose(w1f, (2, 3, 0, 1)).reshape(9 * C1, Cx)
    wl_taps = jnp.transpose(wlf, (2, 3, 0, 1)).reshape(9 * C2, C1)
    wu_taps = jnp.transpose(wuf, (2, 3, 0, 1)).reshape(9 * C1, C2)
    wc_col = jnp.transpose(wcf[0], (1, 2, 0)).reshape(9 * C1, 1)

    # SA 7x7 conv (1->1 channel, no bias) folded into one (HW2, HW2) operator
    K7 = jnp.einsum("t,tpq->pq", params["sa1"].reshape(7 * 7), jnp.asarray(S7))

    fc1_w, fc2_w, fc2_b = params["att"]

    # one parameter slab instead of ~20 tiny DMA'd arrays
    par, offs = _pack_rows([
        ("fc1w", fc1_w), ("fc2w", fc2_w), ("fc2b", fc2_b.reshape(-1, 1)),
        ("w1", w1_taps), ("b1", b1.reshape(-1, 1)),
        ("wl", wl_taps), ("bl", bl.reshape(-1, 1)),
        ("wu", wu_taps), ("bu", bu.reshape(-1, 1)),
        ("wc", wc_col), ("bc", bc.reshape(1, 1)),
    ])

    # spatial-operator slabs (lane widths HW1 and HW2)
    s256 = jnp.concatenate([jnp.asarray(S16), jnp.asarray(M_up)], axis=0)       # (9*HW1+HW2, HW1)
    s64 = jnp.concatenate([jnp.asarray(S8), K7, jnp.asarray(M_down)], axis=0)   # (10*HW2+HW1, HW2)
    o_up = 9 * HW1
    o_k7 = 9 * HW2
    o_md = 10 * HW2

    # ---------------- the fused per-batch kernel
    def kernel(x12_ref, d1_ref, d2_ref, par_ref, s256_ref, s64_ref, rd1_ref, rd2_ref):
        def dot(a, b):
            return jnp.dot(a, b, preferred_element_type=jnp.float32)

        def P(name):
            r0, shp = offs[name]
            return par_ref[r0:r0 + shp[0], 0:shp[1]]

        x12_b = x12_ref[0]                                   # (Cx, HW1)
        d1_b = d1_ref[0]                                     # (C1, HW1)
        d2_b = d2_ref[0]                                     # (Cd2, HW2)

        # ---- attention2d(x12): global avgpool -> fc1 -> relu -> fc2 -> softmax(/T)
        mean_c = jnp.mean(x12_b, axis=1, keepdims=True)      # (Cx, 1)
        h = jnp.maximum(dot(P("fc1w"), mean_c), 0.0)         # (hidden, 1)
        logits = (dot(P("fc2w"), h) + P("fc2b")) * (1.0 / TEMP)
        logits = logits - jnp.max(logits, axis=0, keepdims=True)
        e = jnp.exp(logits)
        attn = e / jnp.sum(e, axis=0, keepdims=True)         # (Cx, 1)

        # ---- 3x3 conv + folded BN on the size1 map via shift-operator matmuls
        def conv3(x, wname, bname, cout):
            w_all = P(wname)                                 # (9*cout, cin)
            acc = P(bname)                                   # (cout, 1) -> broadcasts
            for t in range(9):
                wt = w_all[t * cout:(t + 1) * cout, :]
                acc = acc + dot(dot(wt, x), s256_ref[t * HW1:(t + 1) * HW1, :])
            return acc

        # x12c = BN(conv1(attn * x12))
        x12c = conv3(x12_b * attn, "w1", "b1", C1)           # (C1, HW1)

        # ---- y2 = SA(d2): channel max -> 7x7 conv (folded operator) -> sigmoid
        mx = jnp.max(d2_b, axis=0, keepdims=True)            # (1, HW2)
        mx8 = jnp.broadcast_to(mx, (8, HW2))                 # keep matmul M-dim = 8
        y2 = jax.nn.sigmoid(dot(mx8, s64_ref[o_k7:o_k7 + HW2, :]))   # (8, HW2) equal rows

        # ---- y1 = BN(conv_y1c(bilinear_down_16->8(d1)))
        y1_pre = dot(d1_b, s64_ref[o_md:o_md + HW1, :])      # (C1, HW2)
        wc_all = P("wc")                                     # (9*C1, 1)
        y1 = P("bc")                                         # (1, 1)
        for t in range(9):
            sh = dot(y1_pre, s64_ref[t * HW2:(t + 1) * HW2, :])          # (C1, HW2)
            y1 = y1 + jnp.sum(sh * wc_all[t * C1:(t + 1) * C1, :],
                              axis=0, keepdims=True)         # (1, HW2)

        # ---- y12 = nearest_x2(y1 * y2);  y = BN(conv_y1l(d1)) * y12
        y12 = dot(jnp.broadcast_to(y1, (8, HW2)) * y2,
                  s256_ref[o_up:o_up + HW2, :])              # (8, HW1) equal rows
        y12 = y12[0:1, :]                                    # (1, HW1)
        y1l = conv3(d1_b, "wl", "bl", C2)                    # (C2, HW1)
        y = y1l * y12                                        # (C2, HW1)

        # ---- outputs: rd2 = bilinear_down(y);  rd1 = BN(conv_yuc(y)) * x12c
        rd2_ref[0] = dot(y, s64_ref[o_md:o_md + HW1, :])     # (C2, HW2)
        yu = conv3(y, "wu", "bu", C1)                        # (C1, HW1)
        rd1_ref[0] = yu * x12c

    rd1_flat, rd2_flat = pl.pallas_call(
        kernel,
        grid=(B,),
        in_specs=[
            pl.BlockSpec((1, Cx, HW1), lambda b: (b, 0, 0)),
            pl.BlockSpec((1, C1, HW1), lambda b: (b, 0, 0)),
            pl.BlockSpec((1, Cd2, HW2), lambda b: (b, 0, 0)),
            pl.BlockSpec(par.shape, lambda b: (0, 0)),
            pl.BlockSpec(s256.shape, lambda b: (0, 0)),
            pl.BlockSpec(s64.shape, lambda b: (0, 0)),
        ],
        out_specs=[
            pl.BlockSpec((1, C1, HW1), lambda b: (b, 0, 0)),
            pl.BlockSpec((1, C2, HW2), lambda b: (b, 0, 0)),
        ],
        out_shape=[
            jax.ShapeDtypeStruct((B, C1, HW1), jnp.float32),
            jax.ShapeDtypeStruct((B, C2, HW2), jnp.float32),
        ],
        compiler_params=pltpu.CompilerParams(dimension_semantics=("parallel",)),
    )(x12_flat, d1_flat, d2_flat, par, s256, s64)

    rd1 = rd1_flat.reshape(B, C1, size1, size1)
    rd2 = rd2_flat.reshape(B, C2, size2, size2)
    return rd1, rd2


# --------------------------------------------------------------------- parameters
def init_params(key, c1, c2):
    cx = c1 + c2 // 4
    hidden = int(cx * 0.25) + 1          # attention2d: int(in_planes*ratios)+1
    ks = jax.random.split(key, 12)

    def nrm(k, shape, s=0.25):
        return s * jax.random.normal(k, shape, jnp.float32)

    def bn(k, c):
        k1, k2, k3, k4 = jax.random.split(k, 4)
        gamma = 1.0 + 0.1 * jax.random.normal(k1, (c,), jnp.float32)
        beta = 0.1 * jax.random.normal(k2, (c,), jnp.float32)
        mean = 0.1 * jax.random.normal(k3, (c,), jnp.float32)
        var = 1.0 + 0.1 * jnp.abs(jax.random.normal(k4, (c,), jnp.float32))
        return (gamma, beta, mean, var)

    return {
        "att": (nrm(ks[0], (hidden, cx)),        # fc1 1x1 conv weight (no bias)
                nrm(ks[1], (cx, hidden)),        # fc2 1x1 conv weight (K == in_planes)
                nrm(ks[2], (cx,))),              # fc2 bias
        "conv1": (nrm(ks[3], (c1, cx, 3, 3)), bn(ks[4], c1)),
        "sa1": nrm(ks[5], (1, 1, 7, 7)),         # SA 7x7 conv, no bias
        "y1c": (nrm(ks[6], (1, c1, 3, 3)), bn(ks[7], 1)),
        "y1l": (nrm(ks[8], (c2, c1, 3, 3)), bn(ks[9], c2)),
        "yuc": (nrm(ks[10], (c1, c2, 3, 3)), bn(ks[11], c1)),
    }


# --------------------------------------------------------------------- main
if __name__ == "__main__":
    key = jax.random.PRNGKey(0)
    B = 2
    IN_CH1, IN_CH2 = 4, 8        # in_channel1, in_channel2 (in_channel2 % 4 == 0)
    SIZE1, SIZE2 = 16, 8         # size1 / size2 = pixel-shuffle factor 2
    CD2 = 8                      # channels of d2 (SA only takes a channel max)

    k1, k2, k3, k4, kp = jax.random.split(key, 5)
    r1 = jax.random.normal(k1, (B, IN_CH1, SIZE1, SIZE1), jnp.float32)
    r2 = jax.random.normal(k2, (B, IN_CH2, SIZE2, SIZE2), jnp.float32)
    d1 = jax.random.normal(k3, (B, IN_CH1, SIZE1, SIZE1), jnp.float32)
    d2 = jax.random.normal(k4, (B, CD2, SIZE2, SIZE2), jnp.float32)
    params = init_params(kp, IN_CH1, IN_CH2)

    rd1, rd2 = node_forward(r1, r2, d1, d2, params, size1=SIZE1, size2=SIZE2)
    jax.block_until_ready((rd1, rd2))

    assert rd1.shape == (B, IN_CH1, SIZE1, SIZE1), rd1.shape
    assert rd2.shape == (B, IN_CH2, SIZE2, SIZE2), rd2.shape
    assert rd1.dtype == jnp.float32 and rd2.dtype == jnp.float32
    assert bool(jnp.all(jnp.isfinite(rd1))) and bool(jnp.all(jnp.isfinite(rd2)))
    print("KERNEL_OK")
</pallas_src>

<mosaic_0001>
module attributes {stable_mosaic.version = 11 : i64} {
  func.func @kernel(%arg0: i32, %arg1: memref<1x6x256xf32, #tpu.memory_space<vmem>>, %arg2: memref<1x4x256xf32, #tpu.memory_space<vmem>>, %arg3: memref<1x8x64xf32, #tpu.memory_space<vmem>>, %arg4: memref<248x128xf32, #tpu.memory_space<vmem>>, %arg5: memref<2368x256xf32, #tpu.memory_space<vmem>>, %arg6: memref<896x64xf32, #tpu.memory_space<vmem>>, %arg7: memref<1x4x256xf32, #tpu.memory_space<vmem>>, %arg8: memref<1x8x64xf32, #tpu.memory_space<vmem>>) attributes {dimension_semantics = [#tpu.dimension_semantics<parallel>], iteration_bounds = array<i64: 2>, scalar_prefetch = 0 : i64, scratch_operands = 0 : i64, tpu.core_type = #tpu.core_type<tc>, window_params = [{transform_indices = @transform_0, window_bounds = array<i64: 1, 6, 256>}, {transform_indices = @transform_1, window_bounds = array<i64: 1, 4, 256>}, {transform_indices = @transform_2, window_bounds = array<i64: 1, 8, 64>}, {pipeline_mode = #tpu.pipeline_mode<synchronous>, transform_indices = @transform_3, window_bounds = array<i64: 248, 128>}, {pipeline_mode = #tpu.pipeline_mode<synchronous>, transform_indices = @transform_4, window_bounds = array<i64: 2368, 256>}, {pipeline_mode = #tpu.pipeline_mode<synchronous>, transform_indices = @transform_5, window_bounds = array<i64: 896, 64>}, {transform_indices = @transform_6, window_bounds = array<i64: 1, 4, 256>}, {transform_indices = @transform_7, window_bounds = array<i64: 1, 8, 64>}]} {
    %c0 = arith.constant 0 : index
    %c0_0 = arith.constant 0 : index
    %c0_1 = arith.constant 0 : index
    %0 = vector.load %arg1[%c0, %c0_0, %c0_1] : memref<1x6x256xf32, #tpu.memory_space<vmem>>, vector<1x6x256xf32>
    %1 = vector.shape_cast %0 : vector<1x6x256xf32> to vector<6x256xf32>
    %c0_2 = arith.constant 0 : index
    %c0_3 = arith.constant 0 : index
    %c0_4 = arith.constant 0 : index
    %2 = vector.load %arg2[%c0_2, %c0_3, %c0_4] : memref<1x4x256xf32, #tpu.memory_space<vmem>>, vector<1x4x256xf32>
    %3 = vector.shape_cast %2 : vector<1x4x256xf32> to vector<4x256xf32>
    %c0_5 = arith.constant 0 : index
    %c0_6 = arith.constant 0 : index
    %c0_7 = arith.constant 0 : index
    %4 = vector.load %arg3[%c0_5, %c0_6, %c0_7] : memref<1x8x64xf32, #tpu.memory_space<vmem>>, vector<1x8x64xf32>
    %5 = vector.shape_cast %4 : vector<1x8x64xf32> to vector<8x64xf32>
    %cst = arith.constant dense<0.000000e+00> : vector<6xf32>
    %6 = vector.multi_reduction <add>, %1, %cst [1] : vector<6x256xf32> to vector<6xf32>
    %7 = vector.shape_cast %6 : vector<6xf32> to vector<6x1xf32>
    %cst_8 = arith.constant 2.560000e+02 : f32
    %8 = vector.broadcast %cst_8 : f32 to vector<6x1xf32>
    %9 = arith.divf %7, %8 : vector<6x1xf32>
    %c0_9 = arith.constant 0 : index
    %c0_10 = arith.constant 0 : index
    %10 = vector.load %arg4[%c0_9, %c0_10] : memref<248x128xf32, #tpu.memory_space<vmem>>, vector<2x6xf32>
    %cst_11 = arith.constant dense<0.000000e+00> : vector<2x1xf32>
    %11 = tpu.matmul %10, %9, %cst_11 {dimension_numbers = #tpu.dot_dimension_numbers<[1], [0], [0], [1], [0, 0, 1, 1], [], []>} : vector<2x6xf32>, vector<6x1xf32>, vector<2x1xf32> -> vector<2x1xf32>
    %cst_12 = arith.constant 0.000000e+00 : f32
    %12 = vector.broadcast %cst_12 : f32 to vector<2x1xf32>
    %13 = arith.maximumf %11, %12 : vector<2x1xf32>
    %c8 = arith.constant 8 : index
    %c0_13 = arith.constant 0 : index
    %14 = vector.load %arg4[%c8, %c0_13] : memref<248x128xf32, #tpu.memory_space<vmem>>, vector<6x2xf32>
    %cst_14 = arith.constant dense<0.000000e+00> : vector<6x1xf32>
    %15 = tpu.matmul %14, %13, %cst_14 {dimension_numbers = #tpu.dot_dimension_numbers<[1], [0], [0], [1], [0, 0, 1, 1], [], []>} : vector<6x2xf32>, vector<2x1xf32>, vector<6x1xf32> -> vector<6x1xf32>
    %c16 = arith.constant 16 : index
    %c0_15 = arith.constant 0 : index
    %16 = vector.load %arg4[%c16, %c0_15] : memref<248x128xf32, #tpu.memory_space<vmem>>, vector<6x1xf32>
    %17 = arith.addf %15, %16 : vector<6x1xf32>
    %cst_16 = arith.constant 0.0294117648 : f32
    %18 = vector.broadcast %cst_16 : f32 to vector<6x1xf32>
    %19 = arith.mulf %17, %18 : vector<6x1xf32>
    %cst_17 = arith.constant dense<0xFF800000> : vector<1xf32>
    %20 = vector.multi_reduction <maximumf>, %19, %cst_17 [0] : vector<6x1xf32> to vector<1xf32>
    %21 = vector.shape_cast %20 : vector<1xf32> to vector<1x1xf32>
    %22 = vector.broadcast %21 : vector<1x1xf32> to vector<6x1xf32>
    %23 = arith.subf %19, %22 : vector<6x1xf32>
    %24 = math.exp %23 : vector<6x1xf32>
    %cst_18 = arith.constant dense<0.000000e+00> : vector<1xf32>
    %25 = vector.multi_reduction <add>, %24, %cst_18 [0] : vector<6x1xf32> to vector<1xf32>
    %26 = vector.shape_cast %25 : vector<1xf32> to vector<1x1xf32>
    %27 = vector.broadcast %26 : vector<1x1xf32> to vector<6x1xf32>
    %28 = arith.divf %24, %27 : vector<6x1xf32>
    %29 = vector.broadcast %28 : vector<6x1xf32> to vector<6x256xf32>
    %30 = arith.mulf %1, %29 : vector<6x256xf32>
    %c24 = arith.constant 24 : index
    %c0_19 = arith.constant 0 : index
    %31 = vector.load %arg4[%c24, %c0_19] : memref<248x128xf32, #tpu.memory_space<vmem>>, vector<36x6xf32>
    %c64 = arith.constant 64 : index
    %c0_20 = arith.constant 0 : index
    %32 = vector.load %arg4[%c64, %c0_20] : memref<248x128xf32, #tpu.memory_space<vmem>>, vector<4x1xf32>
    %33 = vector.extract_strided_slice %31 {offsets = [0, 0], sizes = [4, 6], strides = [1, 1]} : vector<36x6xf32> to vector<4x6xf32>
    %cst_21 = arith.constant dense<0.000000e+00> : vector<4x256xf32>
    %34 = tpu.matmul %33, %30, %cst_21 {dimension_numbers = #tpu.dot_dimension_numbers<[1], [0], [0], [1], [0, 0, 1, 1], [], []>} : vector<4x6xf32>, vector<6x256xf32>, vector<4x256xf32> -> vector<4x256xf32>
    %c0_22 = arith.constant 0 : index
    %c0_23 = arith.constant 0 : index
    %35 = vector.load %arg5[%c0_22, %c0_23] : memref<2368x256xf32, #tpu.memory_space<vmem>>, vector<256x256xf32>
    %cst_24 = arith.constant dense<0.000000e+00> : vector<4x256xf32>
    %36 = tpu.matmul %34, %35, %cst_24 {dimension_numbers = #tpu.dot_dimension_numbers<[1], [0], [0], [1], [0, 0, 1, 1], [], []>} : vector<4x256xf32>, vector<256x256xf32>, vector<4x256xf32> -> vector<4x256xf32>
    %37 = vector.broadcast %32 : vector<4x1xf32> to vector<4x256xf32>
    %38 = arith.addf %37, %36 : vector<4x256xf32>
    %39 = vector.extract_strided_slice %31 {offsets = [4, 0], sizes = [4, 6], strides = [1, 1]} : vector<36x6xf32> to vector<4x6xf32>
    %cst_25 = arith.constant dense<0.000000e+00> : vector<4x256xf32>
    %40 = tpu.matmul %39, %30, %cst_25 {dimension_numbers = #tpu.dot_dimension_numbers<[1], [0], [0], [1], [0, 0, 1, 1], [], []>} : vector<4x6xf32>, vector<6x256xf32>, vector<4x256xf32> -> vector<4x256xf32>
    %c256 = arith.constant 256 : index
    %c0_26 = arith.constant 0 : index
    %41 = vector.load %arg5[%c256, %c0_26] : memref<2368x256xf32, #tpu.memory_space<vmem>>, vector<256x256xf32>
    %cst_27 = arith.constant dense<0.000000e+00> : vector<4x256xf32>
    %42 = tpu.matmul %40, %41, %cst_27 {dimension_numbers = #tpu.dot_dimension_numbers<[1], [0], [0], [1], [0, 0, 1, 1], [], []>} : vector<4x256xf32>, vector<256x256xf32>, vector<4x256xf32> -> vector<4x256xf32>
    %43 = arith.addf %38, %42 : vector<4x256xf32>
    %44 = vector.extract_strided_slice %31 {offsets = [8, 0], sizes = [4, 6], strides = [1, 1]} : vector<36x6xf32> to vector<4x6xf32>
    %cst_28 = arith.constant dense<0.000000e+00> : vector<4x256xf32>
    %45 = tpu.matmul %44, %30, %cst_28 {dimension_numbers = #tpu.dot_dimension_numbers<[1], [0], [0], [1], [0, 0, 1, 1], [], []>} : vector<4x6xf32>, vector<6x256xf32>, vector<4x256xf32> -> vector<4x256xf32>
    %c512 = arith.constant 512 : index
    %c0_29 = arith.constant 0 : index
    %46 = vector.load %arg5[%c512, %c0_29] : memref<2368x256xf32, #tpu.memory_space<vmem>>, vector<256x256xf32>
    %cst_30 = arith.constant dense<0.000000e+00> : vector<4x256xf32>
    %47 = tpu.matmul %45, %46, %cst_30 {dimension_numbers = #tpu.dot_dimension_numbers<[1], [0], [0], [1], [0, 0, 1, 1], [], []>} : vector<4x256xf32>, vector<256x256xf32>, vector<4x256xf32> -> vector<4x256xf32>
    %48 = arith.addf %43, %47 : vector<4x256xf32>
    %49 = vector.extract_strided_slice %31 {offsets = [12, 0], sizes = [4, 6], strides = [1, 1]} : vector<36x6xf32> to vector<4x6xf32>
    %cst_31 = arith.constant dense<0.000000e+00> : vector<4x256xf32>
    %50 = tpu.matmul %49, %30, %cst_31 {dimension_numbers = #tpu.dot_dimension_numbers<[1], [0], [0], [1], [0, 0, 1, 1], [], []>} : vector<4x6xf32>, vector<6x256xf32>, vector<4x256xf32> -> vector<4x256xf32>
    %c768 = arith.constant 768 : index
    %c0_32 = arith.constant 0 : index
    %51 = vector.load %arg5[%c768, %c0_32] : memref<2368x256xf32, #tpu.memory_space<vmem>>, vector<256x256xf32>
    %cst_33 = arith.constant dense<0.000000e+00> : vector<4x256xf32>
    %52 = tpu.matmul %50, %51, %cst_33 {dimension_numbers = #tpu.dot_dimension_numbers<[1], [0], [0], [1], [0, 0, 1, 1], [], []>} : vector<4x256xf32>, vector<256x256xf32>, vector<4x256xf32> -> vector<4x256xf32>
    %53 = arith.addf %48, %52 : vector<4x256xf32>
    %54 = vector.extract_strided_slice %31 {offsets = [16, 0], sizes = [4, 6], strides = [1, 1]} : vector<36x6xf32> to vector<4x6xf32>
    %cst_34 = arith.constant dense<0.000000e+00> : vector<4x256xf32>
    %55 = tpu.matmul %54, %30, %cst_34 {dimension_numbers = #tpu.dot_dimension_numbers<[1], [0], [0], [1], [0, 0, 1, 1], [], []>} : vector<4x6xf32>, vector<6x256xf32>, vector<4x256xf32> -> vector<4x256xf32>
    %c1024 = arith.constant 1024 : index
    %c0_35 = arith.constant 0 : index
    %56 = vector.load %arg5[%c1024, %c0_35] : memref<2368x256xf32, #tpu.memory_space<vmem>>, vector<256x256xf32>
    %cst_36 = arith.constant dense<0.000000e+00> : vector<4x256xf32>
    %57 = tpu.matmul %55, %56, %cst_36 {dimension_numbers = #tpu.dot_dimension_numbers<[1], [0], [0], [1], [0, 0, 1, 1], [], []>} : vector<4x256xf32>, vector<256x256xf32>, vector<4x256xf32> -> vector<4x256xf32>
    %58 = arith.addf %53, %57 : vector<4x256xf32>
    %59 = vector.extract_strided_slice %31 {offsets = [20, 0], sizes = [4, 6], strides = [1, 1]} : vector<36x6xf32> to vector<4x6xf32>
    %cst_37 = arith.constant dense<0.000000e+00> : vector<4x256xf32>
    %60 = tpu.matmul %59, %30, %cst_37 {dimension_numbers = #tpu.dot_dimension_numbers<[1], [0], [0], [1], [0, 0, 1, 1], [], []>} : vector<4x6xf32>, vector<6x256xf32>, vector<4x256xf32> -> vector<4x256xf32>
    %c1280 = arith.constant 1280 : index
    %c0_38 = arith.constant 0 : index
    %61 = vector.load %arg5[%c1280, %c0_38] : memref<2368x256xf32, #tpu.memory_space<vmem>>, vector<256x256xf32>
    %cst_39 = arith.constant dense<0.000000e+00> : vector<4x256xf32>
    %62 = tpu.matmul %60, %61, %cst_39 {dimension_numbers = #tpu.dot_dimension_numbers<[1], [0], [0], [1], [0, 0, 1, 1], [], []>} : vector<4x256xf32>, vector<256x256xf32>, vector<4x256xf32> -> vector<4x256xf32>
    %63 = arith.addf %58, %62 : vector<4x256xf32>
    %64 = vector.extract_strided_slice %31 {offsets = [24, 0], sizes = [4, 6], strides = [1, 1]} : vector<36x6xf32> to vector<4x6xf32>
    %cst_40 = arith.constant dense<0.000000e+00> : vector<4x256xf32>
    %65 = tpu.matmul %64, %30, %cst_40 {dimension_numbers = #tpu.dot_dimension_numbers<[1], [0], [0], [1], [0, 0, 1, 1], [], []>} : vector<4x6xf32>, vector<6x256xf32>, vector<4x256xf32> -> vector<4x256xf32>
    %c1536 = arith.constant 1536 : index
    %c0_41 = arith.constant 0 : index
    %66 = vector.load %arg5[%c1536, %c0_41] : memref<2368x256xf32, #tpu.memory_space<vmem>>, vector<256x256xf32>
    %cst_42 = arith.constant dense<0.000000e+00> : vector<4x256xf32>
    %67 = tpu.matmul %65, %66, %cst_42 {dimension_numbers = #tpu.dot_dimension_numbers<[1], [0], [0], [1], [0, 0, 1, 1], [], []>} : vector<4x256xf32>, vector<256x256xf32>, vector<4x256xf32> -> vector<4x256xf32>
    %68 = arith.addf %63, %67 : vector<4x256xf32>
    %69 = vector.extract_strided_slice %31 {offsets = [28, 0], sizes = [4, 6], strides = [1, 1]} : vector<36x6xf32> to vector<4x6xf32>
    %cst_43 = arith.constant dense<0.000000e+00> : vector<4x256xf32>
    %70 = tpu.matmul %69, %30, %cst_43 {dimension_numbers = #tpu.dot_dimension_numbers<[1], [0], [0], [1], [0, 0, 1, 1], [], []>} : vector<4x6xf32>, vector<6x256xf32>, vector<4x256xf32> -> vector<4x256xf32>
    %c1792 = arith.constant 1792 : index
    %c0_44 = arith.constant 0 : index
    %71 = vector.load %arg5[%c1792, %c0_44] : memref<2368x256xf32, #tpu.memory_space<vmem>>, vector<256x256xf32>
    %cst_45 = arith.constant dense<0.000000e+00> : vector<4x256xf32>
    %72 = tpu.matmul %70, %71, %cst_45 {dimension_numbers = #tpu.dot_dimension_numbers<[1], [0], [0], [1], [0, 0, 1, 1], [], []>} : vector<4x256xf32>, vector<256x256xf32>, vector<4x256xf32> -> vector<4x256xf32>
    %73 = arith.addf %68, %72 : vector<4x256xf32>
    %74 = vector.extract_strided_slice %31 {offsets = [32, 0], sizes = [4, 6], strides = [1, 1]} : vector<36x6xf32> to vector<4x6xf32>
    %cst_46 = arith.constant dense<0.000000e+00> : vector<4x256xf32>
    %75 = tpu.matmul %74, %30, %cst_46 {dimension_numbers = #tpu.dot_dimension_numbers<[1], [0], [0], [1], [0, 0, 1, 1], [], []>} : vector<4x6xf32>, vector<6x256xf32>, vector<4x256xf32> -> vector<4x256xf32>
    %c2048 = arith.constant 2048 : index
    %c0_47 = arith.constant 0 : index
    %76 = vector.load %arg5[%c2048, %c0_47] : memref<2368x256xf32, #tpu.memory_space<vmem>>, vector<256x256xf32>
    %cst_48 = arith.constant dense<0.000000e+00> : vector<4x256xf32>
    %77 = tpu.matmul %75, %76, %cst_48 {dimension_numbers = #tpu.dot_dimension_numbers<[1], [0], [0], [1], [0, 0, 1, 1], [], []>} : vector<4x256xf32>, vector<256x256xf32>, vector<4x256xf32> -> vector<4x256xf32>
    %78 = arith.addf %73, %77 : vector<4x256xf32>
    %cst_49 = arith.constant dense<0xFF800000> : vector<64xf32>
    %79 = vector.multi_reduction <maximumf>, %5, %cst_49 [0] : vector<8x64xf32> to vector<64xf32>
    %80 = vector.shape_cast %79 : vector<64xf32> to vector<1x64xf32>
    %81 = vector.shape_cast %80 : vector<1x64xf32> to vector<1x64xf32>
    %82 = vector.broadcast %81 : vector<1x64xf32> to vector<8x64xf32>
    %c576 = arith.constant 576 : index
    %c0_50 = arith.constant 0 : index
    %83 = vector.load %arg6[%c576, %c0_50] : memref<896x64xf32, #tpu.memory_space<vmem>>, vector<64x64xf32>
    %cst_51 = arith.constant dense<0.000000e+00> : vector<8x64xf32>
    %84 = tpu.matmul %82, %83, %cst_51 {dimension_numbers = #tpu.dot_dimension_numbers<[1], [0], [0], [1], [0, 0, 1, 1], [], []>} : vector<8x64xf32>, vector<64x64xf32>, vector<8x64xf32> -> vector<8x64xf32>
    %85 = arith.negf %84 : vector<8x64xf32>
    %86 = math.exp %85 : vector<8x64xf32>
    %cst_52 = arith.constant 1.000000e+00 : f32
    %87 = vector.broadcast %cst_52 : f32 to vector<8x64xf32>
    %88 = arith.addf %87, %86 : vector<8x64xf32>
    %89 = arith.divf %87, %88 : vector<8x64xf32>
    %c640 = arith.constant 640 : index
    %c0_53 = arith.constant 0 : index
    %90 = vector.load %arg6[%c640, %c0_53] : memref<896x64xf32, #tpu.memory_space<vmem>>, vector<256x64xf32>
    %cst_54 = arith.constant dense<0.000000e+00> : vector<4x64xf32>
    %91 = tpu.matmul %3, %90, %cst_54 {dimension_numbers = #tpu.dot_dimension_numbers<[1], [0], [0], [1], [0, 0, 1, 1], [], []>} : vector<4x256xf32>, vector<256x64xf32>, vector<4x64xf32> -> vector<4x64xf32>
    %c200 = arith.constant 200 : index
    %c0_55 = arith.constant 0 : index
    %92 = vector.load %arg4[%c200, %c0_55] : memref<248x128xf32, #tpu.memory_space<vmem>>, vector<36x1xf32>
    %c240 = arith.constant 240 : index
    %c0_56 = arith.constant 0 : index
    %93 = vector.load %arg4[%c240, %c0_56] : memref<248x128xf32, #tpu.memory_space<vmem>>, vector<1x1xf32>
    %c0_57 = arith.constant 0 : index
    %c0_58 = arith.constant 0 : index
    %94 = vector.load %arg6[%c0_57, %c0_58] : memref<896x64xf32, #tpu.memory_space<vmem>>, vector<64x64xf32>
    %cst_59 = arith.constant dense<0.000000e+00> : vector<4x64xf32>
    %95 = tpu.matmul %91, %94, %cst_59 {dimension_numbers = #tpu.dot_dimension_numbers<[1], [0], [0], [1], [0, 0, 1, 1], [], []>} : vector<4x64xf32>, vector<64x64xf32>, vector<4x64xf32> -> vector<4x64xf32>
    %96 = vector.extract_strided_slice %92 {offsets = [0, 0], sizes = [4, 1], strides = [1, 1]} : vector<36x1xf32> to vector<4x1xf32>
    %97 = vector.broadcast %96 : vector<4x1xf32> to vector<4x64xf32>
    %98 = arith.mulf %95, %97 : vector<4x64xf32>
    %cst_60 = arith.constant dense<0.000000e+00> : vector<64xf32>
    %99 = vector.multi_reduction <add>, %98, %cst_60 [0] : vector<4x64xf32> to vector<64xf32>
    %100 = vector.shape_cast %99 : vector<64xf32> to vector<1x64xf32>
    %101 = vector.broadcast %93 : vector<1x1xf32> to vector<1x64xf32>
    %102 = arith.addf %101, %100 : vector<1x64xf32>
    %c64_61 = arith.constant 64 : index
    %c0_62 = arith.constant 0 : index
    %103 = vector.load %arg6[%c64_61, %c0_62] : memref<896x64xf32, #tpu.memory_space<vmem>>, vector<64x64xf32>
    %cst_63 = arith.constant dense<0.000000e+00> : vector<4x64xf32>
    %104 = tpu.matmul %91, %103, %cst_63 {dimension_numbers = #tpu.dot_dimension_numbers<[1], [0], [0], [1], [0, 0, 1, 1], [], []>} : vector<4x64xf32>, vector<64x64xf32>, vector<4x64xf32> -> vector<4x64xf32>
    %105 = vector.extract_strided_slice %92 {offsets = [4, 0], sizes = [4, 1], strides = [1, 1]} : vector<36x1xf32> to vector<4x1xf32>
    %106 = vector.broadcast %105 : vector<4x1xf32> to vector<4x64xf32>
    %107 = arith.mulf %104, %106 : vector<4x64xf32>
    %cst_64 = arith.constant dense<0.000000e+00> : vector<64xf32>
    %108 = vector.multi_reduction <add>, %107, %cst_64 [0] : vector<4x64xf32> to vector<64xf32>
    %109 = vector.shape_cast %108 : vector<64xf32> to vector<1x64xf32>
    %110 = arith.addf %102, %109 : vector<1x64xf32>
    %c128 = arith.constant 128 : index
    %c0_65 = arith.constant 0 : index
    %111 = vector.load %arg6[%c128, %c0_65] : memref<896x64xf32, #tpu.memory_space<vmem>>, vector<64x64xf32>
    %cst_66 = arith.constant dense<0.000000e+00> : vector<4x64xf32>
    %112 = tpu.matmul %91, %111, %cst_66 {dimension_numbers = #tpu.dot_dimension_numbers<[1], [0], [0], [1], [0, 0, 1, 1], [], []>} : vector<4x64xf32>, vector<64x64xf32>, vector<4x64xf32> -> vector<4x64xf32>
    %113 = vector.extract_strided_slice %92 {offsets = [8, 0], sizes = [4, 1], strides = [1, 1]} : vector<36x1xf32> to vector<4x1xf32>
    %114 = vector.broadcast %113 : vector<4x1xf32> to vector<4x64xf32>
    %115 = arith.mulf %112, %114 : vector<4x64xf32>
    %cst_67 = arith.constant dense<0.000000e+00> : vector<64xf32>
    %116 = vector.multi_reduction <add>, %115, %cst_67 [0] : vector<4x64xf32> to vector<64xf32>
    %117 = vector.shape_cast %116 : vector<64xf32> to vector<1x64xf32>
    %118 = arith.addf %110, %117 : vector<1x64xf32>
    %c192 = arith.constant 192 : index
    %c0_68 = arith.constant 0 : index
    %119 = vector.load %arg6[%c192, %c0_68] : memref<896x64xf32, #tpu.memory_space<vmem>>, vector<64x64xf32>
    %cst_69 = arith.constant dense<0.000000e+00> : vector<4x64xf32>
    %120 = tpu.matmul %91, %119, %cst_69 {dimension_numbers = #tpu.dot_dimension_numbers<[1], [0], [0], [1], [0, 0, 1, 1], [], []>} : vector<4x64xf32>, vector<64x64xf32>, vector<4x64xf32> -> vector<4x64xf32>
    %121 = vector.extract_strided_slice %92 {offsets = [12, 0], sizes = [4, 1], strides = [1, 1]} : vector<36x1xf32> to vector<4x1xf32>
    %122 = vector.broadcast %121 : vector<4x1xf32> to vector<4x64xf32>
    %123 = arith.mulf %120, %122 : vector<4x64xf32>
    %cst_70 = arith.constant dense<0.000000e+00> : vector<64xf32>
    %124 = vector.multi_reduction <add>, %123, %cst_70 [0] : vector<4x64xf32> to vector<64xf32>
    %125 = vector.shape_cast %124 : vector<64xf32> to vector<1x64xf32>
    %126 = arith.addf %118, %125 : vector<1x64xf32>
    %c256_71 = arith.constant 256 : index
    %c0_72 = arith.constant 0 : index
    %127 = vector.load %arg6[%c256_71, %c0_72] : memref<896x64xf32, #tpu.memory_space<vmem>>, vector<64x64xf32>
    %cst_73 = arith.constant dense<0.000000e+00> : vector<4x64xf32>
    %128 = tpu.matmul %91, %127, %cst_73 {dimension_numbers = #tpu.dot_dimension_numbers<[1], [0], [0], [1], [0, 0, 1, 1], [], []>} : vector<4x64xf32>, vector<64x64xf32>, vector<4x64xf32> -> vector<4x64xf32>
    %129 = vector.extract_strided_slice %92 {offsets = [16, 0], sizes = [4, 1], strides = [1, 1]} : vector<36x1xf32> to vector<4x1xf32>
    %130 = vector.broadcast %129 : vector<4x1xf32> to vector<4x64xf32>
    %131 = arith.mulf %128, %130 : vector<4x64xf32>
    %cst_74 = arith.constant dense<0.000000e+00> : vector<64xf32>
    %132 = vector.multi_reduction <add>, %131, %cst_74 [0] : vector<4x64xf32> to vector<64xf32>
    %133 = vector.shape_cast %132 : vector<64xf32> to vector<1x64xf32>
    %134 = arith.addf %126, %133 : vector<1x64xf32>
    %c320 = arith.constant 320 : index
    %c0_75 = arith.constant 0 : index
    %135 = vector.load %arg6[%c320, %c0_75] : memref<896x64xf32, #tpu.memory_space<vmem>>, vector<64x64xf32>
    %cst_76 = arith.constant dense<0.000000e+00> : vector<4x64xf32>
    %136 = tpu.matmul %91, %135, %cst_76 {dimension_numbers = #tpu.dot_dimension_numbers<[1], [0], [0], [1], [0, 0, 1, 1], [], []>} : vector<4x64xf32>, vector<64x64xf32>, vector<4x64xf32> -> vector<4x64xf32>
    %137 = vector.extract_strided_slice %92 {offsets = [20, 0], sizes = [4, 1], strides = [1, 1]} : vector<36x1xf32> to vector<4x1xf32>
    %138 = vector.broadcast %137 : vector<4x1xf32> to vector<4x64xf32>
    %139 = arith.mulf %136, %138 : vector<4x64xf32>
    %cst_77 = arith.constant dense<0.000000e+00> : vector<64xf32>
    %140 = vector.multi_reduction <add>, %139, %cst_77 [0] : vector<4x64xf32> to vector<64xf32>
    %141 = vector.shape_cast %140 : vector<64xf32> to vector<1x64xf32>
    %142 = arith.addf %134, %141 : vector<1x64xf32>
    %c384 = arith.constant 384 : index
    %c0_78 = arith.constant 0 : index
    %143 = vector.load %arg6[%c384, %c0_78] : memref<896x64xf32, #tpu.memory_space<vmem>>, vector<64x64xf32>
    %cst_79 = arith.constant dense<0.000000e+00> : vector<4x64xf32>
    %144 = tpu.matmul %91, %143, %cst_79 {dimension_numbers = #tpu.dot_dimension_numbers<[1], [0], [0], [1], [0, 0, 1, 1], [], []>} : vector<4x64xf32>, vector<64x64xf32>, vector<4x64xf32> -> vector<4x64xf32>
    %145 = vector.extract_strided_slice %92 {offsets = [24, 0], sizes = [4, 1], strides = [1, 1]} : vector<36x1xf32> to vector<4x1xf32>
    %146 = vector.broadcast %145 : vector<4x1xf32> to vector<4x64xf32>
    %147 = arith.mulf %144, %146 : vector<4x64xf32>
    %cst_80 = arith.constant dense<0.000000e+00> : vector<64xf32>
    %148 = vector.multi_reduction <add>, %147, %cst_80 [0] : vector<4x64xf32> to vector<64xf32>
    %149 = vector.shape_cast %148 : vector<64xf32> to vector<1x64xf32>
    %150 = arith.addf %142, %149 : vector<1x64xf32>
    %c448 = arith.constant 448 : index
    %c0_81 = arith.constant 0 : index
    %151 = vector.load %arg6[%c448, %c0_81] : memref<896x64xf32, #tpu.memory_space<vmem>>, vector<64x64xf32>
    %cst_82 = arith.constant dense<0.000000e+00> : vector<4x64xf32>
    %152 = tpu.matmul %91, %151, %cst_82 {dimension_numbers = #tpu.dot_dimension_numbers<[1], [0], [0], [1], [0, 0, 1, 1], [], []>} : vector<4x64xf32>, vector<64x64xf32>, vector<4x64xf32> -> vector<4x64xf32>
    %153 = vector.extract_strided_slice %92 {offsets = [28, 0], sizes = [4, 1], strides = [1, 1]} : vector<36x1xf32> to vector<4x1xf32>
    %154 = vector.broadcast %153 : vector<4x1xf32> to vector<4x64xf32>
    %155 = arith.mulf %152, %154 : vector<4x64xf32>
    %cst_83 = arith.constant dense<0.000000e+00> : vector<64xf32>
    %156 = vector.multi_reduction <add>, %155, %cst_83 [0] : vector<4x64xf32> to vector<64xf32>
    %157 = vector.shape_cast %156 : vector<64xf32> to vector<1x64xf32>
    %158 = arith.addf %150, %157 : vector<1x64xf32>
    %c512_84 = arith.constant 512 : index
    %c0_85 = arith.constant 0 : index
    %159 = vector.load %arg6[%c512_84, %c0_85] : memref<896x64xf32, #tpu.memory_space<vmem>>, vector<64x64xf32>
    %cst_86 = arith.constant dense<0.000000e+00> : vector<4x64xf32>
    %160 = tpu.matmul %91, %159, %cst_86 {dimension_numbers = #tpu.dot_dimension_numbers<[1], [0], [0], [1], [0, 0, 1, 1], [], []>} : vector<4x64xf32>, vector<64x64xf32>, vector<4x64xf32> -> vector<4x64xf32>
    %161 = vector.extract_strided_slice %92 {offsets = [32, 0], sizes = [4, 1], strides = [1, 1]} : vector<36x1xf32> to vector<4x1xf32>
    %162 = vector.broadcast %161 : vector<4x1xf32> to vector<4x64xf32>
    %163 = arith.mulf %160, %162 : vector<4x64xf32>
    %cst_87 = arith.constant dense<0.000000e+00> : vector<64xf32>
    %164 = vector.multi_reduction <add>, %163, %cst_87 [0] : vector<4x64xf32> to vector<64xf32>
    %165 = vector.shape_cast %164 : vector<64xf32> to vector<1x64xf32>
    %166 = arith.addf %158, %165 : vector<1x64xf32>
    %167 = vector.shape_cast %166 : vector<1x64xf32> to vector<1x64xf32>
    %168 = vector.broadcast %167 : vector<1x64xf32> to vector<8x64xf32>
    %169 = arith.mulf %168, %89 : vector<8x64xf32>
    %c2304 = arith.constant 2304 : index
    %c0_88 = arith.constant 0 : index
    %170 = vector.load %arg5[%c2304, %c0_88] : memref<2368x256xf32, #tpu.memory_space<vmem>>, vector<64x256xf32>
    %cst_89 = arith.constant dense<0.000000e+00> : vector<8x256xf32>
    %171 = tpu.matmul %169, %170, %cst_89 {dimension_numbers = #tpu.dot_dimension_numbers<[1], [0], [0], [1], [0, 0, 1, 1], [], []>} : vector<8x64xf32>, vector<64x256xf32>, vector<8x256xf32> -> vector<8x256xf32>
    %172 = vector.extract_strided_slice %171 {offsets = [0, 0], sizes = [1, 256], strides = [1, 1]} : vector<8x256xf32> to vector<1x256xf32>
    %c72 = arith.constant 72 : index
    %c0_90 = arith.constant 0 : index
    %173 = vector.load %arg4[%c72, %c0_90] : memref<248x128xf32, #tpu.memory_space<vmem>>, vector<72x4xf32>
    %c144 = arith.constant 144 : index
    %c0_91 = arith.constant 0 : index
    %174 = vector.load %arg4[%c144, %c0_91] : memref<248x128xf32, #tpu.memory_space<vmem>>, vector<8x1xf32>
    %175 = vector.extract_strided_slice %173 {offsets = [0, 0], sizes = [8, 4], strides = [1, 1]} : vector<72x4xf32> to vector<8x4xf32>
    %cst_92 = arith.constant dense<0.000000e+00> : vector<8x256xf32>
    %176 = tpu.matmul %175, %3, %cst_92 {dimension_numbers = #tpu.dot_dimension_numbers<[1], [0], [0], [1], [0, 0, 1, 1], [], []>} : vector<8x4xf32>, vector<4x256xf32>, vector<8x256xf32> -> vector<8x256xf32>
    %c0_93 = arith.constant 0 : index
    %c0_94 = arith.constant 0 : index
    %177 = vector.load %arg5[%c0_93, %c0_94] : memref<2368x256xf32, #tpu.memory_space<vmem>>, vector<256x256xf32>
    %cst_95 = arith.constant dense<0.000000e+00> : vector<8x256xf32>
    %178 = tpu.matmul %176, %177, %cst_95 {dimension_numbers = #tpu.dot_dimension_numbers<[1], [0], [0], [1], [0, 0, 1, 1], [], []>} : vector<8x256xf32>, vector<256x256xf32>, vector<8x256xf32> -> vector<8x256xf32>
    %179 = vector.broadcast %174 : vector<8x1xf32> to vector<8x256xf32>
    %180 = arith.addf %179, %178 : vector<8x256xf32>
    %181 = vector.extract_strided_slice %173 {offsets = [8, 0], sizes = [8, 4], strides = [1, 1]} : vector<72x4xf32> to vector<8x4xf32>
    %cst_96 = arith.constant dense<0.000000e+00> : vector<8x256xf32>
    %182 = tpu.matmul %181, %3, %cst_96 {dimension_numbers = #tpu.dot_dimension_numbers<[1], [0], [0], [1], [0, 0, 1, 1], [], []>} : vector<8x4xf32>, vector<4x256xf32>, vector<8x256xf32> -> vector<8x256xf32>
    %c256_97 = arith.constant 256 : index
    %c0_98 = arith.constant 0 : index
    %183 = vector.load %arg5[%c256_97, %c0_98] : memref<2368x256xf32, #tpu.memory_space<vmem>>, vector<256x256xf32>
    %cst_99 = arith.constant dense<0.000000e+00> : vector<8x256xf32>
    %184 = tpu.matmul %182, %183, %cst_99 {dimension_numbers = #tpu.dot_dimension_numbers<[1], [0], [0], [1], [0, 0, 1, 1], [], []>} : vector<8x256xf32>, vector<256x256xf32>, vector<8x256xf32> -> vector<8x256xf32>
    %185 = arith.addf %180, %184 : vector<8x256xf32>
    %186 = vector.extract_strided_slice %173 {offsets = [16, 0], sizes = [8, 4], strides = [1, 1]} : vector<72x4xf32> to vector<8x4xf32>
    %cst_100 = arith.constant dense<0.000000e+00> : vector<8x256xf32>
    %187 = tpu.matmul %186, %3, %cst_100 {dimension_numbers = #tpu.dot_dimension_numbers<[1], [0], [0], [1], [0, 0, 1, 1], [], []>} : vector<8x4xf32>, vector<4x256xf32>, vector<8x256xf32> -> vector<8x256xf32>
    %c512_101 = arith.constant 512 : index
    %c0_102 = arith.constant 0 : index
    %188 = vector.load %arg5[%c512_101, %c0_102] : memref<2368x256xf32, #tpu.memory_space<vmem>>, vector<256x256xf32>
    %cst_103 = arith.constant dense<0.000000e+00> : vector<8x256xf32>
    %189 = tpu.matmul %187, %188, %cst_103 {dimension_numbers = #tpu.dot_dimension_numbers<[1], [0], [0], [1], [0, 0, 1, 1], [], []>} : vector<8x256xf32>, vector<256x256xf32>, vector<8x256xf32> -> vector<8x256xf32>
    %190 = arith.addf %185, %189 : vector<8x256xf32>
    %191 = vector.extract_strided_slice %173 {offsets = [24, 0], sizes = [8, 4], strides = [1, 1]} : vector<72x4xf32> to vector<8x4xf32>
    %cst_104 = arith.constant dense<0.000000e+00> : vector<8x256xf32>
    %192 = tpu.matmul %191, %3, %cst_104 {dimension_numbers = #tpu.dot_dimension_numbers<[1], [0], [0], [1], [0, 0, 1, 1], [], []>} : vector<8x4xf32>, vector<4x256xf32>, vector<8x256xf32> -> vector<8x256xf32>
    %c768_105 = arith.constant 768 : index
    %c0_106 = arith.constant 0 : index
    %193 = vector.load %arg5[%c768_105, %c0_106] : memref<2368x256xf32, #tpu.memory_space<vmem>>, vector<256x256xf32>
    %cst_107 = arith.constant dense<0.000000e+00> : vector<8x256xf32>
    %194 = tpu.matmul %192, %193, %cst_107 {dimension_numbers = #tpu.dot_dimension_numbers<[1], [0], [0], [1], [0, 0, 1, 1], [], []>} : vector<8x256xf32>, vector<256x256xf32>, vector<8x256xf32> -> vector<8x256xf32>
    %195 = arith.addf %190, %194 : vector<8x256xf32>
    %196 = vector.extract_strided_slice %173 {offsets = [32, 0], sizes = [8, 4], strides = [1, 1]} : vector<72x4xf32> to vector<8x4xf32>
    %cst_108 = arith.constant dense<0.000000e+00> : vector<8x256xf32>
    %197 = tpu.matmul %196, %3, %cst_108 {dimension_numbers = #tpu.dot_dimension_numbers<[1], [0], [0], [1], [0, 0, 1, 1], [], []>} : vector<8x4xf32>, vector<4x256xf32>, vector<8x256xf32> -> vector<8x256xf32>
    %c1024_109 = arith.constant 1024 : index
    %c0_110 = arith.constant 0 : index
    %198 = vector.load %arg5[%c1024_109, %c0_110] : memref<2368x256xf32, #tpu.memory_space<vmem>>, vector<256x256xf32>
    %cst_111 = arith.constant dense<0.000000e+00> : vector<8x256xf32>
    %199 = tpu.matmul %197, %198, %cst_111 {dimension_numbers = #tpu.dot_dimension_numbers<[1], [0], [0], [1], [0, 0, 1, 1], [], []>} : vector<8x256xf32>, vector<256x256xf32>, vector<8x256xf32> -> vector<8x256xf32>
    %200 = arith.addf %195, %199 : vector<8x256xf32>
    %201 = vector.extract_strided_slice %173 {offsets = [40, 0], sizes = [8, 4], strides = [1, 1]} : vector<72x4xf32> to vector<8x4xf32>
    %cst_112 = arith.constant dense<0.000000e+00> : vector<8x256xf32>
    %202 = tpu.matmul %201, %3, %cst_112 {dimension_numbers = #tpu.dot_dimension_numbers<[1], [0], [0], [1], [0, 0, 1, 1], [], []>} : vector<8x4xf32>, vector<4x256xf32>, vector<8x256xf32> -> vector<8x256xf32>
    %c1280_113 = arith.constant 1280 : index
    %c0_114 = arith.constant 0 : index
    %203 = vector.load %arg5[%c1280_113, %c0_114] : memref<2368x256xf32, #tpu.memory_space<vmem>>, vector<256x256xf32>
    %cst_115 = arith.constant dense<0.000000e+00> : vector<8x256xf32>
    %204 = tpu.matmul %202, %203, %cst_115 {dimension_numbers = #tpu.dot_dimension_numbers<[1], [0], [0], [1], [0, 0, 1, 1], [], []>} : vector<8x256xf32>, vector<256x256xf32>, vector<8x256xf32> -> vector<8x256xf32>
    %205 = arith.addf %200, %204 : vector<8x256xf32>
    %206 = vector.extract_strided_slice %173 {offsets = [48, 0], sizes = [8, 4], strides = [1, 1]} : vector<72x4xf32> to vector<8x4xf32>
    %cst_116 = arith.constant dense<0.000000e+00> : vector<8x256xf32>
    %207 = tpu.matmul %206, %3, %cst_116 {dimension_numbers = #tpu.dot_dimension_numbers<[1], [0], [0], [1], [0, 0, 1, 1], [], []>} : vector<8x4xf32>, vector<4x256xf32>, vector<8x256xf32> -> vector<8x256xf32>
    %c1536_117 = arith.constant 1536 : index
    %c0_118 = arith.constant 0 : index
    %208 = vector.load %arg5[%c1536_117, %c0_118] : memref<2368x256xf32, #tpu.memory_space<vmem>>, vector<256x256xf32>
    %cst_119 = arith.constant dense<0.000000e+00> : vector<8x256xf32>
    %209 = tpu.matmul %207, %208, %cst_119 {dimension_numbers = #tpu.dot_dimension_numbers<[1], [0], [0], [1], [0, 0, 1, 1], [], []>} : vector<8x256xf32>, vector<256x256xf32>, vector<8x256xf32> -> vector<8x256xf32>
    %210 = arith.addf %205, %209 : vector<8x256xf32>
    %211 = vector.extract_strided_slice %173 {offsets = [56, 0], sizes = [8, 4], strides = [1, 1]} : vector<72x4xf32> to vector<8x4xf32>
    %cst_120 = arith.constant dense<0.000000e+00> : vector<8x256xf32>
    %212 = tpu.matmul %211, %3, %cst_120 {dimension_numbers = #tpu.dot_dimension_numbers<[1], [0], [0], [1], [0, 0, 1, 1], [], []>} : vector<8x4xf32>, vector<4x256xf32>, vector<8x256xf32> -> vector<8x256xf32>
    %c1792_121 = arith.constant 1792 : index
    %c0_122 = arith.constant 0 : index
    %213 = vector.load %arg5[%c1792_121, %c0_122] : memref<2368x256xf32, #tpu.memory_space<vmem>>, vector<256x256xf32>
    %cst_123 = arith.constant dense<0.000000e+00> : vector<8x256xf32>
    %214 = tpu.matmul %212, %213, %cst_123 {dimension_numbers = #tpu.dot_dimension_numbers<[1], [0], [0], [1], [0, 0, 1, 1], [], []>} : vector<8x256xf32>, vector<256x256xf32>, vector<8x256xf32> -> vector<8x256xf32>
    %215 = arith.addf %210, %214 : vector<8x256xf32>
    %216 = vector.extract_strided_slice %173 {offsets = [64, 0], sizes = [8, 4], strides = [1, 1]} : vector<72x4xf32> to vector<8x4xf32>
    %cst_124 = arith.constant dense<0.000000e+00> : vector<8x256xf32>
    %217 = tpu.matmul %216, %3, %cst_124 {dimension_numbers = #tpu.dot_dimension_numbers<[1], [0], [0], [1], [0, 0, 1, 1], [], []>} : vector<8x4xf32>, vector<4x256xf32>, vector<8x256xf32> -> vector<8x256xf32>
    %c2048_125 = arith.constant 2048 : index
    %c0_126 = arith.constant 0 : index
    %218 = vector.load %arg5[%c2048_125, %c0_126] : memref<2368x256xf32, #tpu.memory_space<vmem>>, vector<256x256xf32>
    %cst_127 = arith.constant dense<0.000000e+00> : vector<8x256xf32>
    %219 = tpu.matmul %217, %218, %cst_127 {dimension_numbers = #tpu.dot_dimension_numbers<[1], [0], [0], [1], [0, 0, 1, 1], [], []>} : vector<8x256xf32>, vector<256x256xf32>, vector<8x256xf32> -> vector<8x256xf32>
    %220 = arith.addf %215, %219 : vector<8x256xf32>
    %221 = vector.broadcast %172 : vector<1x256xf32> to vector<8x256xf32>
    %222 = arith.mulf %220, %221 : vector<8x256xf32>
    %c640_128 = arith.constant 640 : index
    %c0_129 = arith.constant 0 : index
    %223 = vector.load %arg6[%c640_128, %c0_129] : memref<896x64xf32, #tpu.memory_space<vmem>>, vector<256x64xf32>
    %cst_130 = arith.constant dense<0.000000e+00> : vector<8x64xf32>
    %224 = tpu.matmul %222, %223, %cst_130 {dimension_numbers = #tpu.dot_dimension_numbers<[1], [0], [0], [1], [0, 0, 1, 1], [], []>} : vector<8x256xf32>, vector<256x64xf32>, vector<8x64xf32> -> vector<8x64xf32>
    %c0_131 = arith.constant 0 : index
    %c0_132 = arith.constant 0 : index
    %c0_133 = arith.constant 0 : index
    %225 = vector.load %arg8[%c0_131, %c0_132, %c0_133] : memref<1x8x64xf32, #tpu.memory_space<vmem>>, vector<1x8x64xf32>
    %226 = vector.shape_cast %225 : vector<1x8x64xf32> to vector<8x64xf32>
    %227 = vector.shape_cast %224 : vector<8x64xf32> to vector<1x8x64xf32>
    tpu.vector_store %arg8[%c0_131, %c0_132, %c0_133], %227 {strides = array<i32>} : memref<1x8x64xf32, #tpu.memory_space<vmem>>, vector<1x8x64xf32>,
    %c152 = arith.constant 152 : index
    %c0_134 = arith.constant 0 : index
    %228 = vector.load %arg4[%c152, %c0_134] : memref<248x128xf32, #tpu.memory_space<vmem>>, vector<36x8xf32>
    %c192_135 = arith.constant 192 : index
    %c0_136 = arith.constant 0 : index
    %229 = vector.load %arg4[%c192_135, %c0_136] : memref<248x128xf32, #tpu.memory_space<vmem>>, vector<4x1xf32>
    %230 = vector.extract_strided_slice %228 {offsets = [0, 0], sizes = [4, 8], strides = [1, 1]} : vector<36x8xf32> to vector<4x8xf32>
    %cst_137 = arith.constant dense<0.000000e+00> : vector<4x256xf32>
    %231 = tpu.matmul %230, %222, %cst_137 {dimension_numbers = #tpu.dot_dimension_numbers<[1], [0], [0], [1], [0, 0, 1, 1], [], []>} : vector<4x8xf32>, vector<8x256xf32>, vector<4x256xf32> -> vector<4x256xf32>
    %c0_138 = arith.constant 0 : index
    %c0_139 = arith.constant 0 : index
    %232 = vector.load %arg5[%c0_138, %c0_139] : memref<2368x256xf32, #tpu.memory_space<vmem>>, vector<256x256xf32>
    %cst_140 = arith.constant dense<0.000000e+00> : vector<4x256xf32>
    %233 = tpu.matmul %231, %232, %cst_140 {dimension_numbers = #tpu.dot_dimension_numbers<[1], [0], [0], [1], [0, 0, 1, 1], [], []>} : vector<4x256xf32>, vector<256x256xf32>, vector<4x256xf32> -> vector<4x256xf32>
    %234 = vector.broadcast %229 : vector<4x1xf32> to vector<4x256xf32>
    %235 = arith.addf %234, %233 : vector<4x256xf32>
    %236 = vector.extract_strided_slice %228 {offsets = [4, 0], sizes = [4, 8], strides = [1, 1]} : vector<36x8xf32> to vector<4x8xf32>
    %cst_141 = arith.constant dense<0.000000e+00> : vector<4x256xf32>
    %237 = tpu.matmul %236, %222, %cst_141 {dimension_numbers = #tpu.dot_dimension_numbers<[1], [0], [0], [1], [0, 0, 1, 1], [], []>} : vector<4x8xf32>, vector<8x256xf32>, vector<4x256xf32> -> vector<4x256xf32>
    %c256_142 = arith.constant 256 : index
    %c0_143 = arith.constant 0 : index
    %238 = vector.load %arg5[%c256_142, %c0_143] : memref<2368x256xf32, #tpu.memory_space<vmem>>, vector<256x256xf32>
    %cst_144 = arith.constant dense<0.000000e+00> : vector<4x256xf32>
    %239 = tpu.matmul %237, %238, %cst_144 {dimension_numbers = #tpu.dot_dimension_numbers<[1], [0], [0], [1], [0, 0, 1, 1], [], []>} : vector<4x256xf32>, vector<256x256xf32>, vector<4x256xf32> -> vector<4x256xf32>
    %240 = arith.addf %235, %239 : vector<4x256xf32>
    %241 = vector.extract_strided_slice %228 {offsets = [8, 0], sizes = [4, 8], strides = [1, 1]} : vector<36x8xf32> to vector<4x8xf32>
    %cst_145 = arith.constant dense<0.000000e+00> : vector<4x256xf32>
    %242 = tpu.matmul %241, %222, %cst_145 {dimension_numbers = #tpu.dot_dimension_numbers<[1], [0], [0], [1], [0, 0, 1, 1], [], []>} : vector<4x8xf32>, vector<8x256xf32>, vector<4x256xf32> -> vector<4x256xf32>
    %c512_146 = arith.constant 512 : index
    %c0_147 = arith.constant 0 : index
    %243 = vector.load %arg5[%c512_146, %c0_147] : memref<2368x256xf32, #tpu.memory_space<vmem>>, vector<256x256xf32>
    %cst_148 = arith.constant dense<0.000000e+00> : vector<4x256xf32>
    %244 = tpu.matmul %242, %243, %cst_148 {dimension_numbers = #tpu.dot_dimension_numbers<[1], [0], [0], [1], [0, 0, 1, 1], [], []>} : vector<4x256xf32>, vector<256x256xf32>, vector<4x256xf32> -> vector<4x256xf32>
    %245 = arith.addf %240, %244 : vector<4x256xf32>
    %246 = vector.extract_strided_slice %228 {offsets = [12, 0], sizes = [4, 8], strides = [1, 1]} : vector<36x8xf32> to vector<4x8xf32>
    %cst_149 = arith.constant dense<0.000000e+00> : vector<4x256xf32>
    %247 = tpu.matmul %246, %222, %cst_149 {dimension_numbers = #tpu.dot_dimension_numbers<[1], [0], [0], [1], [0, 0, 1, 1], [], []>} : vector<4x8xf32>, vector<8x256xf32>, vector<4x256xf32> -> vector<4x256xf32>
    %c768_150 = arith.constant 768 : index
    %c0_151 = arith.constant 0 : index
    %248 = vector.load %arg5[%c768_150, %c0_151] : memref<2368x256xf32, #tpu.memory_space<vmem>>, vector<256x256xf32>
    %cst_152 = arith.constant dense<0.000000e+00> : vector<4x256xf32>
    %249 = tpu.matmul %247, %248, %cst_152 {dimension_numbers = #tpu.dot_dimension_numbers<[1], [0], [0], [1], [0, 0, 1, 1], [], []>} : vector<4x256xf32>, vector<256x256xf32>, vector<4x256xf32> -> vector<4x256xf32>
    %250 = arith.addf %245, %249 : vector<4x256xf32>
    %251 = vector.extract_strided_slice %228 {offsets = [16, 0], sizes = [4, 8], strides = [1, 1]} : vector<36x8xf32> to vector<4x8xf32>
    %cst_153 = arith.constant dense<0.000000e+00> : vector<4x256xf32>
    %252 = tpu.matmul %251, %222, %cst_153 {dimension_numbers = #tpu.dot_dimension_numbers<[1], [0], [0], [1], [0, 0, 1, 1], [], []>} : vector<4x8xf32>, vector<8x256xf32>, vector<4x256xf32> -> vector<4x256xf32>
    %c1024_154 = arith.constant 1024 : index
    %c0_155 = arith.constant 0 : index
    %253 = vector.load %arg5[%c1024_154, %c0_155] : memref<2368x256xf32, #tpu.memory_space<vmem>>, vector<256x256xf32>
    %cst_156 = arith.constant dense<0.000000e+00> : vector<4x256xf32>
    %254 = tpu.matmul %252, %253, %cst_156 {dimension_numbers = #tpu.dot_dimension_numbers<[1], [0], [0], [1], [0, 0, 1, 1], [], []>} : vector<4x256xf32>, vector<256x256xf32>, vector<4x256xf32> -> vector<4x256xf32>
    %255 = arith.addf %250, %254 : vector<4x256xf32>
    %256 = vector.extract_strided_slice %228 {offsets = [20, 0], sizes = [4, 8], strides = [1, 1]} : vector<36x8xf32> to vector<4x8xf32>
    %cst_157 = arith.constant dense<0.000000e+00> : vector<4x256xf32>
    %257 = tpu.matmul %256, %222, %cst_157 {dimension_numbers = #tpu.dot_dimension_numbers<[1], [0], [0], [1], [0, 0, 1, 1], [], []>} : vector<4x8xf32>, vector<8x256xf32>, vector<4x256xf32> -> vector<4x256xf32>
    %c1280_158 = arith.constant 1280 : index
    %c0_159 = arith.constant 0 : index
    %258 = vector.load %arg5[%c1280_158, %c0_159] : memref<2368x256xf32, #tpu.memory_space<vmem>>, vector<256x256xf32>
    %cst_160 = arith.constant dense<0.000000e+00> : vector<4x256xf32>
    %259 = tpu.matmul %257, %258, %cst_160 {dimension_numbers = #tpu.dot_dimension_numbers<[1], [0], [0], [1], [0, 0, 1, 1], [], []>} : vector<4x256xf32>, vector<256x256xf32>, vector<4x256xf32> -> vector<4x256xf32>
    %260 = arith.addf %255, %259 : vector<4x256xf32>
    %261 = vector.extract_strided_slice %228 {offsets = [24, 0], sizes = [4, 8], strides = [1, 1]} : vector<36x8xf32> to vector<4x8xf32>
    %cst_161 = arith.constant dense<0.000000e+00> : vector<4x256xf32>
    %262 = tpu.matmul %261, %222, %cst_161 {dimension_numbers = #tpu.dot_dimension_numbers<[1], [0], [0], [1], [0, 0, 1, 1], [], []>} : vector<4x8xf32>, vector<8x256xf32>, vector<4x256xf32> -> vector<4x256xf32>
    %c1536_162 = arith.constant 1536 : index
    %c0_163 = arith.constant 0 : index
    %263 = vector.load %arg5[%c1536_162, %c0_163] : memref<2368x256xf32, #tpu.memory_space<vmem>>, vector<256x256xf32>
    %cst_164 = arith.constant dense<0.000000e+00> : vector<4x256xf32>
    %264 = tpu.matmul %262, %263, %cst_164 {dimension_numbers = #tpu.dot_dimension_numbers<[1], [0], [0], [1], [0, 0, 1, 1], [], []>} : vector<4x256xf32>, vector<256x256xf32>, vector<4x256xf32> -> vector<4x256xf32>
    %265 = arith.addf %260, %264 : vector<4x256xf32>
    %266 = vector.extract_strided_slice %228 {offsets = [28, 0], sizes = [4, 8], strides = [1, 1]} : vector<36x8xf32> to vector<4x8xf32>
    %cst_165 = arith.constant dense<0.000000e+00> : vector<4x256xf32>
    %267 = tpu.matmul %266, %222, %cst_165 {dimension_numbers = #tpu.dot_dimension_numbers<[1], [0], [0], [1], [0, 0, 1, 1], [], []>} : vector<4x8xf32>, vector<8x256xf32>, vector<4x256xf32> -> vector<4x256xf32>
    %c1792_166 = arith.constant 1792 : index
    %c0_167 = arith.constant 0 : index
    %268 = vector.load %arg5[%c1792_166, %c0_167] : memref<2368x256xf32, #tpu.memory_space<vmem>>, vector<256x256xf32>
    %cst_168 = arith.constant dense<0.000000e+00> : vector<4x256xf32>
    %269 = tpu.matmul %267, %268, %cst_168 {dimension_numbers = #tpu.dot_dimension_numbers<[1], [0], [0], [1], [0, 0, 1, 1], [], []>} : vector<4x256xf32>, vector<256x256xf32>, vector<4x256xf32> -> vector<4x256xf32>
    %270 = arith.addf %265, %269 : vector<4x256xf32>
    %271 = vector.extract_strided_slice %228 {offsets = [32, 0], sizes = [4, 8], strides = [1, 1]} : vector<36x8xf32> to vector<4x8xf32>
    %cst_169 = arith.constant dense<0.000000e+00> : vector<4x256xf32>
    %272 = tpu.matmul %271, %222, %cst_169 {dimension_numbers = #tpu.dot_dimension_numbers<[1], [0], [0], [1], [0, 0, 1, 1], [], []>} : vector<4x8xf32>, vector<8x256xf32>, vector<4x256xf32> -> vector<4x256xf32>
    %c2048_170 = arith.constant 2048 : index
    %c0_171 = arith.constant 0 : index
    %273 = vector.load %arg5[%c2048_170, %c0_171] : memref<2368x256xf32, #tpu.memory_space<vmem>>, vector<256x256xf32>
    %cst_172 = arith.constant dense<0.000000e+00> : vector<4x256xf32>
    %274 = tpu.matmul %272, %273, %cst_172 {dimension_numbers = #tpu.dot_dimension_numbers<[1], [0], [0], [1], [0, 0, 1, 1], [], []>} : vector<4x256xf32>, vector<256x256xf32>, vector<4x256xf32> -> vector<4x256xf32>
    %275 = arith.addf %270, %274 : vector<4x256xf32>
    %276 = arith.mulf %275, %78 : vector<4x256xf32>
    %c0_173 = arith.constant 0 : index
    %c0_174 = arith.constant 0 : index
    %c0_175 = arith.constant 0 : index
    %277 = vector.load %arg7[%c0_173, %c0_174, %c0_175] : memref<1x4x256xf32, #tpu.memory_space<vmem>>, vector<1x4x256xf32>
    %278 = vector.shape_cast %277 : vector<1x4x256xf32> to vector<4x256xf32>
    %279 = vector.shape_cast %276 : vector<4x256xf32> to vector<1x4x256xf32>
    tpu.vector_store %arg7[%c0_173, %c0_174, %c0_175], %279 {strides = array<i32>} : memref<1x4x256xf32, #tpu.memory_space<vmem>>, vector<1x4x256xf32>,
    return
  }
  func.func @transform_0(%arg0: i32) -> (i32, i32, i32) {
    %c0_i32 = arith.constant 0 : i32
    %c0_i32_0 = arith.constant 0 : i32
    %c0_i32_1 = arith.constant 0 : i32
    return %arg0, %c0_i32, %c0_i32_0 : i32, i32, i32
  }
  func.func @transform_1(%arg0: i32) -> (i32, i32, i32) {
    %c0_i32 = arith.constant 0 : i32
    %c0_i32_0 = arith.constant 0 : i32
    %c0_i32_1 = arith.constant 0 : i32
    return %arg0, %c0_i32, %c0_i32_0 : i32, i32, i32
  }
  func.func @transform_2(%arg0: i32) -> (i32, i32, i32) {
    %c0_i32 = arith.constant 0 : i32
    %c0_i32_0 = arith.constant 0 : i32
    %c0_i32_1 = arith.constant 0 : i32
    return %arg0, %c0_i32, %c0_i32_0 : i32, i32, i32
  }
  func.func @transform_3(%arg0: i32) -> (i32, i32) {
    %c0_i32 = arith.constant 0 : i32
    %c0_i32_0 = arith.constant 0 : i32
    %c0_i32_1 = arith.constant 0 : i32
    return %c0_i32, %c0_i32_0 : i32, i32
  }
  func.func @transform_4(%arg0: i32) -> (i32, i32) {
    %c0_i32 = arith.constant 0 : i32
    %c0_i32_0 = arith.constant 0 : i32
    %c0_i32_1 = arith.constant 0 : i32
    return %c0_i32, %c0_i32_0 : i32, i32
  }
  func.func @transform_5(%arg0: i32) -> (i32, i32) {
    %c0_i32 = arith.constant 0 : i32
    %c0_i32_0 = arith.constant 0 : i32
    %c0_i32_1 = arith.constant 0 : i32
    return %c0_i32, %c0_i32_0 : i32, i32
  }
  func.func @transform_6(%arg0: i32) -> (i32, i32, i32) {
    %c0_i32 = arith.constant 0 : i32
    %c0_i32_0 = arith.constant 0 : i32
    %c0_i32_1 = arith.constant 0 : i32
    return %arg0, %c0_i32, %c0_i32_0 : i32, i32, i32
  }
  func.func @transform_7(%arg0: i32) -> (i32, i32, i32) {
    %c0_i32 = arith.constant 0 : i32
    %c0_i32_0 = arith.constant 0 : i32
    %c0_i32_1 = arith.constant 0 : i32
    return %arg0, %c0_i32, %c0_i32_0 : i32, i32, i32
  }
}

</mosaic_0001>

<llo_original>
// kernel: node_forward.1
$region0: #{node_forward.1}
  #allocation0 [shape = 'u32[]', space=smem, size = 0x4, offset = 0x4, fixed_abs, tag = 'smem constant byte address 0x4 - core index']
  #allocation1 [shape = 'u32[72,128]{1,0:T(1,128)}', space=vmem, size = 0x9000, scoped, tag = 'internal scratch']
  %s0 = inlined_call_operand.vmem [shape: f32[2,6,256], index: 0, kind: input, shape index: {}]
  %s1 = inlined_call_operand.vmem [shape: f32[2,4,256], index: 1, kind: input, shape index: {}]
  %s2 = inlined_call_operand.vmem [shape: f32[2,8,64], index: 2, kind: input, shape index: {}]
  %s3 = inlined_call_operand.vmem [shape: f32[248,128], index: 3, kind: input, shape index: {}]
  %s4 = inlined_call_operand.vmem [shape: f32[2368,256], index: 4, kind: input, shape index: {}]
  %s5 = inlined_call_operand.vmem [shape: f32[896,64], index: 5, kind: input, shape index: {}]
  %s6 = inlined_call_operand.vmem [shape: f32[2,4,256], index: 6, kind: output, shape index: {0}]
  %s7 = inlined_call_operand.vmem [shape: f32[2,8,64], index: 7, kind: output, shape index: {1}]
  %8 = xla_tuple %s6, %s7
  %s9 = sld [smem:[#allocation0]]
  $region65: #{node_forward.1} parent=0
    _
  %s11 = ssub.s32 1, %s9
  %s12 = scalar_select 0, %s11, %s9
  loop: start=0, step=1, limit=4
  $region2: #{node_forward.1} parent=0 // loop_pre_header
    _
  $region3: #{node_forward.1} parent=0 // loop_header
    %s14 = sphi 0, %s18
    %p15 = scmp.ge.s32.totalorder %s14, 4
    %s24 = sphi 0, %s26
    %s27 = sphi 0, %s24
    %s28 = sphi 0, %s27
    %s44 = sphi 0, %s28
    %s50 = sphi 0, %s52
    %s53 = sphi 0, %s50
    %s54 = sphi 0, %s53
    %s70 = sphi 0, %s54
    %s76 = sphi 0, %s78
    %s79 = sphi 0, %s76
    %s80 = sphi 0, %s79
    %s96 = sphi 0, %s80
    %s100 = sphi 0, %s100
    %s102 = sphi 0, %s100
    %s103 = sphi 0, %s102
    %s117 = sphi 0, %s103
    %s121 = sphi 0, %s121
    %s123 = sphi 0, %s121
    %s124 = sphi 0, %s123
    %s138 = sphi 0, %s124
    %s142 = sphi 0, %s142
    %s144 = sphi 0, %s142
    %s145 = sphi 0, %s144
    %s159 = sphi 0, %s145
    %s165 = sphi 0, %s167
    %s168 = sphi 0, %s165
    %s169 = sphi 0, %s168
    %s185 = sphi 0, %s169
    %s191 = sphi 0, %s193
    %s194 = sphi 0, %s191
    %s195 = sphi 0, %s194
    %s211 = sphi 0, %s195
  $region4: #{node_forward.1} parent=0 // loop_header_branch
    %17 = sbr.rel (%p15) target = $region8
  $region5: #{node_forward.1} parent=0 // loop_body
    %s19 = ssub.s32 %s14, 1
    %s20 = ssub.s32 %s14, 2
    %s21 = sadd.s32 %s14, 1
    %s22 = ssub.s32 %s14, %s21
    %p23 = scmp.eq.s32.totalorder %s22, 0
    %s25 = sadd.s32 %s24, 1
    %s26 = scalar_select %p23, %s24, %s25
    %p29 = pneg %p23
    %p30 = scmp.eq.s32.totalorder %s14, 1
    %p31 = por %p29, %p30
    %p32 = scmp.ne.s32.totalorder %s24, %s27
    %p33 = scmp.eq.s32.totalorder %s14, 0
    %p34 = por %p32, %p33
    %p35 = scmp.ne.s32.totalorder %s24, %s27
    %p36 = scmp.eq.s32.totalorder %s19, 1
    %p37 = por %p35, %p36
    %p38 = scmp.ne.s32.totalorder %s27, %s28
    %p39 = scmp.eq.s32.totalorder %s19, 0
    %p40 = por %p38, %p39
    %p41 = scmp.ne.s32.totalorder %s27, %s28
    %p42 = scmp.eq.s32.totalorder %s20, 1
    %p43 = por %p41, %p42
    %p45 = scmp.ne.s32.totalorder %s28, %s44
    %p46 = scmp.eq.s32.totalorder %s20, 0
    %p47 = por %p45, %p46
    %s48 = ssub.s32 %s14, %s21
    %p49 = scmp.eq.s32.totalorder %s48, 0
    %s51 = sadd.s32 %s50, 1
    %s52 = scalar_select %p49, %s50, %s51
    %p55 = pneg %p49
    %p56 = scmp.eq.s32.totalorder %s14, 1
    %p57 = por %p55, %p56
    %p58 = scmp.ne.s32.totalorder %s50, %s53
    %p59 = scmp.eq.s32.totalorder %s14, 0
    %p60 = por %p58, %p59
    %p61 = scmp.ne.s32.totalorder %s50, %s53
    %p62 = scmp.eq.s32.totalorder %s19, 1
    %p63 = por %p61, %p62
    %p64 = scmp.ne.s32.totalorder %s53, %s54
    %p65 = scmp.eq.s32.totalorder %s19, 0
    %p66 = por %p64, %p65
    %p67 = scmp.ne.s32.totalorder %s53, %s54
    %p68 = scmp.eq.s32.totalorder %s20, 1
    %p69 = por %p67, %p68
    %p71 = scmp.ne.s32.totalorder %s54, %s70
    %p72 = scmp.eq.s32.totalorder %s20, 0
    %p73 = por %p71, %p72
    %s74 = ssub.s32 %s14, %s21
    %p75 = scmp.eq.s32.totalorder %s74, 0
    %s77 = sadd.s32 %s76, 1
    %s78 = scalar_select %p75, %s76, %s77
    %p81 = pneg %p75
    %p82 = scmp.eq.s32.totalorder %s14, 1
    %p83 = por %p81, %p82
    %p84 = scmp.ne.s32.totalorder %s76, %s79
    %p85 = scmp.eq.s32.totalorder %s14, 0
    %p86 = por %p84, %p85
    %p87 = scmp.ne.s32.totalorder %s76, %s79
    %p88 = scmp.eq.s32.totalorder %s19, 1
    %p89 = por %p87, %p88
    %p90 = scmp.ne.s32.totalorder %s79, %s80
    %p91 = scmp.eq.s32.totalorder %s19, 0
    %p92 = por %p90, %p91
    %p93 = scmp.ne.s32.totalorder %s79, %s80
    %p94 = scmp.eq.s32.totalorder %s20, 1
    %p95 = por %p93, %p94
    %p97 = scmp.ne.s32.totalorder %s80, %s96
    %p98 = scmp.eq.s32.totalorder %s20, 0
    %p99 = por %p97, %p98
    %s101 = sadd.s32 %s100, 1
    %p104 = scmp.eq.s32.totalorder %s14, 1
    %p105 = scmp.ne.s32.totalorder %s100, %s102
    %p106 = scmp.eq.s32.totalorder %s14, 0
    %p107 = por %p105, %p106
    %p108 = scmp.ne.s32.totalorder %s100, %s102
    %p109 = scmp.eq.s32.totalorder %s19, 1
    %p110 = por %p108, %p109
    %p111 = scmp.ne.s32.totalorder %s102, %s103
    %p112 = scmp.eq.s32.totalorder %s19, 0
    %p113 = por %p111, %p112
    %p114 = scmp.ne.s32.totalorder %s102, %s103
    %p115 = scmp.eq.s32.totalorder %s20, 1
    %p116 = por %p114, %p115
    %p118 = scmp.ne.s32.totalorder %s103, %s117
    %p119 = scmp.eq.s32.totalorder %s20, 0
    %p120 = por %p118, %p119
    %s122 = sadd.s32 %s121, 1
    %p125 = scmp.eq.s32.totalorder %s14, 1
    %p126 = scmp.ne.s32.totalorder %s121, %s123
    %p127 = scmp.eq.s32.totalorder %s14, 0
    %p128 = por %p126, %p127
    %p129 = scmp.ne.s32.totalorder %s121, %s123
    %p130 = scmp.eq.s32.totalorder %s19, 1
    %p131 = por %p129, %p130
    %p132 = scmp.ne.s32.totalorder %s123, %s124
    %p133 = scmp.eq.s32.totalorder %s19, 0
    %p134 = por %p132, %p133
    %p135 = scmp.ne.s32.totalorder %s123, %s124
    %p136 = scmp.eq.s32.totalorder %s20, 1
    %p137 = por %p135, %p136
    %p139 = scmp.ne.s32.totalorder %s124, %s138
    %p140 = scmp.eq.s32.totalorder %s20, 0
    %p141 = por %p139, %p140
    %s143 = sadd.s32 %s142, 1
    %p146 = scmp.eq.s32.totalorder %s14, 1
    %p147 = scmp.ne.s32.totalorder %s142, %s144
    %p148 = scmp.eq.s32.totalorder %s14, 0
    %p149 = por %p147, %p148
    %p150 = scmp.ne.s32.totalorder %s142, %s144
    %p151 = scmp.eq.s32.totalorder %s19, 1
    %p152 = por %p150, %p151
    %p153 = scmp.ne.s32.totalorder %s144, %s145
    %p154 = scmp.eq.s32.totalorder %s19, 0
    %p155 = por %p153, %p154
    %p156 = scmp.ne.s32.totalorder %s144, %s145
    %p157 = scmp.eq.s32.totalorder %s20, 1
    %p158 = por %p156, %p157
    %p160 = scmp.ne.s32.totalorder %s145, %s159
    %p161 = scmp.eq.s32.totalorder %s20, 0
    %p162 = por %p160, %p161
    %s163 = ssub.s32 %s14, %s21
    %p164 = scmp.eq.s32.totalorder %s163, 0
    %s166 = sadd.s32 %s165, 1
    %s167 = scalar_select %p164, %s165, %s166
    %p170 = pneg %p164
    %p171 = scmp.eq.s32.totalorder %s14, 1
    %p172 = por %p170, %p171
    %p173 = scmp.ne.s32.totalorder %s165, %s168
    %p174 = scmp.eq.s32.totalorder %s14, 0
    %p175 = por %p173, %p174
    %p176 = scmp.ne.s32.totalorder %s165, %s168
    %p177 = scmp.eq.s32.totalorder %s19, 1
    %p178 = por %p176, %p177
    %p179 = scmp.ne.s32.totalorder %s168, %s169
    %p180 = scmp.eq.s32.totalorder %s19, 0
    %p181 = por %p179, %p180
    %p182 = scmp.ne.s32.totalorder %s168, %s169
    %p183 = scmp.eq.s32.totalorder %s20, 1
    %p184 = por %p182, %p183
    %p186 = scmp.ne.s32.totalorder %s169, %s185
    %p187 = scmp.eq.s32.totalorder %s20, 0
    %p188 = por %p186, %p187
    %s189 = ssub.s32 %s14, %s21
    %p190 = scmp.eq.s32.totalorder %s189, 0
    %s192 = sadd.s32 %s191, 1
    %s193 = scalar_select %p190, %s191, %s192
    %p196 = pneg %p190
    %p197 = scmp.eq.s32.totalorder %s14, 1
    %p198 = por %p196, %p197
    %p199 = scmp.ne.s32.totalorder %s191, %s194
    %p200 = scmp.eq.s32.totalorder %s14, 0
    %p201 = por %p199, %p200
    %p202 = scmp.ne.s32.totalorder %s191, %s194
    %p203 = scmp.eq.s32.totalorder %s19, 1
    %p204 = por %p202, %p203
    %p205 = scmp.ne.s32.totalorder %s194, %s195
    %p206 = scmp.eq.s32.totalorder %s19, 0
    %p207 = por %p205, %p206
    %p208 = scmp.ne.s32.totalorder %s194, %s195
    %p209 = scmp.eq.s32.totalorder %s20, 1
    %p210 = por %p208, %p209
    %p212 = scmp.ne.s32.totalorder %s195, %s211
    %p213 = scmp.eq.s32.totalorder %s20, 0
    %p214 = por %p212, %p213
    %p215 = scmp.le.s32.totalorder 1, %s14
    %p216 = scmp.lt.s32.totalorder %s14, 3
    %p217 = pnand %p215, %p216
    %p218 = pneg %p217
    // Predicated region
    $region9: #{node_forward.1} parent=5 // pred_check
      _
    $region10: #{node_forward.1} parent=5 // pred_check_branch
      %220 = sbr.rel (%p217) target = $region12
    $region11: #{node_forward.1} parent=5 // pred_region
      %s221 = ssub.s32 %s14, 1
      // Predicated region
      $region13: #{node_forward.1} parent=11 // pred_check
        %p222 = pneg %p113
      $region14: #{node_forward.1} parent=11 // pred_check_branch
        %224 = sbr.rel (%p222) target = $region16
      $region15: #{node_forward.1} parent=11 // pred_region
        _
      $region16: #{node_forward.1} parent=11 // pred_fallthru
        _
      // Predicated region
      $region17: #{node_forward.1} parent=11 // pred_check
        %p225 = pneg %p134
      $region18: #{node_forward.1} parent=11 // pred_check_branch
        %227 = sbr.rel (%p225) target = $region20
      $region19: #{node_forward.1} parent=11 // pred_region
        _
      $region20: #{node_forward.1} parent=11 // pred_fallthru
        _
      // Predicated region
      $region21: #{node_forward.1} parent=11 // pred_check
        %p228 = pneg %p155
      $region22: #{node_forward.1} parent=11 // pred_check_branch
        %230 = sbr.rel (%p228) target = $region24
      $region23: #{node_forward.1} parent=11 // pred_region
        _
      $region24: #{node_forward.1} parent=11 // pred_fallthru
        _
    $region12: #{node_forward.1} parent=5 // pred_fallthru
      _
    %p231 = scmp.lt.s32.totalorder %s14, 2
    // Predicated region
    $region25: #{node_forward.1} parent=5 // pred_check
      %p232 = pneg %p231
    $region26: #{node_forward.1} parent=5 // pred_check_branch
      %234 = sbr.rel (%p232) target = $region28
    $region27: #{node_forward.1} parent=5 // pred_region
      // Predicated region
      $region29: #{node_forward.1} parent=27 // pred_check
        %p235 = pneg %p34
      $region30: #{node_forward.1} parent=27 // pred_check_branch
        %237 = sbr.rel (%p235) target = $region32
      $region31: #{node_forward.1} parent=27 // pred_region
        %p238 = scmp.lt.s32.totalorder %s14, 1
        %s239 = scalar_select %p238, %s14, 1
        %s240 = smul.addr %s239, 2
        %s241 = smul.addr %s240, 8
        %s242 = scalar_lea.vmem %s0, %s241
      $region32: #{node_forward.1} parent=27 // pred_fallthru
        _
      // Predicated region
      $region33: #{node_forward.1} parent=27 // pred_check
        %p243 = pneg %p60
      $region34: #{node_forward.1} parent=27 // pred_check_branch
        %245 = sbr.rel (%p243) target = $region36
      $region35: #{node_forward.1} parent=27 // pred_region
        %p246 = scmp.lt.s32.totalorder %s14, 1
        %s247 = scalar_select %p246, %s14, 1
        %s248 = smul.addr %s247, 2
        %s249 = smul.addr %s248, 4
        %s250 = scalar_lea.vmem %s1, %s249
      $region36: #{node_forward.1} parent=27 // pred_fallthru
        _
      // Predicated region
      $region37: #{node_forward.1} parent=27 // pred_check
        %p251 = pneg %p86
      $region38: #{node_forward.1} parent=27 // pred_check_branch
        %253 = sbr.rel (%p251) target = $region40
      $region39: #{node_forward.1} parent=27 // pred_region
        %p254 = scmp.lt.s32.totalorder %s14, 1
        %s255 = scalar_select %p254, %s14, 1
        %s256 = smul.addr %s255, 8
        %s257 = scalar_lea.vmem %s2, %s256
      $region40: #{node_forward.1} parent=27 // pred_fallthru
        _
    $region28: #{node_forward.1} parent=5 // pred_fallthru
      _
    %p258 = scmp.le.s32.totalorder 1, %s14
    %p259 = scmp.lt.s32.totalorder %s14, 3
    %p260 = pnand %p258, %p259
    %p261 = pneg %p260
    // Predicated region
    $region41: #{node_forward.1} parent=5 // pred_check
      _
    $region42: #{node_forward.1} parent=5 // pred_check_branch
      %263 = sbr.rel (%p260) target = $region44
    $region43: #{node_forward.1} parent=5 // pred_region
      %s264 = ssub.s32 %s14, 1
      %p265 = scmp.lt.s32.totalorder %s19, 1
      %s266 = scalar_select %p265, %s19, 1
      %s267 = smul.addr %s266, 2
      %s268 = smul.addr %s267, 8
      %s269 = scalar_lea.vmem %s0, %s268
      %p270 = pneg %p40
      %p271 = pneg %p37
      %p272 = scmp.lt.s32.totalorder %s19, 1
      %s273 = scalar_select %p272, %s19, 1
      %s274 = smul.addr %s273, 2
      %s275 = smul.addr %s274, 4
      %s276 = scalar_lea.vmem %s1, %s275
      %p277 = pneg %p66
      %p278 = pneg %p63
      %p279 = scmp.lt.s32.totalorder %s19, 1
      %s280 = scalar_select %p279, %s19, 1
      %s281 = smul.addr %s280, 8
      %s282 = scalar_lea.vmem %s2, %s281
      %p283 = pneg %p92
      %p284 = pneg %p89
      %p285 = pneg %p113
      %p286 = pneg %p110
      %p287 = pneg %p134
      %p288 = pneg %p131
      %p289 = pneg %p155
      %p290 = pneg %p152
      %p291 = pneg %p181
      %p292 = pneg %p178
      %p293 = scmp.lt.s32.totalorder %s19, 1
      %s294 = scalar_select %p293, %s19, 1
      %s295 = smul.addr %s294, 2
      %s296 = smul.addr %s295, 4
      %s297 = scalar_lea.vmem %s6, %s296
      %p298 = pneg %p207
      %p299 = pneg %p204
      %p300 = scmp.lt.s32.totalorder %s19, 1
      %s301 = scalar_select %p300, %s19, 1
      %s302 = smul.addr %s301, 8
      %s303 = scalar_lea.vmem %s7, %s302
      %p304 = scmp.lt.s32.totalorder %s19, 1
      %s305 = scalar_select %p304, %s19, 1
      %s306 = smul.addr %s305, 2
      %s307 = smul.addr %s306, 8
      %s308 = scalar_lea.vmem %s0, %s307
      %p309 = scmp.lt.s32.totalorder %s19, 1
      %s310 = scalar_select %p309, %s19, 1
      %s311 = smul.addr %s310, 2
      %s312 = smul.addr %s311, 4
      %s313 = scalar_lea.vmem %s1, %s312
      %p314 = scmp.lt.s32.totalorder %s19, 1
      %s315 = scalar_select %p314, %s19, 1
      %s316 = smul.addr %s315, 8
      %s317 = scalar_lea.vmem %s2, %s316
      %p318 = scmp.lt.s32.totalorder %s19, 1
      %s319 = scalar_select %p318, %s19, 1
      %s320 = smul.addr %s319, 2
      %s321 = smul.addr %s320, 4
      %s322 = scalar_lea.vmem %s6, %s321
      %p323 = scmp.lt.s32.totalorder %s19, 1
      %s324 = scalar_select %p323, %s19, 1
      %s325 = smul.addr %s324, 8
      %s326 = scalar_lea.vmem %s7, %s325
      %v327 = vld [vmem:[%s308] sm:$0x3f]
      %v328 = vld [vmem:[%s308 + $0x8] sm:$0x3f]
      %v329 = vld [vmem:[%s313] sm:$0xff]
      %v330 = vld [vmem:[%s317] sm:$0xff]
      %vm331 = vcmask 1045504
      %v332 = vsel %vm331, %v327, 0.0
      %v333 = vsel %vm331, %v328, 0.0
      %v334 = vadd.f32 %v332, %v333
      %335 = vadd.xlane.f32.xlu0 %v334
      %v336 = vpop.xlane.xlu0 %335
      %v337 = vrcp.pop 256.0
      %v338 = vmul.f32 256.0, %v337
      %v339 = vsub.f32 1.0, %v338
      %v340 = vmul.f32 %v337, %v339
      %v341 = vadd.f32 %v337, %v340
      %vm342 = vweird.f32 %v337
      %v343 = vsel %vm342, %v337, %v341
      %v344 = vmul.f32 %v336, %v343
      %v345 = vld [vmem:[%s3] sm:$0x3]
      %vm346 = vcmask 48128
      %v348 = vsel %vm346, %v345, 0
      %v351 = vsel %vm331, %v344, 0
      %353 = vmatpush.msra.mxu0 0.0
      %354 = vmatpush.msra.mxu0 0.0
      %355 = vmatpush.msra.mxu0 0.0
      %356 = vmatpush.msra.mxu0 0.0
      %357 = vmatpush.msra.mxu0 0.0
      %358 = vmatpush.msra.mxu0 0.0
      %359 = vmatpush.msra.mxu0 0.0
      %360 = vmatpush.msra.mxu0 0.0
      %361 = vmatpush.msra.mxu0 0.0
      %362 = vmatpush.msra.mxu0 0.0
      %363 = vmatpush.msra.mxu0 0.0
      %364 = vmatpush.msra.mxu0 0.0
      %365 = vmatpush.msra.mxu0 0.0
      %366 = vmatpush.msra.mxu0 0.0
      %367 = vmatpush.msra.mxu0 0.0
      %368 = vmatpush.msra.mxu0 %v351
      %369 = vmatmul.f32.gmra.mxu0 %v348
      %v370 = vpop.f32.mrf.mxu0
      %v371 = vadd.f32 0.0, %v370
      %372 = vdwg.mxu0
      %v373 = vmax.f32 %v371, 0.0
      %v374 = vld [vmem:[%s3 + $0x8] sm:$0x3f]
      %v375 = vld [vmem:[%s3 + $0x10] sm:$0x3f]
      %vm376 = vcmask 15360
      %v378 = vsel %vm376, %v374, 0
      %vm380 = vcmask 1041408
      %v382 = vsel %vm380, %v373, 0
      %384 = vmatpush.msra.mxu0 0.0
      %385 = vmatpush.msra.mxu0 0.0
      %386 = vmatpush.msra.mxu0 0.0
      %387 = vmatpush.msra.mxu0 0.0
      %388 = vmatpush.msra.mxu0 0.0
      %389 = vmatpush.msra.mxu0 0.0
      %390 = vmatpush.msra.mxu0 0.0
      %391 = vmatpush.msra.mxu0 0.0
      %392 = vmatpush.msra.mxu0 0.0
      %393 = vmatpush.msra.mxu0 0.0
      %394 = vmatpush.msra.mxu0 0.0
      %395 = vmatpush.msra.mxu0 0.0
      %396 = vmatpush.msra.mxu0 0.0
      %397 = vmatpush.msra.mxu0 0.0
      %398 = vmatpush.msra.mxu0 0.0
      %399 = vmatpush.msra.mxu0 %v382
      %400 = vmatmul.f32.gmra.mxu0 %v378
      %v401 = vpop.f32.mrf.mxu0
      %v402 = vadd.f32 %v375, %v401
      %403 = vdwg.mxu0
      %v404 = vmul.f32 %v402, 0.029411765
      %vm405 = vcmask 5120
      %v406 = vsel %vm405, %v404, -inf
      %v407 = vrot.slane %v406, 4
      %v408 = vmax.f32 %v406, %v407
      %v409 = vrot.slane %v408, 2
      %v410 = vmax.f32 %v408, %v409
      %v411 = vrot.slane %v410, 1
      %v412 = vmax.f32 %v410, %v411
      %v413 = vsub.f32 %v404, %v412
      %v414 = vmul.f32 %v413, 1.442695
      %v415 = vpow.pop %v414
      %v416 = vsel %vm405, %v415, 0.0
      %v417 = vrot.slane %v416, 4
      %v418 = vadd.f32 %v416, %v417
      %v419 = vrot.slane %v418, 2
      %v420 = vadd.f32 %v418, %v419
      %v421 = vrot.slane %v420, 1
      %v422 = vadd.f32 %v420, %v421
      %v423 = vrcp.pop %v422
      %v424 = vmul.f32 %v422, %v423
      %v425 = vsub.f32 1.0, %v424
      %v426 = vmul.f32 %v423, %v425
      %v427 = vadd.f32 %v423, %v426
      %vm428 = vweird.f32 %v422
      %vm429 = vweird.f32 %v423
      %vm430 = vmor %vm428, %vm429
      %v431 = vsel %vm430, %v423, %v427
      %v432 = vand.u32 2147483647, %v422
      %vm433 = vcmp.eq.f32.partialorder %v432, 8.507059e+37
      %v434 = vand.u32 %v422, 2147483648
      %v435 = vor.u32 1.1754944e-38, %v434
      %v436 = vsel %vm433, %v435, %v431
      %v437 = vmul.f32 %v415, %v436
      %439 = vset.pattern.permute.xlu0 0
      %440 = vperm.xlu0 %439, %v437
      %v441 = vpop.permute.xlu0 %440
      %v443 = vmul.f32 %v327, %v441
      %v444 = vmul.f32 %v328, %v441
      %v445 = vld [vmem:[%s3 + $0x18] sm:$0xff]
      %v446 = vld [vmem:[%s3 + $0x20] sm:$0xff]
      %v447 = vld [vmem:[%s3 + $0x28] sm:$0xff]
      %v448 = vld [vmem:[%s3 + $0x30] sm:$0xff]
      %v449 = vld [vmem:[%s3 + $0x38] sm:$0xf]
      %v450 = vld [vmem:[%s3 + $0x40] sm:$0xf]
      %v452 = vsel %vm346, %v445, 0
      %v455 = vsel %vm331, %v443, 0
      %v458 = vsel %vm331, %v444, 0
      %460 = vmatpush.msra.mxu0 0.0
      %461 = vmatpush.msra.mxu0 0.0
      %462 = vmatpush.msra.mxu0 0.0
      %463 = vmatpush.msra.mxu0 0.0
      %464 = vmatpush.msra.mxu0 0.0
      %465 = vmatpush.msra.mxu0 0.0
      %466 = vmatpush.msra.mxu0 0.0
      %467 = vmatpush.msra.mxu0 0.0
      %468 = vmatpush.msra.mxu0 0.0
      %469 = vmatpush.msra.mxu0 0.0
      %470 = vmatpush.msra.mxu0 0.0
      %471 = vmatpush.msra.mxu0 0.0
      %472 = vmatpush.msra.mxu0 0.0
      %473 = vmatpush.msra.mxu0 0.0
      %474 = vmatpush.msra.mxu0 0.0
      %475 = vmatpush.msra.mxu0 %v455
      %476 = vmatmul.f32.gmra.mxu0 %v452
      %v477 = vpop.f32.mrf.mxu0
      %v478 = vadd.f32 0.0, %v477
      %479 = vdwg.mxu0
      %480 = vmatpush.msra.mxu0 0.0
      %481 = vmatpush.msra.mxu0 0.0
      %482 = vmatpush.msra.mxu0 0.0
      %483 = vmatpush.msra.mxu0 0.0
      %484 = vmatpush.msra.mxu0 0.0
      %485 = vmatpush.msra.mxu0 0.0
      %486 = vmatpush.msra.mxu0 0.0
      %487 = vmatpush.msra.mxu0 0.0
      %488 = vmatpush.msra.mxu0 0.0
      %489 = vmatpush.msra.mxu0 0.0
      %490 = vmatpush.msra.mxu0 0.0
      %491 = vmatpush.msra.mxu0 0.0
      %492 = vmatpush.msra.mxu0 0.0
      %493 = vmatpush.msra.mxu0 0.0
      %494 = vmatpush.msra.mxu0 0.0
      %495 = vmatpush.msra.mxu0 %v458
      %496 = vmatmul.f32.gmra.mxu0 %v452
      %v497 = vpop.f32.mrf.mxu0
      %v498 = vadd.f32 0.0, %v497
      %499 = vdwg.mxu0
      %v500 = vld [vmem:[%s4] sm:$0xff]
      %v501 = vld [vmem:[%s4 + $0x8] sm:$0xff]
      %v502 = vld [vmem:[%s4 + $0x10] sm:$0xff]
      %v503 = vld [vmem:[%s4 + $0x18] sm:$0xff]
      %v504 = vld [vmem:[%s4 + $0x20] sm:$0xff]
      %v505 = vld [vmem:[%s4 + $0x28] sm:$0xff]
      %v506 = vld [vmem:[%s4 + $0x30] sm:$0xff]
      %v507 = vld [vmem:[%s4 + $0x38] sm:$0xff]
      %v508 = vld [vmem:[%s4 + $0x40] sm:$0xff]
      %v509 = vld [vmem:[%s4 + $0x48] sm:$0xff]
      %v510 = vld [vmem:[%s4 + $0x50] sm:$0xff]
      %v511 = vld [vmem:[%s4 + $0x58] sm:$0xff]
      %v512 = vld [vmem:[%s4 + $0x60] sm:$0xff]
      %v513 = vld [vmem:[%s4 + $0x68] sm:$0xff]
      %v514 = vld [vmem:[%s4 + $0x70] sm:$0xff]
      %v515 = vld [vmem:[%s4 + $0x78] sm:$0xff]
      %v516 = vld [vmem:[%s4 + $0x80] sm:$0xff]
      %v517 = vld [vmem:[%s4 + $0x88] sm:$0xff]
      %v518 = vld [vmem:[%s4 + $0x90] sm:$0xff]
      %v519 = vld [vmem:[%s4 + $0x98] sm:$0xff]
      %v520 = vld [vmem:[%s4 + $0xa0] sm:$0xff]
      %v521 = vld [vmem:[%s4 + $0xa8] sm:$0xff]
      %v522 = vld [vmem:[%s4 + $0xb0] sm:$0xff]
      %v523 = vld [vmem:[%s4 + $0xb8] sm:$0xff]
      %v524 = vld [vmem:[%s4 + $0xc0] sm:$0xff]
      %v525 = vld [vmem:[%s4 + $0xc8] sm:$0xff]
      %v526 = vld [vmem:[%s4 + $0xd0] sm:$0xff]
      %v527 = vld [vmem:[%s4 + $0xd8] sm:$0xff]
      %v528 = vld [vmem:[%s4 + $0xe0] sm:$0xff]
      %v529 = vld [vmem:[%s4 + $0xe8] sm:$0xff]
      %v530 = vld [vmem:[%s4 + $0xf0] sm:$0xff]
      %v531 = vld [vmem:[%s4 + $0xf8] sm:$0xff]
      %v532 = vld [vmem:[%s4 + $0x100] sm:$0xff]
      %v533 = vld [vmem:[%s4 + $0x108] sm:$0xff]
      %v534 = vld [vmem:[%s4 + $0x110] sm:$0xff]
      %v535 = vld [vmem:[%s4 + $0x118] sm:$0xff]
      %v536 = vld [vmem:[%s4 + $0x120] sm:$0xff]
      %v537 = vld [vmem:[%s4 + $0x128] sm:$0xff]
      %v538 = vld [vmem:[%s4 + $0x130] sm:$0xff]
      %v539 = vld [vmem:[%s4 + $0x138] sm:$0xff]
      %v540 = vld [vmem:[%s4 + $0x140] sm:$0xff]
      %v541 = vld [vmem:[%s4 + $0x148] sm:$0xff]
      %v542 = vld [vmem:[%s4 + $0x150] sm:$0xff]
      %v543 = vld [vmem:[%s4 + $0x158] sm:$0xff]
      %v544 = vld [vmem:[%s4 + $0x160] sm:$0xff]
      %v545 = vld [vmem:[%s4 + $0x168] sm:$0xff]
      %v546 = vld [vmem:[%s4 + $0x170] sm:$0xff]
      %v547 = vld [vmem:[%s4 + $0x178] sm:$0xff]
      %v548 = vld [vmem:[%s4 + $0x180] sm:$0xff]
      %v549 = vld [vmem:[%s4 + $0x188] sm:$0xff]
      %v550 = vld [vmem:[%s4 + $0x190] sm:$0xff]
      %v551 = vld [vmem:[%s4 + $0x198] sm:$0xff]
      %v552 = vld [vmem:[%s4 + $0x1a0] sm:$0xff]
      %v553 = vld [vmem:[%s4 + $0x1a8] sm:$0xff]
      %v554 = vld [vmem:[%s4 + $0x1b0] sm:$0xff]
      %v555 = vld [vmem:[%s4 + $0x1b8] sm:$0xff]
      %v556 = vld [vmem:[%s4 + $0x1c0] sm:$0xff]
      %v557 = vld [vmem:[%s4 + $0x1c8] sm:$0xff]
      %v558 = vld [vmem:[%s4 + $0x1d0] sm:$0xff]
      %v559 = vld [vmem:[%s4 + $0x1d8] sm:$0xff]
      %v560 = vld [vmem:[%s4 + $0x1e0] sm:$0xff]
      %v561 = vld [vmem:[%s4 + $0x1e8] sm:$0xff]
      %v562 = vld [vmem:[%s4 + $0x1f0] sm:$0xff]
      %v563 = vld [vmem:[%s4 + $0x1f8] sm:$0xff]
      %564 = vmatpush.msra.mxu0 %v530
      %565 = vmatpush.msra.mxu0 %v528
      %566 = vmatpush.msra.mxu0 %v526
      %567 = vmatpush.msra.mxu0 %v524
      %568 = vmatpush.msra.mxu0 %v522
      %569 = vmatpush.msra.mxu0 %v520
      %570 = vmatpush.msra.mxu0 %v518
      %571 = vmatpush.msra.mxu0 %v516
      %572 = vmatpush.msra.mxu0 %v514
      %573 = vmatpush.msra.mxu0 %v512
      %574 = vmatpush.msra.mxu0 %v510
      %575 = vmatpush.msra.mxu0 %v508
      %576 = vmatpush.msra.mxu0 %v506
      %577 = vmatpush.msra.mxu0 %v504
      %578 = vmatpush.msra.mxu0 %v502
      %579 = vmatpush.msra.mxu0 %v500
      %580 = vmatmul.f32.gmra.mxu0 %v478
      %v581 = vpop.f32.mrf.mxu0
      %v582 = vadd.f32 0.0, %v581
      %583 = vdwg.mxu0
      %584 = vmatpush.msra.mxu0 %v562
      %585 = vmatpush.msra.mxu0 %v560
      %586 = vmatpush.msra.mxu0 %v558
      %587 = vmatpush.msra.mxu0 %v556
      %588 = vmatpush.msra.mxu0 %v554
      %589 = vmatpush.msra.mxu0 %v552
      %590 = vmatpush.msra.mxu0 %v550
      %591 = vmatpush.msra.mxu0 %v548
      %592 = vmatpush.msra.mxu0 %v546
      %593 = vmatpush.msra.mxu0 %v544
      %594 = vmatpush.msra.mxu0 %v542
      %595 = vmatpush.msra.mxu0 %v540
      %596 = vmatpush.msra.mxu0 %v538
      %597 = vmatpush.msra.mxu0 %v536
      %598 = vmatpush.msra.mxu0 %v534
      %599 = vmatpush.msra.mxu0 %v532
      %600 = vmatmul.f32.gmra.mxu0 %v498
      %v601 = vpop.f32.mrf.mxu0
      %v602 = vadd.f32 %v582, %v601
      %603 = vdwg.mxu0
      %604 = vmatpush.msra.mxu0 %v531
      %605 = vmatpush.msra.mxu0 %v529
      %606 = vmatpush.msra.mxu0 %v527
      %607 = vmatpush.msra.mxu0 %v525
      %608 = vmatpush.msra.mxu0 %v523
      %609 = vmatpush.msra.mxu0 %v521
      %610 = vmatpush.msra.mxu0 %v519
      %611 = vmatpush.msra.mxu0 %v517
      %612 = vmatpush.msra.mxu0 %v515
      %613 = vmatpush.msra.mxu0 %v513
      %614 = vmatpush.msra.mxu0 %v511
      %615 = vmatpush.msra.mxu0 %v509
      %616 = vmatpush.msra.mxu0 %v507
      %617 = vmatpush.msra.mxu0 %v505
      %618 = vmatpush.msra.mxu0 %v503
      %619 = vmatpush.msra.mxu0 %v501
      %620 = vmatmul.f32.gmra.mxu0 %v478
      %v621 = vpop.f32.mrf.mxu0
      %v622 = vadd.f32 0.0, %v621
      %623 = vdwg.mxu0
      %624 = vmatpush.msra.mxu0 %v563
      %625 = vmatpush.msra.mxu0 %v561
      %626 = vmatpush.msra.mxu0 %v559
      %627 = vmatpush.msra.mxu0 %v557
      %628 = vmatpush.msra.mxu0 %v555
      %629 = vmatpush.msra.mxu0 %v553
      %630 = vmatpush.msra.mxu0 %v551
      %631 = vmatpush.msra.mxu0 %v549
      %632 = vmatpush.msra.mxu0 %v547
      %633 = vmatpush.msra.mxu0 %v545
      %634 = vmatpush.msra.mxu0 %v543
      %635 = vmatpush.msra.mxu0 %v541
      %636 = vmatpush.msra.mxu0 %v539
      %637 = vmatpush.msra.mxu0 %v537
      %638 = vmatpush.msra.mxu0 %v535
      %639 = vmatpush.msra.mxu0 %v533
      %640 = vmatmul.f32.gmra.mxu0 %v498
      %v641 = vpop.f32.mrf.mxu0
      %v642 = vadd.f32 %v622, %v641
      %643 = vdwg.mxu0
      %645 = vset.pattern.permute.xlu0 0
      %646 = vperm.xlu0 %645, %v450
      %v647 = vpop.permute.xlu0 %646
      %v649 = vadd.f32 %v647, %v602
      %v650 = vadd.f32 %v647, %v642
      %v651 = vrot.slane %v445, 4
      %v652 = vsel %vm346, %v651, 0
      %654 = vmatpush.msra.mxu0 0.0
      %655 = vmatpush.msra.mxu0 0.0
      %656 = vmatpush.msra.mxu0 0.0
      %657 = vmatpush.msra.mxu0 0.0
      %658 = vmatpush.msra.mxu0 0.0
      %659 = vmatpush.msra.mxu0 0.0
      %660 = vmatpush.msra.mxu0 0.0
      %661 = vmatpush.msra.mxu0 0.0
      %662 = vmatpush.msra.mxu0 0.0
      %663 = vmatpush.msra.mxu0 0.0
      %664 = vmatpush.msra.mxu0 0.0
      %665 = vmatpush.msra.mxu0 0.0
      %666 = vmatpush.msra.mxu0 0.0
      %667 = vmatpush.msra.mxu0 0.0
      %668 = vmatpush.msra.mxu0 0.0
      %669 = vmatpush.msra.mxu0 %v455
      %670 = vmatmul.f32.gmra.mxu0 %v652
      %v671 = vpop.f32.mrf.mxu0
      %v672 = vadd.f32 0.0, %v671
      %673 = vdwg.mxu0
      %674 = vmatpush.msra.mxu0 0.0
      %675 = vmatpush.msra.mxu0 0.0
      %676 = vmatpush.msra.mxu0 0.0
      %677 = vmatpush.msra.mxu0 0.0
      %678 = vmatpush.msra.mxu0 0.0
      %679 = vmatpush.msra.mxu0 0.0
      %680 = vmatpush.msra.mxu0 0.0
      %681 = vmatpush.msra.mxu0 0.0
      %682 = vmatpush.msra.mxu0 0.0
      %683 = vmatpush.msra.mxu0 0.0
      %684 = vmatpush.msra.mxu0 0.0
      %685 = vmatpush.msra.mxu0 0.0
      %686 = vmatpush.msra.mxu0 0.0
      %687 = vmatpush.msra.mxu0 0.0
      %688 = vmatpush.msra.mxu0 0.0
      %689 = vmatpush.msra.mxu0 %v458
      %690 = vmatmul.f32.gmra.mxu0 %v652
      %v691 = vpop.f32.mrf.mxu0
      %v692 = vadd.f32 0.0, %v691
      %693 = vdwg.mxu0
      %v694 = vld [vmem:[%s4 + $0x200] sm:$0xff]
      %v695 = vld [vmem:[%s4 + $0x208] sm:$0xff]
      %v696 = vld [vmem:[%s4 + $0x210] sm:$0xff]
      %v697 = vld [vmem:[%s4 + $0x218] sm:$0xff]
      %v698 = vld [vmem:[%s4 + $0x220] sm:$0xff]
      %v699 = vld [vmem:[%s4 + $0x228] sm:$0xff]
      %v700 = vld [vmem:[%s4 + $0x230] sm:$0xff]
      %v701 = vld [vmem:[%s4 + $0x238] sm:$0xff]
      %v702 = vld [vmem:[%s4 + $0x240] sm:$0xff]
      %v703 = vld [vmem:[%s4 + $0x248] sm:$0xff]
      %v704 = vld [vmem:[%s4 + $0x250] sm:$0xff]
      %v705 = vld [vmem:[%s4 + $0x258] sm:$0xff]
      %v706 = vld [vmem:[%s4 + $0x260] sm:$0xff]
      %v707 = vld [vmem:[%s4 + $0x268] sm:$0xff]
      %v708 = vld [vmem:[%s4 + $0x270] sm:$0xff]
      %v709 = vld [vmem:[%s4 + $0x278] sm:$0xff]
      %v710 = vld [vmem:[%s4 + $0x280] sm:$0xff]
      %v711 = vld [vmem:[%s4 + $0x288] sm:$0xff]
      %v712 = vld [vmem:[%s4 + $0x290] sm:$0xff]
      %v713 = vld [vmem:[%s4 + $0x298] sm:$0xff]
      %v714 = vld [vmem:[%s4 + $0x2a0] sm:$0xff]
      %v715 = vld [vmem:[%s4 + $0x2a8] sm:$0xff]
      %v716 = vld [vmem:[%s4 + $0x2b0] sm:$0xff]
      %v717 = vld [vmem:[%s4 + $0x2b8] sm:$0xff]
      %v718 = vld [vmem:[%s4 + $0x2c0] sm:$0xff]
      %v719 = vld [vmem:[%s4 + $0x2c8] sm:$0xff]
      %v720 = vld [vmem:[%s4 + $0x2d0] sm:$0xff]
      %v721 = vld [vmem:[%s4 + $0x2d8] sm:$0xff]
      %v722 = vld [vmem:[%s4 + $0x2e0] sm:$0xff]
      %v723 = vld [vmem:[%s4 + $0x2e8] sm:$0xff]
      %v724 = vld [vmem:[%s4 + $0x2f0] sm:$0xff]
      %v725 = vld [vmem:[%s4 + $0x2f8] sm:$0xff]
      %v726 = vld [vmem:[%s4 + $0x300] sm:$0xff]
      %v727 = vld [vmem:[%s4 + $0x308] sm:$0xff]
      %v728 = vld [vmem:[%s4 + $0x310] sm:$0xff]
      %v729 = vld [vmem:[%s4 + $0x318] sm:$0xff]
      %v730 = vld [vmem:[%s4 + $0x320] sm:$0xff]
      %v731 = vld [vmem:[%s4 + $0x328] sm:$0xff]
      %v732 = vld [vmem:[%s4 + $0x330] sm:$0xff]
      %v733 = vld [vmem:[%s4 + $0x338] sm:$0xff]
      %v734 = vld [vmem:[%s4 + $0x340] sm:$0xff]
      %v735 = vld [vmem:[%s4 + $0x348] sm:$0xff]
      %v736 = vld [vmem:[%s4 + $0x350] sm:$0xff]
      %v737 = vld [vmem:[%s4 + $0x358] sm:$0xff]
      %v738 = vld [vmem:[%s4 + $0x360] sm:$0xff]
      %v739 = vld [vmem:[%s4 + $0x368] sm:$0xff]
      %v740 = vld [vmem:[%s4 + $0x370] sm:$0xff]
      %v741 = vld [vmem:[%s4 + $0x378] sm:$0xff]
      %v742 = vld [vmem:[%s4 + $0x380] sm:$0xff]
      %v743 = vld [vmem:[%s4 + $0x388] sm:$0xff]
      %v744 = vld [vmem:[%s4 + $0x390] sm:$0xff]
      %v745 = vld [vmem:[%s4 + $0x398] sm:$0xff]
      %v746 = vld [vmem:[%s4 + $0x3a0] sm:$0xff]
      %v747 = vld [vmem:[%s4 + $0x3a8] sm:$0xff]
      %v748 = vld [vmem:[%s4 + $0x3b0] sm:$0xff]
      %v749 = vld [vmem:[%s4 + $0x3b8] sm:$0xff]
      %v750 = vld [vmem:[%s4 + $0x3c0] sm:$0xff]
      %v751 = vld [vmem:[%s4 + $0x3c8] sm:$0xff]
      %v752 = vld [vmem:[%s4 + $0x3d0] sm:$0xff]
      %v753 = vld [vmem:[%s4 + $0x3d8] sm:$0xff]
      %v754 = vld [vmem:[%s4 + $0x3e0] sm:$0xff]
      %v755 = vld [vmem:[%s4 + $0x3e8] sm:$0xff]
      %v756 = vld [vmem:[%s4 + $0x3f0] sm:$0xff]
      %v757 = vld [vmem:[%s4 + $0x3f8] sm:$0xff]
      %758 = vmatpush.msra.mxu0 %v724
      %759 = vmatpush.msra.mxu0 %v722
      %760 = vmatpush.msra.mxu0 %v720
      %761 = vmatpush.msra.mxu0 %v718
      %762 = vmatpush.msra.mxu0 %v716
      %763 = vmatpush.msra.mxu0 %v714
      %764 = vmatpush.msra.mxu0 %v712
      %765 = vmatpush.msra.mxu0 %v710
      %766 = vmatpush.msra.mxu0 %v708
      %767 = vmatpush.msra.mxu0 %v706
      %768 = vmatpush.msra.mxu0 %v704
      %769 = vmatpush.msra.mxu0 %v702
      %770 = vmatpush.msra.mxu0 %v700
      %771 = vmatpush.msra.mxu0 %v698
      %772 = vmatpush.msra.mxu0 %v696
      %773 = vmatpush.msra.mxu0 %v694
      %774 = vmatmul.f32.gmra.mxu0 %v672
      %v775 = vpop.f32.mrf.mxu0
      %v776 = vadd.f32 0.0, %v775
      %777 = vdwg.mxu0
      %778 = vmatpush.msra.mxu0 %v756
      %779 = vmatpush.msra.mxu0 %v754
      %780 = vmatpush.msra.mxu0 %v752
      %781 = vmatpush.msra.mxu0 %v750
      %782 = vmatpush.msra.mxu0 %v748
      %783 = vmatpush.msra.mxu0 %v746
      %784 = vmatpush.msra.mxu0 %v744
      %785 = vmatpush.msra.mxu0 %v742
      %786 = vmatpush.msra.mxu0 %v740
      %787 = vmatpush.msra.mxu0 %v738
      %788 = vmatpush.msra.mxu0 %v736
      %789 = vmatpush.msra.mxu0 %v734
      %790 = vmatpush.msra.mxu0 %v732
      %791 = vmatpush.msra.mxu0 %v730
      %792 = vmatpush.msra.mxu0 %v728
      %793 = vmatpush.msra.mxu0 %v726
      %794 = vmatmul.f32.gmra.mxu0 %v692
      %v795 = vpop.f32.mrf.mxu0
      %v796 = vadd.f32 %v776, %v795
      %797 = vdwg.mxu0
      %798 = vmatpush.msra.mxu0 %v725
      %799 = vmatpush.msra.mxu0 %v723
      %800 = vmatpush.msra.mxu0 %v721
      %801 = vmatpush.msra.mxu0 %v719
      %802 = vmatpush.msra.mxu0 %v717
      %803 = vmatpush.msra.mxu0 %v715
      %804 = vmatpush.msra.mxu0 %v713
      %805 = vmatpush.msra.mxu0 %v711
      %806 = vmatpush.msra.mxu0 %v709
      %807 = vmatpush.msra.mxu0 %v707
      %808 = vmatpush.msra.mxu0 %v705
      %809 = vmatpush.msra.mxu0 %v703
      %810 = vmatpush.msra.mxu0 %v701
      %811 = vmatpush.msra.mxu0 %v699
      %812 = vmatpush.msra.mxu0 %v697
      %813 = vmatpush.msra.mxu0 %v695
      %814 = vmatmul.f32.gmra.mxu0 %v672
      %v815 = vpop.f32.mrf.mxu0
      %v816 = vadd.f32 0.0, %v815
      %817 = vdwg.mxu0
      %818 = vmatpush.msra.mxu0 %v757
      %819 = vmatpush.msra.mxu0 %v755
      %820 = vmatpush.msra.mxu0 %v753
      %821 = vmatpush.msra.mxu0 %v751
      %822 = vmatpush.msra.mxu0 %v749
      %823 = vmatpush.msra.mxu0 %v747
      %824 = vmatpush.msra.mxu0 %v745
      %825 = vmatpush.msra.mxu0 %v743
      %826 = vmatpush.msra.mxu0 %v741
      %827 = vmatpush.msra.mxu0 %v739
      %828 = vmatpush.msra.mxu0 %v737
      %829 = vmatpush.msra.mxu0 %v735
      %830 = vmatpush.msra.mxu0 %v733
      %831 = vmatpush.msra.mxu0 %v731
      %832 = vmatpush.msra.mxu0 %v729
      %833 = vmatpush.msra.mxu0 %v727
      %834 = vmatmul.f32.gmra.mxu0 %v692
      %v835 = vpop.f32.mrf.mxu0
      %v836 = vadd.f32 %v816, %v835
      %837 = vdwg.mxu0
      %v838 = vadd.f32 %v649, %v796
      %v839 = vadd.f32 %v650, %v836
      %v841 = vsel %vm346, %v446, 0
      %843 = vmatpush.msra.mxu0 0.0
      %844 = vmatpush.msra.mxu0 0.0
      %845 = vmatpush.msra.mxu0 0.0
      %846 = vmatpush.msra.mxu0 0.0
      %847 = vmatpush.msra.mxu0 0.0
      %848 = vmatpush.msra.mxu0 0.0
      %849 = vmatpush.msra.mxu0 0.0
      %850 = vmatpush.msra.mxu0 0.0
      %851 = vmatpush.msra.mxu0 0.0
      %852 = vmatpush.msra.mxu0 0.0
      %853 = vmatpush.msra.mxu0 0.0
      %854 = vmatpush.msra.mxu0 0.0
      %855 = vmatpush.msra.mxu0 0.0
      %856 = vmatpush.msra.mxu0 0.0
      %857 = vmatpush.msra.mxu0 0.0
      %858 = vmatpush.msra.mxu0 %v455
      %859 = vmatmul.f32.gmra.mxu0 %v841
      %v860 = vpop.f32.mrf.mxu0
      %v861 = vadd.f32 0.0, %v860
      %862 = vdwg.mxu0
      %863 = vmatpush.msra.mxu0 0.0
      %864 = vmatpush.msra.mxu0 0.0
      %865 = vmatpush.msra.mxu0 0.0
      %866 = vmatpush.msra.mxu0 0.0
      %867 = vmatpush.msra.mxu0 0.0
      %868 = vmatpush.msra.mxu0 0.0
      %869 = vmatpush.msra.mxu0 0.0
      %870 = vmatpush.msra.mxu0 0.0
      %871 = vmatpush.msra.mxu0 0.0
      %872 = vmatpush.msra.mxu0 0.0
      %873 = vmatpush.msra.mxu0 0.0
      %874 = vmatpush.msra.mxu0 0.0
      %875 = vmatpush.msra.mxu0 0.0
      %876 = vmatpush.msra.mxu0 0.0
      %877 = vmatpush.msra.mxu0 0.0
      %878 = vmatpush.msra.mxu0 %v458
      %879 = vmatmul.f32.gmra.mxu0 %v841
      %v880 = vpop.f32.mrf.mxu0
      %v881 = vadd.f32 0.0, %v880
      %882 = vdwg.mxu0
      %v883 = vld [vmem:[%s4 + $0x400] sm:$0xff]
      %v884 = vld [vmem:[%s4 + $0x408] sm:$0xff]
      %v885 = vld [vmem:[%s4 + $0x410] sm:$0xff]
      %v886 = vld [vmem:[%s4 + $0x418] sm:$0xff]
      %v887 = vld [vmem:[%s4 + $0x420] sm:$0xff]
      %v888 = vld [vmem:[%s4 + $0x428] sm:$0xff]
      %v889 = vld [vmem:[%s4 + $0x430] sm:$0xff]
      %v890 = vld [vmem:[%s4 + $0x438] sm:$0xff]
      %v891 = vld [vmem:[%s4 + $0x440] sm:$0xff]
      %v892 = vld [vmem:[%s4 + $0x448] sm:$0xff]
      %v893 = vld [vmem:[%s4 + $0x450] sm:$0xff]
      %v894 = vld [vmem:[%s4 + $0x458] sm:$0xff]
      %v895 = vld [vmem:[%s4 + $0x460] sm:$0xff]
      %v896 = vld [vmem:[%s4 + $0x468] sm:$0xff]
      %v897 = vld [vmem:[%s4 + $0x470] sm:$0xff]
      %v898 = vld [vmem:[%s4 + $0x478] sm:$0xff]
      %v899 = vld [vmem:[%s4 + $0x480] sm:$0xff]
      %v900 = vld [vmem:[%s4 + $0x488] sm:$0xff]
      %v901 = vld [vmem:[%s4 + $0x490] sm:$0xff]
      %v902 = vld [vmem:[%s4 + $0x498] sm:$0xff]
      %v903 = vld [vmem:[%s4 + $0x4a0] sm:$0xff]
      %v904 = vld [vmem:[%s4 + $0x4a8] sm:$0xff]
      %v905 = vld [vmem:[%s4 + $0x4b0] sm:$0xff]
      %v906 = vld [vmem:[%s4 + $0x4b8] sm:$0xff]
      %v907 = vld [vmem:[%s4 + $0x4c0] sm:$0xff]
      %v908 = vld [vmem:[%s4 + $0x4c8] sm:$0xff]
      %v909 = vld [vmem:[%s4 + $0x4d0] sm:$0xff]
      %v910 = vld [vmem:[%s4 + $0x4d8] sm:$0xff]
      %v911 = vld [vmem:[%s4 + $0x4e0] sm:$0xff]
      %v912 = vld [vmem:[%s4 + $0x4e8] sm:$0xff]
      %v913 = vld [vmem:[%s4 + $0x4f0] sm:$0xff]
      %v914 = vld [vmem:[%s4 + $0x4f8] sm:$0xff]
      %v915 = vld [vmem:[%s4 + $0x500] sm:$0xff]
      %v916 = vld [vmem:[%s4 + $0x508] sm:$0xff]
      %v917 = vld [vmem:[%s4 + $0x510] sm:$0xff]
      %v918 = vld [vmem:[%s4 + $0x518] sm:$0xff]
      %v919 = vld [vmem:[%s4 + $0x520] sm:$0xff]
      %v920 = vld [vmem:[%s4 + $0x528] sm:$0xff]
      %v921 = vld [vmem:[%s4 + $0x530] sm:$0xff]
      %v922 = vld [vmem:[%s4 + $0x538] sm:$0xff]
      %v923 = vld [vmem:[%s4 + $0x540] sm:$0xff]
      %v924 = vld [vmem:[%s4 + $0x548] sm:$0xff]
      %v925 = vld [vmem:[%s4 + $0x550] sm:$0xff]
      %v926 = vld [vmem:[%s4 + $0x558] sm:$0xff]
      %v927 = vld [vmem:[%s4 + $0x560] sm:$0xff]
      %v928 = vld [vmem:[%s4 + $0x568] sm:$0xff]
      %v929 = vld [vmem:[%s4 + $0x570] sm:$0xff]
      %v930 = vld [vmem:[%s4 + $0x578] sm:$0xff]
      %v931 = vld [vmem:[%s4 + $0x580] sm:$0xff]
      %v932 = vld [vmem:[%s4 + $0x588] sm:$0xff]
      %v933 = vld [vmem:[%s4 + $0x590] sm:$0xff]
      %v934 = vld [vmem:[%s4 + $0x598] sm:$0xff]
      %v935 = vld [vmem:[%s4 + $0x5a0] sm:$0xff]
      %v936 = vld [vmem:[%s4 + $0x5a8] sm:$0xff]
      %v937 = vld [vmem:[%s4 + $0x5b0] sm:$0xff]
      %v938 = vld [vmem:[%s4 + $0x5b8] sm:$0xff]
      %v939 = vld [vmem:[%s4 + $0x5c0] sm:$0xff]
      %v940 = vld [vmem:[%s4 + $0x5c8] sm:$0xff]
      %v941 = vld [vmem:[%s4 + $0x5d0] sm:$0xff]
      %v942 = vld [vmem:[%s4 + $0x5d8] sm:$0xff]
      %v943 = vld [vmem:[%s4 + $0x5e0] sm:$0xff]
      %v944 = vld [vmem:[%s4 + $0x5e8] sm:$0xff]
      %v945 = vld [vmem:[%s4 + $0x5f0] sm:$0xff]
      %v946 = vld [vmem:[%s4 + $0x5f8] sm:$0xff]
      %947 = vmatpush.msra.mxu0 %v913
      %948 = vmatpush.msra.mxu0 %v911
      %949 = vmatpush.msra.mxu0 %v909
      %950 = vmatpush.msra.mxu0 %v907
      %951 = vmatpush.msra.mxu0 %v905
      %952 = vmatpush.msra.mxu0 %v903
      %953 = vmatpush.msra.mxu0 %v901
      %954 = vmatpush.msra.mxu0 %v899
      %955 = vmatpush.msra.mxu0 %v897
      %956 = vmatpush.msra.mxu0 %v895
      %957 = vmatpush.msra.mxu0 %v893
      %958 = vmatpush.msra.mxu0 %v891
      %959 = vmatpush.msra.mxu0 %v889
      %960 = vmatpush.msra.mxu0 %v887
      %961 = vmatpush.msra.mxu0 %v885
      %962 = vmatpush.msra.mxu0 %v883
      %963 = vmatmul.f32.gmra.mxu0 %v861
      %v964 = vpop.f32.mrf.mxu0
      %v965 = vadd.f32 0.0, %v964
      %966 = vdwg.mxu0
      %967 = vmatpush.msra.mxu0 %v945
      %968 = vmatpush.msra.mxu0 %v943
      %969 = vmatpush.msra.mxu0 %v941
      %970 = vmatpush.msra.mxu0 %v939
      %971 = vmatpush.msra.mxu0 %v937
      %972 = vmatpush.msra.mxu0 %v935
      %973 = vmatpush.msra.mxu0 %v933
      %974 = vmatpush.msra.mxu0 %v931
      %975 = vmatpush.msra.mxu0 %v929
      %976 = vmatpush.msra.mxu0 %v927
      %977 = vmatpush.msra.mxu0 %v925
      %978 = vmatpush.msra.mxu0 %v923
      %979 = vmatpush.msra.mxu0 %v921
      %980 = vmatpush.msra.mxu0 %v919
      %981 = vmatpush.msra.mxu0 %v917
      %982 = vmatpush.msra.mxu0 %v915
      %983 = vmatmul.f32.gmra.mxu0 %v881
      %v984 = vpop.f32.mrf.mxu0
      %v985 = vadd.f32 %v965, %v984
      %986 = vdwg.mxu0
      %987 = vmatpush.msra.mxu0 %v914
      %988 = vmatpush.msra.mxu0 %v912
      %989 = vmatpush.msra.mxu0 %v910
      %990 = vmatpush.msra.mxu0 %v908
      %991 = vmatpush.msra.mxu0 %v906
      %992 = vmatpush.msra.mxu0 %v904
      %993 = vmatpush.msra.mxu0 %v902
      %994 = vmatpush.msra.mxu0 %v900
      %995 = vmatpush.msra.mxu0 %v898
      %996 = vmatpush.msra.mxu0 %v896
      %997 = vmatpush.msra.mxu0 %v894
      %998 = vmatpush.msra.mxu0 %v892
      %999 = vmatpush.msra.mxu0 %v890
      %1000 = vmatpush.msra.mxu0 %v888
      %1001 = vmatpush.msra.mxu0 %v886
      %1002 = vmatpush.msra.mxu0 %v884
      %1003 = vmatmul.f32.gmra.mxu0 %v861
      %v1004 = vpop.f32.mrf.mxu0
      %v1005 = vadd.f32 0.0, %v1004
      %1006 = vdwg.mxu0
      %1007 = vmatpush.msra.mxu0 %v946
      %1008 = vmatpush.msra.mxu0 %v944
      %1009 = vmatpush.msra.mxu0 %v942
      %1010 = vmatpush.msra.mxu0 %v940
      %1011 = vmatpush.msra.mxu0 %v938
      %1012 = vmatpush.msra.mxu0 %v936
      %1013 = vmatpush.msra.mxu0 %v934
      %1014 = vmatpush.msra.mxu0 %v932
      %1015 = vmatpush.msra.mxu0 %v930
      %1016 = vmatpush.msra.mxu0 %v928
      %1017 = vmatpush.msra.mxu0 %v926
      %1018 = vmatpush.msra.mxu0 %v924
      %1019 = vmatpush.msra.mxu0 %v922
      %1020 = vmatpush.msra.mxu0 %v920
      %1021 = vmatpush.msra.mxu0 %v918
      %1022 = vmatpush.msra.mxu0 %v916
      %1023 = vmatmul.f32.gmra.mxu0 %v881
      %v1024 = vpop.f32.mrf.mxu0
      %v1025 = vadd.f32 %v1005, %v1024
      %1026 = vdwg.mxu0
      %v1027 = vadd.f32 %v838, %v985
      %v1028 = vadd.f32 %v839, %v1025
      %v1029 = vrot.slane %v446, 4
      %v1030 = vsel %vm346, %v1029, 0
      %1032 = vmatpush.msra.mxu0 0.0
      %1033 = vmatpush.msra.mxu0 0.0
      %1034 = vmatpush.msra.mxu0 0.0
      %1035 = vmatpush.msra.mxu0 0.0
      %1036 = vmatpush.msra.mxu0 0.0
      %1037 = vmatpush.msra.mxu0 0.0
      %1038 = vmatpush.msra.mxu0 0.0
      %1039 = vmatpush.msra.mxu0 0.0
      %1040 = vmatpush.msra.mxu0 0.0
      %1041 = vmatpush.msra.mxu0 0.0
      %1042 = vmatpush.msra.mxu0 0.0
      %1043 = vmatpush.msra.mxu0 0.0
      %1044 = vmatpush.msra.mxu0 0.0
      %1045 = vmatpush.msra.mxu0 0.0
      %1046 = vmatpush.msra.mxu0 0.0
      %1047 = vmatpush.msra.mxu0 %v455
      %1048 = vmatmul.f32.gmra.mxu0 %v1030
      %v1049 = vpop.f32.mrf.mxu0
      %v1050 = vadd.f32 0.0, %v1049
      %1051 = vdwg.mxu0
      %1052 = vmatpush.msra.mxu0 0.0
      %1053 = vmatpush.msra.mxu0 0.0
      %1054 = vmatpush.msra.mxu0 0.0
      %1055 = vmatpush.msra.mxu0 0.0
      %1056 = vmatpush.msra.mxu0 0.0
      %1057 = vmatpush.msra.mxu0 0.0
      %1058 = vmatpush.msra.mxu0 0.0
      %1059 = vmatpush.msra.mxu0 0.0
      %1060 = vmatpush.msra.mxu0 0.0
      %1061 = vmatpush.msra.mxu0 0.0
      %1062 = vmatpush.msra.mxu0 0.0
      %1063 = vmatpush.msra.mxu0 0.0
      %1064 = vmatpush.msra.mxu0 0.0
      %1065 = vmatpush.msra.mxu0 0.0
      %1066 = vmatpush.msra.mxu0 0.0
      %1067 = vmatpush.msra.mxu0 %v458
      %1068 = vmatmul.f32.gmra.mxu0 %v1030
      %v1069 = vpop.f32.mrf.mxu0
      %v1070 = vadd.f32 0.0, %v1069
      %1071 = vdwg.mxu0
      %v1072 = vld [vmem:[%s4 + $0x600] sm:$0xff]
      %v1073 = vld [vmem:[%s4 + $0x608] sm:$0xff]
      %v1074 = vld [vmem:[%s4 + $0x610] sm:$0xff]
      %v1075 = vld [vmem:[%s4 + $0x618] sm:$0xff]
      %v1076 = vld [vmem:[%s4 + $0x620] sm:$0xff]
      %v1077 = vld [vmem:[%s4 + $0x628] sm:$0xff]
      %v1078 = vld [vmem:[%s4 + $0x630] sm:$0xff]
      %v1079 = vld [vmem:[%s4 + $0x638] sm:$0xff]
      %v1080 = vld [vmem:[%s4 + $0x640] sm:$0xff]
      %v1081 = vld [vmem:[%s4 + $0x648] sm:$0xff]
      %v1082 = vld [vmem:[%s4 + $0x650] sm:$0xff]
      %v1083 = vld [vmem:[%s4 + $0x658] sm:$0xff]
      %v1084 = vld [vmem:[%s4 + $0x660] sm:$0xff]
      %v1085 = vld [vmem:[%s4 + $0x668] sm:$0xff]
      %v1086 = vld [vmem:[%s4 + $0x670] sm:$0xff]
      %v1087 = vld [vmem:[%s4 + $0x678] sm:$0xff]
      %v1088 = vld [vmem:[%s4 + $0x680] sm:$0xff]
      %v1089 = vld [vmem:[%s4 + $0x688] sm:$0xff]
      %v1090 = vld [vmem:[%s4 + $0x690] sm:$0xff]
      %v1091 = vld [vmem:[%s4 + $0x698] sm:$0xff]
      %v1092 = vld [vmem:[%s4 + $0x6a0] sm:$0xff]
      %v1093 = vld [vmem:[%s4 + $0x6a8] sm:$0xff]
      %v1094 = vld [vmem:[%s4 + $0x6b0] sm:$0xff]
      %v1095 = vld [vmem:[%s4 + $0x6b8] sm:$0xff]
      %v1096 = vld [vmem:[%s4 + $0x6c0] sm:$0xff]
      %v1097 = vld [vmem:[%s4 + $0x6c8] sm:$0xff]
      %v1098 = vld [vmem:[%s4 + $0x6d0] sm:$0xff]
      %v1099 = vld [vmem:[%s4 + $0x6d8] sm:$0xff]
      %v1100 = vld [vmem:[%s4 + $0x6e0] sm:$0xff]
      %v1101 = vld [vmem:[%s4 + $0x6e8] sm:$0xff]
      %v1102 = vld [vmem:[%s4 + $0x6f0] sm:$0xff]
      %v1103 = vld [vmem:[%s4 + $0x6f8] sm:$0xff]
      %v1104 = vld [vmem:[%s4 + $0x700] sm:$0xff]
      %v1105 = vld [vmem:[%s4 + $0x708] sm:$0xff]
      %v1106 = vld [vmem:[%s4 + $0x710] sm:$0xff]
      %v1107 = vld [vmem:[%s4 + $0x718] sm:$0xff]
      %v1108 = vld [vmem:[%s4 + $0x720] sm:$0xff]
      %v1109 = vld [vmem:[%s4 + $0x728] sm:$0xff]
      %v1110 = vld [vmem:[%s4 + $0x730] sm:$0xff]
      %v1111 = vld [vmem:[%s4 + $0x738] sm:$0xff]
      %v1112 = vld [vmem:[%s4 + $0x740] sm:$0xff]
      %v1113 = vld [vmem:[%s4 + $0x748] sm:$0xff]
      %v1114 = vld [vmem:[%s4 + $0x750] sm:$0xff]
      %v1115 = vld [vmem:[%s4 + $0x758] sm:$0xff]
      %v1116 = vld [vmem:[%s4 + $0x760] sm:$0xff]
      %v1117 = vld [vmem:[%s4 + $0x768] sm:$0xff]
      %v1118 = vld [vmem:[%s4 + $0x770] sm:$0xff]
      %v1119 = vld [vmem:[%s4 + $0x778] sm:$0xff]
      %v1120 = vld [vmem:[%s4 + $0x780] sm:$0xff]
      %v1121 = vld [vmem:[%s4 + $0x788] sm:$0xff]
      %v1122 = vld [vmem:[%s4 + $0x790] sm:$0xff]
      %v1123 = vld [vmem:[%s4 + $0x798] sm:$0xff]
      %v1124 = vld [vmem:[%s4 + $0x7a0] sm:$0xff]
      %v1125 = vld [vmem:[%s4 + $0x7a8] sm:$0xff]
      %v1126 = vld [vmem:[%s4 + $0x7b0] sm:$0xff]
      %v1127 = vld [vmem:[%s4 + $0x7b8] sm:$0xff]
      %v1128 = vld [vmem:[%s4 + $0x7c0] sm:$0xff]
      %v1129 = vld [vmem:[%s4 + $0x7c8] sm:$0xff]
      %v1130 = vld [vmem:[%s4 + $0x7d0] sm:$0xff]
      %v1131 = vld [vmem:[%s4 + $0x7d8] sm:$0xff]
      %v1132 = vld [vmem:[%s4 + $0x7e0] sm:$0xff]
      %v1133 = vld [vmem:[%s4 + $0x7e8] sm:$0xff]
      %v1134 = vld [vmem:[%s4 + $0x7f0] sm:$0xff]
      %v1135 = vld [vmem:[%s4 + $0x7f8] sm:$0xff]
      %1136 = vmatpush.msra.mxu0 %v1102
      %1137 = vmatpush.msra.mxu0 %v1100
      %1138 = vmatpush.msra.mxu0 %v1098
      %1139 = vmatpush.msra.mxu0 %v1096
      %1140 = vmatpush.msra.mxu0 %v1094
      %1141 = vmatpush.msra.mxu0 %v1092
      %1142 = vmatpush.msra.mxu0 %v1090
      %1143 = vmatpush.msra.mxu0 %v1088
      %1144 = vmatpush.msra.mxu0 %v1086
      %1145 = vmatpush.msra.mxu0 %v1084
      %1146 = vmatpush.msra.mxu0 %v1082
      %1147 = vmatpush.msra.mxu0 %v1080
      %1148 = vmatpush.msra.mxu0 %v1078
      %1149 = vmatpush.msra.mxu0 %v1076
      %1150 = vmatpush.msra.mxu0 %v1074
      %1151 = vmatpush.msra.mxu0 %v1072
      %1152 = vmatmul.f32.gmra.mxu0 %v1050
      %v1153 = vpop.f32.mrf.mxu0
      %v1154 = vadd.f32 0.0, %v1153
      %1155 = vdwg.mxu0
      %1156 = vmatpush.msra.mxu0 %v1134
      %1157 = vmatpush.msra.mxu0 %v1132
      %1158 = vmatpush.msra.mxu0 %v1130
      %1159 = vmatpush.msra.mxu0 %v1128
      %1160 = vmatpush.msra.mxu0 %v1126
      %1161 = vmatpush.msra.mxu0 %v1124
      %1162 = vmatpush.msra.mxu0 %v1122
      %1163 = vmatpush.msra.mxu0 %v1120
      %1164 = vmatpush.msra.mxu0 %v1118
      %1165 = vmatpush.msra.mxu0 %v1116
      %1166 = vmatpush.msra.mxu0 %v1114
      %1167 = vmatpush.msra.mxu0 %v1112
      %1168 = vmatpush.msra.mxu0 %v1110
      %1169 = vmatpush.msra.mxu0 %v1108
      %1170 = vmatpush.msra.mxu0 %v1106
      %1171 = vmatpush.msra.mxu0 %v1104
      %1172 = vmatmul.f32.gmra.mxu0 %v1070
      %v1173 = vpop.f32.mrf.mxu0
      %v1174 = vadd.f32 %v1154, %v1173
      %1175 = vdwg.mxu0
      %1176 = vmatpush.msra.mxu0 %v1103
      %1177 = vmatpush.msra.mxu0 %v1101
      %1178 = vmatpush.msra.mxu0 %v1099
      %1179 = vmatpush.msra.mxu0 %v1097
      %1180 = vmatpush.msra.mxu0 %v1095
      %1181 = vmatpush.msra.mxu0 %v1093
      %1182 = vmatpush.msra.mxu0 %v1091
      %1183 = vmatpush.msra.mxu0 %v1089
      %1184 = vmatpush.msra.mxu0 %v1087
      %1185 = vmatpush.msra.mxu0 %v1085
      %1186 = vmatpush.msra.mxu0 %v1083
      %1187 = vmatpush.msra.mxu0 %v1081
      %1188 = vmatpush.msra.mxu0 %v1079
      %1189 = vmatpush.msra.mxu0 %v1077
      %1190 = vmatpush.msra.mxu0 %v1075
      %1191 = vmatpush.msra.mxu0 %v1073
      %1192 = vmatmul.f32.gmra.mxu0 %v1050
      %v1193 = vpop.f32.mrf.mxu0
      %v1194 = vadd.f32 0.0, %v1193
      %1195 = vdwg.mxu0
      %1196 = vmatpush.msra.mxu0 %v1135
      %1197 = vmatpush.msra.mxu0 %v1133
      %1198 = vmatpush.msra.mxu0 %v1131
      %1199 = vmatpush.msra.mxu0 %v1129
      %1200 = vmatpush.msra.mxu0 %v1127
      %1201 = vmatpush.msra.mxu0 %v1125
      %1202 = vmatpush.msra.mxu0 %v1123
      %1203 = vmatpush.msra.mxu0 %v1121
      %1204 = vmatpush.msra.mxu0 %v1119
      %1205 = vmatpush.msra.mxu0 %v1117
      %1206 = vmatpush.msra.mxu0 %v1115
      %1207 = vmatpush.msra.mxu0 %v1113
      %1208 = vmatpush.msra.mxu0 %v1111
      %1209 = vmatpush.msra.mxu0 %v1109
      %1210 = vmatpush.msra.mxu0 %v1107
      %1211 = vmatpush.msra.mxu0 %v1105
      %1212 = vmatmul.f32.gmra.mxu0 %v1070
      %v1213 = vpop.f32.mrf.mxu0
      %v1214 = vadd.f32 %v1194, %v1213
      %1215 = vdwg.mxu0
      %v1216 = vadd.f32 %v1027, %v1174
      %v1217 = vadd.f32 %v1028, %v1214
      %v1219 = vsel %vm346, %v447, 0
      %1221 = vmatpush.msra.mxu0 0.0
      %1222 = vmatpush.msra.mxu0 0.0
      %1223 = vmatpush.msra.mxu0 0.0
      %1224 = vmatpush.msra.mxu0 0.0
      %1225 = vmatpush.msra.mxu0 0.0
      %1226 = vmatpush.msra.mxu0 0.0
      %1227 = vmatpush.msra.mxu0 0.0
      %1228 = vmatpush.msra.mxu0 0.0
      %1229 = vmatpush.msra.mxu0 0.0
      %1230 = vmatpush.msra.mxu0 0.0
      %1231 = vmatpush.msra.mxu0 0.0
      %1232 = vmatpush.msra.mxu0 0.0
      %1233 = vmatpush.msra.mxu0 0.0
      %1234 = vmatpush.msra.mxu0 0.0
      %1235 = vmatpush.msra.mxu0 0.0
      %1236 = vmatpush.msra.mxu0 %v455
      %1237 = vmatmul.f32.gmra.mxu0 %v1219
      %v1238 = vpop.f32.mrf.mxu0
      %v1239 = vadd.f32 0.0, %v1238
      %1240 = vdwg.mxu0
      %1241 = vmatpush.msra.mxu0 0.0
      %1242 = vmatpush.msra.mxu0 0.0
      %1243 = vmatpush.msra.mxu0 0.0
      %1244 = vmatpush.msra.mxu0 0.0
      %1245 = vmatpush.msra.mxu0 0.0
      %1246 = vmatpush.msra.mxu0 0.0
      %1247 = vmatpush.msra.mxu0 0.0
      %1248 = vmatpush.msra.mxu0 0.0
      %1249 = vmatpush.msra.mxu0 0.0
      %1250 = vmatpush.msra.mxu0 0.0
      %1251 = vmatpush.msra.mxu0 0.0
      %1252 = vmatpush.msra.mxu0 0.0
      %1253 = vmatpush.msra.mxu0 0.0
      %1254 = vmatpush.msra.mxu0 0.0
      %1255 = vmatpush.msra.mxu0 0.0
      %1256 = vmatpush.msra.mxu0 %v458
      %1257 = vmatmul.f32.gmra.mxu0 %v1219
      %v1258 = vpop.f32.mrf.mxu0
      %v1259 = vadd.f32 0.0, %v1258
      %1260 = vdwg.mxu0
      %v1261 = vld [vmem:[%s4 + $0x800] sm:$0xff]
      %v1262 = vld [vmem:[%s4 + $0x808] sm:$0xff]
      %v1263 = vld [vmem:[%s4 + $0x810] sm:$0xff]
      %v1264 = vld [vmem:[%s4 + $0x818] sm:$0xff]
      %v1265 = vld [vmem:[%s4 + $0x820] sm:$0xff]
      %v1266 = vld [vmem:[%s4 + $0x828] sm:$0xff]
      %v1267 = vld [vmem:[%s4 + $0x830] sm:$0xff]
      %v1268 = vld [vmem:[%s4 + $0x838] sm:$0xff]
      %v1269 = vld [vmem:[%s4 + $0x840] sm:$0xff]
      %v1270 = vld [vmem:[%s4 + $0x848] sm:$0xff]
      %v1271 = vld [vmem:[%s4 + $0x850] sm:$0xff]
      %v1272 = vld [vmem:[%s4 + $0x858] sm:$0xff]
      %v1273 = vld [vmem:[%s4 + $0x860] sm:$0xff]
      %v1274 = vld [vmem:[%s4 + $0x868] sm:$0xff]
      %v1275 = vld [vmem:[%s4 + $0x870] sm:$0xff]
      %v1276 = vld [vmem:[%s4 + $0x878] sm:$0xff]
      %v1277 = vld [vmem:[%s4 + $0x880] sm:$0xff]
      %v1278 = vld [vmem:[%s4 + $0x888] sm:$0xff]
      %v1279 = vld [vmem:[%s4 + $0x890] sm:$0xff]
      %v1280 = vld [vmem:[%s4 + $0x898] sm:$0xff]
      %v1281 = vld [vmem:[%s4 + $0x8a0] sm:$0xff]
      %v1282 = vld [vmem:[%s4 + $0x8a8] sm:$0xff]
      %v1283 = vld [vmem:[%s4 + $0x8b0] sm:$0xff]
      %v1284 = vld [vmem:[%s4 + $0x8b8] sm:$0xff]
      %v1285 = vld [vmem:[%s4 + $0x8c0] sm:$0xff]
      %v1286 = vld [vmem:[%s4 + $0x8c8] sm:$0xff]
      %v1287 = vld [vmem:[%s4 + $0x8d0] sm:$0xff]
      %v1288 = vld [vmem:[%s4 + $0x8d8] sm:$0xff]
      %v1289 = vld [vmem:[%s4 + $0x8e0] sm:$0xff]
      %v1290 = vld [vmem:[%s4 + $0x8e8] sm:$0xff]
      %v1291 = vld [vmem:[%s4 + $0x8f0] sm:$0xff]
      %v1292 = vld [vmem:[%s4 + $0x8f8] sm:$0xff]
      %v1293 = vld [vmem:[%s4 + $0x900] sm:$0xff]
      %v1294 = vld [vmem:[%s4 + $0x908] sm:$0xff]
      %v1295 = vld [vmem:[%s4 + $0x910] sm:$0xff]
      %v1296 = vld [vmem:[%s4 + $0x918] sm:$0xff]
      %v1297 = vld [vmem:[%s4 + $0x920] sm:$0xff]
      %v1298 = vld [vmem:[%s4 + $0x928] sm:$0xff]
      %v1299 = vld [vmem:[%s4 + $0x930] sm:$0xff]
      %v1300 = vld [vmem:[%s4 + $0x938] sm:$0xff]
      %v1301 = vld [vmem:[%s4 + $0x940] sm:$0xff]
      %v1302 = vld [vmem:[%s4 + $0x948] sm:$0xff]
      %v1303 = vld [vmem:[%s4 + $0x950] sm:$0xff]
      %v1304 = vld [vmem:[%s4 + $0x958] sm:$0xff]
      %v1305 = vld [vmem:[%s4 + $0x960] sm:$0xff]
      %v1306 = vld [vmem:[%s4 + $0x968] sm:$0xff]
      %v1307 = vld [vmem:[%s4 + $0x970] sm:$0xff]
      %v1308 = vld [vmem:[%s4 + $0x978] sm:$0xff]
      %v1309 = vld [vmem:[%s4 + $0x980] sm:$0xff]
      %v1310 = vld [vmem:[%s4 + $0x988] sm:$0xff]
      %v1311 = vld [vmem:[%s4 + $0x990] sm:$0xff]
      %v1312 = vld [vmem:[%s4 + $0x998] sm:$0xff]
      %v1313 = vld [vmem:[%s4 + $0x9a0] sm:$0xff]
      %v1314 = vld [vmem:[%s4 + $0x9a8] sm:$0xff]
      %v1315 = vld [vmem:[%s4 + $0x9b0] sm:$0xff]
      %v1316 = vld [vmem:[%s4 + $0x9b8] sm:$0xff]
      %v1317 = vld [vmem:[%s4 + $0x9c0] sm:$0xff]
      %v1318 = vld [vmem:[%s4 + $0x9c8] sm:$0xff]
      %v1319 = vld [vmem:[%s4 + $0x9d0] sm:$0xff]
      %v1320 = vld [vmem:[%s4 + $0x9d8] sm:$0xff]
      %v1321 = vld [vmem:[%s4 + $0x9e0] sm:$0xff]
      %v1322 = vld [vmem:[%s4 + $0x9e8] sm:$0xff]
      %v1323 = vld [vmem:[%s4 + $0x9f0] sm:$0xff]
      %v1324 = vld [vmem:[%s4 + $0x9f8] sm:$0xff]
      %1325 = vmatpush.msra.mxu0 %v1291
      %1326 = vmatpush.msra.mxu0 %v1289
      %1327 = vmatpush.msra.mxu0 %v1287
      %1328 = vmatpush.msra.mxu0 %v1285
      %1329 = vmatpush.msra.mxu0 %v1283
      %1330 = vmatpush.msra.mxu0 %v1281
      %1331 = vmatpush.msra.mxu0 %v1279
      %1332 = vmatpush.msra.mxu0 %v1277
      %1333 = vmatpush.msra.mxu0 %v1275
      %1334 = vmatpush.msra.mxu0 %v1273
      %1335 = vmatpush.msra.mxu0 %v1271
      %1336 = vmatpush.msra.mxu0 %v1269
      %1337 = vmatpush.msra.mxu0 %v1267
      %1338 = vmatpush.msra.mxu0 %v1265
      %1339 = vmatpush.msra.mxu0 %v1263
      %1340 = vmatpush.msra.mxu0 %v1261
      %1341 = vmatmul.f32.gmra.mxu0 %v1239
      %v1342 = vpop.f32.mrf.mxu0
      %v1343 = vadd.f32 0.0, %v1342
      %1344 = vdwg.mxu0
      %1345 = vmatpush.msra.mxu0 %v1323
      %1346 = vmatpush.msra.mxu0 %v1321
      %1347 = vmatpush.msra.mxu0 %v1319
      %1348 = vmatpush.msra.mxu0 %v1317
      %1349 = vmatpush.msra.mxu0 %v1315
      %1350 = vmatpush.msra.mxu0 %v1313
      %1351 = vmatpush.msra.mxu0 %v1311
      %1352 = vmatpush.msra.mxu0 %v1309
      %1353 = vmatpush.msra.mxu0 %v1307
      %1354 = vmatpush.msra.mxu0 %v1305
      %1355 = vmatpush.msra.mxu0 %v1303
      %1356 = vmatpush.msra.mxu0 %v1301
      %1357 = vmatpush.msra.mxu0 %v1299
      %1358 = vmatpush.msra.mxu0 %v1297
      %1359 = vmatpush.msra.mxu0 %v1295
      %1360 = vmatpush.msra.mxu0 %v1293
      %1361 = vmatmul.f32.gmra.mxu0 %v1259
      %v1362 = vpop.f32.mrf.mxu0
      %v1363 = vadd.f32 %v1343, %v1362
      %1364 = vdwg.mxu0
      %1365 = vmatpush.msra.mxu0 %v1292
      %1366 = vmatpush.msra.mxu0 %v1290
      %1367 = vmatpush.msra.mxu0 %v1288
      %1368 = vmatpush.msra.mxu0 %v1286
      %1369 = vmatpush.msra.mxu0 %v1284
      %1370 = vmatpush.msra.mxu0 %v1282
      %1371 = vmatpush.msra.mxu0 %v1280
      %1372 = vmatpush.msra.mxu0 %v1278
      %1373 = vmatpush.msra.mxu0 %v1276
      %1374 = vmatpush.msra.mxu0 %v1274
      %1375 = vmatpush.msra.mxu0 %v1272
      %1376 = vmatpush.msra.mxu0 %v1270
      %1377 = vmatpush.msra.mxu0 %v1268
      %1378 = vmatpush.msra.mxu0 %v1266
      %1379 = vmatpush.msra.mxu0 %v1264
      %1380 = vmatpush.msra.mxu0 %v1262
      %1381 = vmatmul.f32.gmra.mxu0 %v1239
      %v1382 = vpop.f32.mrf.mxu0
      %v1383 = vadd.f32 0.0, %v1382
      %1384 = vdwg.mxu0
      %1385 = vmatpush.msra.mxu0 %v1324
      %1386 = vmatpush.msra.mxu0 %v1322
      %1387 = vmatpush.msra.mxu0 %v1320
      %1388 = vmatpush.msra.mxu0 %v1318
      %1389 = vmatpush.msra.mxu0 %v1316
      %1390 = vmatpush.msra.mxu0 %v1314
      %1391 = vmatpush.msra.mxu0 %v1312
      %1392 = vmatpush.msra.mxu0 %v1310
      %1393 = vmatpush.msra.mxu0 %v1308
      %1394 = vmatpush.msra.mxu0 %v1306
      %1395 = vmatpush.msra.mxu0 %v1304
      %1396 = vmatpush.msra.mxu0 %v1302
      %1397 = vmatpush.msra.mxu0 %v1300
      %1398 = vmatpush.msra.mxu0 %v1298
      %1399 = vmatpush.msra.mxu0 %v1296
      %1400 = vmatpush.msra.mxu0 %v1294
      %1401 = vmatmul.f32.gmra.mxu0 %v1259
      %v1402 = vpop.f32.mrf.mxu0
      %v1403 = vadd.f32 %v1383, %v1402
      %1404 = vdwg.mxu0
      %v1405 = vadd.f32 %v1216, %v1363
      %v1406 = vadd.f32 %v1217, %v1403
      %v1407 = vrot.slane %v447, 4
      %v1408 = vsel %vm346, %v1407, 0
      %1410 = vmatpush.msra.mxu0 0.0
      %1411 = vmatpush.msra.mxu0 0.0
      %1412 = vmatpush.msra.mxu0 0.0
      %1413 = vmatpush.msra.mxu0 0.0
      %1414 = vmatpush.msra.mxu0 0.0
      %1415 = vmatpush.msra.mxu0 0.0
      %1416 = vmatpush.msra.mxu0 0.0
      %1417 = vmatpush.msra.mxu0 0.0
      %1418 = vmatpush.msra.mxu0 0.0
      %1419 = vmatpush.msra.mxu0 0.0
      %1420 = vmatpush.msra.mxu0 0.0
      %1421 = vmatpush.msra.mxu0 0.0
      %1422 = vmatpush.msra.mxu0 0.0
      %1423 = vmatpush.msra.mxu0 0.0
      %1424 = vmatpush.msra.mxu0 0.0
      %1425 = vmatpush.msra.mxu0 %v455
      %1426 = vmatmul.f32.gmra.mxu0 %v1408
      %v1427 = vpop.f32.mrf.mxu0
      %v1428 = vadd.f32 0.0, %v1427
      %1429 = vdwg.mxu0
      %1430 = vmatpush.msra.mxu0 0.0
      %1431 = vmatpush.msra.mxu0 0.0
      %1432 = vmatpush.msra.mxu0 0.0
      %1433 = vmatpush.msra.mxu0 0.0
      %1434 = vmatpush.msra.mxu0 0.0
      %1435 = vmatpush.msra.mxu0 0.0
      %1436 = vmatpush.msra.mxu0 0.0
      %1437 = vmatpush.msra.mxu0 0.0
      %1438 = vmatpush.msra.mxu0 0.0
      %1439 = vmatpush.msra.mxu0 0.0
      %1440 = vmatpush.msra.mxu0 0.0
      %1441 = vmatpush.msra.mxu0 0.0
      %1442 = vmatpush.msra.mxu0 0.0
      %1443 = vmatpush.msra.mxu0 0.0
      %1444 = vmatpush.msra.mxu0 0.0
      %1445 = vmatpush.msra.mxu0 %v458
      %1446 = vmatmul.f32.gmra.mxu0 %v1408
      %v1447 = vpop.f32.mrf.mxu0
      %v1448 = vadd.f32 0.0, %v1447
      %1449 = vdwg.mxu0
      %v1450 = vld [vmem:[%s4 + $0xa00] sm:$0xff]
      %v1451 = vld [vmem:[%s4 + $0xa08] sm:$0xff]
      %v1452 = vld [vmem:[%s4 + $0xa10] sm:$0xff]
      %v1453 = vld [vmem:[%s4 + $0xa18] sm:$0xff]
      %v1454 = vld [vmem:[%s4 + $0xa20] sm:$0xff]
      %v1455 = vld [vmem:[%s4 + $0xa28] sm:$0xff]
      %v1456 = vld [vmem:[%s4 + $0xa30] sm:$0xff]
      %v1457 = vld [vmem:[%s4 + $0xa38] sm:$0xff]
      %v1458 = vld [vmem:[%s4 + $0xa40] sm:$0xff]
      %v1459 = vld [vmem:[%s4 + $0xa48] sm:$0xff]
      %v1460 = vld [vmem:[%s4 + $0xa50] sm:$0xff]
      %v1461 = vld [vmem:[%s4 + $0xa58] sm:$0xff]
      %v1462 = vld [vmem:[%s4 + $0xa60] sm:$0xff]
      %v1463 = vld [vmem:[%s4 + $0xa68] sm:$0xff]
      %v1464 = vld [vmem:[%s4 + $0xa70] sm:$0xff]
      %v1465 = vld [vmem:[%s4 + $0xa78] sm:$0xff]
      %v1466 = vld [vmem:[%s4 + $0xa80] sm:$0xff]
      %v1467 = vld [vmem:[%s4 + $0xa88] sm:$0xff]
      %v1468 = vld [vmem:[%s4 + $0xa90] sm:$0xff]
      %v1469 = vld [vmem:[%s4 + $0xa98] sm:$0xff]
      %v1470 = vld [vmem:[%s4 + $0xaa0] sm:$0xff]
      %v1471 = vld [vmem:[%s4 + $0xaa8] sm:$0xff]
      %v1472 = vld [vmem:[%s4 + $0xab0] sm:$0xff]
      %v1473 = vld [vmem:[%s4 + $0xab8] sm:$0xff]
      %v1474 = vld [vmem:[%s4 + $0xac0] sm:$0xff]
      %v1475 = vld [vmem:[%s4 + $0xac8] sm:$0xff]
      %v1476 = vld [vmem:[%s4 + $0xad0] sm:$0xff]
      %v1477 = vld [vmem:[%s4 + $0xad8] sm:$0xff]
      %v1478 = vld [vmem:[%s4 + $0xae0] sm:$0xff]
      %v1479 = vld [vmem:[%s4 + $0xae8] sm:$0xff]
      %v1480 = vld [vmem:[%s4 + $0xaf0] sm:$0xff]
      %v1481 = vld [vmem:[%s4 + $0xaf8] sm:$0xff]
      %v1482 = vld [vmem:[%s4 + $0xb00] sm:$0xff]
      %v1483 = vld [vmem:[%s4 + $0xb08] sm:$0xff]
      %v1484 = vld [vmem:[%s4 + $0xb10] sm:$0xff]
      %v1485 = vld [vmem:[%s4 + $0xb18] sm:$0xff]
      %v1486 = vld [vmem:[%s4 + $0xb20] sm:$0xff]
      %v1487 = vld [vmem:[%s4 + $0xb28] sm:$0xff]
      %v1488 = vld [vmem:[%s4 + $0xb30] sm:$0xff]
      %v1489 = vld [vmem:[%s4 + $0xb38] sm:$0xff]
      %v1490 = vld [vmem:[%s4 + $0xb40] sm:$0xff]
      %v1491 = vld [vmem:[%s4 + $0xb48] sm:$0xff]
      %v1492 = vld [vmem:[%s4 + $0xb50] sm:$0xff]
      %v1493 = vld [vmem:[%s4 + $0xb58] sm:$0xff]
      %v1494 = vld [vmem:[%s4 + $0xb60] sm:$0xff]
      %v1495 = vld [vmem:[%s4 + $0xb68] sm:$0xff]
      %v1496 = vld [vmem:[%s4 + $0xb70] sm:$0xff]
      %v1497 = vld [vmem:[%s4 + $0xb78] sm:$0xff]
      %v1498 = vld [vmem:[%s4 + $0xb80] sm:$0xff]
      %v1499 = vld [vmem:[%s4 + $0xb88] sm:$0xff]
      %v1500 = vld [vmem:[%s4 + $0xb90] sm:$0xff]
      %v1501 = vld [vmem:[%s4 + $0xb98] sm:$0xff]
      %v1502 = vld [vmem:[%s4 + $0xba0] sm:$0xff]
      %v1503 = vld [vmem:[%s4 + $0xba8] sm:$0xff]
      %v1504 = vld [vmem:[%s4 + $0xbb0] sm:$0xff]
      %v1505 = vld [vmem:[%s4 + $0xbb8] sm:$0xff]
      %v1506 = vld [vmem:[%s4 + $0xbc0] sm:$0xff]
      %v1507 = vld [vmem:[%s4 + $0xbc8] sm:$0xff]
      %v1508 = vld [vmem:[%s4 + $0xbd0] sm:$0xff]
      %v1509 = vld [vmem:[%s4 + $0xbd8] sm:$0xff]
      %v1510 = vld [vmem:[%s4 + $0xbe0] sm:$0xff]
      %v1511 = vld [vmem:[%s4 + $0xbe8] sm:$0xff]
      %v1512 = vld [vmem:[%s4 + $0xbf0] sm:$0xff]
      %v1513 = vld [vmem:[%s4 + $0xbf8] sm:$0xff]
      %1514 = vmatpush.msra.mxu0 %v1480
      %1515 = vmatpush.msra.mxu0 %v1478
      %1516 = vmatpush.msra.mxu0 %v1476
      %1517 = vmatpush.msra.mxu0 %v1474
      %1518 = vmatpush.msra.mxu0 %v1472
      %1519 = vmatpush.msra.mxu0 %v1470
      %1520 = vmatpush.msra.mxu0 %v1468
      %1521 = vmatpush.msra.mxu0 %v1466
      %1522 = vmatpush.msra.mxu0 %v1464
      %1523 = vmatpush.msra.mxu0 %v1462
      %1524 = vmatpush.msra.mxu0 %v1460
      %1525 = vmatpush.msra.mxu0 %v1458
      %1526 = vmatpush.msra.mxu0 %v1456
      %1527 = vmatpush.msra.mxu0 %v1454
      %1528 = vmatpush.msra.mxu0 %v1452
      %1529 = vmatpush.msra.mxu0 %v1450
      %1530 = vmatmul.f32.gmra.mxu0 %v1428
      %v1531 = vpop.f32.mrf.mxu0
      %v1532 = vadd.f32 0.0, %v1531
      %1533 = vdwg.mxu0
      %1534 = vmatpush.msra.mxu0 %v1512
      %1535 = vmatpush.msra.mxu0 %v1510
      %1536 = vmatpush.msra.mxu0 %v1508
      %1537 = vmatpush.msra.mxu0 %v1506
      %1538 = vmatpush.msra.mxu0 %v1504
      %1539 = vmatpush.msra.mxu0 %v1502
      %1540 = vmatpush.msra.mxu0 %v1500
      %1541 = vmatpush.msra.mxu0 %v1498
      %1542 = vmatpush.msra.mxu0 %v1496
      %1543 = vmatpush.msra.mxu0 %v1494
      %1544 = vmatpush.msra.mxu0 %v1492
      %1545 = vmatpush.msra.mxu0 %v1490
      %1546 = vmatpush.msra.mxu0 %v1488
      %1547 = vmatpush.msra.mxu0 %v1486
      %1548 = vmatpush.msra.mxu0 %v1484
      %1549 = vmatpush.msra.mxu0 %v1482
      %1550 = vmatmul.f32.gmra.mxu0 %v1448
      %v1551 = vpop.f32.mrf.mxu0
      %v1552 = vadd.f32 %v1532, %v1551
      %1553 = vdwg.mxu0
      %1554 = vmatpush.msra.mxu0 %v1481
      %1555 = vmatpush.msra.mxu0 %v1479
      %1556 = vmatpush.msra.mxu0 %v1477
      %1557 = vmatpush.msra.mxu0 %v1475
      %1558 = vmatpush.msra.mxu0 %v1473
      %1559 = vmatpush.msra.mxu0 %v1471
      %1560 = vmatpush.msra.mxu0 %v1469
      %1561 = vmatpush.msra.mxu0 %v1467
      %1562 = vmatpush.msra.mxu0 %v1465
      %1563 = vmatpush.msra.mxu0 %v1463
      %1564 = vmatpush.msra.mxu0 %v1461
      %1565 = vmatpush.msra.mxu0 %v1459
      %1566 = vmatpush.msra.mxu0 %v1457
      %1567 = vmatpush.msra.mxu0 %v1455
      %1568 = vmatpush.msra.mxu0 %v1453
      %1569 = vmatpush.msra.mxu0 %v1451
      %1570 = vmatmul.f32.gmra.mxu0 %v1428
      %v1571 = vpop.f32.mrf.mxu0
      %v1572 = vadd.f32 0.0, %v1571
      %1573 = vdwg.mxu0
      %1574 = vmatpush.msra.mxu0 %v1513
      %1575 = vmatpush.msra.mxu0 %v1511
      %1576 = vmatpush.msra.mxu0 %v1509
      %1577 = vmatpush.msra.mxu0 %v1507
      %1578 = vmatpush.msra.mxu0 %v1505
      %1579 = vmatpush.msra.mxu0 %v1503
      %1580 = vmatpush.msra.mxu0 %v1501
      %1581 = vmatpush.msra.mxu0 %v1499
      %1582 = vmatpush.msra.mxu0 %v1497
      %1583 = vmatpush.msra.mxu0 %v1495
      %1584 = vmatpush.msra.mxu0 %v1493
      %1585 = vmatpush.msra.mxu0 %v1491
      %1586 = vmatpush.msra.mxu0 %v1489
      %1587 = vmatpush.msra.mxu0 %v1487
      %1588 = vmatpush.msra.mxu0 %v1485
      %1589 = vmatpush.msra.mxu0 %v1483
      %1590 = vmatmul.f32.gmra.mxu0 %v1448
      %v1591 = vpop.f32.mrf.mxu0
      %v1592 = vadd.f32 %v1572, %v1591
      %1593 = vdwg.mxu0
      %v1594 = vadd.f32 %v1405, %v1552
      %v1595 = vadd.f32 %v1406, %v1592
      %v1597 = vsel %vm346, %v448, 0
      %1599 = vmatpush.msra.mxu0 0.0
      %1600 = vmatpush.msra.mxu0 0.0
      %1601 = vmatpush.msra.mxu0 0.0
      %1602 = vmatpush.msra.mxu0 0.0
      %1603 = vmatpush.msra.mxu0 0.0
      %1604 = vmatpush.msra.mxu0 0.0
      %1605 = vmatpush.msra.mxu0 0.0
      %1606 = vmatpush.msra.mxu0 0.0
      %1607 = vmatpush.msra.mxu0 0.0
      %1608 = vmatpush.msra.mxu0 0.0
      %1609 = vmatpush.msra.mxu0 0.0
      %1610 = vmatpush.msra.mxu0 0.0
      %1611 = vmatpush.msra.mxu0 0.0
      %1612 = vmatpush.msra.mxu0 0.0
      %1613 = vmatpush.msra.mxu0 0.0
      %1614 = vmatpush.msra.mxu0 %v455
      %1615 = vmatmul.f32.gmra.mxu0 %v1597
      %v1616 = vpop.f32.mrf.mxu0
      %v1617 = vadd.f32 0.0, %v1616
      %1618 = vdwg.mxu0
      %1619 = vmatpush.msra.mxu0 0.0
      %1620 = vmatpush.msra.mxu0 0.0
      %1621 = vmatpush.msra.mxu0 0.0
      %1622 = vmatpush.msra.mxu0 0.0
      %1623 = vmatpush.msra.mxu0 0.0
      %1624 = vmatpush.msra.mxu0 0.0
      %1625 = vmatpush.msra.mxu0 0.0
      %1626 = vmatpush.msra.mxu0 0.0
      %1627 = vmatpush.msra.mxu0 0.0
      %1628 = vmatpush.msra.mxu0 0.0
      %1629 = vmatpush.msra.mxu0 0.0
      %1630 = vmatpush.msra.mxu0 0.0
      %1631 = vmatpush.msra.mxu0 0.0
      %1632 = vmatpush.msra.mxu0 0.0
      %1633 = vmatpush.msra.mxu0 0.0
      %1634 = vmatpush.msra.mxu0 %v458
      %1635 = vmatmul.f32.gmra.mxu0 %v1597
      %v1636 = vpop.f32.mrf.mxu0
      %v1637 = vadd.f32 0.0, %v1636
      %1638 = vdwg.mxu0
      %v1639 = vld [vmem:[%s4 + $0xc00] sm:$0xff]
      %v1640 = vld [vmem:[%s4 + $0xc08] sm:$0xff]
      %v1641 = vld [vmem:[%s4 + $0xc10] sm:$0xff]
      %v1642 = vld [vmem:[%s4 + $0xc18] sm:$0xff]
      %v1643 = vld [vmem:[%s4 + $0xc20] sm:$0xff]
      %v1644 = vld [vmem:[%s4 + $0xc28] sm:$0xff]
      %v1645 = vld [vmem:[%s4 + $0xc30] sm:$0xff]
      %v1646 = vld [vmem:[%s4 + $0xc38] sm:$0xff]
      %v1647 = vld [vmem:[%s4 + $0xc40] sm:$0xff]
      %v1648 = vld [vmem:[%s4 + $0xc48] sm:$0xff]
      %v1649 = vld [vmem:[%s4 + $0xc50] sm:$0xff]
      %v1650 = vld [vmem:[%s4 + $0xc58] sm:$0xff]
      %v1651 = vld [vmem:[%s4 + $0xc60] sm:$0xff]
      %v1652 = vld [vmem:[%s4 + $0xc68] sm:$0xff]
      %v1653 = vld [vmem:[%s4 + $0xc70] sm:$0xff]
      %v1654 = vld [vmem:[%s4 + $0xc78] sm:$0xff]
      %v1655 = vld [vmem:[%s4 + $0xc80] sm:$0xff]
      %v1656 = vld [vmem:[%s4 + $0xc88] sm:$0xff]
      %v1657 = vld [vmem:[%s4 + $0xc90] sm:$0xff]
      %v1658 = vld [vmem:[%s4 + $0xc98] sm:$0xff]
      %v1659 = vld [vmem:[%s4 + $0xca0] sm:$0xff]
      %v1660 = vld [vmem:[%s4 + $0xca8] sm:$0xff]
      %v1661 = vld [vmem:[%s4 + $0xcb0] sm:$0xff]
      %v1662 = vld [vmem:[%s4 + $0xcb8] sm:$0xff]
      %v1663 = vld [vmem:[%s4 + $0xcc0] sm:$0xff]
      %v1664 = vld [vmem:[%s4 + $0xcc8] sm:$0xff]
      %v1665 = vld [vmem:[%s4 + $0xcd0] sm:$0xff]
      %v1666 = vld [vmem:[%s4 + $0xcd8] sm:$0xff]
      %v1667 = vld [vmem:[%s4 + $0xce0] sm:$0xff]
      %v1668 = vld [vmem:[%s4 + $0xce8] sm:$0xff]
      %v1669 = vld [vmem:[%s4 + $0xcf0] sm:$0xff]
      %v1670 = vld [vmem:[%s4 + $0xcf8] sm:$0xff]
      %v1671 = vld [vmem:[%s4 + $0xd00] sm:$0xff]
      %v1672 = vld [vmem:[%s4 + $0xd08] sm:$0xff]
      %v1673 = vld [vmem:[%s4 + $0xd10] sm:$0xff]
      %v1674 = vld [vmem:[%s4 + $0xd18] sm:$0xff]
      %v1675 = vld [vmem:[%s4 + $0xd20] sm:$0xff]
      %v1676 = vld [vmem:[%s4 + $0xd28] sm:$0xff]
      %v1677 = vld [vmem:[%s4 + $0xd30] sm:$0xff]
      %v1678 = vld [vmem:[%s4 + $0xd38] sm:$0xff]
      %v1679 = vld [vmem:[%s4 + $0xd40] sm:$0xff]
      %v1680 = vld [vmem:[%s4 + $0xd48] sm:$0xff]
      %v1681 = vld [vmem:[%s4 + $0xd50] sm:$0xff]
      %v1682 = vld [vmem:[%s4 + $0xd58] sm:$0xff]
      %v1683 = vld [vmem:[%s4 + $0xd60] sm:$0xff]
      %v1684 = vld [vmem:[%s4 + $0xd68] sm:$0xff]
      %v1685 = vld [vmem:[%s4 + $0xd70] sm:$0xff]
      %v1686 = vld [vmem:[%s4 + $0xd78] sm:$0xff]
      %v1687 = vld [vmem:[%s4 + $0xd80] sm:$0xff]
      %v1688 = vld [vmem:[%s4 + $0xd88] sm:$0xff]
      %v1689 = vld [vmem:[%s4 + $0xd90] sm:$0xff]
      %v1690 = vld [vmem:[%s4 + $0xd98] sm:$0xff]
      %v1691 = vld [vmem:[%s4 + $0xda0] sm:$0xff]
      %v1692 = vld [vmem:[%s4 + $0xda8] sm:$0xff]
      %v1693 = vld [vmem:[%s4 + $0xdb0] sm:$0xff]
      %v1694 = vld [vmem:[%s4 + $0xdb8] sm:$0xff]
      %v1695 = vld [vmem:[%s4 + $0xdc0] sm:$0xff]
      %v1696 = vld [vmem:[%s4 + $0xdc8] sm:$0xff]
      %v1697 = vld [vmem:[%s4 + $0xdd0] sm:$0xff]
      %v1698 = vld [vmem:[%s4 + $0xdd8] sm:$0xff]
      %v1699 = vld [vmem:[%s4 + $0xde0] sm:$0xff]
      %v1700 = vld [vmem:[%s4 + $0xde8] sm:$0xff]
      %v1701 = vld [vmem:[%s4 + $0xdf0] sm:$0xff]
      %v1702 = vld [vmem:[%s4 + $0xdf8] sm:$0xff]
      %1703 = vmatpush.msra.mxu0 %v1669
      %1704 = vmatpush.msra.mxu0 %v1667
      %1705 = vmatpush.msra.mxu0 %v1665
      %1706 = vmatpush.msra.mxu0 %v1663
      %1707 = vmatpush.msra.mxu0 %v1661
      %1708 = vmatpush.msra.mxu0 %v1659
      %1709 = vmatpush.msra.mxu0 %v1657
      %1710 = vmatpush.msra.mxu0 %v1655
      %1711 = vmatpush.msra.mxu0 %v1653
      %1712 = vmatpush.msra.mxu0 %v1651
      %1713 = vmatpush.msra.mxu0 %v1649
      %1714 = vmatpush.msra.mxu0 %v1647
      %1715 = vmatpush.msra.mxu0 %v1645
      %1716 = vmatpush.msra.mxu0 %v1643
      %1717 = vmatpush.msra.mxu0 %v1641
      %1718 = vmatpush.msra.mxu0 %v1639
      %1719 = vmatmul.f32.gmra.mxu0 %v1617
      %v1720 = vpop.f32.mrf.mxu0
      %v1721 = vadd.f32 0.0, %v1720
      %1722 = vdwg.mxu0
      %1723 = vmatpush.msra.mxu0 %v1701
      %1724 = vmatpush.msra.mxu0 %v1699
      %1725 = vmatpush.msra.mxu0 %v1697
      %1726 = vmatpush.msra.mxu0 %v1695
      %1727 = vmatpush.msra.mxu0 %v1693
      %1728 = vmatpush.msra.mxu0 %v1691
      %1729 = vmatpush.msra.mxu0 %v1689
      %1730 = vmatpush.msra.mxu0 %v1687
      %1731 = vmatpush.msra.mxu0 %v1685
      %1732 = vmatpush.msra.mxu0 %v1683
      %1733 = vmatpush.msra.mxu0 %v1681
      %1734 = vmatpush.msra.mxu0 %v1679
      %1735 = vmatpush.msra.mxu0 %v1677
      %1736 = vmatpush.msra.mxu0 %v1675
      %1737 = vmatpush.msra.mxu0 %v1673
      %1738 = vmatpush.msra.mxu0 %v1671
      %1739 = vmatmul.f32.gmra.mxu0 %v1637
      %v1740 = vpop.f32.mrf.mxu0
      %v1741 = vadd.f32 %v1721, %v1740
      %1742 = vdwg.mxu0
      %1743 = vmatpush.msra.mxu0 %v1670
      %1744 = vmatpush.msra.mxu0 %v1668
      %1745 = vmatpush.msra.mxu0 %v1666
      %1746 = vmatpush.msra.mxu0 %v1664
      %1747 = vmatpush.msra.mxu0 %v1662
      %1748 = vmatpush.msra.mxu0 %v1660
      %1749 = vmatpush.msra.mxu0 %v1658
      %1750 = vmatpush.msra.mxu0 %v1656
      %1751 = vmatpush.msra.mxu0 %v1654
      %1752 = vmatpush.msra.mxu0 %v1652
      %1753 = vmatpush.msra.mxu0 %v1650
      %1754 = vmatpush.msra.mxu0 %v1648
      %1755 = vmatpush.msra.mxu0 %v1646
      %1756 = vmatpush.msra.mxu0 %v1644
      %1757 = vmatpush.msra.mxu0 %v1642
      %1758 = vmatpush.msra.mxu0 %v1640
      %1759 = vmatmul.f32.gmra.mxu0 %v1617
      %v1760 = vpop.f32.mrf.mxu0
      %v1761 = vadd.f32 0.0, %v1760
      %1762 = vdwg.mxu0
      %1763 = vmatpush.msra.mxu0 %v1702
      %1764 = vmatpush.msra.mxu0 %v1700
      %1765 = vmatpush.msra.mxu0 %v1698
      %1766 = vmatpush.msra.mxu0 %v1696
      %1767 = vmatpush.msra.mxu0 %v1694
      %1768 = vmatpush.msra.mxu0 %v1692
      %1769 = vmatpush.msra.mxu0 %v1690
      %1770 = vmatpush.msra.mxu0 %v1688
      %1771 = vmatpush.msra.mxu0 %v1686
      %1772 = vmatpush.msra.mxu0 %v1684
      %1773 = vmatpush.msra.mxu0 %v1682
      %1774 = vmatpush.msra.mxu0 %v1680
      %1775 = vmatpush.msra.mxu0 %v1678
      %1776 = vmatpush.msra.mxu0 %v1676
      %1777 = vmatpush.msra.mxu0 %v1674
      %1778 = vmatpush.msra.mxu0 %v1672
      %1779 = vmatmul.f32.gmra.mxu0 %v1637
      %v1780 = vpop.f32.mrf.mxu0
      %v1781 = vadd.f32 %v1761, %v1780
      %1782 = vdwg.mxu0
      %v1783 = vadd.f32 %v1594, %v1741
      %v1784 = vadd.f32 %v1595, %v1781
      %v1785 = vrot.slane %v448, 4
      %v1786 = vsel %vm346, %v1785, 0
      %1788 = vmatpush.msra.mxu0 0.0
      %1789 = vmatpush.msra.mxu0 0.0
      %1790 = vmatpush.msra.mxu0 0.0
      %1791 = vmatpush.msra.mxu0 0.0
      %1792 = vmatpush.msra.mxu0 0.0
      %1793 = vmatpush.msra.mxu0 0.0
      %1794 = vmatpush.msra.mxu0 0.0
      %1795 = vmatpush.msra.mxu0 0.0
      %1796 = vmatpush.msra.mxu0 0.0
      %1797 = vmatpush.msra.mxu0 0.0
      %1798 = vmatpush.msra.mxu0 0.0
      %1799 = vmatpush.msra.mxu0 0.0
      %1800 = vmatpush.msra.mxu0 0.0
      %1801 = vmatpush.msra.mxu0 0.0
      %1802 = vmatpush.msra.mxu0 0.0
      %1803 = vmatpush.msra.mxu0 %v455
      %1804 = vmatmul.f32.gmra.mxu0 %v1786
      %v1805 = vpop.f32.mrf.mxu0
      %v1806 = vadd.f32 0.0, %v1805
      %1807 = vdwg.mxu0
      %1808 = vmatpush.msra.mxu0 0.0
      %1809 = vmatpush.msra.mxu0 0.0
      %1810 = vmatpush.msra.mxu0 0.0
      %1811 = vmatpush.msra.mxu0 0.0
      %1812 = vmatpush.msra.mxu0 0.0
      %1813 = vmatpush.msra.mxu0 0.0
      %1814 = vmatpush.msra.mxu0 0.0
      %1815 = vmatpush.msra.mxu0 0.0
      %1816 = vmatpush.msra.mxu0 0.0
      %1817 = vmatpush.msra.mxu0 0.0
      %1818 = vmatpush.msra.mxu0 0.0
      %1819 = vmatpush.msra.mxu0 0.0
      %1820 = vmatpush.msra.mxu0 0.0
      %1821 = vmatpush.msra.mxu0 0.0
      %1822 = vmatpush.msra.mxu0 0.0
      %1823 = vmatpush.msra.mxu0 %v458
      %1824 = vmatmul.f32.gmra.mxu0 %v1786
      %v1825 = vpop.f32.mrf.mxu0
      %v1826 = vadd.f32 0.0, %v1825
      %1827 = vdwg.mxu0
      %v1828 = vld [vmem:[%s4 + $0xe00] sm:$0xff]
      %v1829 = vld [vmem:[%s4 + $0xe08] sm:$0xff]
      %v1830 = vld [vmem:[%s4 + $0xe10] sm:$0xff]
      %v1831 = vld [vmem:[%s4 + $0xe18] sm:$0xff]
      %v1832 = vld [vmem:[%s4 + $0xe20] sm:$0xff]
      %v1833 = vld [vmem:[%s4 + $0xe28] sm:$0xff]
      %v1834 = vld [vmem:[%s4 + $0xe30] sm:$0xff]
      %v1835 = vld [vmem:[%s4 + $0xe38] sm:$0xff]
      %v1836 = vld [vmem:[%s4 + $0xe40] sm:$0xff]
      %v1837 = vld [vmem:[%s4 + $0xe48] sm:$0xff]
      %v1838 = vld [vmem:[%s4 + $0xe50] sm:$0xff]
      %v1839 = vld [vmem:[%s4 + $0xe58] sm:$0xff]
      %v1840 = vld [vmem:[%s4 + $0xe60] sm:$0xff]
      %v1841 = vld [vmem:[%s4 + $0xe68] sm:$0xff]
      %v1842 = vld [vmem:[%s4 + $0xe70] sm:$0xff]
      %v1843 = vld [vmem:[%s4 + $0xe78] sm:$0xff]
      %v1844 = vld [vmem:[%s4 + $0xe80] sm:$0xff]
      %v1845 = vld [vmem:[%s4 + $0xe88] sm:$0xff]
      %v1846 = vld [vmem:[%s4 + $0xe90] sm:$0xff]
      %v1847 = vld [vmem:[%s4 + $0xe98] sm:$0xff]
      %v1848 = vld [vmem:[%s4 + $0xea0] sm:$0xff]
      %v1849 = vld [vmem:[%s4 + $0xea8] sm:$0xff]
      %v1850 = vld [vmem:[%s4 + $0xeb0] sm:$0xff]
      %v1851 = vld [vmem:[%s4 + $0xeb8] sm:$0xff]
      %v1852 = vld [vmem:[%s4 + $0xec0] sm:$0xff]
      %v1853 = vld [vmem:[%s4 + $0xec8] sm:$0xff]
      %v1854 = vld [vmem:[%s4 + $0xed0] sm:$0xff]
      %v1855 = vld [vmem:[%s4 + $0xed8] sm:$0xff]
      %v1856 = vld [vmem:[%s4 + $0xee0] sm:$0xff]
      %v1857 = vld [vmem:[%s4 + $0xee8] sm:$0xff]
      %v1858 = vld [vmem:[%s4 + $0xef0] sm:$0xff]
      %v1859 = vld [vmem:[%s4 + $0xef8] sm:$0xff]
      %v1860 = vld [vmem:[%s4 + $0xf00] sm:$0xff]
      %v1861 = vld [vmem:[%s4 + $0xf08] sm:$0xff]
      %v1862 = vld [vmem:[%s4 + $0xf10] sm:$0xff]
      %v1863 = vld [vmem:[%s4 + $0xf18] sm:$0xff]
      %v1864 = vld [vmem:[%s4 + $0xf20] sm:$0xff]
      %v1865 = vld [vmem:[%s4 + $0xf28] sm:$0xff]
      %v1866 = vld [vmem:[%s4 + $0xf30] sm:$0xff]
      %v1867 = vld [vmem:[%s4 + $0xf38] sm:$0xff]
      %v1868 = vld [vmem:[%s4 + $0xf40] sm:$0xff]
      %v1869 = vld [vmem:[%s4 + $0xf48] sm:$0xff]
      %v1870 = vld [vmem:[%s4 + $0xf50] sm:$0xff]
      %v1871 = vld [vmem:[%s4 + $0xf58] sm:$0xff]
      %v1872 = vld [vmem:[%s4 + $0xf60] sm:$0xff]
      %v1873 = vld [vmem:[%s4 + $0xf68] sm:$0xff]
      %v1874 = vld [vmem:[%s4 + $0xf70] sm:$0xff]
      %v1875 = vld [vmem:[%s4 + $0xf78] sm:$0xff]
      %v1876 = vld [vmem:[%s4 + $0xf80] sm:$0xff]
      %v1877 = vld [vmem:[%s4 + $0xf88] sm:$0xff]
      %v1878 = vld [vmem:[%s4 + $0xf90] sm:$0xff]
      %v1879 = vld [vmem:[%s4 + $0xf98] sm:$0xff]
      %v1880 = vld [vmem:[%s4 + $0xfa0] sm:$0xff]
      %v1881 = vld [vmem:[%s4 + $0xfa8] sm:$0xff]
      %v1882 = vld [vmem:[%s4 + $0xfb0] sm:$0xff]
      %v1883 = vld [vmem:[%s4 + $0xfb8] sm:$0xff]
      %v1884 = vld [vmem:[%s4 + $0xfc0] sm:$0xff]
      %v1885 = vld [vmem:[%s4 + $0xfc8] sm:$0xff]
      %v1886 = vld [vmem:[%s4 + $0xfd0] sm:$0xff]
      %v1887 = vld [vmem:[%s4 + $0xfd8] sm:$0xff]
      %v1888 = vld [vmem:[%s4 + $0xfe0] sm:$0xff]
      %v1889 = vld [vmem:[%s4 + $0xfe8] sm:$0xff]
      %v1890 = vld [vmem:[%s4 + $0xff0] sm:$0xff]
      %v1891 = vld [vmem:[%s4 + $0xff8] sm:$0xff]
      %1892 = vmatpush.msra.mxu0 %v1858
      %1893 = vmatpush.msra.mxu0 %v1856
      %1894 = vmatpush.msra.mxu0 %v1854
      %1895 = vmatpush.msra.mxu0 %v1852
      %1896 = vmatpush.msra.mxu0 %v1850
      %1897 = vmatpush.msra.mxu0 %v1848
      %1898 = vmatpush.msra.mxu0 %v1846
      %1899 = vmatpush.msra.mxu0 %v1844
      %1900 = vmatpush.msra.mxu0 %v1842
      %1901 = vmatpush.msra.mxu0 %v1840
      %1902 = vmatpush.msra.mxu0 %v1838
      %1903 = vmatpush.msra.mxu0 %v1836
      %1904 = vmatpush.msra.mxu0 %v1834
      %1905 = vmatpush.msra.mxu0 %v1832
      %1906 = vmatpush.msra.mxu0 %v1830
      %1907 = vmatpush.msra.mxu0 %v1828
      %1908 = vmatmul.f32.gmra.mxu0 %v1806
      %v1909 = vpop.f32.mrf.mxu0
      %v1910 = vadd.f32 0.0, %v1909
      %1911 = vdwg.mxu0
      %1912 = vmatpush.msra.mxu0 %v1890
      %1913 = vmatpush.msra.mxu0 %v1888
      %1914 = vmatpush.msra.mxu0 %v1886
      %1915 = vmatpush.msra.mxu0 %v1884
      %1916 = vmatpush.msra.mxu0 %v1882
      %1917 = vmatpush.msra.mxu0 %v1880
      %1918 = vmatpush.msra.mxu0 %v1878
      %1919 = vmatpush.msra.mxu0 %v1876
      %1920 = vmatpush.msra.mxu0 %v1874
      %1921 = vmatpush.msra.mxu0 %v1872
      %1922 = vmatpush.msra.mxu0 %v1870
      %1923 = vmatpush.msra.mxu0 %v1868
      %1924 = vmatpush.msra.mxu0 %v1866
      %1925 = vmatpush.msra.mxu0 %v1864
      %1926 = vmatpush.msra.mxu0 %v1862
      %1927 = vmatpush.msra.mxu0 %v1860
      %1928 = vmatmul.f32.gmra.mxu0 %v1826
      %v1929 = vpop.f32.mrf.mxu0
      %v1930 = vadd.f32 %v1910, %v1929
      %1931 = vdwg.mxu0
      %1932 = vmatpush.msra.mxu0 %v1859
      %1933 = vmatpush.msra.mxu0 %v1857
      %1934 = vmatpush.msra.mxu0 %v1855
      %1935 = vmatpush.msra.mxu0 %v1853
      %1936 = vmatpush.msra.mxu0 %v1851
      %1937 = vmatpush.msra.mxu0 %v1849
      %1938 = vmatpush.msra.mxu0 %v1847
      %1939 = vmatpush.msra.mxu0 %v1845
      %1940 = vmatpush.msra.mxu0 %v1843
      %1941 = vmatpush.msra.mxu0 %v1841
      %1942 = vmatpush.msra.mxu0 %v1839
      %1943 = vmatpush.msra.mxu0 %v1837
      %1944 = vmatpush.msra.mxu0 %v1835
      %1945 = vmatpush.msra.mxu0 %v1833
      %1946 = vmatpush.msra.mxu0 %v1831
      %1947 = vmatpush.msra.mxu0 %v1829
      %1948 = vmatmul.f32.gmra.mxu0 %v1806
      %v1949 = vpop.f32.mrf.mxu0
      %v1950 = vadd.f32 0.0, %v1949
      %1951 = vdwg.mxu0
      %1952 = vmatpush.msra.mxu0 %v1891
      %1953 = vmatpush.msra.mxu0 %v1889
      %1954 = vmatpush.msra.mxu0 %v1887
      %1955 = vmatpush.msra.mxu0 %v1885
      %1956 = vmatpush.msra.mxu0 %v1883
      %1957 = vmatpush.msra.mxu0 %v1881
      %1958 = vmatpush.msra.mxu0 %v1879
      %1959 = vmatpush.msra.mxu0 %v1877
      %1960 = vmatpush.msra.mxu0 %v1875
      %1961 = vmatpush.msra.mxu0 %v1873
      %1962 = vmatpush.msra.mxu0 %v1871
      %1963 = vmatpush.msra.mxu0 %v1869
      %1964 = vmatpush.msra.mxu0 %v1867
      %1965 = vmatpush.msra.mxu0 %v1865
      %1966 = vmatpush.msra.mxu0 %v1863
      %1967 = vmatpush.msra.mxu0 %v1861
      %1968 = vmatmul.f32.gmra.mxu0 %v1826
      %v1969 = vpop.f32.mrf.mxu0
      %v1970 = vadd.f32 %v1950, %v1969
      %1971 = vdwg.mxu0
      %v1972 = vadd.f32 %v1783, %v1930
      %v1973 = vadd.f32 %v1784, %v1970
      %v1975 = vsel %vm346, %v449, 0
      %1977 = vmatpush.msra.mxu0 0.0
      %1978 = vmatpush.msra.mxu0 0.0
      %1979 = vmatpush.msra.mxu0 0.0
      %1980 = vmatpush.msra.mxu0 0.0
      %1981 = vmatpush.msra.mxu0 0.0
      %1982 = vmatpush.msra.mxu0 0.0
      %1983 = vmatpush.msra.mxu0 0.0
      %1984 = vmatpush.msra.mxu0 0.0
      %1985 = vmatpush.msra.mxu0 0.0
      %1986 = vmatpush.msra.mxu0 0.0
      %1987 = vmatpush.msra.mxu0 0.0
      %1988 = vmatpush.msra.mxu0 0.0
      %1989 = vmatpush.msra.mxu0 0.0
      %1990 = vmatpush.msra.mxu0 0.0
      %1991 = vmatpush.msra.mxu0 0.0
      %1992 = vmatpush.msra.mxu0 %v455
      %1993 = vmatmul.f32.gmra.mxu0 %v1975
      %v1994 = vpop.f32.mrf.mxu0
      %v1995 = vadd.f32 0.0, %v1994
      %1996 = vdwg.mxu0
      %1997 = vmatpush.msra.mxu0 0.0
      %1998 = vmatpush.msra.mxu0 0.0
      %1999 = vmatpush.msra.mxu0 0.0
      %2000 = vmatpush.msra.mxu0 0.0
      %2001 = vmatpush.msra.mxu0 0.0
      %2002 = vmatpush.msra.mxu0 0.0
      %2003 = vmatpush.msra.mxu0 0.0
      %2004 = vmatpush.msra.mxu0 0.0
      %2005 = vmatpush.msra.mxu0 0.0
      %2006 = vmatpush.msra.mxu0 0.0
      %2007 = vmatpush.msra.mxu0 0.0
      %2008 = vmatpush.msra.mxu0 0.0
      %2009 = vmatpush.msra.mxu0 0.0
      %2010 = vmatpush.msra.mxu0 0.0
      %2011 = vmatpush.msra.mxu0 0.0
      %2012 = vmatpush.msra.mxu0 %v458
      %2013 = vmatmul.f32.gmra.mxu0 %v1975
      %v2014 = vpop.f32.mrf.mxu0
      %v2015 = vadd.f32 0.0, %v2014
      %2016 = vdwg.mxu0
      %v2017 = vld [vmem:[%s4 + $0x1000] sm:$0xff]
      %v2018 = vld [vmem:[%s4 + $0x1008] sm:$0xff]
      %v2019 = vld [vmem:[%s4 + $0x1010] sm:$0xff]
      %v2020 = vld [vmem:[%s4 + $0x1018] sm:$0xff]
      %v2021 = vld [vmem:[%s4 + $0x1020] sm:$0xff]
      %v2022 = vld [vmem:[%s4 + $0x1028] sm:$0xff]
      %v2023 = vld [vmem:[%s4 + $0x1030] sm:$0xff]
      %v2024 = vld [vmem:[%s4 + $0x1038] sm:$0xff]
      %v2025 = vld [vmem:[%s4 + $0x1040] sm:$0xff]
      %v2026 = vld [vmem:[%s4 + $0x1048] sm:$0xff]
      %v2027 = vld [vmem:[%s4 + $0x1050] sm:$0xff]
      %v2028 = vld [vmem:[%s4 + $0x1058] sm:$0xff]
      %v2029 = vld [vmem:[%s4 + $0x1060] sm:$0xff]
      %v2030 = vld [vmem:[%s4 + $0x1068] sm:$0xff]
      %v2031 = vld [vmem:[%s4 + $0x1070] sm:$0xff]
      %v2032 = vld [vmem:[%s4 + $0x1078] sm:$0xff]
      %v2033 = vld [vmem:[%s4 + $0x1080] sm:$0xff]
      %v2034 = vld [vmem:[%s4 + $0x1088] sm:$0xff]
      %v2035 = vld [vmem:[%s4 + $0x1090] sm:$0xff]
      %v2036 = vld [vmem:[%s4 + $0x1098] sm:$0xff]
      %v2037 = vld [vmem:[%s4 + $0x10a0] sm:$0xff]
      %v2038 = vld [vmem:[%s4 + $0x10a8] sm:$0xff]
      %v2039 = vld [vmem:[%s4 + $0x10b0] sm:$0xff]
      %v2040 = vld [vmem:[%s4 + $0x10b8] sm:$0xff]
      %v2041 = vld [vmem:[%s4 + $0x10c0] sm:$0xff]
      %v2042 = vld [vmem:[%s4 + $0x10c8] sm:$0xff]
      %v2043 = vld [vmem:[%s4 + $0x10d0] sm:$0xff]
      %v2044 = vld [vmem:[%s4 + $0x10d8] sm:$0xff]
      %v2045 = vld [vmem:[%s4 + $0x10e0] sm:$0xff]
      %v2046 = vld [vmem:[%s4 + $0x10e8] sm:$0xff]
      %v2047 = vld [vmem:[%s4 + $0x10f0] sm:$0xff]
      %v2048 = vld [vmem:[%s4 + $0x10f8] sm:$0xff]
      %v2049 = vld [vmem:[%s4 + $0x1100] sm:$0xff]
      %v2050 = vld [vmem:[%s4 + $0x1108] sm:$0xff]
      %v2051 = vld [vmem:[%s4 + $0x1110] sm:$0xff]
      %v2052 = vld [vmem:[%s4 + $0x1118] sm:$0xff]
      %v2053 = vld [vmem:[%s4 + $0x1120] sm:$0xff]
      %v2054 = vld [vmem:[%s4 + $0x1128] sm:$0xff]
      %v2055 = vld [vmem:[%s4 + $0x1130] sm:$0xff]
      %v2056 = vld [vmem:[%s4 + $0x1138] sm:$0xff]
      %v2057 = vld [vmem:[%s4 + $0x1140] sm:$0xff]
      %v2058 = vld [vmem:[%s4 + $0x1148] sm:$0xff]
      %v2059 = vld [vmem:[%s4 + $0x1150] sm:$0xff]
      %v2060 = vld [vmem:[%s4 + $0x1158] sm:$0xff]
      %v2061 = vld [vmem:[%s4 + $0x1160] sm:$0xff]
      %v2062 = vld [vmem:[%s4 + $0x1168] sm:$0xff]
      %v2063 = vld [vmem:[%s4 + $0x1170] sm:$0xff]
      %v2064 = vld [vmem:[%s4 + $0x1178] sm:$0xff]
      %v2065 = vld [vmem:[%s4 + $0x1180] sm:$0xff]
      %v2066 = vld [vmem:[%s4 + $0x1188] sm:$0xff]
      %v2067 = vld [vmem:[%s4 + $0x1190] sm:$0xff]
      %v2068 = vld [vmem:[%s4 + $0x1198] sm:$0xff]
      %v2069 = vld [vmem:[%s4 + $0x11a0] sm:$0xff]
      %v2070 = vld [vmem:[%s4 + $0x11a8] sm:$0xff]
      %v2071 = vld [vmem:[%s4 + $0x11b0] sm:$0xff]
      %v2072 = vld [vmem:[%s4 + $0x11b8] sm:$0xff]
      %v2073 = vld [vmem:[%s4 + $0x11c0] sm:$0xff]
      %v2074 = vld [vmem:[%s4 + $0x11c8] sm:$0xff]
      %v2075 = vld [vmem:[%s4 + $0x11d0] sm:$0xff]
      %v2076 = vld [vmem:[%s4 + $0x11d8] sm:$0xff]
      %v2077 = vld [vmem:[%s4 + $0x11e0] sm:$0xff]
      %v2078 = vld [vmem:[%s4 + $0x11e8] sm:$0xff]
      %v2079 = vld [vmem:[%s4 + $0x11f0] sm:$0xff]
      %v2080 = vld [vmem:[%s4 + $0x11f8] sm:$0xff]
      %2081 = vmatpush.msra.mxu0 %v2047
      %2082 = vmatpush.msra.mxu0 %v2045
      %2083 = vmatpush.msra.mxu0 %v2043
      %2084 = vmatpush.msra.mxu0 %v2041
      %2085 = vmatpush.msra.mxu0 %v2039
      %2086 = vmatpush.msra.mxu0 %v2037
      %2087 = vmatpush.msra.mxu0 %v2035
      %2088 = vmatpush.msra.mxu0 %v2033
      %2089 = vmatpush.msra.mxu0 %v2031
      %2090 = vmatpush.msra.mxu0 %v2029
      %2091 = vmatpush.msra.mxu0 %v2027
      %2092 = vmatpush.msra.mxu0 %v2025
      %2093 = vmatpush.msra.mxu0 %v2023
      %2094 = vmatpush.msra.mxu0 %v2021
      %2095 = vmatpush.msra.mxu0 %v2019
      %2096 = vmatpush.msra.mxu0 %v2017
      %2097 = vmatmul.f32.gmra.mxu0 %v1995
      %v2098 = vpop.f32.mrf.mxu0
      %v2099 = vadd.f32 0.0, %v2098
      %2100 = vdwg.mxu0
      %2101 = vmatpush.msra.mxu0 %v2079
      %2102 = vmatpush.msra.mxu0 %v2077
      %2103 = vmatpush.msra.mxu0 %v2075
      %2104 = vmatpush.msra.mxu0 %v2073
      %2105 = vmatpush.msra.mxu0 %v2071
      %2106 = vmatpush.msra.mxu0 %v2069
      %2107 = vmatpush.msra.mxu0 %v2067
      %2108 = vmatpush.msra.mxu0 %v2065
      %2109 = vmatpush.msra.mxu0 %v2063
      %2110 = vmatpush.msra.mxu0 %v2061
      %2111 = vmatpush.msra.mxu0 %v2059
      %2112 = vmatpush.msra.mxu0 %v2057
      %2113 = vmatpush.msra.mxu0 %v2055
      %2114 = vmatpush.msra.mxu0 %v2053
      %2115 = vmatpush.msra.mxu0 %v2051
      %2116 = vmatpush.msra.mxu0 %v2049
      %2117 = vmatmul.f32.gmra.mxu0 %v2015
      %v2118 = vpop.f32.mrf.mxu0
      %v2119 = vadd.f32 %v2099, %v2118
      %2120 = vdwg.mxu0
      %2121 = vmatpush.msra.mxu0 %v2048
      %2122 = vmatpush.msra.mxu0 %v2046
      %2123 = vmatpush.msra.mxu0 %v2044
      %2124 = vmatpush.msra.mxu0 %v2042
      %2125 = vmatpush.msra.mxu0 %v2040
      %2126 = vmatpush.msra.mxu0 %v2038
      %2127 = vmatpush.msra.mxu0 %v2036
      %2128 = vmatpush.msra.mxu0 %v2034
      %2129 = vmatpush.msra.mxu0 %v2032
      %2130 = vmatpush.msra.mxu0 %v2030
      %2131 = vmatpush.msra.mxu0 %v2028
      %2132 = vmatpush.msra.mxu0 %v2026
      %2133 = vmatpush.msra.mxu0 %v2024
      %2134 = vmatpush.msra.mxu0 %v2022
      %2135 = vmatpush.msra.mxu0 %v2020
      %2136 = vmatpush.msra.mxu0 %v2018
      %2137 = vmatmul.f32.gmra.mxu0 %v1995
      %v2138 = vpop.f32.mrf.mxu0
      %v2139 = vadd.f32 0.0, %v2138
      %2140 = vdwg.mxu0
      %2141 = vmatpush.msra.mxu0 %v2080
      %2142 = vmatpush.msra.mxu0 %v2078
      %2143 = vmatpush.msra.mxu0 %v2076
      %2144 = vmatpush.msra.mxu0 %v2074
      %2145 = vmatpush.msra.mxu0 %v2072
      %2146 = vmatpush.msra.mxu0 %v2070
      %2147 = vmatpush.msra.mxu0 %v2068
      %2148 = vmatpush.msra.mxu0 %v2066
      %2149 = vmatpush.msra.mxu0 %v2064
      %2150 = vmatpush.msra.mxu0 %v2062
      %2151 = vmatpush.msra.mxu0 %v2060
      %2152 = vmatpush.msra.mxu0 %v2058
      %2153 = vmatpush.msra.mxu0 %v2056
      %2154 = vmatpush.msra.mxu0 %v2054
      %2155 = vmatpush.msra.mxu0 %v2052
      %2156 = vmatpush.msra.mxu0 %v2050
      %2157 = vmatmul.f32.gmra.mxu0 %v2015
      %v2158 = vpop.f32.mrf.mxu0
      %v2159 = vadd.f32 %v2139, %v2158
      %2160 = vdwg.mxu0
      %v2161 = vadd.f32 %v1972, %v2119
      %v2162 = vadd.f32 %v1973, %v2159
      %vm2163 = vcmask 523264
      %v2164 = vsel %vm2163, %v330, -inf
      %v2165 = vrot.slane %v2164, 4
      %v2166 = vmax.f32 %v2164, %v2165
      %v2167 = vrot.slane %v2166, 2
      %v2168 = vmax.f32 %v2166, %v2167
      %v2169 = vrot.slane %v2168, 1
      %v2170 = vmax.f32 %v2168, %v2169
      %v2171 = vld [vmem:[%s5 + $0x240] sm:$0xff]
      %v2172 = vld [vmem:[%s5 + $0x248] sm:$0xff]
      %v2173 = vld [vmem:[%s5 + $0x250] sm:$0xff]
      %v2174 = vld [vmem:[%s5 + $0x258] sm:$0xff]
      %v2175 = vld [vmem:[%s5 + $0x260] sm:$0xff]
      %v2176 = vld [vmem:[%s5 + $0x268] sm:$0xff]
      %v2177 = vld [vmem:[%s5 + $0x270] sm:$0xff]
      %v2178 = vld [vmem:[%s5 + $0x278] sm:$0xff]
      %v2180 = vsel %vm2163, %v2170, 0
      %2182 = vmatpush.msra.mxu0 0.0
      %2183 = vmatpush.msra.mxu0 0.0
      %2184 = vmatpush.msra.mxu0 0.0
      %2185 = vmatpush.msra.mxu0 0.0
      %2186 = vmatpush.msra.mxu0 0.0
      %2187 = vmatpush.msra.mxu0 0.0
      %2188 = vmatpush.msra.mxu0 0.0
      %2189 = vmatpush.msra.mxu0 0.0
      %2190 = vmatpush.msra.mxu0 %v2178
      %2191 = vmatpush.msra.mxu0 %v2177
      %2192 = vmatpush.msra.mxu0 %v2176
      %2193 = vmatpush.msra.mxu0 %v2175
      %2194 = vmatpush.msra.mxu0 %v2174
      %2195 = vmatpush.msra.mxu0 %v2173
      %2196 = vmatpush.msra.mxu0 %v2172
      %2197 = vmatpush.msra.mxu0 %v2171
      %2198 = vmatmul.f32.gmra.mxu0 %v2180
      %v2199 = vpop.f32.mrf.mxu0
      %v2200 = vadd.f32 0.0, %v2199
      %2201 = vdwg.mxu0
      %v2202 = vxor.u32 %v2200, 2147483648
      %v2203 = vmul.f32 %v2202, 1.442695
      %v2204 = vpow.pop %v2203
      %v2205 = vadd.f32 %v2204, 1.0
      %v2206 = vrcp.pop %v2205
      %v2207 = vmul.f32 %v2205, %v2206
      %v2208 = vsub.f32 1.0, %v2207
      %v2209 = vmul.f32 %v2206, %v2208
      %v2210 = vadd.f32 %v2206, %v2209
      %vm2211 = vweird.f32 %v2205
      %vm2212 = vweird.f32 %v2206
      %vm2213 = vmor %vm2211, %vm2212
      %v2214 = vsel %vm2213, %v2206, %v2210
      %v2215 = vand.u32 2147483647, %v2205
      %vm2216 = vcmp.eq.f32.partialorder %v2215, 8.507059e+37
      %v2217 = vand.u32 %v2205, 2147483648
      %v2218 = vor.u32 1.1754944e-38, %v2217
      %v2219 = vsel %vm2216, %v2218, %v2214
      %v2220 = vmul.f32 1.0, %v2219
      %v2221 = vld [vmem:[%s5 + $0x280] sm:$0xff]
      %v2222 = vld [vmem:[%s5 + $0x288] sm:$0xff]
      %v2223 = vld [vmem:[%s5 + $0x290] sm:$0xff]
      %v2224 = vld [vmem:[%s5 + $0x298] sm:$0xff]
      %v2225 = vld [vmem:[%s5 + $0x2a0] sm:$0xff]
      %v2226 = vld [vmem:[%s5 + $0x2a8] sm:$0xff]
      %v2227 = vld [vmem:[%s5 + $0x2b0] sm:$0xff]
      %v2228 = vld [vmem:[%s5 + $0x2b8] sm:$0xff]
      %v2229 = vld [vmem:[%s5 + $0x2c0] sm:$0xff]
      %v2230 = vld [vmem:[%s5 + $0x2c8] sm:$0xff]
      %v2231 = vld [vmem:[%s5 + $0x2d0] sm:$0xff]
      %v2232 = vld [vmem:[%s5 + $0x2d8] sm:$0xff]
      %v2233 = vld [vmem:[%s5 + $0x2e0] sm:$0xff]
      %v2234 = vld [vmem:[%s5 + $0x2e8] sm:$0xff]
      %v2235 = vld [vmem:[%s5 + $0x2f0] sm:$0xff]
      %v2236 = vld [vmem:[%s5 + $0x2f8] sm:$0xff]
      %v2237 = vld [vmem:[%s5 + $0x300] sm:$0xff]
      %v2238 = vld [vmem:[%s5 + $0x308] sm:$0xff]
      %v2239 = vld [vmem:[%s5 + $0x310] sm:$0xff]
      %v2240 = vld [vmem:[%s5 + $0x318] sm:$0xff]
      %v2241 = vld [vmem:[%s5 + $0x320] sm:$0xff]
      %v2242 = vld [vmem:[%s5 + $0x328] sm:$0xff]
      %v2243 = vld [vmem:[%s5 + $0x330] sm:$0xff]
      %v2244 = vld [vmem:[%s5 + $0x338] sm:$0xff]
      %v2245 = vld [vmem:[%s5 + $0x340] sm:$0xff]
      %v2246 = vld [vmem:[%s5 + $0x348] sm:$0xff]
      %v2247 = vld [vmem:[%s5 + $0x350] sm:$0xff]
      %v2248 = vld [vmem:[%s5 + $0x358] sm:$0xff]
      %v2249 = vld [vmem:[%s5 + $0x360] sm:$0xff]
      %v2250 = vld [vmem:[%s5 + $0x368] sm:$0xff]
      %v2251 = vld [vmem:[%s5 + $0x370] sm:$0xff]
      %v2252 = vld [vmem:[%s5 + $0x378] sm:$0xff]
      %2254 = vst [vmem:[#allocation1] ss:$2 sm:$0xff] %v329
      %v2255 = vld.sshfl [vmem:[#allocation1] sm:$0xff pattern:$0x75316420]
      %v2256 = vld.sshfl [vmem:[#allocation1 + $0x8] sm:$0xff pattern:$0x75316420]
      %2259 = vmatpush.msra.mxu0 %v2236
      %2260 = vmatpush.msra.mxu0 %v2235
      %2261 = vmatpush.msra.mxu0 %v2234
      %2262 = vmatpush.msra.mxu0 %v2233
      %2263 = vmatpush.msra.mxu0 %v2232
      %2264 = vmatpush.msra.mxu0 %v2231
      %2265 = vmatpush.msra.mxu0 %v2230
      %2266 = vmatpush.msra.mxu0 %v2229
      %2267 = vmatpush.msra.mxu0 %v2228
      %2268 = vmatpush.msra.mxu0 %v2227
      %2269 = vmatpush.msra.mxu0 %v2226
      %2270 = vmatpush.msra.mxu0 %v2225
      %2271 = vmatpush.msra.mxu0 %v2224
      %2272 = vmatpush.msra.mxu0 %v2223
      %2273 = vmatpush.msra.mxu0 %v2222
      %2274 = vmatpush.msra.mxu0 %v2221
      %2275 = vmatmul.f32.gmra.mxu0 %v2255
      %v2276 = vpop.f32.mrf.mxu0
      %v2277 = vadd.f32 0.0, %v2276
      %2278 = vdwg.mxu0
      %2279 = vmatpush.msra.mxu0 %v2252
      %2280 = vmatpush.msra.mxu0 %v2251
      %2281 = vmatpush.msra.mxu0 %v2250
      %2282 = vmatpush.msra.mxu0 %v2249
      %2283 = vmatpush.msra.mxu0 %v2248
      %2284 = vmatpush.msra.mxu0 %v2247
      %2285 = vmatpush.msra.mxu0 %v2246
      %2286 = vmatpush.msra.mxu0 %v2245
      %2287 = vmatpush.msra.mxu0 %v2244
      %2288 = vmatpush.msra.mxu0 %v2243
      %2289 = vmatpush.msra.mxu0 %v2242
      %2290 = vmatpush.msra.mxu0 %v2241
      %2291 = vmatpush.msra.mxu0 %v2240
      %2292 = vmatpush.msra.mxu0 %v2239
      %2293 = vmatpush.msra.mxu0 %v2238
      %2294 = vmatpush.msra.mxu0 %v2237
      %2295 = vmatmul.f32.gmra.mxu0 %v2256
      %v2296 = vpop.f32.mrf.mxu0
      %v2297 = vadd.f32 %v2277, %v2296
      %2298 = vdwg.mxu0
      %v2299 = vld [vmem:[%s3 + $0xc8] sm:$0xff]
      %v2300 = vld [vmem:[%s3 + $0xd0] sm:$0xff]
      %v2301 = vld [vmem:[%s3 + $0xd8] sm:$0xff]
      %v2302 = vld [vmem:[%s3 + $0xe0] sm:$0xff]
      %v2303 = vld [vmem:[%s3 + $0xe8] sm:$0xf]
      %v2304 = vld [vmem:[%s3 + $0xf0] sm:$0x1]
      %v2305 = vld [vmem:[%s5] sm:$0xff]
      %v2306 = vld [vmem:[%s5 + $0x8] sm:$0xff]
      %v2307 = vld [vmem:[%s5 + $0x10] sm:$0xff]
      %v2308 = vld [vmem:[%s5 + $0x18] sm:$0xff]
      %v2309 = vld [vmem:[%s5 + $0x20] sm:$0xff]
      %v2310 = vld [vmem:[%s5 + $0x28] sm:$0xff]
      %v2311 = vld [vmem:[%s5 + $0x30] sm:$0xff]
      %v2312 = vld [vmem:[%s5 + $0x38] sm:$0xff]
      %v2314 = vsel %vm2163, %v2297, 0
      %2316 = vmatpush.msra.mxu0 0.0
      %2317 = vmatpush.msra.mxu0 0.0
      %2318 = vmatpush.msra.mxu0 0.0
      %2319 = vmatpush.msra.mxu0 0.0
      %2320 = vmatpush.msra.mxu0 0.0
      %2321 = vmatpush.msra.mxu0 0.0
      %2322 = vmatpush.msra.mxu0 0.0
      %2323 = vmatpush.msra.mxu0 0.0
      %2324 = vmatpush.msra.mxu0 %v2312
      %2325 = vmatpush.msra.mxu0 %v2311
      %2326 = vmatpush.msra.mxu0 %v2310
      %2327 = vmatpush.msra.mxu0 %v2309
      %2328 = vmatpush.msra.mxu0 %v2308
      %2329 = vmatpush.msra.mxu0 %v2307
      %2330 = vmatpush.msra.mxu0 %v2306
      %2331 = vmatpush.msra.mxu0 %v2305
      %2332 = vmatmul.f32.gmra.mxu0 %v2314
      %v2333 = vpop.f32.mrf.mxu0
      %v2334 = vadd.f32 0.0, %v2333
      %2335 = vdwg.mxu0
      %2337 = vset.pattern.permute.xlu0 0
      %2338 = vperm.xlu0 %2337, %v2299
      %v2339 = vpop.permute.xlu0 %2338
      %v2341 = vmul.f32 %v2334, %v2339
      %vm2342 = vcmask 519168
      %v2343 = vsel %vm2342, %v2341, 0.0
      %v2344 = vrot.slane %v2343, 4
      %v2345 = vadd.f32 %v2343, %v2344
      %v2346 = vrot.slane %v2345, 2
      %v2347 = vadd.f32 %v2345, %v2346
      %v2348 = vrot.slane %v2347, 1
      %v2349 = vadd.f32 %v2347, %v2348
      %2351 = vset.pattern.permute.xlu0 0
      %2352 = vperm.xlu0 %2351, %v2304
      %v2353 = vpop.permute.xlu0 %2352
      %v2355 = vadd.f32 %v2353, %v2349
      %v2356 = vld [vmem:[%s5 + $0x40] sm:$0xff]
      %v2357 = vld [vmem:[%s5 + $0x48] sm:$0xff]
      %v2358 = vld [vmem:[%s5 + $0x50] sm:$0xff]
      %v2359 = vld [vmem:[%s5 + $0x58] sm:$0xff]
      %v2360 = vld [vmem:[%s5 + $0x60] sm:$0xff]
      %v2361 = vld [vmem:[%s5 + $0x68] sm:$0xff]
      %v2362 = vld [vmem:[%s5 + $0x70] sm:$0xff]
      %v2363 = vld [vmem:[%s5 + $0x78] sm:$0xff]
      %2364 = vmatpush.msra.mxu0 0.0
      %2365 = vmatpush.msra.mxu0 0.0
      %2366 = vmatpush.msra.mxu0 0.0
      %2367 = vmatpush.msra.mxu0 0.0
      %2368 = vmatpush.msra.mxu0 0.0
      %2369 = vmatpush.msra.mxu0 0.0
      %2370 = vmatpush.msra.mxu0 0.0
      %2371 = vmatpush.msra.mxu0 0.0
      %2372 = vmatpush.msra.mxu0 %v2363
      %2373 = vmatpush.msra.mxu0 %v2362
      %2374 = vmatpush.msra.mxu0 %v2361
      %2375 = vmatpush.msra.mxu0 %v2360
      %2376 = vmatpush.msra.mxu0 %v2359
      %2377 = vmatpush.msra.mxu0 %v2358
      %2378 = vmatpush.msra.mxu0 %v2357
      %2379 = vmatpush.msra.mxu0 %v2356
      %2380 = vmatmul.f32.gmra.mxu0 %v2314
      %v2381 = vpop.f32.mrf.mxu0
      %v2382 = vadd.f32 0.0, %v2381
      %2383 = vdwg.mxu0
      %v2384 = vrot.slane %v2339, 4
      %v2386 = vmul.f32 %v2382, %v2384
      %v2387 = vsel %vm2342, %v2386, 0.0
      %v2388 = vrot.slane %v2387, 4
      %v2389 = vadd.f32 %v2387, %v2388
      %v2390 = vrot.slane %v2389, 2
      %v2391 = vadd.f32 %v2389, %v2390
      %v2392 = vrot.slane %v2391, 1
      %v2393 = vadd.f32 %v2391, %v2392
      %v2394 = vadd.f32 %v2355, %v2393
      %v2395 = vld [vmem:[%s5 + $0x80] sm:$0xff]
      %v2396 = vld [vmem:[%s5 + $0x88] sm:$0xff]
      %v2397 = vld [vmem:[%s5 + $0x90] sm:$0xff]
      %v2398 = vld [vmem:[%s5 + $0x98] sm:$0xff]
      %v2399 = vld [vmem:[%s5 + $0xa0] sm:$0xff]
      %v2400 = vld [vmem:[%s5 + $0xa8] sm:$0xff]
      %v2401 = vld [vmem:[%s5 + $0xb0] sm:$0xff]
      %v2402 = vld [vmem:[%s5 + $0xb8] sm:$0xff]
      %2403 = vmatpush.msra.mxu0 0.0
      %2404 = vmatpush.msra.mxu0 0.0
      %2405 = vmatpush.msra.mxu0 0.0
      %2406 = vmatpush.msra.mxu0 0.0
      %2407 = vmatpush.msra.mxu0 0.0
      %2408 = vmatpush.msra.mxu0 0.0
      %2409 = vmatpush.msra.mxu0 0.0
      %2410 = vmatpush.msra.mxu0 0.0
      %2411 = vmatpush.msra.mxu0 %v2402
      %2412 = vmatpush.msra.mxu0 %v2401
      %2413 = vmatpush.msra.mxu0 %v2400
      %2414 = vmatpush.msra.mxu0 %v2399
      %2415 = vmatpush.msra.mxu0 %v2398
      %2416 = vmatpush.msra.mxu0 %v2397
      %2417 = vmatpush.msra.mxu0 %v2396
      %2418 = vmatpush.msra.mxu0 %v2395
      %2419 = vmatmul.f32.gmra.mxu0 %v2314
      %v2420 = vpop.f32.mrf.mxu0
      %v2421 = vadd.f32 0.0, %v2420
      %2422 = vdwg.mxu0
      %2424 = vset.pattern.permute.xlu0 0
      %2425 = vperm.xlu0 %2424, %v2300
      %v2426 = vpop.permute.xlu0 %2425
      %v2428 = vmul.f32 %v2421, %v2426
      %v2429 = vsel %vm2342, %v2428, 0.0
      %v2430 = vrot.slane %v2429, 4
      %v2431 = vadd.f32 %v2429, %v2430
      %v2432 = vrot.slane %v2431, 2
      %v2433 = vadd.f32 %v2431, %v2432
      %v2434 = vrot.slane %v2433, 1
      %v2435 = vadd.f32 %v2433, %v2434
      %v2436 = vadd.f32 %v2394, %v2435
      %v2437 = vld [vmem:[%s5 + $0xc0] sm:$0xff]
      %v2438 = vld [vmem:[%s5 + $0xc8] sm:$0xff]
      %v2439 = vld [vmem:[%s5 + $0xd0] sm:$0xff]
      %v2440 = vld [vmem:[%s5 + $0xd8] sm:$0xff]
      %v2441 = vld [vmem:[%s5 + $0xe0] sm:$0xff]
      %v2442 = vld [vmem:[%s5 + $0xe8] sm:$0xff]
      %v2443 = vld [vmem:[%s5 + $0xf0] sm:$0xff]
      %v2444 = vld [vmem:[%s5 + $0xf8] sm:$0xff]
      %2445 = vmatpush.msra.mxu0 0.0
      %2446 = vmatpush.msra.mxu0 0.0
      %2447 = vmatpush.msra.mxu0 0.0
      %2448 = vmatpush.msra.mxu0 0.0
      %2449 = vmatpush.msra.mxu0 0.0
      %2450 = vmatpush.msra.mxu0 0.0
      %2451 = vmatpush.msra.mxu0 0.0
      %2452 = vmatpush.msra.mxu0 0.0
      %2453 = vmatpush.msra.mxu0 %v2444
      %2454 = vmatpush.msra.mxu0 %v2443
      %2455 = vmatpush.msra.mxu0 %v2442
      %2456 = vmatpush.msra.mxu0 %v2441
      %2457 = vmatpush.msra.mxu0 %v2440
      %2458 = vmatpush.msra.mxu0 %v2439
      %2459 = vmatpush.msra.mxu0 %v2438
      %2460 = vmatpush.msra.mxu0 %v2437
      %2461 = vmatmul.f32.gmra.mxu0 %v2314
      %v2462 = vpop.f32.mrf.mxu0
      %v2463 = vadd.f32 0.0, %v2462
      %2464 = vdwg.mxu0
      %v2465 = vrot.slane %v2426, 4
      %v2467 = vmul.f32 %v2463, %v2465
      %v2468 = vsel %vm2342, %v2467, 0.0
      %v2469 = vrot.slane %v2468, 4
      %v2470 = vadd.f32 %v2468, %v2469
      %v2471 = vrot.slane %v2470, 2
      %v2472 = vadd.f32 %v2470, %v2471
      %v2473 = vrot.slane %v2472, 1
      %v2474 = vadd.f32 %v2472, %v2473
      %v2475 = vadd.f32 %v2436, %v2474
      %v2476 = vld [vmem:[%s5 + $0x100] sm:$0xff]
      %v2477 = vld [vmem:[%s5 + $0x108] sm:$0xff]
      %v2478 = vld [vmem:[%s5 + $0x110] sm:$0xff]
      %v2479 = vld [vmem:[%s5 + $0x118] sm:$0xff]
      %v2480 = vld [vmem:[%s5 + $0x120] sm:$0xff]
      %v2481 = vld [vmem:[%s5 + $0x128] sm:$0xff]
      %v2482 = vld [vmem:[%s5 + $0x130] sm:$0xff]
      %v2483 = vld [vmem:[%s5 + $0x138] sm:$0xff]
      %2484 = vmatpush.msra.mxu0 0.0
      %2485 = vmatpush.msra.mxu0 0.0
      %2486 = vmatpush.msra.mxu0 0.0
      %2487 = vmatpush.msra.mxu0 0.0
      %2488 = vmatpush.msra.mxu0 0.0
      %2489 = vmatpush.msra.mxu0 0.0
      %2490 = vmatpush.msra.mxu0 0.0
      %2491 = vmatpush.msra.mxu0 0.0
      %2492 = vmatpush.msra.mxu0 %v2483
      %2493 = vmatpush.msra.mxu0 %v2482
      %2494 = vmatpush.msra.mxu0 %v2481
      %2495 = vmatpush.msra.mxu0 %v2480
      %2496 = vmatpush.msra.mxu0 %v2479
      %2497 = vmatpush.msra.mxu0 %v2478
      %2498 = vmatpush.msra.mxu0 %v2477
      %2499 = vmatpush.msra.mxu0 %v2476
      %2500 = vmatmul.f32.gmra.mxu0 %v2314
      %v2501 = vpop.f32.mrf.mxu0
      %v2502 = vadd.f32 0.0, %v2501
      %2503 = vdwg.mxu0
      %2505 = vset.pattern.permute.xlu0 0
      %2506 = vperm.xlu0 %2505, %v2301
      %v2507 = vpop.permute.xlu0 %2506
      %v2509 = vmul.f32 %v2502, %v2507
      %v2510 = vsel %vm2342, %v2509, 0.0
      %v2511 = vrot.slane %v2510, 4
      %v2512 = vadd.f32 %v2510, %v2511
      %v2513 = vrot.slane %v2512, 2
      %v2514 = vadd.f32 %v2512, %v2513
      %v2515 = vrot.slane %v2514, 1
      %v2516 = vadd.f32 %v2514, %v2515
      %v2517 = vadd.f32 %v2475, %v2516
      %v2518 = vld [vmem:[%s5 + $0x140] sm:$0xff]
      %v2519 = vld [vmem:[%s5 + $0x148] sm:$0xff]
      %v2520 = vld [vmem:[%s5 + $0x150] sm:$0xff]
      %v2521 = vld [vmem:[%s5 + $0x158] sm:$0xff]
      %v2522 = vld [vmem:[%s5 + $0x160] sm:$0xff]
      %v2523 = vld [vmem:[%s5 + $0x168] sm:$0xff]
      %v2524 = vld [vmem:[%s5 + $0x170] sm:$0xff]
      %v2525 = vld [vmem:[%s5 + $0x178] sm:$0xff]
      %2526 = vmatpush.msra.mxu0 0.0
      %2527 = vmatpush.msra.mxu0 0.0
      %2528 = vmatpush.msra.mxu0 0.0
      %2529 = vmatpush.msra.mxu0 0.0
      %2530 = vmatpush.msra.mxu0 0.0
      %2531 = vmatpush.msra.mxu0 0.0
      %2532 = vmatpush.msra.mxu0 0.0
      %2533 = vmatpush.msra.mxu0 0.0
      %2534 = vmatpush.msra.mxu0 %v2525
      %2535 = vmatpush.msra.mxu0 %v2524
      %2536 = vmatpush.msra.mxu0 %v2523
      %2537 = vmatpush.msra.mxu0 %v2522
      %2538 = vmatpush.msra.mxu0 %v2521
      %2539 = vmatpush.msra.mxu0 %v2520
      %2540 = vmatpush.msra.mxu0 %v2519
      %2541 = vmatpush.msra.mxu0 %v2518
      %2542 = vmatmul.f32.gmra.mxu0 %v2314
      %v2543 = vpop.f32.mrf.mxu0
      %v2544 = vadd.f32 0.0, %v2543
      %2545 = vdwg.mxu0
      %v2546 = vrot.slane %v2507, 4
      %v2548 = vmul.f32 %v2544, %v2546
      %v2549 = vsel %vm2342, %v2548, 0.0
      %v2550 = vrot.slane %v2549, 4
      %v2551 = vadd.f32 %v2549, %v2550
      %v2552 = vrot.slane %v2551, 2
      %v2553 = vadd.f32 %v2551, %v2552
      %v2554 = vrot.slane %v2553, 1
      %v2555 = vadd.f32 %v2553, %v2554
      %v2556 = vadd.f32 %v2517, %v2555
      %v2557 = vld [vmem:[%s5 + $0x180] sm:$0xff]
      %v2558 = vld [vmem:[%s5 + $0x188] sm:$0xff]
      %v2559 = vld [vmem:[%s5 + $0x190] sm:$0xff]
      %v2560 = vld [vmem:[%s5 + $0x198] sm:$0xff]
      %v2561 = vld [vmem:[%s5 + $0x1a0] sm:$0xff]
      %v2562 = vld [vmem:[%s5 + $0x1a8] sm:$0xff]
      %v2563 = vld [vmem:[%s5 + $0x1b0] sm:$0xff]
      %v2564 = vld [vmem:[%s5 + $0x1b8] sm:$0xff]
      %2565 = vmatpush.msra.mxu0 0.0
      %2566 = vmatpush.msra.mxu0 0.0
      %2567 = vmatpush.msra.mxu0 0.0
      %2568 = vmatpush.msra.mxu0 0.0
      %2569 = vmatpush.msra.mxu0 0.0
      %2570 = vmatpush.msra.mxu0 0.0
      %2571 = vmatpush.msra.mxu0 0.0
      %2572 = vmatpush.msra.mxu0 0.0
      %2573 = vmatpush.msra.mxu0 %v2564
      %2574 = vmatpush.msra.mxu0 %v2563
      %2575 = vmatpush.msra.mxu0 %v2562
      %2576 = vmatpush.msra.mxu0 %v2561
      %2577 = vmatpush.msra.mxu0 %v2560
      %2578 = vmatpush.msra.mxu0 %v2559
      %2579 = vmatpush.msra.mxu0 %v2558
      %2580 = vmatpush.msra.mxu0 %v2557
      %2581 = vmatmul.f32.gmra.mxu0 %v2314
      %v2582 = vpop.f32.mrf.mxu0
      %v2583 = vadd.f32 0.0, %v2582
      %2584 = vdwg.mxu0
      %2586 = vset.pattern.permute.xlu0 0
      %2587 = vperm.xlu0 %2586, %v2302
      %v2588 = vpop.permute.xlu0 %2587
      %v2590 = vmul.f32 %v2583, %v2588
      %v2591 = vsel %vm2342, %v2590, 0.0
      %v2592 = vrot.slane %v2591, 4
      %v2593 = vadd.f32 %v2591, %v2592
      %v2594 = vrot.slane %v2593, 2
      %v2595 = vadd.f32 %v2593, %v2594
      %v2596 = vrot.slane %v2595, 1
      %v2597 = vadd.f32 %v2595, %v2596
      %v2598 = vadd.f32 %v2556, %v2597
      %v2599 = vld [vmem:[%s5 + $0x1c0] sm:$0xff]
      %v2600 = vld [vmem:[%s5 + $0x1c8] sm:$0xff]
      %v2601 = vld [vmem:[%s5 + $0x1d0] sm:$0xff]
      %v2602 = vld [vmem:[%s5 + $0x1d8] sm:$0xff]
      %v2603 = vld [vmem:[%s5 + $0x1e0] sm:$0xff]
      %v2604 = vld [vmem:[%s5 + $0x1e8] sm:$0xff]
      %v2605 = vld [vmem:[%s5 + $0x1f0] sm:$0xff]
      %v2606 = vld [vmem:[%s5 + $0x1f8] sm:$0xff]
      %2607 = vmatpush.msra.mxu0 0.0
      %2608 = vmatpush.msra.mxu0 0.0
      %2609 = vmatpush.msra.mxu0 0.0
      %2610 = vmatpush.msra.mxu0 0.0
      %2611 = vmatpush.msra.mxu0 0.0
      %2612 = vmatpush.msra.mxu0 0.0
      %2613 = vmatpush.msra.mxu0 0.0
      %2614 = vmatpush.msra.mxu0 0.0
      %2615 = vmatpush.msra.mxu0 %v2606
      %2616 = vmatpush.msra.mxu0 %v2605
      %2617 = vmatpush.msra.mxu0 %v2604
      %2618 = vmatpush.msra.mxu0 %v2603
      %2619 = vmatpush.msra.mxu0 %v2602
      %2620 = vmatpush.msra.mxu0 %v2601
      %2621 = vmatpush.msra.mxu0 %v2600
      %2622 = vmatpush.msra.mxu0 %v2599
      %2623 = vmatmul.f32.gmra.mxu0 %v2314
      %v2624 = vpop.f32.mrf.mxu0
      %v2625 = vadd.f32 0.0, %v2624
      %2626 = vdwg.mxu0
      %v2627 = vrot.slane %v2588, 4
      %v2629 = vmul.f32 %v2625, %v2627
      %v2630 = vsel %vm2342, %v2629, 0.0
      %v2631 = vrot.slane %v2630, 4
      %v2632 = vadd.f32 %v2630, %v2631
      %v2633 = vrot.slane %v2632, 2
      %v2634 = vadd.f32 %v2632, %v2633
      %v2635 = vrot.slane %v2634, 1
      %v2636 = vadd.f32 %v2634, %v2635
      %v2637 = vadd.f32 %v2598, %v2636
      %v2638 = vld [vmem:[%s5 + $0x200] sm:$0xff]
      %v2639 = vld [vmem:[%s5 + $0x208] sm:$0xff]
      %v2640 = vld [vmem:[%s5 + $0x210] sm:$0xff]
      %v2641 = vld [vmem:[%s5 + $0x218] sm:$0xff]
      %v2642 = vld [vmem:[%s5 + $0x220] sm:$0xff]
      %v2643 = vld [vmem:[%s5 + $0x228] sm:$0xff]
      %v2644 = vld [vmem:[%s5 + $0x230] sm:$0xff]
      %v2645 = vld [vmem:[%s5 + $0x238] sm:$0xff]
      %2646 = vmatpush.msra.mxu0 0.0
      %2647 = vmatpush.msra.mxu0 0.0
      %2648 = vmatpush.msra.mxu0 0.0
      %2649 = vmatpush.msra.mxu0 0.0
      %2650 = vmatpush.msra.mxu0 0.0
      %2651 = vmatpush.msra.mxu0 0.0
      %2652 = vmatpush.msra.mxu0 0.0
      %2653 = vmatpush.msra.mxu0 0.0
      %2654 = vmatpush.msra.mxu0 %v2645
      %2655 = vmatpush.msra.mxu0 %v2644
      %2656 = vmatpush.msra.mxu0 %v2643
      %2657 = vmatpush.msra.mxu0 %v2642
      %2658 = vmatpush.msra.mxu0 %v2641
      %2659 = vmatpush.msra.mxu0 %v2640
      %2660 = vmatpush.msra.mxu0 %v2639
      %2661 = vmatpush.msra.mxu0 %v2638
      %2662 = vmatmul.f32.gmra.mxu0 %v2314
      %v2663 = vpop.f32.mrf.mxu0
      %v2664 = vadd.f32 0.0, %v2663
      %2665 = vdwg.mxu0
      %2667 = vset.pattern.permute.xlu0 0
      %2668 = vperm.xlu0 %2667, %v2303
      %v2669 = vpop.permute.xlu0 %2668
      %v2671 = vmul.f32 %v2664, %v2669
      %v2672 = vsel %vm2342, %v2671, 0.0
      %v2673 = vrot.slane %v2672, 4
      %v2674 = vadd.f32 %v2672, %v2673
      %v2675 = vrot.slane %v2674, 2
      %v2676 = vadd.f32 %v2674, %v2675
      %v2677 = vrot.slane %v2676, 1
      %v2678 = vadd.f32 %v2676, %v2677
      %v2679 = vadd.f32 %v2637, %v2678
      %v2680 = vperm.slane %v2679, 0
      %v2681 = vmul.f32 %v2680, %v2220
      %v2682 = vld [vmem:[%s4 + $0x1200] sm:$0xff]
      %v2683 = vld [vmem:[%s4 + $0x1208] sm:$0xff]
      %v2684 = vld [vmem:[%s4 + $0x1210] sm:$0xff]
      %v2685 = vld [vmem:[%s4 + $0x1218] sm:$0xff]
      %v2686 = vld [vmem:[%s4 + $0x1220] sm:$0xff]
      %v2687 = vld [vmem:[%s4 + $0x1228] sm:$0xff]
      %v2688 = vld [vmem:[%s4 + $0x1230] sm:$0xff]
      %v2689 = vld [vmem:[%s4 + $0x1238] sm:$0xff]
      %v2690 = vld [vmem:[%s4 + $0x1240] sm:$0xff]
      %v2691 = vld [vmem:[%s4 + $0x1248] sm:$0xff]
      %v2692 = vld [vmem:[%s4 + $0x1250] sm:$0xff]
      %v2693 = vld [vmem:[%s4 + $0x1258] sm:$0xff]
      %v2694 = vld [vmem:[%s4 + $0x1260] sm:$0xff]
      %v2695 = vld [vmem:[%s4 + $0x1268] sm:$0xff]
      %v2696 = vld [vmem:[%s4 + $0x1270] sm:$0xff]
      %v2697 = vld [vmem:[%s4 + $0x1278] sm:$0xff]
      %v2699 = vsel %vm2163, %v2681, 0
      %2701 = vmatpush.msra.mxu0 0.0
      %2702 = vmatpush.msra.mxu0 0.0
      %2703 = vmatpush.msra.mxu0 0.0
      %2704 = vmatpush.msra.mxu0 0.0
      %2705 = vmatpush.msra.mxu0 0.0
      %2706 = vmatpush.msra.mxu0 0.0
      %2707 = vmatpush.msra.mxu0 0.0
      %2708 = vmatpush.msra.mxu0 0.0
      %2709 = vmatpush.msra.mxu0 %v2696
      %2710 = vmatpush.msra.mxu0 %v2694
      %2711 = vmatpush.msra.mxu0 %v2692
      %2712 = vmatpush.msra.mxu0 %v2690
      %2713 = vmatpush.msra.mxu0 %v2688
      %2714 = vmatpush.msra.mxu0 %v2686
      %2715 = vmatpush.msra.mxu0 %v2684
      %2716 = vmatpush.msra.mxu0 %v2682
      %2717 = vmatmul.f32.gmra.mxu0 %v2699
      %v2718 = vpop.f32.mrf.mxu0
      %v2719 = vadd.f32 0.0, %v2718
      %2720 = vdwg.mxu0
      %2721 = vmatpush.msra.mxu0 0.0
      %2722 = vmatpush.msra.mxu0 0.0
      %2723 = vmatpush.msra.mxu0 0.0
      %2724 = vmatpush.msra.mxu0 0.0
      %2725 = vmatpush.msra.mxu0 0.0
      %2726 = vmatpush.msra.mxu0 0.0
      %2727 = vmatpush.msra.mxu0 0.0
      %2728 = vmatpush.msra.mxu0 0.0
      %2729 = vmatpush.msra.mxu0 %v2697
      %2730 = vmatpush.msra.mxu0 %v2695
      %2731 = vmatpush.msra.mxu0 %v2693
      %2732 = vmatpush.msra.mxu0 %v2691
      %2733 = vmatpush.msra.mxu0 %v2689
      %2734 = vmatpush.msra.mxu0 %v2687
      %2735 = vmatpush.msra.mxu0 %v2685
      %2736 = vmatpush.msra.mxu0 %v2683
      %2737 = vmatmul.f32.gmra.mxu0 %v2699
      %v2738 = vpop.f32.mrf.mxu0
      %v2739 = vadd.f32 0.0, %v2738
      %2740 = vdwg.mxu0
      %v2741 = vld [vmem:[%s3 + $0x48] sm:$0xff]
      %v2742 = vld [vmem:[%s3 + $0x50] sm:$0xff]
      %v2743 = vld [vmem:[%s3 + $0x58] sm:$0xff]
      %v2744 = vld [vmem:[%s3 + $0x60] sm:$0xff]
      %v2745 = vld [vmem:[%s3 + $0x68] sm:$0xff]
      %v2746 = vld [vmem:[%s3 + $0x70] sm:$0xff]
      %v2747 = vld [vmem:[%s3 + $0x78] sm:$0xff]
      %v2748 = vld [vmem:[%s3 + $0x80] sm:$0xff]
      %v2749 = vld [vmem:[%s3 + $0x88] sm:$0xff]
      %v2750 = vld [vmem:[%s3 + $0x90] sm:$0xff]
      %2751 = vst [vmem:[#allocation1] ss:$2 sm:$0xff] %v329
      %v2752 = vld.sshfl [vmem:[#allocation1] sm:$0xff pattern:$0x75316420]
      %v2753 = vld.sshfl [vmem:[#allocation1 + $0x8] sm:$0xff pattern:$0x75316420]
      %vm2754 = vcmask 31744
      %v2756 = vsel %vm2754, %v2741, 0
      %vm2758 = vcmask 1043456
      %v2759 = vsel %vm2758, %v2752, 0
      %v2761 = vsel %vm2758, %v2753, 0
      %2763 = vmatpush.msra.mxu0 0.0
      %2764 = vmatpush.msra.mxu0 0.0
      %2765 = vmatpush.msra.mxu0 0.0
      %2766 = vmatpush.msra.mxu0 0.0
      %2767 = vmatpush.msra.mxu0 0.0
      %2768 = vmatpush.msra.mxu0 0.0
      %2769 = vmatpush.msra.mxu0 0.0
      %2770 = vmatpush.msra.mxu0 0.0
      %2771 = vmatpush.msra.mxu0 0.0
      %2772 = vmatpush.msra.mxu0 0.0
      %2773 = vmatpush.msra.mxu0 0.0
      %2774 = vmatpush.msra.mxu0 0.0
      %2775 = vmatpush.msra.mxu0 0.0
      %2776 = vmatpush.msra.mxu0 0.0
      %2777 = vmatpush.msra.mxu0 0.0
      %2778 = vmatpush.msra.mxu0 %v2759
      %2779 = vmatmul.f32.gmra.mxu0 %v2756
      %v2780 = vpop.f32.mrf.mxu0
      %v2781 = vadd.f32 0.0, %v2780
      %2782 = vdwg.mxu0
      %2783 = vmatpush.msra.mxu0 0.0
      %2784 = vmatpush.msra.mxu0 0.0
      %2785 = vmatpush.msra.mxu0 0.0
      %2786 = vmatpush.msra.mxu0 0.0
      %2787 = vmatpush.msra.mxu0 0.0
      %2788 = vmatpush.msra.mxu0 0.0
      %2789 = vmatpush.msra.mxu0 0.0
      %2790 = vmatpush.msra.mxu0 0.0
      %2791 = vmatpush.msra.mxu0 0.0
      %2792 = vmatpush.msra.mxu0 0.0
      %2793 = vmatpush.msra.mxu0 0.0
      %2794 = vmatpush.msra.mxu0 0.0
      %2795 = vmatpush.msra.mxu0 0.0
      %2796 = vmatpush.msra.mxu0 0.0
      %2797 = vmatpush.msra.mxu0 0.0
      %2798 = vmatpush.msra.mxu0 %v2761
      %2799 = vmatmul.f32.gmra.mxu0 %v2756
      %v2800 = vpop.f32.mrf.mxu0
      %v2801 = vadd.f32 0.0, %v2800
      %2802 = vdwg.mxu0
      %2803 = vmatpush.msra.mxu0 %v530
      %2804 = vmatpush.msra.mxu0 %v528
      %2805 = vmatpush.msra.mxu0 %v526
      %2806 = vmatpush.msra.mxu0 %v524
      %2807 = vmatpush.msra.mxu0 %v522
      %2808 = vmatpush.msra.mxu0 %v520
      %2809 = vmatpush.msra.mxu0 %v518
      %2810 = vmatpush.msra.mxu0 %v516
      %2811 = vmatpush.msra.mxu0 %v514
      %2812 = vmatpush.msra.mxu0 %v512
      %2813 = vmatpush.msra.mxu0 %v510
      %2814 = vmatpush.msra.mxu0 %v508
      %2815 = vmatpush.msra.mxu0 %v506
      %2816 = vmatpush.msra.mxu0 %v504
      %2817 = vmatpush.msra.mxu0 %v502
      %2818 = vmatpush.msra.mxu0 %v500
      %2819 = vmatmul.f32.gmra.mxu0 %v2781
      %v2820 = vpop.f32.mrf.mxu0
      %v2821 = vadd.f32 0.0, %v2820
      %2822 = vdwg.mxu0
      %2823 = vmatpush.msra.mxu0 %v562
      %2824 = vmatpush.msra.mxu0 %v560
      %2825 = vmatpush.msra.mxu0 %v558
      %2826 = vmatpush.msra.mxu0 %v556
      %2827 = vmatpush.msra.mxu0 %v554
      %2828 = vmatpush.msra.mxu0 %v552
      %2829 = vmatpush.msra.mxu0 %v550
      %2830 = vmatpush.msra.mxu0 %v548
      %2831 = vmatpush.msra.mxu0 %v546
      %2832 = vmatpush.msra.mxu0 %v544
      %2833 = vmatpush.msra.mxu0 %v542
      %2834 = vmatpush.msra.mxu0 %v540
      %2835 = vmatpush.msra.mxu0 %v538
      %2836 = vmatpush.msra.mxu0 %v536
      %2837 = vmatpush.msra.mxu0 %v534
      %2838 = vmatpush.msra.mxu0 %v532
      %2839 = vmatmul.f32.gmra.mxu0 %v2801
      %v2840 = vpop.f32.mrf.mxu0
      %v2841 = vadd.f32 %v2821, %v2840
      %2842 = vdwg.mxu0
      %2843 = vmatpush.msra.mxu0 %v531
      %2844 = vmatpush.msra.mxu0 %v529
      %2845 = vmatpush.msra.mxu0 %v527
      %2846 = vmatpush.msra.mxu0 %v525
      %2847 = vmatpush.msra.mxu0 %v523
      %2848 = vmatpush.msra.mxu0 %v521
      %2849 = vmatpush.msra.mxu0 %v519
      %2850 = vmatpush.msra.mxu0 %v517
      %2851 = vmatpush.msra.mxu0 %v515
      %2852 = vmatpush.msra.mxu0 %v513
      %2853 = vmatpush.msra.mxu0 %v511
      %2854 = vmatpush.msra.mxu0 %v509
      %2855 = vmatpush.msra.mxu0 %v507
      %2856 = vmatpush.msra.mxu0 %v505
      %2857 = vmatpush.msra.mxu0 %v503
      %2858 = vmatpush.msra.mxu0 %v501
      %2859 = vmatmul.f32.gmra.mxu0 %v2781
      %v2860 = vpop.f32.mrf.mxu0
      %v2861 = vadd.f32 0.0, %v2860
      %2862 = vdwg.mxu0
      %2863 = vmatpush.msra.mxu0 %v563
      %2864 = vmatpush.msra.mxu0 %v561
      %2865 = vmatpush.msra.mxu0 %v559
      %2866 = vmatpush.msra.mxu0 %v557
      %2867 = vmatpush.msra.mxu0 %v555
      %2868 = vmatpush.msra.mxu0 %v553
      %2869 = vmatpush.msra.mxu0 %v551
      %2870 = vmatpush.msra.mxu0 %v549
      %2871 = vmatpush.msra.mxu0 %v547
      %2872 = vmatpush.msra.mxu0 %v545
      %2873 = vmatpush.msra.mxu0 %v543
      %2874 = vmatpush.msra.mxu0 %v541
      %2875 = vmatpush.msra.mxu0 %v539
      %2876 = vmatpush.msra.mxu0 %v537
      %2877 = vmatpush.msra.mxu0 %v535
      %2878 = vmatpush.msra.mxu0 %v533
      %2879 = vmatmul.f32.gmra.mxu0 %v2801
      %v2880 = vpop.f32.mrf.mxu0
      %v2881 = vadd.f32 %v2861, %v2880
      %2882 = vdwg.mxu0
      %2884 = vset.pattern.permute.xlu0 0
      %2885 = vperm.xlu0 %2884, %v2750
      %v2886 = vpop.permute.xlu0 %2885
      %v2888 = vadd.f32 %v2886, %v2841
      %v2889 = vadd.f32 %v2886, %v2881
      %2890 = vst [vmem:[#allocation1] ss:$2 sm:$0xff] %v329
      %v2891 = vld.sshfl [vmem:[#allocation1] sm:$0xff pattern:$0x75316420]
      %v2892 = vld.sshfl [vmem:[#allocation1 + $0x8] sm:$0xff pattern:$0x75316420]
      %v2894 = vsel %vm2754, %v2742, 0
      %v2896 = vsel %vm2758, %v2891, 0
      %v2898 = vsel %vm2758, %v2892, 0
      %2900 = vmatpush.msra.mxu0 0.0
      %2901 = vmatpush.msra.mxu0 0.0
      %2902 = vmatpush.msra.mxu0 0.0
      %2903 = vmatpush.msra.mxu0 0.0
      %2904 = vmatpush.msra.mxu0 0.0
      %2905 = vmatpush.msra.mxu0 0.0
      %2906 = vmatpush.msra.mxu0 0.0
      %2907 = vmatpush.msra.mxu0 0.0
      %2908 = vmatpush.msra.mxu0 0.0
      %2909 = vmatpush.msra.mxu0 0.0
      %2910 = vmatpush.msra.mxu0 0.0
      %2911 = vmatpush.msra.mxu0 0.0
      %2912 = vmatpush.msra.mxu0 0.0
      %2913 = vmatpush.msra.mxu0 0.0
      %2914 = vmatpush.msra.mxu0 0.0
      %2915 = vmatpush.msra.mxu0 %v2896
      %2916 = vmatmul.f32.gmra.mxu0 %v2894
      %v2917 = vpop.f32.mrf.mxu0
      %v2918 = vadd.f32 0.0, %v2917
      %2919 = vdwg.mxu0
      %2920 = vmatpush.msra.mxu0 0.0
      %2921 = vmatpush.msra.mxu0 0.0
      %2922 = vmatpush.msra.mxu0 0.0
      %2923 = vmatpush.msra.mxu0 0.0
      %2924 = vmatpush.msra.mxu0 0.0
      %2925 = vmatpush.msra.mxu0 0.0
      %2926 = vmatpush.msra.mxu0 0.0
      %2927 = vmatpush.msra.mxu0 0.0
      %2928 = vmatpush.msra.mxu0 0.0
      %2929 = vmatpush.msra.mxu0 0.0
      %2930 = vmatpush.msra.mxu0 0.0
      %2931 = vmatpush.msra.mxu0 0.0
      %2932 = vmatpush.msra.mxu0 0.0
      %2933 = vmatpush.msra.mxu0 0.0
      %2934 = vmatpush.msra.mxu0 0.0
      %2935 = vmatpush.msra.mxu0 %v2898
      %2936 = vmatmul.f32.gmra.mxu0 %v2894
      %v2937 = vpop.f32.mrf.mxu0
      %v2938 = vadd.f32 0.0, %v2937
      %2939 = vdwg.mxu0
      %2940 = vmatpush.msra.mxu0 %v724
      %2941 = vmatpush.msra.mxu0 %v722
      %2942 = vmatpush.msra.mxu0 %v720
      %2943 = vmatpush.msra.mxu0 %v718
      %2944 = vmatpush.msra.mxu0 %v716
      %2945 = vmatpush.msra.mxu0 %v714
      %2946 = vmatpush.msra.mxu0 %v712
      %2947 = vmatpush.msra.mxu0 %v710
      %2948 = vmatpush.msra.mxu0 %v708
      %2949 = vmatpush.msra.mxu0 %v706
      %2950 = vmatpush.msra.mxu0 %v704
      %2951 = vmatpush.msra.mxu0 %v702
      %2952 = vmatpush.msra.mxu0 %v700
      %2953 = vmatpush.msra.mxu0 %v698
      %2954 = vmatpush.msra.mxu0 %v696
      %2955 = vmatpush.msra.mxu0 %v694
      %2956 = vmatmul.f32.gmra.mxu0 %v2918
      %v2957 = vpop.f32.mrf.mxu0
      %v2958 = vadd.f32 0.0, %v2957
      %2959 = vdwg.mxu0
      %2960 = vmatpush.msra.mxu0 %v756
      %2961 = vmatpush.msra.mxu0 %v754
      %2962 = vmatpush.msra.mxu0 %v752
      %2963 = vmatpush.msra.mxu0 %v750
      %2964 = vmatpush.msra.mxu0 %v748
      %2965 = vmatpush.msra.mxu0 %v746
      %2966 = vmatpush.msra.mxu0 %v744
      %2967 = vmatpush.msra.mxu0 %v742
      %2968 = vmatpush.msra.mxu0 %v740
      %2969 = vmatpush.msra.mxu0 %v738
      %2970 = vmatpush.msra.mxu0 %v736
      %2971 = vmatpush.msra.mxu0 %v734
      %2972 = vmatpush.msra.mxu0 %v732
      %2973 = vmatpush.msra.mxu0 %v730
      %2974 = vmatpush.msra.mxu0 %v728
      %2975 = vmatpush.msra.mxu0 %v726
      %2976 = vmatmul.f32.gmra.mxu0 %v2938
      %v2977 = vpop.f32.mrf.mxu0
      %v2978 = vadd.f32 %v2958, %v2977
      %2979 = vdwg.mxu0
      %2980 = vmatpush.msra.mxu0 %v725
      %2981 = vmatpush.msra.mxu0 %v723
      %2982 = vmatpush.msra.mxu0 %v721
      %2983 = vmatpush.msra.mxu0 %v719
      %2984 = vmatpush.msra.mxu0 %v717
      %2985 = vmatpush.msra.mxu0 %v715
      %2986 = vmatpush.msra.mxu0 %v713
      %2987 = vmatpush.msra.mxu0 %v711
      %2988 = vmatpush.msra.mxu0 %v709
      %2989 = vmatpush.msra.mxu0 %v707
      %2990 = vmatpush.msra.mxu0 %v705
      %2991 = vmatpush.msra.mxu0 %v703
      %2992 = vmatpush.msra.mxu0 %v701
      %2993 = vmatpush.msra.mxu0 %v699
      %2994 = vmatpush.msra.mxu0 %v697
      %2995 = vmatpush.msra.mxu0 %v695
      %2996 = vmatmul.f32.gmra.mxu0 %v2918
      %v2997 = vpop.f32.mrf.mxu0
      %v2998 = vadd.f32 0.0, %v2997
      %2999 = vdwg.mxu0
      %3000 = vmatpush.msra.mxu0 %v757
      %3001 = vmatpush.msra.mxu0 %v755
      %3002 = vmatpush.msra.mxu0 %v753
      %3003 = vmatpush.msra.mxu0 %v751
      %3004 = vmatpush.msra.mxu0 %v749
      %3005 = vmatpush.msra.mxu0 %v747
      %3006 = vmatpush.msra.mxu0 %v745
      %3007 = vmatpush.msra.mxu0 %v743
      %3008 = vmatpush.msra.mxu0 %v741
      %3009 = vmatpush.msra.mxu0 %v739
      %3010 = vmatpush.msra.mxu0 %v737
      %3011 = vmatpush.msra.mxu0 %v735
      %3012 = vmatpush.msra.mxu0 %v733
      %3013 = vmatpush.msra.mxu0 %v731
      %3014 = vmatpush.msra.mxu0 %v729
      %3015 = vmatpush.msra.mxu0 %v727
      %3016 = vmatmul.f32.gmra.mxu0 %v2938
      %v3017 = vpop.f32.mrf.mxu0
      %v3018 = vadd.f32 %v2998, %v3017
      %3019 = vdwg.mxu0
      %v3020 = vadd.f32 %v2888, %v2978
      %v3021 = vadd.f32 %v2889, %v3018
      %3022 = vst [vmem:[#allocation1] ss:$2 sm:$0xff] %v329
      %v3023 = vld.sshfl [vmem:[#allocation1] sm:$0xff pattern:$0x75316420]
      %v3024 = vld.sshfl [vmem:[#allocation1 + $0x8] sm:$0xff pattern:$0x75316420]
      %v3026 = vsel %vm2754, %v2743, 0
      %v3028 = vsel %vm2758, %v3023, 0
      %v3030 = vsel %vm2758, %v3024, 0
      %3032 = vmatpush.msra.mxu0 0.0
      %3033 = vmatpush.msra.mxu0 0.0
      %3034 = vmatpush.msra.mxu0 0.0
      %3035 = vmatpush.msra.mxu0 0.0
      %3036 = vmatpush.msra.mxu0 0.0
      %3037 = vmatpush.msra.mxu0 0.0
      %3038 = vmatpush.msra.mxu0 0.0
      %3039 = vmatpush.msra.mxu0 0.0
      %3040 = vmatpush.msra.mxu0 0.0
      %3041 = vmatpush.msra.mxu0 0.0
      %3042 = vmatpush.msra.mxu0 0.0
      %3043 = vmatpush.msra.mxu0 0.0
      %3044 = vmatpush.msra.mxu0 0.0
      %3045 = vmatpush.msra.mxu0 0.0
      %3046 = vmatpush.msra.mxu0 0.0
      %3047 = vmatpush.msra.mxu0 %v3028
      %3048 = vmatmul.f32.gmra.mxu0 %v3026
      %v3049 = vpop.f32.mrf.mxu0
      %v3050 = vadd.f32 0.0, %v3049
      %3051 = vdwg.mxu0
      %3052 = vmatpush.msra.mxu0 0.0
      %3053 = vmatpush.msra.mxu0 0.0
      %3054 = vmatpush.msra.mxu0 0.0
      %3055 = vmatpush.msra.mxu0 0.0
      %3056 = vmatpush.msra.mxu0 0.0
      %3057 = vmatpush.msra.mxu0 0.0
      %3058 = vmatpush.msra.mxu0 0.0
      %3059 = vmatpush.msra.mxu0 0.0
      %3060 = vmatpush.msra.mxu0 0.0
      %3061 = vmatpush.msra.mxu0 0.0
      %3062 = vmatpush.msra.mxu0 0.0
      %3063 = vmatpush.msra.mxu0 0.0
      %3064 = vmatpush.msra.mxu0 0.0
      %3065 = vmatpush.msra.mxu0 0.0
      %3066 = vmatpush.msra.mxu0 0.0
      %3067 = vmatpush.msra.mxu0 %v3030
      %3068 = vmatmul.f32.gmra.mxu0 %v3026
      %v3069 = vpop.f32.mrf.mxu0
      %v3070 = vadd.f32 0.0, %v3069
      %3071 = vdwg.mxu0
      %3072 = vmatpush.msra.mxu0 %v913
      %3073 = vmatpush.msra.mxu0 %v911
      %3074 = vmatpush.msra.mxu0 %v909
      %3075 = vmatpush.msra.mxu0 %v907
      %3076 = vmatpush.msra.mxu0 %v905
      %3077 = vmatpush.msra.mxu0 %v903
      %3078 = vmatpush.msra.mxu0 %v901
      %3079 = vmatpush.msra.mxu0 %v899
      %3080 = vmatpush.msra.mxu0 %v897
      %3081 = vmatpush.msra.mxu0 %v895
      %3082 = vmatpush.msra.mxu0 %v893
      %3083 = vmatpush.msra.mxu0 %v891
      %3084 = vmatpush.msra.mxu0 %v889
      %3085 = vmatpush.msra.mxu0 %v887
      %3086 = vmatpush.msra.mxu0 %v885
      %3087 = vmatpush.msra.mxu0 %v883
      %3088 = vmatmul.f32.gmra.mxu0 %v3050
      %v3089 = vpop.f32.mrf.mxu0
      %v3090 = vadd.f32 0.0, %v3089
      %3091 = vdwg.mxu0
      %3092 = vmatpush.msra.mxu0 %v945
      %3093 = vmatpush.msra.mxu0 %v943
      %3094 = vmatpush.msra.mxu0 %v941
      %3095 = vmatpush.msra.mxu0 %v939
      %3096 = vmatpush.msra.mxu0 %v937
      %3097 = vmatpush.msra.mxu0 %v935
      %3098 = vmatpush.msra.mxu0 %v933
      %3099 = vmatpush.msra.mxu0 %v931
      %3100 = vmatpush.msra.mxu0 %v929
      %3101 = vmatpush.msra.mxu0 %v927
      %3102 = vmatpush.msra.mxu0 %v925
      %3103 = vmatpush.msra.mxu0 %v923
      %3104 = vmatpush.msra.mxu0 %v921
      %3105 = vmatpush.msra.mxu0 %v919
      %3106 = vmatpush.msra.mxu0 %v917
      %3107 = vmatpush.msra.mxu0 %v915
      %3108 = vmatmul.f32.gmra.mxu0 %v3070
      %v3109 = vpop.f32.mrf.mxu0
      %v3110 = vadd.f32 %v3090, %v3109
      %3111 = vdwg.mxu0
      %3112 = vmatpush.msra.mxu0 %v914
      %3113 = vmatpush.msra.mxu0 %v912
      %3114 = vmatpush.msra.mxu0 %v910
      %3115 = vmatpush.msra.mxu0 %v908
      %3116 = vmatpush.msra.mxu0 %v906
      %3117 = vmatpush.msra.mxu0 %v904
      %3118 = vmatpush.msra.mxu0 %v902
      %3119 = vmatpush.msra.mxu0 %v900
      %3120 = vmatpush.msra.mxu0 %v898
      %3121 = vmatpush.msra.mxu0 %v896
      %3122 = vmatpush.msra.mxu0 %v894
      %3123 = vmatpush.msra.mxu0 %v892
      %3124 = vmatpush.msra.mxu0 %v890
      %3125 = vmatpush.msra.mxu0 %v888
      %3126 = vmatpush.msra.mxu0 %v886
      %3127 = vmatpush.msra.mxu0 %v884
      %3128 = vmatmul.f32.gmra.mxu0 %v3050
      %v3129 = vpop.f32.mrf.mxu0
      %v3130 = vadd.f32 0.0, %v3129
      %3131 = vdwg.mxu0
      %3132 = vmatpush.msra.mxu0 %v946
      %3133 = vmatpush.msra.mxu0 %v944
      %3134 = vmatpush.msra.mxu0 %v942
      %3135 = vmatpush.msra.mxu0 %v940
      %3136 = vmatpush.msra.mxu0 %v938
      %3137 = vmatpush.msra.mxu0 %v936
      %3138 = vmatpush.msra.mxu0 %v934
      %3139 = vmatpush.msra.mxu0 %v932
      %3140 = vmatpush.msra.mxu0 %v930
      %3141 = vmatpush.msra.mxu0 %v928
      %3142 = vmatpush.msra.mxu0 %v926
      %3143 = vmatpush.msra.mxu0 %v924
      %3144 = vmatpush.msra.mxu0 %v922
      %3145 = vmatpush.msra.mxu0 %v920
      %3146 = vmatpush.msra.mxu0 %v918
      %3147 = vmatpush.msra.mxu0 %v916
      %3148 = vmatmul.f32.gmra.mxu0 %v3070
      %v3149 = vpop.f32.mrf.mxu0
      %v3150 = vadd.f32 %v3130, %v3149
      %3151 = vdwg.mxu0
      %v3152 = vadd.f32 %v3020, %v3110
      %v3153 = vadd.f32 %v3021, %v3150
      %3154 = vst [vmem:[#allocation1] ss:$2 sm:$0xff] %v329
      %v3155 = vld.sshfl [vmem:[#allocation1] sm:$0xff pattern:$0x75316420]
      %v3156 = vld.sshfl [vmem:[#allocation1 + $0x8] sm:$0xff pattern:$0x75316420]
      %v3158 = vsel %vm2754, %v2744, 0
      %v3160 = vsel %vm2758, %v3155, 0
      %v3162 = vsel %vm2758, %v3156, 0
      %3164 = vmatpush.msra.mxu0 0.0
      %3165 = vmatpush.msra.mxu0 0.0
      %3166 = vmatpush.msra.mxu0 0.0
      %3167 = vmatpush.msra.mxu0 0.0
      %3168 = vmatpush.msra.mxu0 0.0
      %3169 = vmatpush.msra.mxu0 0.0
      %3170 = vmatpush.msra.mxu0 0.0
      %3171 = vmatpush.msra.mxu0 0.0
      %3172 = vmatpush.msra.mxu0 0.0
      %3173 = vmatpush.msra.mxu0 0.0
      %3174 = vmatpush.msra.mxu0 0.0
      %3175 = vmatpush.msra.mxu0 0.0
      %3176 = vmatpush.msra.mxu0 0.0
      %3177 = vmatpush.msra.mxu0 0.0
      %3178 = vmatpush.msra.mxu0 0.0
      %3179 = vmatpush.msra.mxu0 %v3160
      %3180 = vmatmul.f32.gmra.mxu0 %v3158
      %v3181 = vpop.f32.mrf.mxu0
      %v3182 = vadd.f32 0.0, %v3181
      %3183 = vdwg.mxu0
      %3184 = vmatpush.msra.mxu0 0.0
      %3185 = vmatpush.msra.mxu0 0.0
      %3186 = vmatpush.msra.mxu0 0.0
      %3187 = vmatpush.msra.mxu0 0.0
      %3188 = vmatpush.msra.mxu0 0.0
      %3189 = vmatpush.msra.mxu0 0.0
      %3190 = vmatpush.msra.mxu0 0.0
      %3191 = vmatpush.msra.mxu0 0.0
      %3192 = vmatpush.msra.mxu0 0.0
      %3193 = vmatpush.msra.mxu0 0.0
      %3194 = vmatpush.msra.mxu0 0.0
      %3195 = vmatpush.msra.mxu0 0.0
      %3196 = vmatpush.msra.mxu0 0.0
      %3197 = vmatpush.msra.mxu0 0.0
      %3198 = vmatpush.msra.mxu0 0.0
      %3199 = vmatpush.msra.mxu0 %v3162
      %3200 = vmatmul.f32.gmra.mxu0 %v3158
      %v3201 = vpop.f32.mrf.mxu0
      %v3202 = vadd.f32 0.0, %v3201
      %3203 = vdwg.mxu0
      %3204 = vmatpush.msra.mxu0 %v1102
      %3205 = vmatpush.msra.mxu0 %v1100
      %3206 = vmatpush.msra.mxu0 %v1098
      %3207 = vmatpush.msra.mxu0 %v1096
      %3208 = vmatpush.msra.mxu0 %v1094
      %3209 = vmatpush.msra.mxu0 %v1092
      %3210 = vmatpush.msra.mxu0 %v1090
      %3211 = vmatpush.msra.mxu0 %v1088
      %3212 = vmatpush.msra.mxu0 %v1086
      %3213 = vmatpush.msra.mxu0 %v1084
      %3214 = vmatpush.msra.mxu0 %v1082
      %3215 = vmatpush.msra.mxu0 %v1080
      %3216 = vmatpush.msra.mxu0 %v1078
      %3217 = vmatpush.msra.mxu0 %v1076
      %3218 = vmatpush.msra.mxu0 %v1074
      %3219 = vmatpush.msra.mxu0 %v1072
      %3220 = vmatmul.f32.gmra.mxu0 %v3182
      %v3221 = vpop.f32.mrf.mxu0
      %v3222 = vadd.f32 0.0, %v3221
      %3223 = vdwg.mxu0
      %3224 = vmatpush.msra.mxu0 %v1134
      %3225 = vmatpush.msra.mxu0 %v1132
      %3226 = vmatpush.msra.mxu0 %v1130
      %3227 = vmatpush.msra.mxu0 %v1128
      %3228 = vmatpush.msra.mxu0 %v1126
      %3229 = vmatpush.msra.mxu0 %v1124
      %3230 = vmatpush.msra.mxu0 %v1122
      %3231 = vmatpush.msra.mxu0 %v1120
      %3232 = vmatpush.msra.mxu0 %v1118
      %3233 = vmatpush.msra.mxu0 %v1116
      %3234 = vmatpush.msra.mxu0 %v1114
      %3235 = vmatpush.msra.mxu0 %v1112
      %3236 = vmatpush.msra.mxu0 %v1110
      %3237 = vmatpush.msra.mxu0 %v1108
      %3238 = vmatpush.msra.mxu0 %v1106
      %3239 = vmatpush.msra.mxu0 %v1104
      %3240 = vmatmul.f32.gmra.mxu0 %v3202
      %v3241 = vpop.f32.mrf.mxu0
      %v3242 = vadd.f32 %v3222, %v3241
      %3243 = vdwg.mxu0
      %3244 = vmatpush.msra.mxu0 %v1103
      %3245 = vmatpush.msra.mxu0 %v1101
      %3246 = vmatpush.msra.mxu0 %v1099
      %3247 = vmatpush.msra.mxu0 %v1097
      %3248 = vmatpush.msra.mxu0 %v1095
      %3249 = vmatpush.msra.mxu0 %v1093
      %3250 = vmatpush.msra.mxu0 %v1091
      %3251 = vmatpush.msra.mxu0 %v1089
      %3252 = vmatpush.msra.mxu0 %v1087
      %3253 = vmatpush.msra.mxu0 %v1085
      %3254 = vmatpush.msra.mxu0 %v1083
      %3255 = vmatpush.msra.mxu0 %v1081
      %3256 = vmatpush.msra.mxu0 %v1079
      %3257 = vmatpush.msra.mxu0 %v1077
      %3258 = vmatpush.msra.mxu0 %v1075
      %3259 = vmatpush.msra.mxu0 %v1073
      %3260 = vmatmul.f32.gmra.mxu0 %v3182
      %v3261 = vpop.f32.mrf.mxu0
      %v3262 = vadd.f32 0.0, %v3261
      %3263 = vdwg.mxu0
      %3264 = vmatpush.msra.mxu0 %v1135
      %3265 = vmatpush.msra.mxu0 %v1133
      %3266 = vmatpush.msra.mxu0 %v1131
      %3267 = vmatpush.msra.mxu0 %v1129
      %3268 = vmatpush.msra.mxu0 %v1127
      %3269 = vmatpush.msra.mxu0 %v1125
      %3270 = vmatpush.msra.mxu0 %v1123
      %3271 = vmatpush.msra.mxu0 %v1121
      %3272 = vmatpush.msra.mxu0 %v1119
      %3273 = vmatpush.msra.mxu0 %v1117
      %3274 = vmatpush.msra.mxu0 %v1115
      %3275 = vmatpush.msra.mxu0 %v1113
      %3276 = vmatpush.msra.mxu0 %v1111
      %3277 = vmatpush.msra.mxu0 %v1109
      %3278 = vmatpush.msra.mxu0 %v1107
      %3279 = vmatpush.msra.mxu0 %v1105
      %3280 = vmatmul.f32.gmra.mxu0 %v3202
      %v3281 = vpop.f32.mrf.mxu0
      %v3282 = vadd.f32 %v3262, %v3281
      %3283 = vdwg.mxu0
      %v3284 = vadd.f32 %v3152, %v3242
      %v3285 = vadd.f32 %v3153, %v3282
      %3286 = vst [vmem:[#allocation1] ss:$2 sm:$0xff] %v329
      %v3287 = vld.sshfl [vmem:[#allocation1] sm:$0xff pattern:$0x75316420]
      %v3288 = vld.sshfl [vmem:[#allocation1 + $0x8] sm:$0xff pattern:$0x75316420]
      %v3290 = vsel %vm2754, %v2745, 0
      %v3292 = vsel %vm2758, %v3287, 0
      %v3294 = vsel %vm2758, %v3288, 0
      %3296 = vmatpush.msra.mxu0 0.0
      %3297 = vmatpush.msra.mxu0 0.0
      %3298 = vmatpush.msra.mxu0 0.0
      %3299 = vmatpush.msra.mxu0 0.0
      %3300 = vmatpush.msra.mxu0 0.0
      %3301 = vmatpush.msra.mxu0 0.0
      %3302 = vmatpush.msra.mxu0 0.0
      %3303 = vmatpush.msra.mxu0 0.0
      %3304 = vmatpush.msra.mxu0 0.0
      %3305 = vmatpush.msra.mxu0 0.0
      %3306 = vmatpush.msra.mxu0 0.0
      %3307 = vmatpush.msra.mxu0 0.0
      %3308 = vmatpush.msra.mxu0 0.0
      %3309 = vmatpush.msra.mxu0 0.0
      %3310 = vmatpush.msra.mxu0 0.0
      %3311 = vmatpush.msra.mxu0 %v3292
      %3312 = vmatmul.f32.gmra.mxu0 %v3290
      %v3313 = vpop.f32.mrf.mxu0
      %v3314 = vadd.f32 0.0, %v3313
      %3315 = vdwg.mxu0
      %3316 = vmatpush.msra.mxu0 0.0
      %3317 = vmatpush.msra.mxu0 0.0
      %3318 = vmatpush.msra.mxu0 0.0
      %3319 = vmatpush.msra.mxu0 0.0
      %3320 = vmatpush.msra.mxu0 0.0
      %3321 = vmatpush.msra.mxu0 0.0
      %3322 = vmatpush.msra.mxu0 0.0
      %3323 = vmatpush.msra.mxu0 0.0
      %3324 = vmatpush.msra.mxu0 0.0
      %3325 = vmatpush.msra.mxu0 0.0
      %3326 = vmatpush.msra.mxu0 0.0
      %3327 = vmatpush.msra.mxu0 0.0
      %3328 = vmatpush.msra.mxu0 0.0
      %3329 = vmatpush.msra.mxu0 0.0
      %3330 = vmatpush.msra.mxu0 0.0
      %3331 = vmatpush.msra.mxu0 %v3294
      %3332 = vmatmul.f32.gmra.mxu0 %v3290
      %v3333 = vpop.f32.mrf.mxu0
      %v3334 = vadd.f32 0.0, %v3333
      %3335 = vdwg.mxu0
      %3336 = vmatpush.msra.mxu0 %v1291
      %3337 = vmatpush.msra.mxu0 %v1289
      %3338 = vmatpush.msra.mxu0 %v1287
      %3339 = vmatpush.msra.mxu0 %v1285
      %3340 = vmatpush.msra.mxu0 %v1283
      %3341 = vmatpush.msra.mxu0 %v1281
      %3342 = vmatpush.msra.mxu0 %v1279
      %3343 = vmatpush.msra.mxu0 %v1277
      %3344 = vmatpush.msra.mxu0 %v1275
      %3345 = vmatpush.msra.mxu0 %v1273
      %3346 = vmatpush.msra.mxu0 %v1271
      %3347 = vmatpush.msra.mxu0 %v1269
      %3348 = vmatpush.msra.mxu0 %v1267
      %3349 = vmatpush.msra.mxu0 %v1265
      %3350 = vmatpush.msra.mxu0 %v1263
      %3351 = vmatpush.msra.mxu0 %v1261
      %3352 = vmatmul.f32.gmra.mxu0 %v3314
      %v3353 = vpop.f32.mrf.mxu0
      %v3354 = vadd.f32 0.0, %v3353
      %3355 = vdwg.mxu0
      %3356 = vmatpush.msra.mxu0 %v1323
      %3357 = vmatpush.msra.mxu0 %v1321
      %3358 = vmatpush.msra.mxu0 %v1319
      %3359 = vmatpush.msra.mxu0 %v1317
      %3360 = vmatpush.msra.mxu0 %v1315
      %3361 = vmatpush.msra.mxu0 %v1313
      %3362 = vmatpush.msra.mxu0 %v1311
      %3363 = vmatpush.msra.mxu0 %v1309
      %3364 = vmatpush.msra.mxu0 %v1307
      %3365 = vmatpush.msra.mxu0 %v1305
      %3366 = vmatpush.msra.mxu0 %v1303
      %3367 = vmatpush.msra.mxu0 %v1301
      %3368 = vmatpush.msra.mxu0 %v1299
      %3369 = vmatpush.msra.mxu0 %v1297
      %3370 = vmatpush.msra.mxu0 %v1295
      %3371 = vmatpush.msra.mxu0 %v1293
      %3372 = vmatmul.f32.gmra.mxu0 %v3334
      %v3373 = vpop.f32.mrf.mxu0
      %v3374 = vadd.f32 %v3354, %v3373
      %3375 = vdwg.mxu0
      %3376 = vmatpush.msra.mxu0 %v1292
      %3377 = vmatpush.msra.mxu0 %v1290
      %3378 = vmatpush.msra.mxu0 %v1288
      %3379 = vmatpush.msra.mxu0 %v1286
      %3380 = vmatpush.msra.mxu0 %v1284
      %3381 = vmatpush.msra.mxu0 %v1282
      %3382 = vmatpush.msra.mxu0 %v1280
      %3383 = vmatpush.msra.mxu0 %v1278
      %3384 = vmatpush.msra.mxu0 %v1276
      %3385 = vmatpush.msra.mxu0 %v1274
      %3386 = vmatpush.msra.mxu0 %v1272
      %3387 = vmatpush.msra.mxu0 %v1270
      %3388 = vmatpush.msra.mxu0 %v1268
      %3389 = vmatpush.msra.mxu0 %v1266
      %3390 = vmatpush.msra.mxu0 %v1264
      %3391 = vmatpush.msra.mxu0 %v1262
      %3392 = vmatmul.f32.gmra.mxu0 %v3314
      %v3393 = vpop.f32.mrf.mxu0
      %v3394 = vadd.f32 0.0, %v3393
      %3395 = vdwg.mxu0
      %3396 = vmatpush.msra.mxu0 %v1324
      %3397 = vmatpush.msra.mxu0 %v1322
      %3398 = vmatpush.msra.mxu0 %v1320
      %3399 = vmatpush.msra.mxu0 %v1318
      %3400 = vmatpush.msra.mxu0 %v1316
      %3401 = vmatpush.msra.mxu0 %v1314
      %3402 = vmatpush.msra.mxu0 %v1312
      %3403 = vmatpush.msra.mxu0 %v1310
      %3404 = vmatpush.msra.mxu0 %v1308
      %3405 = vmatpush.msra.mxu0 %v1306
      %3406 = vmatpush.msra.mxu0 %v1304
      %3407 = vmatpush.msra.mxu0 %v1302
      %3408 = vmatpush.msra.mxu0 %v1300
      %3409 = vmatpush.msra.mxu0 %v1298
      %3410 = vmatpush.msra.mxu0 %v1296
      %3411 = vmatpush.msra.mxu0 %v1294
      %3412 = vmatmul.f32.gmra.mxu0 %v3334
      %v3413 = vpop.f32.mrf.mxu0
      %v3414 = vadd.f32 %v3394, %v3413
      %3415 = vdwg.mxu0
      %v3416 = vadd.f32 %v3284, %v3374
      %v3417 = vadd.f32 %v3285, %v3414
      %3418 = vst [vmem:[#allocation1] ss:$2 sm:$0xff] %v329
      %v3419 = vld.sshfl [vmem:[#allocation1] sm:$0xff pattern:$0x75316420]
      %v3420 = vld.sshfl [vmem:[#allocation1 + $0x8] sm:$0xff pattern:$0x75316420]
      %v3422 = vsel %vm2754, %v2746, 0
      %v3424 = vsel %vm2758, %v3419, 0
      %v3426 = vsel %vm2758, %v3420, 0
      %3428 = vmatpush.msra.mxu0 0.0
      %3429 = vmatpush.msra.mxu0 0.0
      %3430 = vmatpush.msra.mxu0 0.0
      %3431 = vmatpush.msra.mxu0 0.0
      %3432 = vmatpush.msra.mxu0 0.0
      %3433 = vmatpush.msra.mxu0 0.0
      %3434 = vmatpush.msra.mxu0 0.0
      %3435 = vmatpush.msra.mxu0 0.0
      %3436 = vmatpush.msra.mxu0 0.0
      %3437 = vmatpush.msra.mxu0 0.0
      %3438 = vmatpush.msra.mxu0 0.0
      %3439 = vmatpush.msra.mxu0 0.0
      %3440 = vmatpush.msra.mxu0 0.0
      %3441 = vmatpush.msra.mxu0 0.0
      %3442 = vmatpush.msra.mxu0 0.0
      %3443 = vmatpush.msra.mxu0 %v3424
      %3444 = vmatmul.f32.gmra.mxu0 %v3422
      %v3445 = vpop.f32.mrf.mxu0
      %v3446 = vadd.f32 0.0, %v3445
      %3447 = vdwg.mxu0
      %3448 = vmatpush.msra.mxu0 0.0
      %3449 = vmatpush.msra.mxu0 0.0
      %3450 = vmatpush.msra.mxu0 0.0
      %3451 = vmatpush.msra.mxu0 0.0
      %3452 = vmatpush.msra.mxu0 0.0
      %3453 = vmatpush.msra.mxu0 0.0
      %3454 = vmatpush.msra.mxu0 0.0
      %3455 = vmatpush.msra.mxu0 0.0
      %3456 = vmatpush.msra.mxu0 0.0
      %3457 = vmatpush.msra.mxu0 0.0
      %3458 = vmatpush.msra.mxu0 0.0
      %3459 = vmatpush.msra.mxu0 0.0
      %3460 = vmatpush.msra.mxu0 0.0
      %3461 = vmatpush.msra.mxu0 0.0
      %3462 = vmatpush.msra.mxu0 0.0
      %3463 = vmatpush.msra.mxu0 %v3426
      %3464 = vmatmul.f32.gmra.mxu0 %v3422
      %v3465 = vpop.f32.mrf.mxu0
      %v3466 = vadd.f32 0.0, %v3465
      %3467 = vdwg.mxu0
      %3468 = vmatpush.msra.mxu0 %v1480
      %3469 = vmatpush.msra.mxu0 %v1478
      %3470 = vmatpush.msra.mxu0 %v1476
      %3471 = vmatpush.msra.mxu0 %v1474
      %3472 = vmatpush.msra.mxu0 %v1472
      %3473 = vmatpush.msra.mxu0 %v1470
      %3474 = vmatpush.msra.mxu0 %v1468
      %3475 = vmatpush.msra.mxu0 %v1466
      %3476 = vmatpush.msra.mxu0 %v1464
      %3477 = vmatpush.msra.mxu0 %v1462
      %3478 = vmatpush.msra.mxu0 %v1460
      %3479 = vmatpush.msra.mxu0 %v1458
      %3480 = vmatpush.msra.mxu0 %v1456
      %3481 = vmatpush.msra.mxu0 %v1454
      %3482 = vmatpush.msra.mxu0 %v1452
      %3483 = vmatpush.msra.mxu0 %v1450
      %3484 = vmatmul.f32.gmra.mxu0 %v3446
      %v3485 = vpop.f32.mrf.mxu0
      %v3486 = vadd.f32 0.0, %v3485
      %3487 = vdwg.mxu0
      %3488 = vmatpush.msra.mxu0 %v1512
      %3489 = vmatpush.msra.mxu0 %v1510
      %3490 = vmatpush.msra.mxu0 %v1508
      %3491 = vmatpush.msra.mxu0 %v1506
      %3492 = vmatpush.msra.mxu0 %v1504
      %3493 = vmatpush.msra.mxu0 %v1502
      %3494 = vmatpush.msra.mxu0 %v1500
      %3495 = vmatpush.msra.mxu0 %v1498
      %3496 = vmatpush.msra.mxu0 %v1496
      %3497 = vmatpush.msra.mxu0 %v1494
      %3498 = vmatpush.msra.mxu0 %v1492
      %3499 = vmatpush.msra.mxu0 %v1490
      %3500 = vmatpush.msra.mxu0 %v1488
      %3501 = vmatpush.msra.mxu0 %v1486
      %3502 = vmatpush.msra.mxu0 %v1484
      %3503 = vmatpush.msra.mxu0 %v1482
      %3504 = vmatmul.f32.gmra.mxu0 %v3466
      %v3505 = vpop.f32.mrf.mxu0
      %v3506 = vadd.f32 %v3486, %v3505
      %3507 = vdwg.mxu0
      %3508 = vmatpush.msra.mxu0 %v1481
      %3509 = vmatpush.msra.mxu0 %v1479
      %3510 = vmatpush.msra.mxu0 %v1477
      %3511 = vmatpush.msra.mxu0 %v1475
      %3512 = vmatpush.msra.mxu0 %v1473
      %3513 = vmatpush.msra.mxu0 %v1471
      %3514 = vmatpush.msra.mxu0 %v1469
      %3515 = vmatpush.msra.mxu0 %v1467
      %3516 = vmatpush.msra.mxu0 %v1465
      %3517 = vmatpush.msra.mxu0 %v1463
      %3518 = vmatpush.msra.mxu0 %v1461
      %3519 = vmatpush.msra.mxu0 %v1459
      %3520 = vmatpush.msra.mxu0 %v1457
      %3521 = vmatpush.msra.mxu0 %v1455
      %3522 = vmatpush.msra.mxu0 %v1453
      %3523 = vmatpush.msra.mxu0 %v1451
      %3524 = vmatmul.f32.gmra.mxu0 %v3446
      %v3525 = vpop.f32.mrf.mxu0
      %v3526 = vadd.f32 0.0, %v3525
      %3527 = vdwg.mxu0
      %3528 = vmatpush.msra.mxu0 %v1513
      %3529 = vmatpush.msra.mxu0 %v1511
      %3530 = vmatpush.msra.mxu0 %v1509
      %3531 = vmatpush.msra.mxu0 %v1507
      %3532 = vmatpush.msra.mxu0 %v1505
      %3533 = vmatpush.msra.mxu0 %v1503
      %3534 = vmatpush.msra.mxu0 %v1501
      %3535 = vmatpush.msra.mxu0 %v1499
      %3536 = vmatpush.msra.mxu0 %v1497
      %3537 = vmatpush.msra.mxu0 %v1495
      %3538 = vmatpush.msra.mxu0 %v1493
      %3539 = vmatpush.msra.mxu0 %v1491
      %3540 = vmatpush.msra.mxu0 %v1489
      %3541 = vmatpush.msra.mxu0 %v1487
      %3542 = vmatpush.msra.mxu0 %v1485
      %3543 = vmatpush.msra.mxu0 %v1483
      %3544 = vmatmul.f32.gmra.mxu0 %v3466
      %v3545 = vpop.f32.mrf.mxu0
      %v3546 = vadd.f32 %v3526, %v3545
      %3547 = vdwg.mxu0
      %v3548 = vadd.f32 %v3416, %v3506
      %v3549 = vadd.f32 %v3417, %v3546
      %3550 = vst [vmem:[#allocation1] ss:$2 sm:$0xff] %v329
      %v3551 = vld.sshfl [vmem:[#allocation1] sm:$0xff pattern:$0x75316420]
      %v3552 = vld.sshfl [vmem:[#allocation1 + $0x8] sm:$0xff pattern:$0x75316420]
      %v3554 = vsel %vm2754, %v2747, 0
      %v3556 = vsel %vm2758, %v3551, 0
      %v3558 = vsel %vm2758, %v3552, 0
      %3560 = vmatpush.msra.mxu0 0.0
      %3561 = vmatpush.msra.mxu0 0.0
      %3562 = vmatpush.msra.mxu0 0.0
      %3563 = vmatpush.msra.mxu0 0.0
      %3564 = vmatpush.msra.mxu0 0.0
      %3565 = vmatpush.msra.mxu0 0.0
      %3566 = vmatpush.msra.mxu0 0.0
      %3567 = vmatpush.msra.mxu0 0.0
      %3568 = vmatpush.msra.mxu0 0.0
      %3569 = vmatpush.msra.mxu0 0.0
      %3570 = vmatpush.msra.mxu0 0.0
      %3571 = vmatpush.msra.mxu0 0.0
      %3572 = vmatpush.msra.mxu0 0.0
      %3573 = vmatpush.msra.mxu0 0.0
      %3574 = vmatpush.msra.mxu0 0.0
      %3575 = vmatpush.msra.mxu0 %v3556
      %3576 = vmatmul.f32.gmra.mxu0 %v3554
      %v3577 = vpop.f32.mrf.mxu0
      %v3578 = vadd.f32 0.0, %v3577
      %3579 = vdwg.mxu0
      %3580 = vmatpush.msra.mxu0 0.0
      %3581 = vmatpush.msra.mxu0 0.0
      %3582 = vmatpush.msra.mxu0 0.0
      %3583 = vmatpush.msra.mxu0 0.0
      %3584 = vmatpush.msra.mxu0 0.0
      %3585 = vmatpush.msra.mxu0 0.0
      %3586 = vmatpush.msra.mxu0 0.0
      %3587 = vmatpush.msra.mxu0 0.0
      %3588 = vmatpush.msra.mxu0 0.0
      %3589 = vmatpush.msra.mxu0 0.0
      %3590 = vmatpush.msra.mxu0 0.0
      %3591 = vmatpush.msra.mxu0 0.0
      %3592 = vmatpush.msra.mxu0 0.0
      %3593 = vmatpush.msra.mxu0 0.0
      %3594 = vmatpush.msra.mxu0 0.0
      %3595 = vmatpush.msra.mxu0 %v3558
      %3596 = vmatmul.f32.gmra.mxu0 %v3554
      %v3597 = vpop.f32.mrf.mxu0
      %v3598 = vadd.f32 0.0, %v3597
      %3599 = vdwg.mxu0
      %3600 = vmatpush.msra.mxu0 %v1669
      %3601 = vmatpush.msra.mxu0 %v1667
      %3602 = vmatpush.msra.mxu0 %v1665
      %3603 = vmatpush.msra.mxu0 %v1663
      %3604 = vmatpush.msra.mxu0 %v1661
      %3605 = vmatpush.msra.mxu0 %v1659
      %3606 = vmatpush.msra.mxu0 %v1657
      %3607 = vmatpush.msra.mxu0 %v1655
      %3608 = vmatpush.msra.mxu0 %v1653
      %3609 = vmatpush.msra.mxu0 %v1651
      %3610 = vmatpush.msra.mxu0 %v1649
      %3611 = vmatpush.msra.mxu0 %v1647
      %3612 = vmatpush.msra.mxu0 %v1645
      %3613 = vmatpush.msra.mxu0 %v1643
      %3614 = vmatpush.msra.mxu0 %v1641
      %3615 = vmatpush.msra.mxu0 %v1639
      %3616 = vmatmul.f32.gmra.mxu0 %v3578
      %v3617 = vpop.f32.mrf.mxu0
      %v3618 = vadd.f32 0.0, %v3617
      %3619 = vdwg.mxu0
      %3620 = vmatpush.msra.mxu0 %v1701
      %3621 = vmatpush.msra.mxu0 %v1699
      %3622 = vmatpush.msra.mxu0 %v1697
      %3623 = vmatpush.msra.mxu0 %v1695
      %3624 = vmatpush.msra.mxu0 %v1693
      %3625 = vmatpush.msra.mxu0 %v1691
      %3626 = vmatpush.msra.mxu0 %v1689
      %3627 = vmatpush.msra.mxu0 %v1687
      %3628 = vmatpush.msra.mxu0 %v1685
      %3629 = vmatpush.msra.mxu0 %v1683
      %3630 = vmatpush.msra.mxu0 %v1681
      %3631 = vmatpush.msra.mxu0 %v1679
      %3632 = vmatpush.msra.mxu0 %v1677
      %3633 = vmatpush.msra.mxu0 %v1675
      %3634 = vmatpush.msra.mxu0 %v1673
      %3635 = vmatpush.msra.mxu0 %v1671
      %3636 = vmatmul.f32.gmra.mxu0 %v3598
      %v3637 = vpop.f32.mrf.mxu0
      %v3638 = vadd.f32 %v3618, %v3637
      %3639 = vdwg.mxu0
      %3640 = vmatpush.msra.mxu0 %v1670
      %3641 = vmatpush.msra.mxu0 %v1668
      %3642 = vmatpush.msra.mxu0 %v1666
      %3643 = vmatpush.msra.mxu0 %v1664
      %3644 = vmatpush.msra.mxu0 %v1662
      %3645 = vmatpush.msra.mxu0 %v1660
      %3646 = vmatpush.msra.mxu0 %v1658
      %3647 = vmatpush.msra.mxu0 %v1656
      %3648 = vmatpush.msra.mxu0 %v1654
      %3649 = vmatpush.msra.mxu0 %v1652
      %3650 = vmatpush.msra.mxu0 %v1650
      %3651 = vmatpush.msra.mxu0 %v1648
      %3652 = vmatpush.msra.mxu0 %v1646
      %3653 = vmatpush.msra.mxu0 %v1644
      %3654 = vmatpush.msra.mxu0 %v1642
      %3655 = vmatpush.msra.mxu0 %v1640
      %3656 = vmatmul.f32.gmra.mxu0 %v3578
      %v3657 = vpop.f32.mrf.mxu0
      %v3658 = vadd.f32 0.0, %v3657
      %3659 = vdwg.mxu0
      %3660 = vmatpush.msra.mxu0 %v1702
      %3661 = vmatpush.msra.mxu0 %v1700
      %3662 = vmatpush.msra.mxu0 %v1698
      %3663 = vmatpush.msra.mxu0 %v1696
      %3664 = vmatpush.msra.mxu0 %v1694
      %3665 = vmatpush.msra.mxu0 %v1692
      %3666 = vmatpush.msra.mxu0 %v1690
      %3667 = vmatpush.msra.mxu0 %v1688
      %3668 = vmatpush.msra.mxu0 %v1686
      %3669 = vmatpush.msra.mxu0 %v1684
      %3670 = vmatpush.msra.mxu0 %v1682
      %3671 = vmatpush.msra.mxu0 %v1680
      %3672 = vmatpush.msra.mxu0 %v1678
      %3673 = vmatpush.msra.mxu0 %v1676
      %3674 = vmatpush.msra.mxu0 %v1674
      %3675 = vmatpush.msra.mxu0 %v1672
      %3676 = vmatmul.f32.gmra.mxu0 %v3598
      %v3677 = vpop.f32.mrf.mxu0
      %v3678 = vadd.f32 %v3658, %v3677
      %3679 = vdwg.mxu0
      %v3680 = vadd.f32 %v3548, %v3638
      %v3681 = vadd.f32 %v3549, %v3678
      %3682 = vst [vmem:[#allocation1] ss:$2 sm:$0xff] %v329
      %v3683 = vld.sshfl [vmem:[#allocation1] sm:$0xff pattern:$0x75316420]
      %v3684 = vld.sshfl [vmem:[#allocation1 + $0x8] sm:$0xff pattern:$0x75316420]
      %v3686 = vsel %vm2754, %v2748, 0
      %v3688 = vsel %vm2758, %v3683, 0
      %v3690 = vsel %vm2758, %v3684, 0
      %3692 = vmatpush.msra.mxu0 0.0
      %3693 = vmatpush.msra.mxu0 0.0
      %3694 = vmatpush.msra.mxu0 0.0
      %3695 = vmatpush.msra.mxu0 0.0
      %3696 = vmatpush.msra.mxu0 0.0
      %3697 = vmatpush.msra.mxu0 0.0
      %3698 = vmatpush.msra.mxu0 0.0
      %3699 = vmatpush.msra.mxu0 0.0
      %3700 = vmatpush.msra.mxu0 0.0
      %3701 = vmatpush.msra.mxu0 0.0
      %3702 = vmatpush.msra.mxu0 0.0
      %3703 = vmatpush.msra.mxu0 0.0
      %3704 = vmatpush.msra.mxu0 0.0
      %3705 = vmatpush.msra.mxu0 0.0
      %3706 = vmatpush.msra.mxu0 0.0
      %3707 = vmatpush.msra.mxu0 %v3688
      %3708 = vmatmul.f32.gmra.mxu0 %v3686
      %v3709 = vpop.f32.mrf.mxu0
      %v3710 = vadd.f32 0.0, %v3709
      %3711 = vdwg.mxu0
      %3712 = vmatpush.msra.mxu0 0.0
      %3713 = vmatpush.msra.mxu0 0.0
      %3714 = vmatpush.msra.mxu0 0.0
      %3715 = vmatpush.msra.mxu0 0.0
      %3716 = vmatpush.msra.mxu0 0.0
      %3717 = vmatpush.msra.mxu0 0.0
      %3718 = vmatpush.msra.mxu0 0.0
      %3719 = vmatpush.msra.mxu0 0.0
      %3720 = vmatpush.msra.mxu0 0.0
      %3721 = vmatpush.msra.mxu0 0.0
      %3722 = vmatpush.msra.mxu0 0.0
      %3723 = vmatpush.msra.mxu0 0.0
      %3724 = vmatpush.msra.mxu0 0.0
      %3725 = vmatpush.msra.mxu0 0.0
      %3726 = vmatpush.msra.mxu0 0.0
      %3727 = vmatpush.msra.mxu0 %v3690
      %3728 = vmatmul.f32.gmra.mxu0 %v3686
      %v3729 = vpop.f32.mrf.mxu0
      %v3730 = vadd.f32 0.0, %v3729
      %3731 = vdwg.mxu0
      %3732 = vmatpush.msra.mxu0 %v1858
      %3733 = vmatpush.msra.mxu0 %v1856
      %3734 = vmatpush.msra.mxu0 %v1854
      %3735 = vmatpush.msra.mxu0 %v1852
      %3736 = vmatpush.msra.mxu0 %v1850
      %3737 = vmatpush.msra.mxu0 %v1848
      %3738 = vmatpush.msra.mxu0 %v1846
      %3739 = vmatpush.msra.mxu0 %v1844
      %3740 = vmatpush.msra.mxu0 %v1842
      %3741 = vmatpush.msra.mxu0 %v1840
      %3742 = vmatpush.msra.mxu0 %v1838
      %3743 = vmatpush.msra.mxu0 %v1836
      %3744 = vmatpush.msra.mxu0 %v1834
      %3745 = vmatpush.msra.mxu0 %v1832
      %3746 = vmatpush.msra.mxu0 %v1830
      %3747 = vmatpush.msra.mxu0 %v1828
      %3748 = vmatmul.f32.gmra.mxu0 %v3710
      %v3749 = vpop.f32.mrf.mxu0
      %v3750 = vadd.f32 0.0, %v3749
      %3751 = vdwg.mxu0
      %3752 = vmatpush.msra.mxu0 %v1890
      %3753 = vmatpush.msra.mxu0 %v1888
      %3754 = vmatpush.msra.mxu0 %v1886
      %3755 = vmatpush.msra.mxu0 %v1884
      %3756 = vmatpush.msra.mxu0 %v1882
      %3757 = vmatpush.msra.mxu0 %v1880
      %3758 = vmatpush.msra.mxu0 %v1878
      %3759 = vmatpush.msra.mxu0 %v1876
      %3760 = vmatpush.msra.mxu0 %v1874
      %3761 = vmatpush.msra.mxu0 %v1872
      %3762 = vmatpush.msra.mxu0 %v1870
      %3763 = vmatpush.msra.mxu0 %v1868
      %3764 = vmatpush.msra.mxu0 %v1866
      %3765 = vmatpush.msra.mxu0 %v1864
      %3766 = vmatpush.msra.mxu0 %v1862
      %3767 = vmatpush.msra.mxu0 %v1860
      %3768 = vmatmul.f32.gmra.mxu0 %v3730
      %v3769 = vpop.f32.mrf.mxu0
      %v3770 = vadd.f32 %v3750, %v3769
      %3771 = vdwg.mxu0
      %3772 = vmatpush.msra.mxu0 %v1859
      %3773 = vmatpush.msra.mxu0 %v1857
      %3774 = vmatpush.msra.mxu0 %v1855
      %3775 = vmatpush.msra.mxu0 %v1853
      %3776 = vmatpush.msra.mxu0 %v1851
      %3777 = vmatpush.msra.mxu0 %v1849
      %3778 = vmatpush.msra.mxu0 %v1847
      %3779 = vmatpush.msra.mxu0 %v1845
      %3780 = vmatpush.msra.mxu0 %v1843
      %3781 = vmatpush.msra.mxu0 %v1841
      %3782 = vmatpush.msra.mxu0 %v1839
      %3783 = vmatpush.msra.mxu0 %v1837
      %3784 = vmatpush.msra.mxu0 %v1835
      %3785 = vmatpush.msra.mxu0 %v1833
      %3786 = vmatpush.msra.mxu0 %v1831
      %3787 = vmatpush.msra.mxu0 %v1829
      %3788 = vmatmul.f32.gmra.mxu0 %v3710
      %v3789 = vpop.f32.mrf.mxu0
      %v3790 = vadd.f32 0.0, %v3789
      %3791 = vdwg.mxu0
      %3792 = vmatpush.msra.mxu0 %v1891
      %3793 = vmatpush.msra.mxu0 %v1889
      %3794 = vmatpush.msra.mxu0 %v1887
      %3795 = vmatpush.msra.mxu0 %v1885
      %3796 = vmatpush.msra.mxu0 %v1883
      %3797 = vmatpush.msra.mxu0 %v1881
      %3798 = vmatpush.msra.mxu0 %v1879
      %3799 = vmatpush.msra.mxu0 %v1877
      %3800 = vmatpush.msra.mxu0 %v1875
      %3801 = vmatpush.msra.mxu0 %v1873
      %3802 = vmatpush.msra.mxu0 %v1871
      %3803 = vmatpush.msra.mxu0 %v1869
      %3804 = vmatpush.msra.mxu0 %v1867
      %3805 = vmatpush.msra.mxu0 %v1865
      %3806 = vmatpush.msra.mxu0 %v1863
      %3807 = vmatpush.msra.mxu0 %v1861
      %3808 = vmatmul.f32.gmra.mxu0 %v3730
      %v3809 = vpop.f32.mrf.mxu0
      %v3810 = vadd.f32 %v3790, %v3809
      %3811 = vdwg.mxu0
      %v3812 = vadd.f32 %v3680, %v3770
      %v3813 = vadd.f32 %v3681, %v3810
      %3814 = vst [vmem:[#allocation1] ss:$2 sm:$0xff] %v329
      %v3815 = vld.sshfl [vmem:[#allocation1] sm:$0xff pattern:$0x75316420]
      %v3816 = vld.sshfl [vmem:[#allocation1 + $0x8] sm:$0xff pattern:$0x75316420]
      %v3818 = vsel %vm2754, %v2749, 0
      %v3820 = vsel %vm2758, %v3815, 0
      %v3822 = vsel %vm2758, %v3816, 0
      %3824 = vmatpush.msra.mxu0 0.0
      %3825 = vmatpush.msra.mxu0 0.0
      %3826 = vmatpush.msra.mxu0 0.0
      %3827 = vmatpush.msra.mxu0 0.0
      %3828 = vmatpush.msra.mxu0 0.0
      %3829 = vmatpush.msra.mxu0 0.0
      %3830 = vmatpush.msra.mxu0 0.0
      %3831 = vmatpush.msra.mxu0 0.0
      %3832 = vmatpush.msra.mxu0 0.0
      %3833 = vmatpush.msra.mxu0 0.0
      %3834 = vmatpush.msra.mxu0 0.0
      %3835 = vmatpush.msra.mxu0 0.0
      %3836 = vmatpush.msra.mxu0 0.0
      %3837 = vmatpush.msra.mxu0 0.0
      %3838 = vmatpush.msra.mxu0 0.0
      %3839 = vmatpush.msra.mxu0 %v3820
      %3840 = vmatmul.f32.gmra.mxu0 %v3818
      %v3841 = vpop.f32.mrf.mxu0
      %v3842 = vadd.f32 0.0, %v3841
      %3843 = vdwg.mxu0
      %3844 = vmatpush.msra.mxu0 0.0
      %3845 = vmatpush.msra.mxu0 0.0
      %3846 = vmatpush.msra.mxu0 0.0
      %3847 = vmatpush.msra.mxu0 0.0
      %3848 = vmatpush.msra.mxu0 0.0
      %3849 = vmatpush.msra.mxu0 0.0
      %3850 = vmatpush.msra.mxu0 0.0
      %3851 = vmatpush.msra.mxu0 0.0
      %3852 = vmatpush.msra.mxu0 0.0
      %3853 = vmatpush.msra.mxu0 0.0
      %3854 = vmatpush.msra.mxu0 0.0
      %3855 = vmatpush.msra.mxu0 0.0
      %3856 = vmatpush.msra.mxu0 0.0
      %3857 = vmatpush.msra.mxu0 0.0
      %3858 = vmatpush.msra.mxu0 0.0
      %3859 = vmatpush.msra.mxu0 %v3822
      %3860 = vmatmul.f32.gmra.mxu0 %v3818
      %v3861 = vpop.f32.mrf.mxu0
      %v3862 = vadd.f32 0.0, %v3861
      %3863 = vdwg.mxu0
      %3864 = vmatpush.msra.mxu0 %v2047
      %3865 = vmatpush.msra.mxu0 %v2045
      %3866 = vmatpush.msra.mxu0 %v2043
      %3867 = vmatpush.msra.mxu0 %v2041
      %3868 = vmatpush.msra.mxu0 %v2039
      %3869 = vmatpush.msra.mxu0 %v2037
      %3870 = vmatpush.msra.mxu0 %v2035
      %3871 = vmatpush.msra.mxu0 %v2033
      %3872 = vmatpush.msra.mxu0 %v2031
      %3873 = vmatpush.msra.mxu0 %v2029
      %3874 = vmatpush.msra.mxu0 %v2027
      %3875 = vmatpush.msra.mxu0 %v2025
      %3876 = vmatpush.msra.mxu0 %v2023
      %3877 = vmatpush.msra.mxu0 %v2021
      %3878 = vmatpush.msra.mxu0 %v2019
      %3879 = vmatpush.msra.mxu0 %v2017
      %3880 = vmatmul.f32.gmra.mxu0 %v3842
      %v3881 = vpop.f32.mrf.mxu0
      %v3882 = vadd.f32 0.0, %v3881
      %3883 = vdwg.mxu0
      %3884 = vmatpush.msra.mxu0 %v2079
      %3885 = vmatpush.msra.mxu0 %v2077
      %3886 = vmatpush.msra.mxu0 %v2075
      %3887 = vmatpush.msra.mxu0 %v2073
      %3888 = vmatpush.msra.mxu0 %v2071
      %3889 = vmatpush.msra.mxu0 %v2069
      %3890 = vmatpush.msra.mxu0 %v2067
      %3891 = vmatpush.msra.mxu0 %v2065
      %3892 = vmatpush.msra.mxu0 %v2063
      %3893 = vmatpush.msra.mxu0 %v2061
      %3894 = vmatpush.msra.mxu0 %v2059
      %3895 = vmatpush.msra.mxu0 %v2057
      %3896 = vmatpush.msra.mxu0 %v2055
      %3897 = vmatpush.msra.mxu0 %v2053
      %3898 = vmatpush.msra.mxu0 %v2051
      %3899 = vmatpush.msra.mxu0 %v2049
      %3900 = vmatmul.f32.gmra.mxu0 %v3862
      %v3901 = vpop.f32.mrf.mxu0
      %v3902 = vadd.f32 %v3882, %v3901
      %3903 = vdwg.mxu0
      %3904 = vmatpush.msra.mxu0 %v2048
      %3905 = vmatpush.msra.mxu0 %v2046
      %3906 = vmatpush.msra.mxu0 %v2044
      %3907 = vmatpush.msra.mxu0 %v2042
      %3908 = vmatpush.msra.mxu0 %v2040
      %3909 = vmatpush.msra.mxu0 %v2038
      %3910 = vmatpush.msra.mxu0 %v2036
      %3911 = vmatpush.msra.mxu0 %v2034
      %3912 = vmatpush.msra.mxu0 %v2032
      %3913 = vmatpush.msra.mxu0 %v2030
      %3914 = vmatpush.msra.mxu0 %v2028
      %3915 = vmatpush.msra.mxu0 %v2026
      %3916 = vmatpush.msra.mxu0 %v2024
      %3917 = vmatpush.msra.mxu0 %v2022
      %3918 = vmatpush.msra.mxu0 %v2020
      %3919 = vmatpush.msra.mxu0 %v2018
      %3920 = vmatmul.f32.gmra.mxu0 %v3842
      %v3921 = vpop.f32.mrf.mxu0
      %v3922 = vadd.f32 0.0, %v3921
      %3923 = vdwg.mxu0
      %3924 = vmatpush.msra.mxu0 %v2080
      %3925 = vmatpush.msra.mxu0 %v2078
      %3926 = vmatpush.msra.mxu0 %v2076
      %3927 = vmatpush.msra.mxu0 %v2074
      %3928 = vmatpush.msra.mxu0 %v2072
      %3929 = vmatpush.msra.mxu0 %v2070
      %3930 = vmatpush.msra.mxu0 %v2068
      %3931 = vmatpush.msra.mxu0 %v2066
      %3932 = vmatpush.msra.mxu0 %v2064
      %3933 = vmatpush.msra.mxu0 %v2062
      %3934 = vmatpush.msra.mxu0 %v2060
      %3935 = vmatpush.msra.mxu0 %v2058
      %3936 = vmatpush.msra.mxu0 %v2056
      %3937 = vmatpush.msra.mxu0 %v2054
      %3938 = vmatpush.msra.mxu0 %v2052
      %3939 = vmatpush.msra.mxu0 %v2050
      %3940 = vmatmul.f32.gmra.mxu0 %v3862
      %v3941 = vpop.f32.mrf.mxu0
      %v3942 = vadd.f32 %v3922, %v3941
      %3943 = vdwg.mxu0
      %v3944 = vadd.f32 %v3812, %v3902
      %v3945 = vadd.f32 %v3813, %v3942
      %v3946 = vperm.slane %v2719, 0
      %v3947 = vperm.slane %v2739, 0
      %v3948 = vmul.f32 %v3944, %v3946
      %v3949 = vmul.f32 %v3945, %v3947
      %3950 = vmatpush.msra.mxu0 %v2236
      %3951 = vmatpush.msra.mxu0 %v2235
      %3952 = vmatpush.msra.mxu0 %v2234
      %3953 = vmatpush.msra.mxu0 %v2233
      %3954 = vmatpush.msra.mxu0 %v2232
      %3955 = vmatpush.msra.mxu0 %v2231
      %3956 = vmatpush.msra.mxu0 %v2230
      %3957 = vmatpush.msra.mxu0 %v2229
      %3958 = vmatpush.msra.mxu0 %v2228
      %3959 = vmatpush.msra.mxu0 %v2227
      %3960 = vmatpush.msra.mxu0 %v2226
      %3961 = vmatpush.msra.mxu0 %v2225
      %3962 = vmatpush.msra.mxu0 %v2224
      %3963 = vmatpush.msra.mxu0 %v2223
      %3964 = vmatpush.msra.mxu0 %v2222
      %3965 = vmatpush.msra.mxu0 %v2221
      %3966 = vmatmul.f32.gmra.mxu0 %v3948
      %v3967 = vpop.f32.mrf.mxu0
      %v3968 = vadd.f32 0.0, %v3967
      %3969 = vdwg.mxu0
      %3970 = vmatpush.msra.mxu0 %v2252
      %3971 = vmatpush.msra.mxu0 %v2251
      %3972 = vmatpush.msra.mxu0 %v2250
      %3973 = vmatpush.msra.mxu0 %v2249
      %3974 = vmatpush.msra.mxu0 %v2248
      %3975 = vmatpush.msra.mxu0 %v2247
      %3976 = vmatpush.msra.mxu0 %v2246
      %3977 = vmatpush.msra.mxu0 %v2245
      %3978 = vmatpush.msra.mxu0 %v2244
      %3979 = vmatpush.msra.mxu0 %v2243
      %3980 = vmatpush.msra.mxu0 %v2242
      %3981 = vmatpush.msra.mxu0 %v2241
      %3982 = vmatpush.msra.mxu0 %v2240
      %3983 = vmatpush.msra.mxu0 %v2239
      %3984 = vmatpush.msra.mxu0 %v2238
      %3985 = vmatpush.msra.mxu0 %v2237
      %3986 = vmatmul.f32.gmra.mxu0 %v3949
      %v3987 = vpop.f32.mrf.mxu0
      %v3988 = vadd.f32 %v3968, %v3987
      %3989 = vdwg.mxu0
      %3990 = vst.msk [vmem:[%s326] sm:$0xff] %vm2163, %v3988
      %v3991 = vld [vmem:[%s3 + $0x98] sm:$0xff]
      %v3992 = vld [vmem:[%s3 + $0xa0] sm:$0xff]
      %v3993 = vld [vmem:[%s3 + $0xa8] sm:$0xff]
      %v3994 = vld [vmem:[%s3 + $0xb0] sm:$0xff]
      %v3995 = vld [vmem:[%s3 + $0xb8] sm:$0xf]
      %v3996 = vld [vmem:[%s3 + $0xc0] sm:$0xf]
      %vm3997 = vcmask 64512
      %v3999 = vsel %vm3997, %v3991, 0
      %4001 = vmatpush.msra.mxu0 0.0
      %4002 = vmatpush.msra.mxu0 0.0
      %4003 = vmatpush.msra.mxu0 0.0
      %4004 = vmatpush.msra.mxu0 0.0
      %4005 = vmatpush.msra.mxu0 0.0
      %4006 = vmatpush.msra.mxu0 0.0
      %4007 = vmatpush.msra.mxu0 0.0
      %4008 = vmatpush.msra.mxu0 0.0
      %4009 = vmatpush.msra.mxu0 0.0
      %4010 = vmatpush.msra.mxu0 0.0
      %4011 = vmatpush.msra.mxu0 0.0
      %4012 = vmatpush.msra.mxu0 0.0
      %4013 = vmatpush.msra.mxu0 0.0
      %4014 = vmatpush.msra.mxu0 0.0
      %4015 = vmatpush.msra.mxu0 0.0
      %4016 = vmatpush.msra.mxu0 %v3948
      %4017 = vmatmul.f32.gmra.mxu0 %v3999
      %v4018 = vpop.f32.mrf.mxu0
      %v4019 = vadd.f32 0.0, %v4018
      %4020 = vdwg.mxu0
      %4021 = vmatpush.msra.mxu0 0.0
      %4022 = vmatpush.msra.mxu0 0.0
      %4023 = vmatpush.msra.mxu0 0.0
      %4024 = vmatpush.msra.mxu0 0.0
      %4025 = vmatpush.msra.mxu0 0.0
      %4026 = vmatpush.msra.mxu0 0.0
      %4027 = vmatpush.msra.mxu0 0.0
      %4028 = vmatpush.msra.mxu0 0.0
      %4029 = vmatpush.msra.mxu0 0.0
      %4030 = vmatpush.msra.mxu0 0.0
      %4031 = vmatpush.msra.mxu0 0.0
      %4032 = vmatpush.msra.mxu0 0.0
      %4033 = vmatpush.msra.mxu0 0.0
      %4034 = vmatpush.msra.mxu0 0.0
      %4035 = vmatpush.msra.mxu0 0.0
      %4036 = vmatpush.msra.mxu0 %v3949
      %4037 = vmatmul.f32.gmra.mxu0 %v3999
      %v4038 = vpop.f32.mrf.mxu0
      %v4039 = vadd.f32 0.0, %v4038
      %4040 = vdwg.mxu0
      %v4041 = vld [vmem:[%s4] sm:$0xff]
      %v4042 = vld [vmem:[%s4 + $0x8] sm:$0xff]
      %v4043 = vld [vmem:[%s4 + $0x10] sm:$0xff]
      %v4044 = vld [vmem:[%s4 + $0x18] sm:$0xff]
      %v4045 = vld [vmem:[%s4 + $0x20] sm:$0xff]
      %v4046 = vld [vmem:[%s4 + $0x28] sm:$0xff]
      %v4047 = vld [vmem:[%s4 + $0x30] sm:$0xff]
      %v4048 = vld [vmem:[%s4 + $0x38] sm:$0xff]
      %v4049 = vld [vmem:[%s4 + $0x40] sm:$0xff]
      %v4050 = vld [vmem:[%s4 + $0x48] sm:$0xff]
      %v4051 = vld [vmem:[%s4 + $0x50] sm:$0xff]
      %v4052 = vld [vmem:[%s4 + $0x58] sm:$0xff]
      %v4053 = vld [vmem:[%s4 + $0x60] sm:$0xff]
      %v4054 = vld [vmem:[%s4 + $0x68] sm:$0xff]
      %v4055 = vld [vmem:[%s4 + $0x70] sm:$0xff]
      %v4056 = vld [vmem:[%s4 + $0x78] sm:$0xff]
      %v4057 = vld [vmem:[%s4 + $0x80] sm:$0xff]
      %v4058 = vld [vmem:[%s4 + $0x88] sm:$0xff]
      %v4059 = vld [vmem:[%s4 + $0x90] sm:$0xff]
      %v4060 = vld [vmem:[%s4 + $0x98] sm:$0xff]
      %v4061 = vld [vmem:[%s4 + $0xa0] sm:$0xff]
      %v4062 = vld [vmem:[%s4 + $0xa8] sm:$0xff]
      %v4063 = vld [vmem:[%s4 + $0xb0] sm:$0xff]
      %v4064 = vld [vmem:[%s4 + $0xb8] sm:$0xff]
      %v4065 = vld [vmem:[%s4 + $0xc0] sm:$0xff]
      %v4066 = vld [vmem:[%s4 + $0xc8] sm:$0xff]
      %v4067 = vld [vmem:[%s4 + $0xd0] sm:$0xff]
      %v4068 = vld [vmem:[%s4 + $0xd8] sm:$0xff]
      %v4069 = vld [vmem:[%s4 + $0xe0] sm:$0xff]
      %v4070 = vld [vmem:[%s4 + $0xe8] sm:$0xff]
      %v4071 = vld [vmem:[%s4 + $0xf0] sm:$0xff]
      %v4072 = vld [vmem:[%s4 + $0xf8] sm:$0xff]
      %v4073 = vld [vmem:[%s4 + $0x100] sm:$0xff]
      %v4074 = vld [vmem:[%s4 + $0x108] sm:$0xff]
      %v4075 = vld [vmem:[%s4 + $0x110] sm:$0xff]
      %v4076 = vld [vmem:[%s4 + $0x118] sm:$0xff]
      %v4077 = vld [vmem:[%s4 + $0x120] sm:$0xff]
      %v4078 = vld [vmem:[%s4 + $0x128] sm:$0xff]
      %v4079 = vld [vmem:[%s4 + $0x130] sm:$0xff]
      %v4080 = vld [vmem:[%s4 + $0x138] sm:$0xff]
      %v4081 = vld [vmem:[%s4 + $0x140] sm:$0xff]
      %v4082 = vld [vmem:[%s4 + $0x148] sm:$0xff]
      %v4083 = vld [vmem:[%s4 + $0x150] sm:$0xff]
      %v4084 = vld [vmem:[%s4 + $0x158] sm:$0xff]
      %v4085 = vld [vmem:[%s4 + $0x160] sm:$0xff]
      %v4086 = vld [vmem:[%s4 + $0x168] sm:$0xff]
      %v4087 = vld [vmem:[%s4 + $0x170] sm:$0xff]
      %v4088 = vld [vmem:[%s4 + $0x178] sm:$0xff]
      %v4089 = vld [vmem:[%s4 + $0x180] sm:$0xff]
      %v4090 = vld [vmem:[%s4 + $0x188] sm:$0xff]
      %v4091 = vld [vmem:[%s4 + $0x190] sm:$0xff]
      %v4092 = vld [vmem:[%s4 + $0x198] sm:$0xff]
      %v4093 = vld [vmem:[%s4 + $0x1a0] sm:$0xff]
      %v4094 = vld [vmem:[%s4 + $0x1a8] sm:$0xff]
      %v4095 = vld [vmem:[%s4 + $0x1b0] sm:$0xff]
      %v4096 = vld [vmem:[%s4 + $0x1b8] sm:$0xff]
      %v4097 = vld [vmem:[%s4 + $0x1c0] sm:$0xff]
      %v4098 = vld [vmem:[%s4 + $0x1c8] sm:$0xff]
      %v4099 = vld [vmem:[%s4 + $0x1d0] sm:$0xff]
      %v4100 = vld [vmem:[%s4 + $0x1d8] sm:$0xff]
      %v4101 = vld [vmem:[%s4 + $0x1e0] sm:$0xff]
      %v4102 = vld [vmem:[%s4 + $0x1e8] sm:$0xff]
      %v4103 = vld [vmem:[%s4 + $0x1f0] sm:$0xff]
      %v4104 = vld [vmem:[%s4 + $0x1f8] sm:$0xff]
      %4105 = vmatpush.msra.mxu0 %v4071
      %4106 = vmatpush.msra.mxu0 %v4069
      %4107 = vmatpush.msra.mxu0 %v4067
      %4108 = vmatpush.msra.mxu0 %v4065
      %4109 = vmatpush.msra.mxu0 %v4063
      %4110 = vmatpush.msra.mxu0 %v4061
      %4111 = vmatpush.msra.mxu0 %v4059
      %4112 = vmatpush.msra.mxu0 %v4057
      %4113 = vmatpush.msra.mxu0 %v4055
      %4114 = vmatpush.msra.mxu0 %v4053
      %4115 = vmatpush.msra.mxu0 %v4051
      %4116 = vmatpush.msra.mxu0 %v4049
      %4117 = vmatpush.msra.mxu0 %v4047
      %4118 = vmatpush.msra.mxu0 %v4045
      %4119 = vmatpush.msra.mxu0 %v4043
      %4120 = vmatpush.msra.mxu0 %v4041
      %4121 = vmatmul.f32.gmra.mxu0 %v4019
      %v4122 = vpop.f32.mrf.mxu0
      %v4123 = vadd.f32 0.0, %v4122
      %4124 = vdwg.mxu0
      %4125 = vmatpush.msra.mxu0 %v4103
      %4126 = vmatpush.msra.mxu0 %v4101
      %4127 = vmatpush.msra.mxu0 %v4099
      %4128 = vmatpush.msra.mxu0 %v4097
      %4129 = vmatpush.msra.mxu0 %v4095
      %4130 = vmatpush.msra.mxu0 %v4093
      %4131 = vmatpush.msra.mxu0 %v4091
      %4132 = vmatpush.msra.mxu0 %v4089
      %4133 = vmatpush.msra.mxu0 %v4087
      %4134 = vmatpush.msra.mxu0 %v4085
      %4135 = vmatpush.msra.mxu0 %v4083
      %4136 = vmatpush.msra.mxu0 %v4081
      %4137 = vmatpush.msra.mxu0 %v4079
      %4138 = vmatpush.msra.mxu0 %v4077
      %4139 = vmatpush.msra.mxu0 %v4075
      %4140 = vmatpush.msra.mxu0 %v4073
      %4141 = vmatmul.f32.gmra.mxu0 %v4039
      %v4142 = vpop.f32.mrf.mxu0
      %v4143 = vadd.f32 %v4123, %v4142
      %4144 = vdwg.mxu0
      %4145 = vmatpush.msra.mxu0 %v4072
      %4146 = vmatpush.msra.mxu0 %v4070
      %4147 = vmatpush.msra.mxu0 %v4068
      %4148 = vmatpush.msra.mxu0 %v4066
      %4149 = vmatpush.msra.mxu0 %v4064
      %4150 = vmatpush.msra.mxu0 %v4062
      %4151 = vmatpush.msra.mxu0 %v4060
      %4152 = vmatpush.msra.mxu0 %v4058
      %4153 = vmatpush.msra.mxu0 %v4056
      %4154 = vmatpush.msra.mxu0 %v4054
      %4155 = vmatpush.msra.mxu0 %v4052
      %4156 = vmatpush.msra.mxu0 %v4050
      %4157 = vmatpush.msra.mxu0 %v4048
      %4158 = vmatpush.msra.mxu0 %v4046
      %4159 = vmatpush.msra.mxu0 %v4044
      %4160 = vmatpush.msra.mxu0 %v4042
      %4161 = vmatmul.f32.gmra.mxu0 %v4019
      %v4162 = vpop.f32.mrf.mxu0
      %v4163 = vadd.f32 0.0, %v4162
      %4164 = vdwg.mxu0
      %4165 = vmatpush.msra.mxu0 %v4104
      %4166 = vmatpush.msra.mxu0 %v4102
      %4167 = vmatpush.msra.mxu0 %v4100
      %4168 = vmatpush.msra.mxu0 %v4098
      %4169 = vmatpush.msra.mxu0 %v4096
      %4170 = vmatpush.msra.mxu0 %v4094
      %4171 = vmatpush.msra.mxu0 %v4092
      %4172 = vmatpush.msra.mxu0 %v4090
      %4173 = vmatpush.msra.mxu0 %v4088
      %4174 = vmatpush.msra.mxu0 %v4086
      %4175 = vmatpush.msra.mxu0 %v4084
      %4176 = vmatpush.msra.mxu0 %v4082
      %4177 = vmatpush.msra.mxu0 %v4080
      %4178 = vmatpush.msra.mxu0 %v4078
      %4179 = vmatpush.msra.mxu0 %v4076
      %4180 = vmatpush.msra.mxu0 %v4074
      %4181 = vmatmul.f32.gmra.mxu0 %v4039
      %v4182 = vpop.f32.mrf.mxu0
      %v4183 = vadd.f32 %v4163, %v4182
      %4184 = vdwg.mxu0
      %4186 = vset.pattern.permute.xlu0 0
      %4187 = vperm.xlu0 %4186, %v3996
      %v4188 = vpop.permute.xlu0 %4187
      %v4190 = vadd.f32 %v4188, %v4143
      %v4191 = vadd.f32 %v4188, %v4183
      %v4192 = vrot.slane %v3991, 4
      %v4193 = vsel %vm3997, %v4192, 0
      %4195 = vmatpush.msra.mxu0 0.0
      %4196 = vmatpush.msra.mxu0 0.0
      %4197 = vmatpush.msra.mxu0 0.0
      %4198 = vmatpush.msra.mxu0 0.0
      %4199 = vmatpush.msra.mxu0 0.0
      %4200 = vmatpush.msra.mxu0 0.0
      %4201 = vmatpush.msra.mxu0 0.0
      %4202 = vmatpush.msra.mxu0 0.0
      %4203 = vmatpush.msra.mxu0 0.0
      %4204 = vmatpush.msra.mxu0 0.0
      %4205 = vmatpush.msra.mxu0 0.0
      %4206 = vmatpush.msra.mxu0 0.0
      %4207 = vmatpush.msra.mxu0 0.0
      %4208 = vmatpush.msra.mxu0 0.0
      %4209 = vmatpush.msra.mxu0 0.0
      %4210 = vmatpush.msra.mxu0 %v3948
      %4211 = vmatmul.f32.gmra.mxu0 %v4193
      %v4212 = vpop.f32.mrf.mxu0
      %v4213 = vadd.f32 0.0, %v4212
      %4214 = vdwg.mxu0
      %4215 = vmatpush.msra.mxu0 0.0
      %4216 = vmatpush.msra.mxu0 0.0
      %4217 = vmatpush.msra.mxu0 0.0
      %4218 = vmatpush.msra.mxu0 0.0
      %4219 = vmatpush.msra.mxu0 0.0
      %4220 = vmatpush.msra.mxu0 0.0
      %4221 = vmatpush.msra.mxu0 0.0
      %4222 = vmatpush.msra.mxu0 0.0
      %4223 = vmatpush.msra.mxu0 0.0
      %4224 = vmatpush.msra.mxu0 0.0
      %4225 = vmatpush.msra.mxu0 0.0
      %4226 = vmatpush.msra.mxu0 0.0
      %4227 = vmatpush.msra.mxu0 0.0
      %4228 = vmatpush.msra.mxu0 0.0
      %4229 = vmatpush.msra.mxu0 0.0
      %4230 = vmatpush.msra.mxu0 %v3949
      %4231 = vmatmul.f32.gmra.mxu0 %v4193
      %v4232 = vpop.f32.mrf.mxu0
      %v4233 = vadd.f32 0.0, %v4232
      %4234 = vdwg.mxu0
      %v4235 = vld [vmem:[%s4 + $0x200] sm:$0xff]
      %v4236 = vld [vmem:[%s4 + $0x208] sm:$0xff]
      %v4237 = vld [vmem:[%s4 + $0x210] sm:$0xff]
      %v4238 = vld [vmem:[%s4 + $0x218] sm:$0xff]
      %v4239 = vld [vmem:[%s4 + $0x220] sm:$0xff]
      %v4240 = vld [vmem:[%s4 + $0x228] sm:$0xff]
      %v4241 = vld [vmem:[%s4 + $0x230] sm:$0xff]
      %v4242 = vld [vmem:[%s4 + $0x238] sm:$0xff]
      %v4243 = vld [vmem:[%s4 + $0x240] sm:$0xff]
      %v4244 = vld [vmem:[%s4 + $0x248] sm:$0xff]
      %v4245 = vld [vmem:[%s4 + $0x250] sm:$0xff]
      %v4246 = vld [vmem:[%s4 + $0x258] sm:$0xff]
      %v4247 = vld [vmem:[%s4 + $0x260] sm:$0xff]
      %v4248 = vld [vmem:[%s4 + $0x268] sm:$0xff]
      %v4249 = vld [vmem:[%s4 + $0x270] sm:$0xff]
      %v4250 = vld [vmem:[%s4 + $0x278] sm:$0xff]
      %v4251 = vld [vmem:[%s4 + $0x280] sm:$0xff]
      %v4252 = vld [vmem:[%s4 + $0x288] sm:$0xff]
      %v4253 = vld [vmem:[%s4 + $0x290] sm:$0xff]
      %v4254 = vld [vmem:[%s4 + $0x298] sm:$0xff]
      %v4255 = vld [vmem:[%s4 + $0x2a0] sm:$0xff]
      %v4256 = vld [vmem:[%s4 + $0x2a8] sm:$0xff]
      %v4257 = vld [vmem:[%s4 + $0x2b0] sm:$0xff]
      %v4258 = vld [vmem:[%s4 + $0x2b8] sm:$0xff]
      %v4259 = vld [vmem:[%s4 + $0x2c0] sm:$0xff]
      %v4260 = vld [vmem:[%s4 + $0x2c8] sm:$0xff]
      %v4261 = vld [vmem:[%s4 + $0x2d0] sm:$0xff]
      %v4262 = vld [vmem:[%s4 + $0x2d8] sm:$0xff]
      %v4263 = vld [vmem:[%s4 + $0x2e0] sm:$0xff]
      %v4264 = vld [vmem:[%s4 + $0x2e8] sm:$0xff]
      %v4265 = vld [vmem:[%s4 + $0x2f0] sm:$0xff]
      %v4266 = vld [vmem:[%s4 + $0x2f8] sm:$0xff]
      %v4267 = vld [vmem:[%s4 + $0x300] sm:$0xff]
      %v4268 = vld [vmem:[%s4 + $0x308] sm:$0xff]
      %v4269 = vld [vmem:[%s4 + $0x310] sm:$0xff]
      %v4270 = vld [vmem:[%s4 + $0x318] sm:$0xff]
      %v4271 = vld [vmem:[%s4 + $0x320] sm:$0xff]
      %v4272 = vld [vmem:[%s4 + $0x328] sm:$0xff]
      %v4273 = vld [vmem:[%s4 + $0x330] sm:$0xff]
      %v4274 = vld [vmem:[%s4 + $0x338] sm:$0xff]
      %v4275 = vld [vmem:[%s4 + $0x340] sm:$0xff]
      %v4276 = vld [vmem:[%s4 + $0x348] sm:$0xff]
      %v4277 = vld [vmem:[%s4 + $0x350] sm:$0xff]
      %v4278 = vld [vmem:[%s4 + $0x358] sm:$0xff]
      %v4279 = vld [vmem:[%s4 + $0x360] sm:$0xff]
      %v4280 = vld [vmem:[%s4 + $0x368] sm:$0xff]
      %v4281 = vld [vmem:[%s4 + $0x370] sm:$0xff]
      %v4282 = vld [vmem:[%s4 + $0x378] sm:$0xff]
      %v4283 = vld [vmem:[%s4 + $0x380] sm:$0xff]
      %v4284 = vld [vmem:[%s4 + $0x388] sm:$0xff]
      %v4285 = vld [vmem:[%s4 + $0x390] sm:$0xff]
      %v4286 = vld [vmem:[%s4 + $0x398] sm:$0xff]
      %v4287 = vld [vmem:[%s4 + $0x3a0] sm:$0xff]
      %v4288 = vld [vmem:[%s4 + $0x3a8] sm:$0xff]
      %v4289 = vld [vmem:[%s4 + $0x3b0] sm:$0xff]
      %v4290 = vld [vmem:[%s4 + $0x3b8] sm:$0xff]
      %v4291 = vld [vmem:[%s4 + $0x3c0] sm:$0xff]
      %v4292 = vld [vmem:[%s4 + $0x3c8] sm:$0xff]
      %v4293 = vld [vmem:[%s4 + $0x3d0] sm:$0xff]
      %v4294 = vld [vmem:[%s4 + $0x3d8] sm:$0xff]
      %v4295 = vld [vmem:[%s4 + $0x3e0] sm:$0xff]
      %v4296 = vld [vmem:[%s4 + $0x3e8] sm:$0xff]
      %v4297 = vld [vmem:[%s4 + $0x3f0] sm:$0xff]
      %v4298 = vld [vmem:[%s4 + $0x3f8] sm:$0xff]
      %4299 = vmatpush.msra.mxu0 %v4265
      %4300 = vmatpush.msra.mxu0 %v4263
      %4301 = vmatpush.msra.mxu0 %v4261
      %4302 = vmatpush.msra.mxu0 %v4259
      %4303 = vmatpush.msra.mxu0 %v4257
      %4304 = vmatpush.msra.mxu0 %v4255
      %4305 = vmatpush.msra.mxu0 %v4253
      %4306 = vmatpush.msra.mxu0 %v4251
      %4307 = vmatpush.msra.mxu0 %v4249
      %4308 = vmatpush.msra.mxu0 %v4247
      %4309 = vmatpush.msra.mxu0 %v4245
      %4310 = vmatpush.msra.mxu0 %v4243
      %4311 = vmatpush.msra.mxu0 %v4241
      %4312 = vmatpush.msra.mxu0 %v4239
      %4313 = vmatpush.msra.mxu0 %v4237
      %4314 = vmatpush.msra.mxu0 %v4235
      %4315 = vmatmul.f32.gmra.mxu0 %v4213
      %v4316 = vpop.f32.mrf.mxu0
      %v4317 = vadd.f32 0.0, %v4316
      %4318 = vdwg.mxu0
      %4319 = vmatpush.msra.mxu0 %v4297
      %4320 = vmatpush.msra.mxu0 %v4295
      %4321 = vmatpush.msra.mxu0 %v4293
      %4322 = vmatpush.msra.mxu0 %v4291
      %4323 = vmatpush.msra.mxu0 %v4289
      %4324 = vmatpush.msra.mxu0 %v4287
      %4325 = vmatpush.msra.mxu0 %v4285
      %4326 = vmatpush.msra.mxu0 %v4283
      %4327 = vmatpush.msra.mxu0 %v4281
      %4328 = vmatpush.msra.mxu0 %v4279
      %4329 = vmatpush.msra.mxu0 %v4277
      %4330 = vmatpush.msra.mxu0 %v4275
      %4331 = vmatpush.msra.mxu0 %v4273
      %4332 = vmatpush.msra.mxu0 %v4271
      %4333 = vmatpush.msra.mxu0 %v4269
      %4334 = vmatpush.msra.mxu0 %v4267
      %4335 = vmatmul.f32.gmra.mxu0 %v4233
      %v4336 = vpop.f32.mrf.mxu0
      %v4337 = vadd.f32 %v4317, %v4336
      %4338 = vdwg.mxu0
      %4339 = vmatpush.msra.mxu0 %v4266
      %4340 = vmatpush.msra.mxu0 %v4264
      %4341 = vmatpush.msra.mxu0 %v4262
      %4342 = vmatpush.msra.mxu0 %v4260
      %4343 = vmatpush.msra.mxu0 %v4258
      %4344 = vmatpush.msra.mxu0 %v4256
      %4345 = vmatpush.msra.mxu0 %v4254
      %4346 = vmatpush.msra.mxu0 %v4252
      %4347 = vmatpush.msra.mxu0 %v4250
      %4348 = vmatpush.msra.mxu0 %v4248
      %4349 = vmatpush.msra.mxu0 %v4246
      %4350 = vmatpush.msra.mxu0 %v4244
      %4351 = vmatpush.msra.mxu0 %v4242
      %4352 = vmatpush.msra.mxu0 %v4240
      %4353 = vmatpush.msra.mxu0 %v4238
      %4354 = vmatpush.msra.mxu0 %v4236
      %4355 = vmatmul.f32.gmra.mxu0 %v4213
      %v4356 = vpop.f32.mrf.mxu0
      %v4357 = vadd.f32 0.0, %v4356
      %4358 = vdwg.mxu0
      %4359 = vmatpush.msra.mxu0 %v4298
      %4360 = vmatpush.msra.mxu0 %v4296
      %4361 = vmatpush.msra.mxu0 %v4294
      %4362 = vmatpush.msra.mxu0 %v4292
      %4363 = vmatpush.msra.mxu0 %v4290
      %4364 = vmatpush.msra.mxu0 %v4288
      %4365 = vmatpush.msra.mxu0 %v4286
      %4366 = vmatpush.msra.mxu0 %v4284
      %4367 = vmatpush.msra.mxu0 %v4282
      %4368 = vmatpush.msra.mxu0 %v4280
      %4369 = vmatpush.msra.mxu0 %v4278
      %4370 = vmatpush.msra.mxu0 %v4276
      %4371 = vmatpush.msra.mxu0 %v4274
      %4372 = vmatpush.msra.mxu0 %v4272
      %4373 = vmatpush.msra.mxu0 %v4270
      %4374 = vmatpush.msra.mxu0 %v4268
      %4375 = vmatmul.f32.gmra.mxu0 %v4233
      %v4376 = vpop.f32.mrf.mxu0
      %v4377 = vadd.f32 %v4357, %v4376
      %4378 = vdwg.mxu0
      %v4379 = vadd.f32 %v4190, %v4337
      %v4380 = vadd.f32 %v4191, %v4377
      %v4382 = vsel %vm3997, %v3992, 0
      %4384 = vmatpush.msra.mxu0 0.0
      %4385 = vmatpush.msra.mxu0 0.0
      %4386 = vmatpush.msra.mxu0 0.0
      %4387 = vmatpush.msra.mxu0 0.0
      %4388 = vmatpush.msra.mxu0 0.0
      %4389 = vmatpush.msra.mxu0 0.0
      %4390 = vmatpush.msra.mxu0 0.0
      %4391 = vmatpush.msra.mxu0 0.0
      %4392 = vmatpush.msra.mxu0 0.0
      %4393 = vmatpush.msra.mxu0 0.0
      %4394 = vmatpush.msra.mxu0 0.0
      %4395 = vmatpush.msra.mxu0 0.0
      %4396 = vmatpush.msra.mxu0 0.0
      %4397 = vmatpush.msra.mxu0 0.0
      %4398 = vmatpush.msra.mxu0 0.0
      %4399 = vmatpush.msra.mxu0 %v3948
      %4400 = vmatmul.f32.gmra.mxu0 %v4382
      %v4401 = vpop.f32.mrf.mxu0
      %v4402 = vadd.f32 0.0, %v4401
      %4403 = vdwg.mxu0
      %4404 = vmatpush.msra.mxu0 0.0
      %4405 = vmatpush.msra.mxu0 0.0
      %4406 = vmatpush.msra.mxu0 0.0
      %4407 = vmatpush.msra.mxu0 0.0
      %4408 = vmatpush.msra.mxu0 0.0
      %4409 = vmatpush.msra.mxu0 0.0
      %4410 = vmatpush.msra.mxu0 0.0
      %4411 = vmatpush.msra.mxu0 0.0
      %4412 = vmatpush.msra.mxu0 0.0
      %4413 = vmatpush.msra.mxu0 0.0
      %4414 = vmatpush.msra.mxu0 0.0
      %4415 = vmatpush.msra.mxu0 0.0
      %4416 = vmatpush.msra.mxu0 0.0
      %4417 = vmatpush.msra.mxu0 0.0
      %4418 = vmatpush.msra.mxu0 0.0
      %4419 = vmatpush.msra.mxu0 %v3949
      %4420 = vmatmul.f32.gmra.mxu0 %v4382
      %v4421 = vpop.f32.mrf.mxu0
      %v4422 = vadd.f32 0.0, %v4421
      %4423 = vdwg.mxu0
      %v4424 = vld [vmem:[%s4 + $0x400] sm:$0xff]
      %v4425 = vld [vmem:[%s4 + $0x408] sm:$0xff]
      %v4426 = vld [vmem:[%s4 + $0x410] sm:$0xff]
      %v4427 = vld [vmem:[%s4 + $0x418] sm:$0xff]
      %v4428 = vld [vmem:[%s4 + $0x420] sm:$0xff]
      %v4429 = vld [vmem:[%s4 + $0x428] sm:$0xff]
      %v4430 = vld [vmem:[%s4 + $0x430] sm:$0xff]
      %v4431 = vld [vmem:[%s4 + $0x438] sm:$0xff]
      %v4432 = vld [vmem:[%s4 + $0x440] sm:$0xff]
      %v4433 = vld [vmem:[%s4 + $0x448] sm:$0xff]
      %v4434 = vld [vmem:[%s4 + $0x450] sm:$0xff]
      %v4435 = vld [vmem:[%s4 + $0x458] sm:$0xff]
      %v4436 = vld [vmem:[%s4 + $0x460] sm:$0xff]
      %v4437 = vld [vmem:[%s4 + $0x468] sm:$0xff]
      %v4438 = vld [vmem:[%s4 + $0x470] sm:$0xff]
      %v4439 = vld [vmem:[%s4 + $0x478] sm:$0xff]
      %v4440 = vld [vmem:[%s4 + $0x480] sm:$0xff]
      %v4441 = vld [vmem:[%s4 + $0x488] sm:$0xff]
      %v4442 = vld [vmem:[%s4 + $0x490] sm:$0xff]
      %v4443 = vld [vmem:[%s4 + $0x498] sm:$0xff]
      %v4444 = vld [vmem:[%s4 + $0x4a0] sm:$0xff]
      %v4445 = vld [vmem:[%s4 + $0x4a8] sm:$0xff]
      %v4446 = vld [vmem:[%s4 + $0x4b0] sm:$0xff]
      %v4447 = vld [vmem:[%s4 + $0x4b8] sm:$0xff]
      %v4448 = vld [vmem:[%s4 + $0x4c0] sm:$0xff]
      %v4449 = vld [vmem:[%s4 + $0x4c8] sm:$0xff]
      %v4450 = vld [vmem:[%s4 + $0x4d0] sm:$0xff]
      %v4451 = vld [vmem:[%s4 + $0x4d8] sm:$0xff]
      %v4452 = vld [vmem:[%s4 + $0x4e0] sm:$0xff]
      %v4453 = vld [vmem:[%s4 + $0x4e8] sm:$0xff]
      %v4454 = vld [vmem:[%s4 + $0x4f0] sm:$0xff]
      %v4455 = vld [vmem:[%s4 + $0x4f8] sm:$0xff]
      %v4456 = vld [vmem:[%s4 + $0x500] sm:$0xff]
      %v4457 = vld [vmem:[%s4 + $0x508] sm:$0xff]
      %v4458 = vld [vmem:[%s4 + $0x510] sm:$0xff]
      %v4459 = vld [vmem:[%s4 + $0x518] sm:$0xff]
      %v4460 = vld [vmem:[%s4 + $0x520] sm:$0xff]
      %v4461 = vld [vmem:[%s4 + $0x528] sm:$0xff]
      %v4462 = vld [vmem:[%s4 + $0x530] sm:$0xff]
      %v4463 = vld [vmem:[%s4 + $0x538] sm:$0xff]
      %v4464 = vld [vmem:[%s4 + $0x540] sm:$0xff]
      %v4465 = vld [vmem:[%s4 + $0x548] sm:$0xff]
      %v4466 = vld [vmem:[%s4 + $0x550] sm:$0xff]
      %v4467 = vld [vmem:[%s4 + $0x558] sm:$0xff]
      %v4468 = vld [vmem:[%s4 + $0x560] sm:$0xff]
      %v4469 = vld [vmem:[%s4 + $0x568] sm:$0xff]
      %v4470 = vld [vmem:[%s4 + $0x570] sm:$0xff]
      %v4471 = vld [vmem:[%s4 + $0x578] sm:$0xff]
      %v4472 = vld [vmem:[%s4 + $0x580] sm:$0xff]
      %v4473 = vld [vmem:[%s4 + $0x588] sm:$0xff]
      %v4474 = vld [vmem:[%s4 + $0x590] sm:$0xff]
      %v4475 = vld [vmem:[%s4 + $0x598] sm:$0xff]
      %v4476 = vld [vmem:[%s4 + $0x5a0] sm:$0xff]
      %v4477 = vld [vmem:[%s4 + $0x5a8] sm:$0xff]
      %v4478 = vld [vmem:[%s4 + $0x5b0] sm:$0xff]
      %v4479 = vld [vmem:[%s4 + $0x5b8] sm:$0xff]
      %v4480 = vld [vmem:[%s4 + $0x5c0] sm:$0xff]
      %v4481 = vld [vmem:[%s4 + $0x5c8] sm:$0xff]
      %v4482 = vld [vmem:[%s4 + $0x5d0] sm:$0xff]
      %v4483 = vld [vmem:[%s4 + $0x5d8] sm:$0xff]
      %v4484 = vld [vmem:[%s4 + $0x5e0] sm:$0xff]
      %v4485 = vld [vmem:[%s4 + $0x5e8] sm:$0xff]
      %v4486 = vld [vmem:[%s4 + $0x5f0] sm:$0xff]
      %v4487 = vld [vmem:[%s4 + $0x5f8] sm:$0xff]
      %4488 = vmatpush.msra.mxu0 %v4454
      %4489 = vmatpush.msra.mxu0 %v4452
      %4490 = vmatpush.msra.mxu0 %v4450
      %4491 = vmatpush.msra.mxu0 %v4448
      %4492 = vmatpush.msra.mxu0 %v4446
      %4493 = vmatpush.msra.mxu0 %v4444
      %4494 = vmatpush.msra.mxu0 %v4442
      %4495 = vmatpush.msra.mxu0 %v4440
      %4496 = vmatpush.msra.mxu0 %v4438
      %4497 = vmatpush.msra.mxu0 %v4436
      %4498 = vmatpush.msra.mxu0 %v4434
      %4499 = vmatpush.msra.mxu0 %v4432
      %4500 = vmatpush.msra.mxu0 %v4430
      %4501 = vmatpush.msra.mxu0 %v4428
      %4502 = vmatpush.msra.mxu0 %v4426
      %4503 = vmatpush.msra.mxu0 %v4424
      %4504 = vmatmul.f32.gmra.mxu0 %v4402
      %v4505 = vpop.f32.mrf.mxu0
      %v4506 = vadd.f32 0.0, %v4505
      %4507 = vdwg.mxu0
      %4508 = vmatpush.msra.mxu0 %v4486
      %4509 = vmatpush.msra.mxu0 %v4484
      %4510 = vmatpush.msra.mxu0 %v4482
      %4511 = vmatpush.msra.mxu0 %v4480
      %4512 = vmatpush.msra.mxu0 %v4478
      %4513 = vmatpush.msra.mxu0 %v4476
      %4514 = vmatpush.msra.mxu0 %v4474
      %4515 = vmatpush.msra.mxu0 %v4472
      %4516 = vmatpush.msra.mxu0 %v4470
      %4517 = vmatpush.msra.mxu0 %v4468
      %4518 = vmatpush.msra.mxu0 %v4466
      %4519 = vmatpush.msra.mxu0 %v4464
      %4520 = vmatpush.msra.mxu0 %v4462
      %4521 = vmatpush.msra.mxu0 %v4460
      %4522 = vmatpush.msra.mxu0 %v4458
      %4523 = vmatpush.msra.mxu0 %v4456
      %4524 = vmatmul.f32.gmra.mxu0 %v4422
      %v4525 = vpop.f32.mrf.mxu0
      %v4526 = vadd.f32 %v4506, %v4525
      %4527 = vdwg.mxu0
      %4528 = vmatpush.msra.mxu0 %v4455
      %4529 = vmatpush.msra.mxu0 %v4453
      %4530 = vmatpush.msra.mxu0 %v4451
      %4531 = vmatpush.msra.mxu0 %v4449
      %4532 = vmatpush.msra.mxu0 %v4447
      %4533 = vmatpush.msra.mxu0 %v4445
      %4534 = vmatpush.msra.mxu0 %v4443
      %4535 = vmatpush.msra.mxu0 %v4441
      %4536 = vmatpush.msra.mxu0 %v4439
      %4537 = vmatpush.msra.mxu0 %v4437
      %4538 = vmatpush.msra.mxu0 %v4435
      %4539 = vmatpush.msra.mxu0 %v4433
      %4540 = vmatpush.msra.mxu0 %v4431
      %4541 = vmatpush.msra.mxu0 %v4429
      %4542 = vmatpush.msra.mxu0 %v4427
      %4543 = vmatpush.msra.mxu0 %v4425
      %4544 = vmatmul.f32.gmra.mxu0 %v4402
      %v4545 = vpop.f32.mrf.mxu0
      %v4546 = vadd.f32 0.0, %v4545
      %4547 = vdwg.mxu0
      %4548 = vmatpush.msra.mxu0 %v4487
      %4549 = vmatpush.msra.mxu0 %v4485
      %4550 = vmatpush.msra.mxu0 %v4483
      %4551 = vmatpush.msra.mxu0 %v4481
      %4552 = vmatpush.msra.mxu0 %v4479
      %4553 = vmatpush.msra.mxu0 %v4477
      %4554 = vmatpush.msra.mxu0 %v4475
      %4555 = vmatpush.msra.mxu0 %v4473
      %4556 = vmatpush.msra.mxu0 %v4471
      %4557 = vmatpush.msra.mxu0 %v4469
      %4558 = vmatpush.msra.mxu0 %v4467
      %4559 = vmatpush.msra.mxu0 %v4465
      %4560 = vmatpush.msra.mxu0 %v4463
      %4561 = vmatpush.msra.mxu0 %v4461
      %4562 = vmatpush.msra.mxu0 %v4459
      %4563 = vmatpush.msra.mxu0 %v4457
      %4564 = vmatmul.f32.gmra.mxu0 %v4422
      %v4565 = vpop.f32.mrf.mxu0
      %v4566 = vadd.f32 %v4546, %v4565
      %4567 = vdwg.mxu0
      %v4568 = vadd.f32 %v4379, %v4526
      %v4569 = vadd.f32 %v4380, %v4566
      %v4570 = vrot.slane %v3992, 4
      %v4571 = vsel %vm3997, %v4570, 0
      %4573 = vmatpush.msra.mxu0 0.0
      %4574 = vmatpush.msra.mxu0 0.0
      %4575 = vmatpush.msra.mxu0 0.0
      %4576 = vmatpush.msra.mxu0 0.0
      %4577 = vmatpush.msra.mxu0 0.0
      %4578 = vmatpush.msra.mxu0 0.0
      %4579 = vmatpush.msra.mxu0 0.0
      %4580 = vmatpush.msra.mxu0 0.0
      %4581 = vmatpush.msra.mxu0 0.0
      %4582 = vmatpush.msra.mxu0 0.0
      %4583 = vmatpush.msra.mxu0 0.0
      %4584 = vmatpush.msra.mxu0 0.0
      %4585 = vmatpush.msra.mxu0 0.0
      %4586 = vmatpush.msra.mxu0 0.0
      %4587 = vmatpush.msra.mxu0 0.0
      %4588 = vmatpush.msra.mxu0 %v3948
      %4589 = vmatmul.f32.gmra.mxu0 %v4571
      %v4590 = vpop.f32.mrf.mxu0
      %v4591 = vadd.f32 0.0, %v4590
      %4592 = vdwg.mxu0
      %4593 = vmatpush.msra.mxu0 0.0
      %4594 = vmatpush.msra.mxu0 0.0
      %4595 = vmatpush.msra.mxu0 0.0
      %4596 = vmatpush.msra.mxu0 0.0
      %4597 = vmatpush.msra.mxu0 0.0
      %4598 = vmatpush.msra.mxu0 0.0
      %4599 = vmatpush.msra.mxu0 0.0
      %4600 = vmatpush.msra.mxu0 0.0
      %4601 = vmatpush.msra.mxu0 0.0
      %4602 = vmatpush.msra.mxu0 0.0
      %4603 = vmatpush.msra.mxu0 0.0
      %4604 = vmatpush.msra.mxu0 0.0
      %4605 = vmatpush.msra.mxu0 0.0
      %4606 = vmatpush.msra.mxu0 0.0
      %4607 = vmatpush.msra.mxu0 0.0
      %4608 = vmatpush.msra.mxu0 %v3949
      %4609 = vmatmul.f32.gmra.mxu0 %v4571
      %v4610 = vpop.f32.mrf.mxu0
      %v4611 = vadd.f32 0.0, %v4610
      %4612 = vdwg.mxu0
      %v4613 = vld [vmem:[%s4 + $0x600] sm:$0xff]
      %v4614 = vld [vmem:[%s4 + $0x608] sm:$0xff]
      %v4615 = vld [vmem:[%s4 + $0x610] sm:$0xff]
      %v4616 = vld [vmem:[%s4 + $0x618] sm:$0xff]
      %v4617 = vld [vmem:[%s4 + $0x620] sm:$0xff]
      %v4618 = vld [vmem:[%s4 + $0x628] sm:$0xff]
      %v4619 = vld [vmem:[%s4 + $0x630] sm:$0xff]
      %v4620 = vld [vmem:[%s4 + $0x638] sm:$0xff]
      %v4621 = vld [vmem:[%s4 + $0x640] sm:$0xff]
      %v4622 = vld [vmem:[%s4 + $0x648] sm:$0xff]
      %v4623 = vld [vmem:[%s4 + $0x650] sm:$0xff]
      %v4624 = vld [vmem:[%s4 + $0x658] sm:$0xff]
      %v4625 = vld [vmem:[%s4 + $0x660] sm:$0xff]
      %v4626 = vld [vmem:[%s4 + $0x668] sm:$0xff]
      %v4627 = vld [vmem:[%s4 + $0x670] sm:$0xff]
      %v4628 = vld [vmem:[%s4 + $0x678] sm:$0xff]
      %v4629 = vld [vmem:[%s4 + $0x680] sm:$0xff]
      %v4630 = vld [vmem:[%s4 + $0x688] sm:$0xff]
      %v4631 = vld [vmem:[%s4 + $0x690] sm:$0xff]
      %v4632 = vld [vmem:[%s4 + $0x698] sm:$0xff]
      %v4633 = vld [vmem:[%s4 + $0x6a0] sm:$0xff]
      %v4634 = vld [vmem:[%s4 + $0x6a8] sm:$0xff]
      %v4635 = vld [vmem:[%s4 + $0x6b0] sm:$0xff]
      %v4636 = vld [vmem:[%s4 + $0x6b8] sm:$0xff]
      %v4637 = vld [vmem:[%s4 + $0x6c0] sm:$0xff]
      %v4638 = vld [vmem:[%s4 + $0x6c8] sm:$0xff]
      %v4639 = vld [vmem:[%s4 + $0x6d0] sm:$0xff]
      %v4640 = vld [vmem:[%s4 + $0x6d8] sm:$0xff]
      %v4641 = vld [vmem:[%s4 + $0x6e0] sm:$0xff]
      %v4642 = vld [vmem:[%s4 + $0x6e8] sm:$0xff]
      %v4643 = vld [vmem:[%s4 + $0x6f0] sm:$0xff]
      %v4644 = vld [vmem:[%s4 + $0x6f8] sm:$0xff]
      %v4645 = vld [vmem:[%s4 + $0x700] sm:$0xff]
      %v4646 = vld [vmem:[%s4 + $0x708] sm:$0xff]
      %v4647 = vld [vmem:[%s4 + $0x710] sm:$0xff]
      %v4648 = vld [vmem:[%s4 + $0x718] sm:$0xff]
      %v4649 = vld [vmem:[%s4 + $0x720] sm:$0xff]
      %v4650 = vld [vmem:[%s4 + $0x728] sm:$0xff]
      %v4651 = vld [vmem:[%s4 + $0x730] sm:$0xff]
      %v4652 = vld [vmem:[%s4 + $0x738] sm:$0xff]
      %v4653 = vld [vmem:[%s4 + $0x740] sm:$0xff]
      %v4654 = vld [vmem:[%s4 + $0x748] sm:$0xff]
      %v4655 = vld [vmem:[%s4 + $0x750] sm:$0xff]
      %v4656 = vld [vmem:[%s4 + $0x758] sm:$0xff]
      %v4657 = vld [vmem:[%s4 + $0x760] sm:$0xff]
      %v4658 = vld [vmem:[%s4 + $0x768] sm:$0xff]
      %v4659 = vld [vmem:[%s4 + $0x770] sm:$0xff]
      %v4660 = vld [vmem:[%s4 + $0x778] sm:$0xff]
      %v4661 = vld [vmem:[%s4 + $0x780] sm:$0xff]
      %v4662 = vld [vmem:[%s4 + $0x788] sm:$0xff]
      %v4663 = vld [vmem:[%s4 + $0x790] sm:$0xff]
      %v4664 = vld [vmem:[%s4 + $0x798] sm:$0xff]
      %v4665 = vld [vmem:[%s4 + $0x7a0] sm:$0xff]
      %v4666 = vld [vmem:[%s4 + $0x7a8] sm:$0xff]
      %v4667 = vld [vmem:[%s4 + $0x7b0] sm:$0xff]
      %v4668 = vld [vmem:[%s4 + $0x7b8] sm:$0xff]
      %v4669 = vld [vmem:[%s4 + $0x7c0] sm:$0xff]
      %v4670 = vld [vmem:[%s4 + $0x7c8] sm:$0xff]
      %v4671 = vld [vmem:[%s4 + $0x7d0] sm:$0xff]
      %v4672 = vld [vmem:[%s4 + $0x7d8] sm:$0xff]
      %v4673 = vld [vmem:[%s4 + $0x7e0] sm:$0xff]
      %v4674 = vld [vmem:[%s4 + $0x7e8] sm:$0xff]
      %v4675 = vld [vmem:[%s4 + $0x7f0] sm:$0xff]
      %v4676 = vld [vmem:[%s4 + $0x7f8] sm:$0xff]
      %4677 = vmatpush.msra.mxu0 %v4643
      %4678 = vmatpush.msra.mxu0 %v4641
      %4679 = vmatpush.msra.mxu0 %v4639
      %4680 = vmatpush.msra.mxu0 %v4637
      %4681 = vmatpush.msra.mxu0 %v4635
      %4682 = vmatpush.msra.mxu0 %v4633
      %4683 = vmatpush.msra.mxu0 %v4631
      %4684 = vmatpush.msra.mxu0 %v4629
      %4685 = vmatpush.msra.mxu0 %v4627
      %4686 = vmatpush.msra.mxu0 %v4625
      %4687 = vmatpush.msra.mxu0 %v4623
      %4688 = vmatpush.msra.mxu0 %v4621
      %4689 = vmatpush.msra.mxu0 %v4619
      %4690 = vmatpush.msra.mxu0 %v4617
      %4691 = vmatpush.msra.mxu0 %v4615
      %4692 = vmatpush.msra.mxu0 %v4613
      %4693 = vmatmul.f32.gmra.mxu0 %v4591
      %v4694 = vpop.f32.mrf.mxu0
      %v4695 = vadd.f32 0.0, %v4694
      %4696 = vdwg.mxu0
      %4697 = vmatpush.msra.mxu0 %v4675
      %4698 = vmatpush.msra.mxu0 %v4673
      %4699 = vmatpush.msra.mxu0 %v4671
      %4700 = vmatpush.msra.mxu0 %v4669
      %4701 = vmatpush.msra.mxu0 %v4667
      %4702 = vmatpush.msra.mxu0 %v4665
      %4703 = vmatpush.msra.mxu0 %v4663
      %4704 = vmatpush.msra.mxu0 %v4661
      %4705 = vmatpush.msra.mxu0 %v4659
      %4706 = vmatpush.msra.mxu0 %v4657
      %4707 = vmatpush.msra.mxu0 %v4655
      %4708 = vmatpush.msra.mxu0 %v4653
      %4709 = vmatpush.msra.mxu0 %v4651
      %4710 = vmatpush.msra.mxu0 %v4649
      %4711 = vmatpush.msra.mxu0 %v4647
      %4712 = vmatpush.msra.mxu0 %v4645
      %4713 = vmatmul.f32.gmra.mxu0 %v4611
      %v4714 = vpop.f32.mrf.mxu0
      %v4715 = vadd.f32 %v4695, %v4714
      %4716 = vdwg.mxu0
      %4717 = vmatpush.msra.mxu0 %v4644
      %4718 = vmatpush.msra.mxu0 %v4642
      %4719 = vmatpush.msra.mxu0 %v4640
      %4720 = vmatpush.msra.mxu0 %v4638
      %4721 = vmatpush.msra.mxu0 %v4636
      %4722 = vmatpush.msra.mxu0 %v4634
      %4723 = vmatpush.msra.mxu0 %v4632
      %4724 = vmatpush.msra.mxu0 %v4630
      %4725 = vmatpush.msra.mxu0 %v4628
      %4726 = vmatpush.msra.mxu0 %v4626
      %4727 = vmatpush.msra.mxu0 %v4624
      %4728 = vmatpush.msra.mxu0 %v4622
      %4729 = vmatpush.msra.mxu0 %v4620
      %4730 = vmatpush.msra.mxu0 %v4618
      %4731 = vmatpush.msra.mxu0 %v4616
      %4732 = vmatpush.msra.mxu0 %v4614
      %4733 = vmatmul.f32.gmra.mxu0 %v4591
      %v4734 = vpop.f32.mrf.mxu0
      %v4735 = vadd.f32 0.0, %v4734
      %4736 = vdwg.mxu0
      %4737 = vmatpush.msra.mxu0 %v4676
      %4738 = vmatpush.msra.mxu0 %v4674
      %4739 = vmatpush.msra.mxu0 %v4672
      %4740 = vmatpush.msra.mxu0 %v4670
      %4741 = vmatpush.msra.mxu0 %v4668
      %4742 = vmatpush.msra.mxu0 %v4666
      %4743 = vmatpush.msra.mxu0 %v4664
      %4744 = vmatpush.msra.mxu0 %v4662
      %4745 = vmatpush.msra.mxu0 %v4660
      %4746 = vmatpush.msra.mxu0 %v4658
      %4747 = vmatpush.msra.mxu0 %v4656
      %4748 = vmatpush.msra.mxu0 %v4654
      %4749 = vmatpush.msra.mxu0 %v4652
      %4750 = vmatpush.msra.mxu0 %v4650
      %4751 = vmatpush.msra.mxu0 %v4648
      %4752 = vmatpush.msra.mxu0 %v4646
      %4753 = vmatmul.f32.gmra.mxu0 %v4611
      %v4754 = vpop.f32.mrf.mxu0
      %v4755 = vadd.f32 %v4735, %v4754
      %4756 = vdwg.mxu0
      %v4757 = vadd.f32 %v4568, %v4715
      %v4758 = vadd.f32 %v4569, %v4755
      %v4760 = vsel %vm3997, %v3993, 0
      %4762 = vmatpush.msra.mxu0 0.0
      %4763 = vmatpush.msra.mxu0 0.0
      %4764 = vmatpush.msra.mxu0 0.0
      %4765 = vmatpush.msra.mxu0 0.0
      %4766 = vmatpush.msra.mxu0 0.0
      %4767 = vmatpush.msra.mxu0 0.0
      %4768 = vmatpush.msra.mxu0 0.0
      %4769 = vmatpush.msra.mxu0 0.0
      %4770 = vmatpush.msra.mxu0 0.0
      %4771 = vmatpush.msra.mxu0 0.0
      %4772 = vmatpush.msra.mxu0 0.0
      %4773 = vmatpush.msra.mxu0 0.0
      %4774 = vmatpush.msra.mxu0 0.0
      %4775 = vmatpush.msra.mxu0 0.0
      %4776 = vmatpush.msra.mxu0 0.0
      %4777 = vmatpush.msra.mxu0 %v3948
      %4778 = vmatmul.f32.gmra.mxu0 %v4760
      %v4779 = vpop.f32.mrf.mxu0
      %v4780 = vadd.f32 0.0, %v4779
      %4781 = vdwg.mxu0
      %4782 = vmatpush.msra.mxu0 0.0
      %4783 = vmatpush.msra.mxu0 0.0
      %4784 = vmatpush.msra.mxu0 0.0
      %4785 = vmatpush.msra.mxu0 0.0
      %4786 = vmatpush.msra.mxu0 0.0
      %4787 = vmatpush.msra.mxu0 0.0
      %4788 = vmatpush.msra.mxu0 0.0
      %4789 = vmatpush.msra.mxu0 0.0
      %4790 = vmatpush.msra.mxu0 0.0
      %4791 = vmatpush.msra.mxu0 0.0
      %4792 = vmatpush.msra.mxu0 0.0
      %4793 = vmatpush.msra.mxu0 0.0
      %4794 = vmatpush.msra.mxu0 0.0
      %4795 = vmatpush.msra.mxu0 0.0
      %4796 = vmatpush.msra.mxu0 0.0
      %4797 = vmatpush.msra.mxu0 %v3949
      %4798 = vmatmul.f32.gmra.mxu0 %v4760
      %v4799 = vpop.f32.mrf.mxu0
      %v4800 = vadd.f32 0.0, %v4799
      %4801 = vdwg.mxu0
      %v4802 = vld [vmem:[%s4 + $0x800] sm:$0xff]
      %v4803 = vld [vmem:[%s4 + $0x808] sm:$0xff]
      %v4804 = vld [vmem:[%s4 + $0x810] sm:$0xff]
      %v4805 = vld [vmem:[%s4 + $0x818] sm:$0xff]
      %v4806 = vld [vmem:[%s4 + $0x820] sm:$0xff]
      %v4807 = vld [vmem:[%s4 + $0x828] sm:$0xff]
      %v4808 = vld [vmem:[%s4 + $0x830] sm:$0xff]
      %v4809 = vld [vmem:[%s4 + $0x838] sm:$0xff]
      %v4810 = vld [vmem:[%s4 + $0x840] sm:$0xff]
      %v4811 = vld [vmem:[%s4 + $0x848] sm:$0xff]
      %v4812 = vld [vmem:[%s4 + $0x850] sm:$0xff]
      %v4813 = vld [vmem:[%s4 + $0x858] sm:$0xff]
      %v4814 = vld [vmem:[%s4 + $0x860] sm:$0xff]
      %v4815 = vld [vmem:[%s4 + $0x868] sm:$0xff]
      %v4816 = vld [vmem:[%s4 + $0x870] sm:$0xff]
      %v4817 = vld [vmem:[%s4 + $0x878] sm:$0xff]
      %v4818 = vld [vmem:[%s4 + $0x880] sm:$0xff]
      %v4819 = vld [vmem:[%s4 + $0x888] sm:$0xff]
      %v4820 = vld [vmem:[%s4 + $0x890] sm:$0xff]
      %v4821 = vld [vmem:[%s4 + $0x898] sm:$0xff]
      %v4822 = vld [vmem:[%s4 + $0x8a0] sm:$0xff]
      %v4823 = vld [vmem:[%s4 + $0x8a8] sm:$0xff]
      %v4824 = vld [vmem:[%s4 + $0x8b0] sm:$0xff]
      %v4825 = vld [vmem:[%s4 + $0x8b8] sm:$0xff]
      %v4826 = vld [vmem:[%s4 + $0x8c0] sm:$0xff]
      %v4827 = vld [vmem:[%s4 + $0x8c8] sm:$0xff]
      %v4828 = vld [vmem:[%s4 + $0x8d0] sm:$0xff]
      %v4829 = vld [vmem:[%s4 + $0x8d8] sm:$0xff]
      %v4830 = vld [vmem:[%s4 + $0x8e0] sm:$0xff]
      %v4831 = vld [vmem:[%s4 + $0x8e8] sm:$0xff]
      %v4832 = vld [vmem:[%s4 + $0x8f0] sm:$0xff]
      %v4833 = vld [vmem:[%s4 + $0x8f8] sm:$0xff]
      %v4834 = vld [vmem:[%s4 + $0x900] sm:$0xff]
      %v4835 = vld [vmem:[%s4 + $0x908] sm:$0xff]
      %v4836 = vld [vmem:[%s4 + $0x910] sm:$0xff]
      %v4837 = vld [vmem:[%s4 + $0x918] sm:$0xff]
      %v4838 = vld [vmem:[%s4 + $0x920] sm:$0xff]
      %v4839 = vld [vmem:[%s4 + $0x928] sm:$0xff]
      %v4840 = vld [vmem:[%s4 + $0x930] sm:$0xff]
      %v4841 = vld [vmem:[%s4 + $0x938] sm:$0xff]
      %v4842 = vld [vmem:[%s4 + $0x940] sm:$0xff]
      %v4843 = vld [vmem:[%s4 + $0x948] sm:$0xff]
      %v4844 = vld [vmem:[%s4 + $0x950] sm:$0xff]
      %v4845 = vld [vmem:[%s4 + $0x958] sm:$0xff]
      %v4846 = vld [vmem:[%s4 + $0x960] sm:$0xff]
      %v4847 = vld [vmem:[%s4 + $0x968] sm:$0xff]
      %v4848 = vld [vmem:[%s4 + $0x970] sm:$0xff]
      %v4849 = vld [vmem:[%s4 + $0x978] sm:$0xff]
      %v4850 = vld [vmem:[%s4 + $0x980] sm:$0xff]
      %v4851 = vld [vmem:[%s4 + $0x988] sm:$0xff]
      %v4852 = vld [vmem:[%s4 + $0x990] sm:$0xff]
      %v4853 = vld [vmem:[%s4 + $0x998] sm:$0xff]
      %v4854 = vld [vmem:[%s4 + $0x9a0] sm:$0xff]
      %v4855 = vld [vmem:[%s4 + $0x9a8] sm:$0xff]
      %v4856 = vld [vmem:[%s4 + $0x9b0] sm:$0xff]
      %v4857 = vld [vmem:[%s4 + $0x9b8] sm:$0xff]
      %v4858 = vld [vmem:[%s4 + $0x9c0] sm:$0xff]
      %v4859 = vld [vmem:[%s4 + $0x9c8] sm:$0xff]
      %v4860 = vld [vmem:[%s4 + $0x9d0] sm:$0xff]
      %v4861 = vld [vmem:[%s4 + $0x9d8] sm:$0xff]
      %v4862 = vld [vmem:[%s4 + $0x9e0] sm:$0xff]
      %v4863 = vld [vmem:[%s4 + $0x9e8] sm:$0xff]
      %v4864 = vld [vmem:[%s4 + $0x9f0] sm:$0xff]
      %v4865 = vld [vmem:[%s4 + $0x9f8] sm:$0xff]
      %4866 = vmatpush.msra.mxu0 %v4832
      %4867 = vmatpush.msra.mxu0 %v4830
      %4868 = vmatpush.msra.mxu0 %v4828
      %4869 = vmatpush.msra.mxu0 %v4826
      %4870 = vmatpush.msra.mxu0 %v4824
      %4871 = vmatpush.msra.mxu0 %v4822
      %4872 = vmatpush.msra.mxu0 %v4820
      %4873 = vmatpush.msra.mxu0 %v4818
      %4874 = vmatpush.msra.mxu0 %v4816
      %4875 = vmatpush.msra.mxu0 %v4814
      %4876 = vmatpush.msra.mxu0 %v4812
      %4877 = vmatpush.msra.mxu0 %v4810
      %4878 = vmatpush.msra.mxu0 %v4808
      %4879 = vmatpush.msra.mxu0 %v4806
      %4880 = vmatpush.msra.mxu0 %v4804
      %4881 = vmatpush.msra.mxu0 %v4802
      %4882 = vmatmul.f32.gmra.mxu0 %v4780
      %v4883 = vpop.f32.mrf.mxu0
      %v4884 = vadd.f32 0.0, %v4883
      %4885 = vdwg.mxu0
      %4886 = vmatpush.msra.mxu0 %v4864
      %4887 = vmatpush.msra.mxu0 %v4862
      %4888 = vmatpush.msra.mxu0 %v4860
      %4889 = vmatpush.msra.mxu0 %v4858
      %4890 = vmatpush.msra.mxu0 %v4856
      %4891 = vmatpush.msra.mxu0 %v4854
      %4892 = vmatpush.msra.mxu0 %v4852
      %4893 = vmatpush.msra.mxu0 %v4850
      %4894 = vmatpush.msra.mxu0 %v4848
      %4895 = vmatpush.msra.mxu0 %v4846
      %4896 = vmatpush.msra.mxu0 %v4844
      %4897 = vmatpush.msra.mxu0 %v4842
      %4898 = vmatpush.msra.mxu0 %v4840
      %4899 = vmatpush.msra.mxu0 %v4838
      %4900 = vmatpush.msra.mxu0 %v4836
      %4901 = vmatpush.msra.mxu0 %v4834
      %4902 = vmatmul.f32.gmra.mxu0 %v4800
      %v4903 = vpop.f32.mrf.mxu0
      %v4904 = vadd.f32 %v4884, %v4903
      %4905 = vdwg.mxu0
      %4906 = vmatpush.msra.mxu0 %v4833
      %4907 = vmatpush.msra.mxu0 %v4831
      %4908 = vmatpush.msra.mxu0 %v4829
      %4909 = vmatpush.msra.mxu0 %v4827
      %4910 = vmatpush.msra.mxu0 %v4825
      %4911 = vmatpush.msra.mxu0 %v4823
      %4912 = vmatpush.msra.mxu0 %v4821
      %4913 = vmatpush.msra.mxu0 %v4819
      %4914 = vmatpush.msra.mxu0 %v4817
      %4915 = vmatpush.msra.mxu0 %v4815
      %4916 = vmatpush.msra.mxu0 %v4813
      %4917 = vmatpush.msra.mxu0 %v4811
      %4918 = vmatpush.msra.mxu0 %v4809
      %4919 = vmatpush.msra.mxu0 %v4807
      %4920 = vmatpush.msra.mxu0 %v4805
      %4921 = vmatpush.msra.mxu0 %v4803
      %4922 = vmatmul.f32.gmra.mxu0 %v4780
      %v4923 = vpop.f32.mrf.mxu0
      %v4924 = vadd.f32 0.0, %v4923
      %4925 = vdwg.mxu0
      %4926 = vmatpush.msra.mxu0 %v4865
      %4927 = vmatpush.msra.mxu0 %v4863
      %4928 = vmatpush.msra.mxu0 %v4861
      %4929 = vmatpush.msra.mxu0 %v4859
      %4930 = vmatpush.msra.mxu0 %v4857
      %4931 = vmatpush.msra.mxu0 %v4855
      %4932 = vmatpush.msra.mxu0 %v4853
      %4933 = vmatpush.msra.mxu0 %v4851
      %4934 = vmatpush.msra.mxu0 %v4849
      %4935 = vmatpush.msra.mxu0 %v4847
      %4936 = vmatpush.msra.mxu0 %v4845
      %4937 = vmatpush.msra.mxu0 %v4843
      %4938 = vmatpush.msra.mxu0 %v4841
      %4939 = vmatpush.msra.mxu0 %v4839
      %4940 = vmatpush.msra.mxu0 %v4837
      %4941 = vmatpush.msra.mxu0 %v4835
      %4942 = vmatmul.f32.gmra.mxu0 %v4800
      %v4943 = vpop.f32.mrf.mxu0
      %v4944 = vadd.f32 %v4924, %v4943
      %4945 = vdwg.mxu0
      %v4946 = vadd.f32 %v4757, %v4904
      %v4947 = vadd.f32 %v4758, %v4944
      %v4948 = vrot.slane %v3993, 4
      %v4949 = vsel %vm3997, %v4948, 0
      %4951 = vmatpush.msra.mxu0 0.0
      %4952 = vmatpush.msra.mxu0 0.0
      %4953 = vmatpush.msra.mxu0 0.0
      %4954 = vmatpush.msra.mxu0 0.0
      %4955 = vmatpush.msra.mxu0 0.0
      %4956 = vmatpush.msra.mxu0 0.0
      %4957 = vmatpush.msra.mxu0 0.0
      %4958 = vmatpush.msra.mxu0 0.0
      %4959 = vmatpush.msra.mxu0 0.0
      %4960 = vmatpush.msra.mxu0 0.0
      %4961 = vmatpush.msra.mxu0 0.0
      %4962 = vmatpush.msra.mxu0 0.0
      %4963 = vmatpush.msra.mxu0 0.0
      %4964 = vmatpush.msra.mxu0 0.0
      %4965 = vmatpush.msra.mxu0 0.0
      %4966 = vmatpush.msra.mxu0 %v3948
      %4967 = vmatmul.f32.gmra.mxu0 %v4949
      %v4968 = vpop.f32.mrf.mxu0
      %v4969 = vadd.f32 0.0, %v4968
      %4970 = vdwg.mxu0
      %4971 = vmatpush.msra.mxu0 0.0
      %4972 = vmatpush.msra.mxu0 0.0
      %4973 = vmatpush.msra.mxu0 0.0
      %4974 = vmatpush.msra.mxu0 0.0
      %4975 = vmatpush.msra.mxu0 0.0
      %4976 = vmatpush.msra.mxu0 0.0
      %4977 = vmatpush.msra.mxu0 0.0
      %4978 = vmatpush.msra.mxu0 0.0
      %4979 = vmatpush.msra.mxu0 0.0
      %4980 = vmatpush.msra.mxu0 0.0
      %4981 = vmatpush.msra.mxu0 0.0
      %4982 = vmatpush.msra.mxu0 0.0
      %4983 = vmatpush.msra.mxu0 0.0
      %4984 = vmatpush.msra.mxu0 0.0
      %4985 = vmatpush.msra.mxu0 0.0
      %4986 = vmatpush.msra.mxu0 %v3949
      %4987 = vmatmul.f32.gmra.mxu0 %v4949
      %v4988 = vpop.f32.mrf.mxu0
      %v4989 = vadd.f32 0.0, %v4988
      %4990 = vdwg.mxu0
      %v4991 = vld [vmem:[%s4 + $0xa00] sm:$0xff]
      %v4992 = vld [vmem:[%s4 + $0xa08] sm:$0xff]
      %v4993 = vld [vmem:[%s4 + $0xa10] sm:$0xff]
      %v4994 = vld [vmem:[%s4 + $0xa18] sm:$0xff]
      %v4995 = vld [vmem:[%s4 + $0xa20] sm:$0xff]
      %v4996 = vld [vmem:[%s4 + $0xa28] sm:$0xff]
      %v4997 = vld [vmem:[%s4 + $0xa30] sm:$0xff]
      %v4998 = vld [vmem:[%s4 + $0xa38] sm:$0xff]
      %v4999 = vld [vmem:[%s4 + $0xa40] sm:$0xff]
      %v5000 = vld [vmem:[%s4 + $0xa48] sm:$0xff]
      %v5001 = vld [vmem:[%s4 + $0xa50] sm:$0xff]
      %v5002 = vld [vmem:[%s4 + $0xa58] sm:$0xff]
      %v5003 = vld [vmem:[%s4 + $0xa60] sm:$0xff]
      %v5004 = vld [vmem:[%s4 + $0xa68] sm:$0xff]
      %v5005 = vld [vmem:[%s4 + $0xa70] sm:$0xff]
      %v5006 = vld [vmem:[%s4 + $0xa78] sm:$0xff]
      %v5007 = vld [vmem:[%s4 + $0xa80] sm:$0xff]
      %v5008 = vld [vmem:[%s4 + $0xa88] sm:$0xff]
      %v5009 = vld [vmem:[%s4 + $0xa90] sm:$0xff]
      %v5010 = vld [vmem:[%s4 + $0xa98] sm:$0xff]
      %v5011 = vld [vmem:[%s4 + $0xaa0] sm:$0xff]
      %v5012 = vld [vmem:[%s4 + $0xaa8] sm:$0xff]
      %v5013 = vld [vmem:[%s4 + $0xab0] sm:$0xff]
      %v5014 = vld [vmem:[%s4 + $0xab8] sm:$0xff]
      %v5015 = vld [vmem:[%s4 + $0xac0] sm:$0xff]
      %v5016 = vld [vmem:[%s4 + $0xac8] sm:$0xff]
      %v5017 = vld [vmem:[%s4 + $0xad0] sm:$0xff]
      %v5018 = vld [vmem:[%s4 + $0xad8] sm:$0xff]
      %v5019 = vld [vmem:[%s4 + $0xae0] sm:$0xff]
      %v5020 = vld [vmem:[%s4 + $0xae8] sm:$0xff]
      %v5021 = vld [vmem:[%s4 + $0xaf0] sm:$0xff]
      %v5022 = vld [vmem:[%s4 + $0xaf8] sm:$0xff]
      %v5023 = vld [vmem:[%s4 + $0xb00] sm:$0xff]
      %v5024 = vld [vmem:[%s4 + $0xb08] sm:$0xff]
      %v5025 = vld [vmem:[%s4 + $0xb10] sm:$0xff]
      %v5026 = vld [vmem:[%s4 + $0xb18] sm:$0xff]
      %v5027 = vld [vmem:[%s4 + $0xb20] sm:$0xff]
      %v5028 = vld [vmem:[%s4 + $0xb28] sm:$0xff]
      %v5029 = vld [vmem:[%s4 + $0xb30] sm:$0xff]
      %v5030 = vld [vmem:[%s4 + $0xb38] sm:$0xff]
      %v5031 = vld [vmem:[%s4 + $0xb40] sm:$0xff]
      %v5032 = vld [vmem:[%s4 + $0xb48] sm:$0xff]
      %v5033 = vld [vmem:[%s4 + $0xb50] sm:$0xff]
      %v5034 = vld [vmem:[%s4 + $0xb58] sm:$0xff]
      %v5035 = vld [vmem:[%s4 + $0xb60] sm:$0xff]
      %v5036 = vld [vmem:[%s4 + $0xb68] sm:$0xff]
      %v5037 = vld [vmem:[%s4 + $0xb70] sm:$0xff]
      %v5038 = vld [vmem:[%s4 + $0xb78] sm:$0xff]
      %v5039 = vld [vmem:[%s4 + $0xb80] sm:$0xff]
      %v5040 = vld [vmem:[%s4 + $0xb88] sm:$0xff]
      %v5041 = vld [vmem:[%s4 + $0xb90] sm:$0xff]
      %v5042 = vld [vmem:[%s4 + $0xb98] sm:$0xff]
      %v5043 = vld [vmem:[%s4 + $0xba0] sm:$0xff]
      %v5044 = vld [vmem:[%s4 + $0xba8] sm:$0xff]
      %v5045 = vld [vmem:[%s4 + $0xbb0] sm:$0xff]
      %v5046 = vld [vmem:[%s4 + $0xbb8] sm:$0xff]
      %v5047 = vld [vmem:[%s4 + $0xbc0] sm:$0xff]
      %v5048 = vld [vmem:[%s4 + $0xbc8] sm:$0xff]
      %v5049 = vld [vmem:[%s4 + $0xbd0] sm:$0xff]
      %v5050 = vld [vmem:[%s4 + $0xbd8] sm:$0xff]
      %v5051 = vld [vmem:[%s4 + $0xbe0] sm:$0xff]
      %v5052 = vld [vmem:[%s4 + $0xbe8] sm:$0xff]
      %v5053 = vld [vmem:[%s4 + $0xbf0] sm:$0xff]
      %v5054 = vld [vmem:[%s4 + $0xbf8] sm:$0xff]
      %5055 = vmatpush.msra.mxu0 %v5021
      %5056 = vmatpush.msra.mxu0 %v5019
      %5057 = vmatpush.msra.mxu0 %v5017
      %5058 = vmatpush.msra.mxu0 %v5015
      %5059 = vmatpush.msra.mxu0 %v5013
      %5060 = vmatpush.msra.mxu0 %v5011
      %5061 = vmatpush.msra.mxu0 %v5009
      %5062 = vmatpush.msra.mxu0 %v5007
      %5063 = vmatpush.msra.mxu0 %v5005
      %5064 = vmatpush.msra.mxu0 %v5003
      %5065 = vmatpush.msra.mxu0 %v5001
      %5066 = vmatpush.msra.mxu0 %v4999
      %5067 = vmatpush.msra.mxu0 %v4997
      %5068 = vmatpush.msra.mxu0 %v4995
      %5069 = vmatpush.msra.mxu0 %v4993
      %5070 = vmatpush.msra.mxu0 %v4991
      %5071 = vmatmul.f32.gmra.mxu0 %v4969
      %v5072 = vpop.f32.mrf.mxu0
      %v5073 = vadd.f32 0.0, %v5072
      %5074 = vdwg.mxu0
      %5075 = vmatpush.msra.mxu0 %v5053
      %5076 = vmatpush.msra.mxu0 %v5051
      %5077 = vmatpush.msra.mxu0 %v5049
      %5078 = vmatpush.msra.mxu0 %v5047
      %5079 = vmatpush.msra.mxu0 %v5045
      %5080 = vmatpush.msra.mxu0 %v5043
      %5081 = vmatpush.msra.mxu0 %v5041
      %5082 = vmatpush.msra.mxu0 %v5039
      %5083 = vmatpush.msra.mxu0 %v5037
      %5084 = vmatpush.msra.mxu0 %v5035
      %5085 = vmatpush.msra.mxu0 %v5033
      %5086 = vmatpush.msra.mxu0 %v5031
      %5087 = vmatpush.msra.mxu0 %v5029
      %5088 = vmatpush.msra.mxu0 %v5027
      %5089 = vmatpush.msra.mxu0 %v5025
      %5090 = vmatpush.msra.mxu0 %v5023
      %5091 = vmatmul.f32.gmra.mxu0 %v4989
      %v5092 = vpop.f32.mrf.mxu0
      %v5093 = vadd.f32 %v5073, %v5092
      %5094 = vdwg.mxu0
      %5095 = vmatpush.msra.mxu0 %v5022
      %5096 = vmatpush.msra.mxu0 %v5020
      %5097 = vmatpush.msra.mxu0 %v5018
      %5098 = vmatpush.msra.mxu0 %v5016
      %5099 = vmatpush.msra.mxu0 %v5014
      %5100 = vmatpush.msra.mxu0 %v5012
      %5101 = vmatpush.msra.mxu0 %v5010
      %5102 = vmatpush.msra.mxu0 %v5008
      %5103 = vmatpush.msra.mxu0 %v5006
      %5104 = vmatpush.msra.mxu0 %v5004
      %5105 = vmatpush.msra.mxu0 %v5002
      %5106 = vmatpush.msra.mxu0 %v5000
      %5107 = vmatpush.msra.mxu0 %v4998
      %5108 = vmatpush.msra.mxu0 %v4996
      %5109 = vmatpush.msra.mxu0 %v4994
      %5110 = vmatpush.msra.mxu0 %v4992
      %5111 = vmatmul.f32.gmra.mxu0 %v4969
      %v5112 = vpop.f32.mrf.mxu0
      %v5113 = vadd.f32 0.0, %v5112
      %5114 = vdwg.mxu0
      %5115 = vmatpush.msra.mxu0 %v5054
      %5116 = vmatpush.msra.mxu0 %v5052
      %5117 = vmatpush.msra.mxu0 %v5050
      %5118 = vmatpush.msra.mxu0 %v5048
      %5119 = vmatpush.msra.mxu0 %v5046
      %5120 = vmatpush.msra.mxu0 %v5044
      %5121 = vmatpush.msra.mxu0 %v5042
      %5122 = vmatpush.msra.mxu0 %v5040
      %5123 = vmatpush.msra.mxu0 %v5038
      %5124 = vmatpush.msra.mxu0 %v5036
      %5125 = vmatpush.msra.mxu0 %v5034
      %5126 = vmatpush.msra.mxu0 %v5032
      %5127 = vmatpush.msra.mxu0 %v5030
      %5128 = vmatpush.msra.mxu0 %v5028
      %5129 = vmatpush.msra.mxu0 %v5026
      %5130 = vmatpush.msra.mxu0 %v5024
      %5131 = vmatmul.f32.gmra.mxu0 %v4989
      %v5132 = vpop.f32.mrf.mxu0
      %v5133 = vadd.f32 %v5113, %v5132
      %5134 = vdwg.mxu0
      %v5135 = vadd.f32 %v4946, %v5093
      %v5136 = vadd.f32 %v4947, %v5133
      %v5138 = vsel %vm3997, %v3994, 0
      %5140 = vmatpush.msra.mxu0 0.0
      %5141 = vmatpush.msra.mxu0 0.0
      %5142 = vmatpush.msra.mxu0 0.0
      %5143 = vmatpush.msra.mxu0 0.0
      %5144 = vmatpush.msra.mxu0 0.0
      %5145 = vmatpush.msra.mxu0 0.0
      %5146 = vmatpush.msra.mxu0 0.0
      %5147 = vmatpush.msra.mxu0 0.0
      %5148 = vmatpush.msra.mxu0 0.0
      %5149 = vmatpush.msra.mxu0 0.0
      %5150 = vmatpush.msra.mxu0 0.0
      %5151 = vmatpush.msra.mxu0 0.0
      %5152 = vmatpush.msra.mxu0 0.0
      %5153 = vmatpush.msra.mxu0 0.0
      %5154 = vmatpush.msra.mxu0 0.0
      %5155 = vmatpush.msra.mxu0 %v3948
      %5156 = vmatmul.f32.gmra.mxu0 %v5138
      %v5157 = vpop.f32.mrf.mxu0
      %v5158 = vadd.f32 0.0, %v5157
      %5159 = vdwg.mxu0
      %5160 = vmatpush.msra.mxu0 0.0
      %5161 = vmatpush.msra.mxu0 0.0
      %5162 = vmatpush.msra.mxu0 0.0
      %5163 = vmatpush.msra.mxu0 0.0
      %5164 = vmatpush.msra.mxu0 0.0
      %5165 = vmatpush.msra.mxu0 0.0
      %5166 = vmatpush.msra.mxu0 0.0
      %5167 = vmatpush.msra.mxu0 0.0
      %5168 = vmatpush.msra.mxu0 0.0
      %5169 = vmatpush.msra.mxu0 0.0
      %5170 = vmatpush.msra.mxu0 0.0
      %5171 = vmatpush.msra.mxu0 0.0
      %5172 = vmatpush.msra.mxu0 0.0
      %5173 = vmatpush.msra.mxu0 0.0
      %5174 = vmatpush.msra.mxu0 0.0
      %5175 = vmatpush.msra.mxu0 %v3949
      %5176 = vmatmul.f32.gmra.mxu0 %v5138
      %v5177 = vpop.f32.mrf.mxu0
      %v5178 = vadd.f32 0.0, %v5177
      %5179 = vdwg.mxu0
      %v5180 = vld [vmem:[%s4 + $0xc00] sm:$0xff]
      %v5181 = vld [vmem:[%s4 + $0xc08] sm:$0xff]
      %v5182 = vld [vmem:[%s4 + $0xc10] sm:$0xff]
      %v5183 = vld [vmem:[%s4 + $0xc18] sm:$0xff]
      %v5184 = vld [vmem:[%s4 + $0xc20] sm:$0xff]
      %v5185 = vld [vmem:[%s4 + $0xc28] sm:$0xff]
      %v5186 = vld [vmem:[%s4 + $0xc30] sm:$0xff]
      %v5187 = vld [vmem:[%s4 + $0xc38] sm:$0xff]
      %v5188 = vld [vmem:[%s4 + $0xc40] sm:$0xff]
      %v5189 = vld [vmem:[%s4 + $0xc48] sm:$0xff]
      %v5190 = vld [vmem:[%s4 + $0xc50] sm:$0xff]
      %v5191 = vld [vmem:[%s4 + $0xc58] sm:$0xff]
      %v5192 = vld [vmem:[%s4 + $0xc60] sm:$0xff]
      %v5193 = vld [vmem:[%s4 + $0xc68] sm:$0xff]
      %v5194 = vld [vmem:[%s4 + $0xc70] sm:$0xff]
      %v5195 = vld [vmem:[%s4 + $0xc78] sm:$0xff]
      %v5196 = vld [vmem:[%s4 + $0xc80] sm:$0xff]
      %v5197 = vld [vmem:[%s4 + $0xc88] sm:$0xff]
      %v5198 = vld [vmem:[%s4 + $0xc90] sm:$0xff]
      %v5199 = vld [vmem:[%s4 + $0xc98] sm:$0xff]
      %v5200 = vld [vmem:[%s4 + $0xca0] sm:$0xff]
      %v5201 = vld [vmem:[%s4 + $0xca8] sm:$0xff]
      %v5202 = vld [vmem:[%s4 + $0xcb0] sm:$0xff]
      %v5203 = vld [vmem:[%s4 + $0xcb8] sm:$0xff]
      %v5204 = vld [vmem:[%s4 + $0xcc0] sm:$0xff]
      %v5205 = vld [vmem:[%s4 + $0xcc8] sm:$0xff]
      %v5206 = vld [vmem:[%s4 + $0xcd0] sm:$0xff]
      %v5207 = vld [vmem:[%s4 + $0xcd8] sm:$0xff]
      %v5208 = vld [vmem:[%s4 + $0xce0] sm:$0xff]
      %v5209 = vld [vmem:[%s4 + $0xce8] sm:$0xff]
      %v5210 = vld [vmem:[%s4 + $0xcf0] sm:$0xff]
      %v5211 = vld [vmem:[%s4 + $0xcf8] sm:$0xff]
      %v5212 = vld [vmem:[%s4 + $0xd00] sm:$0xff]
      %v5213 = vld [vmem:[%s4 + $0xd08] sm:$0xff]
      %v5214 = vld [vmem:[%s4 + $0xd10] sm:$0xff]
      %v5215 = vld [vmem:[%s4 + $0xd18] sm:$0xff]
      %v5216 = vld [vmem:[%s4 + $0xd20] sm:$0xff]
      %v5217 = vld [vmem:[%s4 + $0xd28] sm:$0xff]
      %v5218 = vld [vmem:[%s4 + $0xd30] sm:$0xff]
      %v5219 = vld [vmem:[%s4 + $0xd38] sm:$0xff]
      %v5220 = vld [vmem:[%s4 + $0xd40] sm:$0xff]
      %v5221 = vld [vmem:[%s4 + $0xd48] sm:$0xff]
      %v5222 = vld [vmem:[%s4 + $0xd50] sm:$0xff]
      %v5223 = vld [vmem:[%s4 + $0xd58] sm:$0xff]
      %v5224 = vld [vmem:[%s4 + $0xd60] sm:$0xff]
      %v5225 = vld [vmem:[%s4 + $0xd68] sm:$0xff]
      %v5226 = vld [vmem:[%s4 + $0xd70] sm:$0xff]
      %v5227 = vld [vmem:[%s4 + $0xd78] sm:$0xff]
      %v5228 = vld [vmem:[%s4 + $0xd80] sm:$0xff]
      %v5229 = vld [vmem:[%s4 + $0xd88] sm:$0xff]
      %v5230 = vld [vmem:[%s4 + $0xd90] sm:$0xff]
      %v5231 = vld [vmem:[%s4 + $0xd98] sm:$0xff]
      %v5232 = vld [vmem:[%s4 + $0xda0] sm:$0xff]
      %v5233 = vld [vmem:[%s4 + $0xda8] sm:$0xff]
      %v5234 = vld [vmem:[%s4 + $0xdb0] sm:$0xff]
      %v5235 = vld [vmem:[%s4 + $0xdb8] sm:$0xff]
      %v5236 = vld [vmem:[%s4 + $0xdc0] sm:$0xff]
      %v5237 = vld [vmem:[%s4 + $0xdc8] sm:$0xff]
      %v5238 = vld [vmem:[%s4 + $0xdd0] sm:$0xff]
      %v5239 = vld [vmem:[%s4 + $0xdd8] sm:$0xff]
      %v5240 = vld [vmem:[%s4 + $0xde0] sm:$0xff]
      %v5241 = vld [vmem:[%s4 + $0xde8] sm:$0xff]
      %v5242 = vld [vmem:[%s4 + $0xdf0] sm:$0xff]
      %v5243 = vld [vmem:[%s4 + $0xdf8] sm:$0xff]
      %5244 = vmatpush.msra.mxu0 %v5210
      %5245 = vmatpush.msra.mxu0 %v5208
      %5246 = vmatpush.msra.mxu0 %v5206
      %5247 = vmatpush.msra.mxu0 %v5204
      %5248 = vmatpush.msra.mxu0 %v5202
      %5249 = vmatpush.msra.mxu0 %v5200
      %5250 = vmatpush.msra.mxu0 %v5198
      %5251 = vmatpush.msra.mxu0 %v5196
      %5252 = vmatpush.msra.mxu0 %v5194
      %5253 = vmatpush.msra.mxu0 %v5192
      %5254 = vmatpush.msra.mxu0 %v5190
      %5255 = vmatpush.msra.mxu0 %v5188
      %5256 = vmatpush.msra.mxu0 %v5186
      %5257 = vmatpush.msra.mxu0 %v5184
      %5258 = vmatpush.msra.mxu0 %v5182
      %5259 = vmatpush.msra.mxu0 %v5180
      %5260 = vmatmul.f32.gmra.mxu0 %v5158
      %v5261 = vpop.f32.mrf.mxu0
      %v5262 = vadd.f32 0.0, %v5261
      %5263 = vdwg.mxu0
      %5264 = vmatpush.msra.mxu0 %v5242
      %5265 = vmatpush.msra.mxu0 %v5240
      %5266 = vmatpush.msra.mxu0 %v5238
      %5267 = vmatpush.msra.mxu0 %v5236
      %5268 = vmatpush.msra.mxu0 %v5234
      %5269 = vmatpush.msra.mxu0 %v5232
      %5270 = vmatpush.msra.mxu0 %v5230
      %5271 = vmatpush.msra.mxu0 %v5228
      %5272 = vmatpush.msra.mxu0 %v5226
      %5273 = vmatpush.msra.mxu0 %v5224
      %5274 = vmatpush.msra.mxu0 %v5222
      %5275 = vmatpush.msra.mxu0 %v5220
      %5276 = vmatpush.msra.mxu0 %v5218
      %5277 = vmatpush.msra.mxu0 %v5216
      %5278 = vmatpush.msra.mxu0 %v5214
      %5279 = vmatpush.msra.mxu0 %v5212
      %5280 = vmatmul.f32.gmra.mxu0 %v5178
      %v5281 = vpop.f32.mrf.mxu0
      %v5282 = vadd.f32 %v5262, %v5281
      %5283 = vdwg.mxu0
      %5284 = vmatpush.msra.mxu0 %v5211
      %5285 = vmatpush.msra.mxu0 %v5209
      %5286 = vmatpush.msra.mxu0 %v5207
      %5287 = vmatpush.msra.mxu0 %v5205
      %5288 = vmatpush.msra.mxu0 %v5203
      %5289 = vmatpush.msra.mxu0 %v5201
      %5290 = vmatpush.msra.mxu0 %v5199
      %5291 = vmatpush.msra.mxu0 %v5197
      %5292 = vmatpush.msra.mxu0 %v5195
      %5293 = vmatpush.msra.mxu0 %v5193
      %5294 = vmatpush.msra.mxu0 %v5191
      %5295 = vmatpush.msra.mxu0 %v5189
      %5296 = vmatpush.msra.mxu0 %v5187
      %5297 = vmatpush.msra.mxu0 %v5185
      %5298 = vmatpush.msra.mxu0 %v5183
      %5299 = vmatpush.msra.mxu0 %v5181
      %5300 = vmatmul.f32.gmra.mxu0 %v5158
      %v5301 = vpop.f32.mrf.mxu0
      %v5302 = vadd.f32 0.0, %v5301
      %5303 = vdwg.mxu0
      %5304 = vmatpush.msra.mxu0 %v5243
      %5305 = vmatpush.msra.mxu0 %v5241
      %5306 = vmatpush.msra.mxu0 %v5239
      %5307 = vmatpush.msra.mxu0 %v5237
      %5308 = vmatpush.msra.mxu0 %v5235
      %5309 = vmatpush.msra.mxu0 %v5233
      %5310 = vmatpush.msra.mxu0 %v5231
      %5311 = vmatpush.msra.mxu0 %v5229
      %5312 = vmatpush.msra.mxu0 %v5227
      %5313 = vmatpush.msra.mxu0 %v5225
      %5314 = vmatpush.msra.mxu0 %v5223
      %5315 = vmatpush.msra.mxu0 %v5221
      %5316 = vmatpush.msra.mxu0 %v5219
      %5317 = vmatpush.msra.mxu0 %v5217
      %5318 = vmatpush.msra.mxu0 %v5215
      %5319 = vmatpush.msra.mxu0 %v5213
      %5320 = vmatmul.f32.gmra.mxu0 %v5178
      %v5321 = vpop.f32.mrf.mxu0
      %v5322 = vadd.f32 %v5302, %v5321
      %5323 = vdwg.mxu0
      %v5324 = vadd.f32 %v5135, %v5282
      %v5325 = vadd.f32 %v5136, %v5322
      %v5326 = vrot.slane %v3994, 4
      %v5327 = vsel %vm3997, %v5326, 0
      %5329 = vmatpush.msra.mxu0 0.0
      %5330 = vmatpush.msra.mxu0 0.0
      %5331 = vmatpush.msra.mxu0 0.0
      %5332 = vmatpush.msra.mxu0 0.0
      %5333 = vmatpush.msra.mxu0 0.0
      %5334 = vmatpush.msra.mxu0 0.0
      %5335 = vmatpush.msra.mxu0 0.0
      %5336 = vmatpush.msra.mxu0 0.0
      %5337 = vmatpush.msra.mxu0 0.0
      %5338 = vmatpush.msra.mxu0 0.0
      %5339 = vmatpush.msra.mxu0 0.0
      %5340 = vmatpush.msra.mxu0 0.0
      %5341 = vmatpush.msra.mxu0 0.0
      %5342 = vmatpush.msra.mxu0 0.0
      %5343 = vmatpush.msra.mxu0 0.0
      %5344 = vmatpush.msra.mxu0 %v3948
      %5345 = vmatmul.f32.gmra.mxu0 %v5327
      %v5346 = vpop.f32.mrf.mxu0
      %v5347 = vadd.f32 0.0, %v5346
      %5348 = vdwg.mxu0
      %5349 = vmatpush.msra.mxu0 0.0
      %5350 = vmatpush.msra.mxu0 0.0
      %5351 = vmatpush.msra.mxu0 0.0
      %5352 = vmatpush.msra.mxu0 0.0
      %5353 = vmatpush.msra.mxu0 0.0
      %5354 = vmatpush.msra.mxu0 0.0
      %5355 = vmatpush.msra.mxu0 0.0
      %5356 = vmatpush.msra.mxu0 0.0
      %5357 = vmatpush.msra.mxu0 0.0
      %5358 = vmatpush.msra.mxu0 0.0
      %5359 = vmatpush.msra.mxu0 0.0
      %5360 = vmatpush.msra.mxu0 0.0
      %5361 = vmatpush.msra.mxu0 0.0
      %5362 = vmatpush.msra.mxu0 0.0
      %5363 = vmatpush.msra.mxu0 0.0
      %5364 = vmatpush.msra.mxu0 %v3949
      %5365 = vmatmul.f32.gmra.mxu0 %v5327
      %v5366 = vpop.f32.mrf.mxu0
      %v5367 = vadd.f32 0.0, %v5366
      %5368 = vdwg.mxu0
      %v5369 = vld [vmem:[%s4 + $0xe00] sm:$0xff]
      %v5370 = vld [vmem:[%s4 + $0xe08] sm:$0xff]
      %v5371 = vld [vmem:[%s4 + $0xe10] sm:$0xff]
      %v5372 = vld [vmem:[%s4 + $0xe18] sm:$0xff]
      %v5373 = vld [vmem:[%s4 + $0xe20] sm:$0xff]
      %v5374 = vld [vmem:[%s4 + $0xe28] sm:$0xff]
      %v5375 = vld [vmem:[%s4 + $0xe30] sm:$0xff]
      %v5376 = vld [vmem:[%s4 + $0xe38] sm:$0xff]
      %v5377 = vld [vmem:[%s4 + $0xe40] sm:$0xff]
      %v5378 = vld [vmem:[%s4 + $0xe48] sm:$0xff]
      %v5379 = vld [vmem:[%s4 + $0xe50] sm:$0xff]
      %v5380 = vld [vmem:[%s4 + $0xe58] sm:$0xff]
      %v5381 = vld [vmem:[%s4 + $0xe60] sm:$0xff]
      %v5382 = vld [vmem:[%s4 + $0xe68] sm:$0xff]
      %v5383 = vld [vmem:[%s4 + $0xe70] sm:$0xff]
      %v5384 = vld [vmem:[%s4 + $0xe78] sm:$0xff]
      %v5385 = vld [vmem:[%s4 + $0xe80] sm:$0xff]
      %v5386 = vld [vmem:[%s4 + $0xe88] sm:$0xff]
      %v5387 = vld [vmem:[%s4 + $0xe90] sm:$0xff]
      %v5388 = vld [vmem:[%s4 + $0xe98] sm:$0xff]
      %v5389 = vld [vmem:[%s4 + $0xea0] sm:$0xff]
      %v5390 = vld [vmem:[%s4 + $0xea8] sm:$0xff]
      %v5391 = vld [vmem:[%s4 + $0xeb0] sm:$0xff]
      %v5392 = vld [vmem:[%s4 + $0xeb8] sm:$0xff]
      %v5393 = vld [vmem:[%s4 + $0xec0] sm:$0xff]
      %v5394 = vld [vmem:[%s4 + $0xec8] sm:$0xff]
      %v5395 = vld [vmem:[%s4 + $0xed0] sm:$0xff]
      %v5396 = vld [vmem:[%s4 + $0xed8] sm:$0xff]
      %v5397 = vld [vmem:[%s4 + $0xee0] sm:$0xff]
      %v5398 = vld [vmem:[%s4 + $0xee8] sm:$0xff]
      %v5399 = vld [vmem:[%s4 + $0xef0] sm:$0xff]
      %v5400 = vld [vmem:[%s4 + $0xef8] sm:$0xff]
      %v5401 = vld [vmem:[%s4 + $0xf00] sm:$0xff]
      %v5402 = vld [vmem:[%s4 + $0xf08] sm:$0xff]
      %v5403 = vld [vmem:[%s4 + $0xf10] sm:$0xff]
      %v5404 = vld [vmem:[%s4 + $0xf18] sm:$0xff]
      %v5405 = vld [vmem:[%s4 + $0xf20] sm:$0xff]
      %v5406 = vld [vmem:[%s4 + $0xf28] sm:$0xff]
      %v5407 = vld [vmem:[%s4 + $0xf30] sm:$0xff]
      %v5408 = vld [vmem:[%s4 + $0xf38] sm:$0xff]
      %v5409 = vld [vmem:[%s4 + $0xf40] sm:$0xff]
      %v5410 = vld [vmem:[%s4 + $0xf48] sm:$0xff]
      %v5411 = vld [vmem:[%s4 + $0xf50] sm:$0xff]
      %v5412 = vld [vmem:[%s4 + $0xf58] sm:$0xff]
      %v5413 = vld [vmem:[%s4 + $0xf60] sm:$0xff]
      %v5414 = vld [vmem:[%s4 + $0xf68] sm:$0xff]
      %v5415 = vld [vmem:[%s4 + $0xf70] sm:$0xff]
      %v5416 = vld [vmem:[%s4 + $0xf78] sm:$0xff]
      %v5417 = vld [vmem:[%s4 + $0xf80] sm:$0xff]
      %v5418 = vld [vmem:[%s4 + $0xf88] sm:$0xff]
      %v5419 = vld [vmem:[%s4 + $0xf90] sm:$0xff]
      %v5420 = vld [vmem:[%s4 + $0xf98] sm:$0xff]
      %v5421 = vld [vmem:[%s4 + $0xfa0] sm:$0xff]
      %v5422 = vld [vmem:[%s4 + $0xfa8] sm:$0xff]
      %v5423 = vld [vmem:[%s4 + $0xfb0] sm:$0xff]
      %v5424 = vld [vmem:[%s4 + $0xfb8] sm:$0xff]
      %v5425 = vld [vmem:[%s4 + $0xfc0] sm:$0xff]
      %v5426 = vld [vmem:[%s4 + $0xfc8] sm:$0xff]
      %v5427 = vld [vmem:[%s4 + $0xfd0] sm:$0xff]
      %v5428 = vld [vmem:[%s4 + $0xfd8] sm:$0xff]
      %v5429 = vld [vmem:[%s4 + $0xfe0] sm:$0xff]
      %v5430 = vld [vmem:[%s4 + $0xfe8] sm:$0xff]
      %v5431 = vld [vmem:[%s4 + $0xff0] sm:$0xff]
      %v5432 = vld [vmem:[%s4 + $0xff8] sm:$0xff]
      %5433 = vmatpush.msra.mxu0 %v5399
      %5434 = vmatpush.msra.mxu0 %v5397
      %5435 = vmatpush.msra.mxu0 %v5395
      %5436 = vmatpush.msra.mxu0 %v5393
      %5437 = vmatpush.msra.mxu0 %v5391
      %5438 = vmatpush.msra.mxu0 %v5389
      %5439 = vmatpush.msra.mxu0 %v5387
      %5440 = vmatpush.msra.mxu0 %v5385
      %5441 = vmatpush.msra.mxu0 %v5383
      %5442 = vmatpush.msra.mxu0 %v5381
      %5443 = vmatpush.msra.mxu0 %v5379
      %5444 = vmatpush.msra.mxu0 %v5377
      %5445 = vmatpush.msra.mxu0 %v5375
      %5446 = vmatpush.msra.mxu0 %v5373
      %5447 = vmatpush.msra.mxu0 %v5371
      %5448 = vmatpush.msra.mxu0 %v5369
      %5449 = vmatmul.f32.gmra.mxu0 %v5347
      %v5450 = vpop.f32.mrf.mxu0
      %v5451 = vadd.f32 0.0, %v5450
      %5452 = vdwg.mxu0
      %5453 = vmatpush.msra.mxu0 %v5431
      %5454 = vmatpush.msra.mxu0 %v5429
      %5455 = vmatpush.msra.mxu0 %v5427
      %5456 = vmatpush.msra.mxu0 %v5425
      %5457 = vmatpush.msra.mxu0 %v5423
      %5458 = vmatpush.msra.mxu0 %v5421
      %5459 = vmatpush.msra.mxu0 %v5419
      %5460 = vmatpush.msra.mxu0 %v5417
      %5461 = vmatpush.msra.mxu0 %v5415
      %5462 = vmatpush.msra.mxu0 %v5413
      %5463 = vmatpush.msra.mxu0 %v5411
      %5464 = vmatpush.msra.mxu0 %v5409
      %5465 = vmatpush.msra.mxu0 %v5407
      %5466 = vmatpush.msra.mxu0 %v5405
      %5467 = vmatpush.msra.mxu0 %v5403
      %5468 = vmatpush.msra.mxu0 %v5401
      %5469 = vmatmul.f32.gmra.mxu0 %v5367
      %v5470 = vpop.f32.mrf.mxu0
      %v5471 = vadd.f32 %v5451, %v5470
      %5472 = vdwg.mxu0
      %5473 = vmatpush.msra.mxu0 %v5400
      %5474 = vmatpush.msra.mxu0 %v5398
      %5475 = vmatpush.msra.mxu0 %v5396
      %5476 = vmatpush.msra.mxu0 %v5394
      %5477 = vmatpush.msra.mxu0 %v5392
      %5478 = vmatpush.msra.mxu0 %v5390
      %5479 = vmatpush.msra.mxu0 %v5388
      %5480 = vmatpush.msra.mxu0 %v5386
      %5481 = vmatpush.msra.mxu0 %v5384
      %5482 = vmatpush.msra.mxu0 %v5382
      %5483 = vmatpush.msra.mxu0 %v5380
      %5484 = vmatpush.msra.mxu0 %v5378
      %5485 = vmatpush.msra.mxu0 %v5376
      %5486 = vmatpush.msra.mxu0 %v5374
      %5487 = vmatpush.msra.mxu0 %v5372
      %5488 = vmatpush.msra.mxu0 %v5370
      %5489 = vmatmul.f32.gmra.mxu0 %v5347
      %v5490 = vpop.f32.mrf.mxu0
      %v5491 = vadd.f32 0.0, %v5490
      %5492 = vdwg.mxu0
      %5493 = vmatpush.msra.mxu0 %v5432
      %5494 = vmatpush.msra.mxu0 %v5430
      %5495 = vmatpush.msra.mxu0 %v5428
      %5496 = vmatpush.msra.mxu0 %v5426
      %5497 = vmatpush.msra.mxu0 %v5424
      %5498 = vmatpush.msra.mxu0 %v5422
      %5499 = vmatpush.msra.mxu0 %v5420
      %5500 = vmatpush.msra.mxu0 %v5418
      %5501 = vmatpush.msra.mxu0 %v5416
      %5502 = vmatpush.msra.mxu0 %v5414
      %5503 = vmatpush.msra.mxu0 %v5412
      %5504 = vmatpush.msra.mxu0 %v5410
      %5505 = vmatpush.msra.mxu0 %v5408
      %5506 = vmatpush.msra.mxu0 %v5406
      %5507 = vmatpush.msra.mxu0 %v5404
      %5508 = vmatpush.msra.mxu0 %v5402
      %5509 = vmatmul.f32.gmra.mxu0 %v5367
      %v5510 = vpop.f32.mrf.mxu0
      %v5511 = vadd.f32 %v5491, %v5510
      %5512 = vdwg.mxu0
      %v5513 = vadd.f32 %v5324, %v5471
      %v5514 = vadd.f32 %v5325, %v5511
      %v5516 = vsel %vm3997, %v3995, 0
      %5518 = vmatpush.msra.mxu0 0.0
      %5519 = vmatpush.msra.mxu0 0.0
      %5520 = vmatpush.msra.mxu0 0.0
      %5521 = vmatpush.msra.mxu0 0.0
      %5522 = vmatpush.msra.mxu0 0.0
      %5523 = vmatpush.msra.mxu0 0.0
      %5524 = vmatpush.msra.mxu0 0.0
      %5525 = vmatpush.msra.mxu0 0.0
      %5526 = vmatpush.msra.mxu0 0.0
      %5527 = vmatpush.msra.mxu0 0.0
      %5528 = vmatpush.msra.mxu0 0.0
      %5529 = vmatpush.msra.mxu0 0.0
      %5530 = vmatpush.msra.mxu0 0.0
      %5531 = vmatpush.msra.mxu0 0.0
      %5532 = vmatpush.msra.mxu0 0.0
      %5533 = vmatpush.msra.mxu0 %v3948
      %5534 = vmatmul.f32.gmra.mxu0 %v5516
      %v5535 = vpop.f32.mrf.mxu0
      %v5536 = vadd.f32 0.0, %v5535
      %5537 = vdwg.mxu0
      %5538 = vmatpush.msra.mxu0 0.0
      %5539 = vmatpush.msra.mxu0 0.0
      %5540 = vmatpush.msra.mxu0 0.0
      %5541 = vmatpush.msra.mxu0 0.0
      %5542 = vmatpush.msra.mxu0 0.0
      %5543 = vmatpush.msra.mxu0 0.0
      %5544 = vmatpush.msra.mxu0 0.0
      %5545 = vmatpush.msra.mxu0 0.0
      %5546 = vmatpush.msra.mxu0 0.0
      %5547 = vmatpush.msra.mxu0 0.0
      %5548 = vmatpush.msra.mxu0 0.0
      %5549 = vmatpush.msra.mxu0 0.0
      %5550 = vmatpush.msra.mxu0 0.0
      %5551 = vmatpush.msra.mxu0 0.0
      %5552 = vmatpush.msra.mxu0 0.0
      %5553 = vmatpush.msra.mxu0 %v3949
      %5554 = vmatmul.f32.gmra.mxu0 %v5516
      %v5555 = vpop.f32.mrf.mxu0
      %v5556 = vadd.f32 0.0, %v5555
      %5557 = vdwg.mxu0
      %v5558 = vld [vmem:[%s4 + $0x1000] sm:$0xff]
      %v5559 = vld [vmem:[%s4 + $0x1008] sm:$0xff]
      %v5560 = vld [vmem:[%s4 + $0x1010] sm:$0xff]
      %v5561 = vld [vmem:[%s4 + $0x1018] sm:$0xff]
      %v5562 = vld [vmem:[%s4 + $0x1020] sm:$0xff]
      %v5563 = vld [vmem:[%s4 + $0x1028] sm:$0xff]
      %v5564 = vld [vmem:[%s4 + $0x1030] sm:$0xff]
      %v5565 = vld [vmem:[%s4 + $0x1038] sm:$0xff]
      %v5566 = vld [vmem:[%s4 + $0x1040] sm:$0xff]
      %v5567 = vld [vmem:[%s4 + $0x1048] sm:$0xff]
      %v5568 = vld [vmem:[%s4 + $0x1050] sm:$0xff]
      %v5569 = vld [vmem:[%s4 + $0x1058] sm:$0xff]
      %v5570 = vld [vmem:[%s4 + $0x1060] sm:$0xff]
      %v5571 = vld [vmem:[%s4 + $0x1068] sm:$0xff]
      %v5572 = vld [vmem:[%s4 + $0x1070] sm:$0xff]
      %v5573 = vld [vmem:[%s4 + $0x1078] sm:$0xff]
      %v5574 = vld [vmem:[%s4 + $0x1080] sm:$0xff]
      %v5575 = vld [vmem:[%s4 + $0x1088] sm:$0xff]
      %v5576 = vld [vmem:[%s4 + $0x1090] sm:$0xff]
      %v5577 = vld [vmem:[%s4 + $0x1098] sm:$0xff]
      %v5578 = vld [vmem:[%s4 + $0x10a0] sm:$0xff]
      %v5579 = vld [vmem:[%s4 + $0x10a8] sm:$0xff]
      %v5580 = vld [vmem:[%s4 + $0x10b0] sm:$0xff]
      %v5581 = vld [vmem:[%s4 + $0x10b8] sm:$0xff]
      %v5582 = vld [vmem:[%s4 + $0x10c0] sm:$0xff]
      %v5583 = vld [vmem:[%s4 + $0x10c8] sm:$0xff]
      %v5584 = vld [vmem:[%s4 + $0x10d0] sm:$0xff]
      %v5585 = vld [vmem:[%s4 + $0x10d8] sm:$0xff]
      %v5586 = vld [vmem:[%s4 + $0x10e0] sm:$0xff]
      %v5587 = vld [vmem:[%s4 + $0x10e8] sm:$0xff]
      %v5588 = vld [vmem:[%s4 + $0x10f0] sm:$0xff]
      %v5589 = vld [vmem:[%s4 + $0x10f8] sm:$0xff]
      %v5590 = vld [vmem:[%s4 + $0x1100] sm:$0xff]
      %v5591 = vld [vmem:[%s4 + $0x1108] sm:$0xff]
      %v5592 = vld [vmem:[%s4 + $0x1110] sm:$0xff]
      %v5593 = vld [vmem:[%s4 + $0x1118] sm:$0xff]
      %v5594 = vld [vmem:[%s4 + $0x1120] sm:$0xff]
      %v5595 = vld [vmem:[%s4 + $0x1128] sm:$0xff]
      %v5596 = vld [vmem:[%s4 + $0x1130] sm:$0xff]
      %v5597 = vld [vmem:[%s4 + $0x1138] sm:$0xff]
      %v5598 = vld [vmem:[%s4 + $0x1140] sm:$0xff]
      %v5599 = vld [vmem:[%s4 + $0x1148] sm:$0xff]
      %v5600 = vld [vmem:[%s4 + $0x1150] sm:$0xff]
      %v5601 = vld [vmem:[%s4 + $0x1158] sm:$0xff]
      %v5602 = vld [vmem:[%s4 + $0x1160] sm:$0xff]
      %v5603 = vld [vmem:[%s4 + $0x1168] sm:$0xff]
      %v5604 = vld [vmem:[%s4 + $0x1170] sm:$0xff]
      %v5605 = vld [vmem:[%s4 + $0x1178] sm:$0xff]
      %v5606 = vld [vmem:[%s4 + $0x1180] sm:$0xff]
      %v5607 = vld [vmem:[%s4 + $0x1188] sm:$0xff]
      %v5608 = vld [vmem:[%s4 + $0x1190] sm:$0xff]
      %v5609 = vld [vmem:[%s4 + $0x1198] sm:$0xff]
      %v5610 = vld [vmem:[%s4 + $0x11a0] sm:$0xff]
      %v5611 = vld [vmem:[%s4 + $0x11a8] sm:$0xff]
      %v5612 = vld [vmem:[%s4 + $0x11b0] sm:$0xff]
      %v5613 = vld [vmem:[%s4 + $0x11b8] sm:$0xff]
      %v5614 = vld [vmem:[%s4 + $0x11c0] sm:$0xff]
      %v5615 = vld [vmem:[%s4 + $0x11c8] sm:$0xff]
      %v5616 = vld [vmem:[%s4 + $0x11d0] sm:$0xff]
      %v5617 = vld [vmem:[%s4 + $0x11d8] sm:$0xff]
      %v5618 = vld [vmem:[%s4 + $0x11e0] sm:$0xff]
      %v5619 = vld [vmem:[%s4 + $0x11e8] sm:$0xff]
      %v5620 = vld [vmem:[%s4 + $0x11f0] sm:$0xff]
      %v5621 = vld [vmem:[%s4 + $0x11f8] sm:$0xff]
      %5622 = vmatpush.msra.mxu0 %v5588
      %5623 = vmatpush.msra.mxu0 %v5586
      %5624 = vmatpush.msra.mxu0 %v5584
      %5625 = vmatpush.msra.mxu0 %v5582
      %5626 = vmatpush.msra.mxu0 %v5580
      %5627 = vmatpush.msra.mxu0 %v5578
      %5628 = vmatpush.msra.mxu0 %v5576
      %5629 = vmatpush.msra.mxu0 %v5574
      %5630 = vmatpush.msra.mxu0 %v5572
      %5631 = vmatpush.msra.mxu0 %v5570
      %5632 = vmatpush.msra.mxu0 %v5568
      %5633 = vmatpush.msra.mxu0 %v5566
      %5634 = vmatpush.msra.mxu0 %v5564
      %5635 = vmatpush.msra.mxu0 %v5562
      %5636 = vmatpush.msra.mxu0 %v5560
      %5637 = vmatpush.msra.mxu0 %v5558
      %5638 = vmatmul.f32.gmra.mxu0 %v5536
      %v5639 = vpop.f32.mrf.mxu0
      %v5640 = vadd.f32 0.0, %v5639
      %5641 = vdwg.mxu0
      %5642 = vmatpush.msra.mxu0 %v5620
      %5643 = vmatpush.msra.mxu0 %v5618
      %5644 = vmatpush.msra.mxu0 %v5616
      %5645 = vmatpush.msra.mxu0 %v5614
      %5646 = vmatpush.msra.mxu0 %v5612
      %5647 = vmatpush.msra.mxu0 %v5610
      %5648 = vmatpush.msra.mxu0 %v5608
      %5649 = vmatpush.msra.mxu0 %v5606
      %5650 = vmatpush.msra.mxu0 %v5604
      %5651 = vmatpush.msra.mxu0 %v5602
      %5652 = vmatpush.msra.mxu0 %v5600
      %5653 = vmatpush.msra.mxu0 %v5598
      %5654 = vmatpush.msra.mxu0 %v5596
      %5655 = vmatpush.msra.mxu0 %v5594
      %5656 = vmatpush.msra.mxu0 %v5592
      %5657 = vmatpush.msra.mxu0 %v5590
      %5658 = vmatmul.f32.gmra.mxu0 %v5556
      %v5659 = vpop.f32.mrf.mxu0
      %v5660 = vadd.f32 %v5640, %v5659
      %5661 = vdwg.mxu0
      %5662 = vmatpush.msra.mxu0 %v5589
      %5663 = vmatpush.msra.mxu0 %v5587
      %5664 = vmatpush.msra.mxu0 %v5585
      %5665 = vmatpush.msra.mxu0 %v5583
      %5666 = vmatpush.msra.mxu0 %v5581
      %5667 = vmatpush.msra.mxu0 %v5579
      %5668 = vmatpush.msra.mxu0 %v5577
      %5669 = vmatpush.msra.mxu0 %v5575
      %5670 = vmatpush.msra.mxu0 %v5573
      %5671 = vmatpush.msra.mxu0 %v5571
      %5672 = vmatpush.msra.mxu0 %v5569
      %5673 = vmatpush.msra.mxu0 %v5567
      %5674 = vmatpush.msra.mxu0 %v5565
      %5675 = vmatpush.msra.mxu0 %v5563
      %5676 = vmatpush.msra.mxu0 %v5561
      %5677 = vmatpush.msra.mxu0 %v5559
      %5678 = vmatmul.f32.gmra.mxu0 %v5536
      %v5679 = vpop.f32.mrf.mxu0
      %v5680 = vadd.f32 0.0, %v5679
      %5681 = vdwg.mxu0
      %5682 = vmatpush.msra.mxu0 %v5621
      %5683 = vmatpush.msra.mxu0 %v5619
      %5684 = vmatpush.msra.mxu0 %v5617
      %5685 = vmatpush.msra.mxu0 %v5615
      %5686 = vmatpush.msra.mxu0 %v5613
      %5687 = vmatpush.msra.mxu0 %v5611
      %5688 = vmatpush.msra.mxu0 %v5609
      %5689 = vmatpush.msra.mxu0 %v5607
      %5690 = vmatpush.msra.mxu0 %v5605
      %5691 = vmatpush.msra.mxu0 %v5603
      %5692 = vmatpush.msra.mxu0 %v5601
      %5693 = vmatpush.msra.mxu0 %v5599
      %5694 = vmatpush.msra.mxu0 %v5597
      %5695 = vmatpush.msra.mxu0 %v5595
      %5696 = vmatpush.msra.mxu0 %v5593
      %5697 = vmatpush.msra.mxu0 %v5591
      %5698 = vmatmul.f32.gmra.mxu0 %v5556
      %v5699 = vpop.f32.mrf.mxu0
      %v5700 = vadd.f32 %v5680, %v5699
      %5701 = vdwg.mxu0
      %v5702 = vadd.f32 %v5513, %v5660
      %v5703 = vadd.f32 %v5514, %v5700
      %v5704 = vmul.f32 %v5702, %v2161
      %v5705 = vmul.f32 %v5703, %v2162
      %v5708 = vrot.slane %v5705, 4
      %v5709 = vsel %vm2758, %v5704, %v5708
      %5711 = vst [vmem:[%s322] sm:$0xff] %v5709
      %p5712 = scmp.lt.s32.totalorder %s19, 1
      %s5713 = scalar_select %p5712, %s19, 1
      %s5714 = smul.addr %s5713, 2
      %s5715 = smul.addr %s5714, 4
      %s5716 = scalar_lea.vmem %s6, %s5715
      %p5717 = scmp.lt.s32.totalorder %s19, 1
      %s5718 = scalar_select %p5717, %s19, 1
      %s5719 = smul.addr %s5718, 8
      %s5720 = scalar_lea.vmem %s7, %s5719
      // Predicated region
      $region45: #{node_forward.1} parent=43 // pred_check
        %p5721 = pneg %p178
      $region46: #{node_forward.1} parent=43 // pred_check_branch
        %5723 = sbr.rel (%p5721) target = $region48
      $region47: #{node_forward.1} parent=43 // pred_region
        _
      $region48: #{node_forward.1} parent=43 // pred_fallthru
        _
      // Predicated region
      $region49: #{node_forward.1} parent=43 // pred_check
        %p5724 = pneg %p204
      $region50: #{node_forward.1} parent=43 // pred_check_branch
        %5726 = sbr.rel (%p5724) target = $region52
      $region51: #{node_forward.1} parent=43 // pred_region
        _
      $region52: #{node_forward.1} parent=43 // pred_fallthru
        _
    $region44: #{node_forward.1} parent=5 // pred_fallthru
      _
    %p5727 = scmp.le.s32.totalorder 2, %s14
    // Predicated region
    $region53: #{node_forward.1} parent=5 // pred_check
      %p5728 = pneg %p5727
    $region54: #{node_forward.1} parent=5 // pred_check_branch
      %5730 = sbr.rel (%p5728) target = $region56
    $region55: #{node_forward.1} parent=5 // pred_region
      %s5731 = ssub.s32 %s14, 2
      // Predicated region
      $region57: #{node_forward.1} parent=55 // pred_check
        %p5732 = pneg %p184
      $region58: #{node_forward.1} parent=55 // pred_check_branch
        %5734 = sbr.rel (%p5732) target = $region60
      $region59: #{node_forward.1} parent=55 // pred_region
        %p5735 = scmp.lt.s32.totalorder %s20, 1
        %s5736 = scalar_select %p5735, %s20, 1
        %s5737 = smul.addr %s5736, 2
        %s5738 = smul.addr %s5737, 4
        %s5739 = scalar_lea.vmem %s6, %s5738
      $region60: #{node_forward.1} parent=55 // pred_fallthru
        _
      // Predicated region
      $region61: #{node_forward.1} parent=55 // pred_check
        %p5740 = pneg %p210
      $region62: #{node_forward.1} parent=55 // pred_check_branch
        %5742 = sbr.rel (%p5740) target = $region64
      $region63: #{node_forward.1} parent=55 // pred_region
        %p5743 = scmp.lt.s32.totalorder %s20, 1
        %s5744 = scalar_select %p5743, %s20, 1
        %s5745 = smul.addr %s5744, 8
        %s5746 = scalar_lea.vmem %s7, %s5745
      $region64: #{node_forward.1} parent=55 // pred_fallthru
        _
    $region56: #{node_forward.1} parent=5 // pred_fallthru
      _
  $region6: #{node_forward.1} parent=0 // loop_footer
    %s18 = sadd.s32 1, %s14
  $region7: #{node_forward.1} parent=0 // loop_footer_branch
    %13 = sbr.rel target = $region3
  $region8: #{node_forward.1} parent=0 // loop_exit
    _

</llo_original>
